<compile_context>
chip_gen: v7x
topology: tpu7x:2x2x1
jax: 0.10.0
libtpu: 0.0.40
codegen_flags: <defaults>
</compile_context>

<pallas_src>
import jax
import jax.numpy as jnp
from jax import lax
from jax.experimental import pallas as pl
from jax.experimental.pallas import tpu as pltpu


# ---------------------------------------------------------------------------
# Fused Pallas kernel: conv1..conv5 (3x3 + ReLU) + last (1x1), one image/step.
# ---------------------------------------------------------------------------
def _fcn_fused_kernel(x_ref, wconv_ref, bconv_ref, wlast_ref, blast_ref,
                      o_ref, pad_ref, patch_ref):
    # x_ref:     (1, H, W, Cin0)    f32   one image, NHWC
    # wconv_ref: (L, 9*Cmax, F)     bf16  im2col conv weights, Cin 0-padded
    # bconv_ref: (L, 1, F)          f32
    # wlast_ref: (NC, F)            bf16  transposed 1x1 weights
    # blast_ref: (NC, 1)            f32
    # o_ref:     (1, NC, H*W)       f32   channel-major -> lane-dense store
    # pad_ref:   (H+2, W+2, Cmax)   f32   VMEM scratch (SAME-padded activation)
    # patch_ref: (H*W, 9*Cmax)      bf16  VMEM scratch (im2col patch matrix)
    _, H, W, cin0 = x_ref.shape
    cmax = pad_ref.shape[-1]
    n_conv, _, F = wconv_ref.shape

    # Zero once: the 1-pixel border (and any unused channels) must read as 0.
    pad_ref[...] = jnp.zeros_like(pad_ref)
    pad_ref[1:H + 1, 1:W + 1, :cin0] = x_ref[0]

    y = None
    for l in range(n_conv):
        p = pad_ref[...]                                   # (H+2, W+2, Cmax)
        # im2col: 9 shifted slabs; column order (dh, dw, ci) must match the
        # (3, 3, Cmax, F) -> (9*Cmax, F) weight reshape done in the wrapper.
        for k in range(9):
            dh, dw = divmod(k, 3)
            slab = p[dh:dh + H, dw:dw + W, :].reshape(H * W, cmax)
            patch_ref[:, k * cmax:(k + 1) * cmax] = slab.astype(patch_ref.dtype)
        # Single MXU matmul per layer (K = 9*Cmax), f32 accumulation.
        y = jnp.dot(patch_ref[...], wconv_ref[l],
                    preferred_element_type=jnp.float32)     # (H*W, F)
        y = jnp.maximum(y + bconv_ref[l], 0.0)               # bias + ReLU
        if l < n_conv - 1:
            pad_ref[1:H + 1, 1:W + 1, :F] = (
                y.reshape(H, W, F).astype(pad_ref.dtype))

    # Final 1x1 conv (no ReLU), emitted channel-major: (NC, H*W).
    a_last = y.astype(wlast_ref.dtype)                        # (H*W, F) bf16
    out = jnp.dot(wlast_ref[...], a_last.T,
                  preferred_element_type=jnp.float32)         # (NC, H*W)
    o_ref[0] = (out + blast_ref[...]).astype(o_ref.dtype)


# ---------------------------------------------------------------------------
# Wrapper
# ---------------------------------------------------------------------------
def _pack_params(params, cmax):
    """Pack f32 master params into the kernel's im2col / bf16 layout."""
    wcs, bcs = [], []
    for w, b in params[:-1]:                       # w: (3,3,Cin,F), b: (1,F)
        cin = w.shape[2]
        w = jnp.pad(w, ((0, 0), (0, 0), (0, cmax - cin), (0, 0)))
        wcs.append(w.reshape(9 * cmax, w.shape[-1]))          # (9*Cmax, F)
        bcs.append(b.reshape(1, -1))
    w_last, b_last = params[-1]                    # (F, NC), (1, NC)
    return (jnp.stack(wcs).astype(jnp.bfloat16),              # (L, 9*Cmax, F)
            jnp.stack(bcs).astype(jnp.float32),               # (L, 1, F)
            w_last.T.astype(jnp.bfloat16),                    # (NC, F)
            b_last.reshape(-1, 1).astype(jnp.float32))        # (NC, 1)


@jax.jit
def fcn_forward(x_nchw, params):
    """x_nchw: (N, C, H, W) f32 -> (N, num_classes, H, W) f32."""
    N, cin0, H, W = x_nchw.shape
    F = params[0][0].shape[-1]
    NC = params[-1][0].shape[-1]
    L = len(params) - 1
    cmax = max(cin0, F)

    wconv, bconv, wlast, blast = _pack_params(params, cmax)
    x_nhwc = jnp.transpose(x_nchw, (0, 2, 3, 1))   # tiny input-side transpose

    out = pl.pallas_call(
        _fcn_fused_kernel,
        out_shape=jax.ShapeDtypeStruct((N, NC, H * W), jnp.float32),
        grid=(N,),
        in_specs=[
            pl.BlockSpec((1, H, W, cin0), lambda n: (n, 0, 0, 0)),
            pl.BlockSpec((L, 9 * cmax, F), lambda n: (0, 0, 0)),
            pl.BlockSpec((L, 1, F), lambda n: (0, 0, 0)),
            pl.BlockSpec((NC, F), lambda n: (0, 0)),
            pl.BlockSpec((NC, 1), lambda n: (0, 0)),
        ],
        out_specs=pl.BlockSpec((1, NC, H * W), lambda n: (n, 0, 0)),
        scratch_shapes=[
            pltpu.VMEM((H + 2, W + 2, cmax), jnp.float32),    # padded activation
            pltpu.VMEM((H * W, 9 * cmax), jnp.bfloat16),      # im2col patches
        ],
        compiler_params=pltpu.CompilerParams(
            dimension_semantics=("parallel",),
            vmem_limit_bytes=32 * 1024 * 1024,   # size up with blocks at larger H,W
        ),
    )(x_nhwc, wconv, bconv, wlast, blast)

    # Free reshape: (N, NC, H*W) -> (N, NC, H, W); output is already NCHW.
    return out.reshape(N, NC, H, W)


# ---------------------------------------------------------------------------
# Parameter init (f32 masters) + pure-JAX f32 reference
# ---------------------------------------------------------------------------
def init_fcn_params(key, num_input_channels, num_output_classes, num_filters):
    params = []
    c_in = num_input_channels
    for _ in range(5):  # conv1..conv5: 3x3, SAME
        key, kw, kb = jax.random.split(key, 3)
        bound = 1.0 / jnp.sqrt(c_in * 9.0)
        w = jax.random.uniform(kw, (3, 3, c_in, num_filters), jnp.float32,
                               -bound, bound)
        b = jax.random.uniform(kb, (1, num_filters), jnp.float32, -bound, bound)
        params.append((w, b))
        c_in = num_filters
    key, kw, kb = jax.random.split(key, 3)
    bound = 1.0 / jnp.sqrt(float(num_filters))
    w_last = jax.random.uniform(kw, (num_filters, num_output_classes),
                                jnp.float32, -bound, bound)
    b_last = jax.random.uniform(kb, (1, num_output_classes), jnp.float32,
                                -bound, bound)
    params.append((w_last, b_last))
    return params


def fcn_reference(x_nchw, params):
    x = x_nchw
    dn = ("NCHW", "HWIO", "NCHW")
    for w, b in params[:-1]:
        x = lax.conv_general_dilated(x, w, (1, 1), "SAME", dimension_numbers=dn)
        x = jnp.maximum(x + b.reshape(1, -1, 1, 1), 0.0)
    w_last, b_last = params[-1]
    w_last4 = w_last.reshape(1, 1, *w_last.shape)
    x = lax.conv_general_dilated(x, w_last4, (1, 1), "VALID",
                                 dimension_numbers=dn)
    return x + b_last.reshape(1, -1, 1, 1)


if __name__ == "__main__":
    N, C_IN, H, W = 2, 4, 16, 16
    NUM_FILTERS = 32
    NUM_CLASSES = 10

    key = jax.random.PRNGKey(0)
    key, kx = jax.random.split(key)
    x = jax.random.normal(kx, (N, C_IN, H, W), jnp.float32)
    params = init_fcn_params(key, C_IN, NUM_CLASSES, NUM_FILTERS)

    out = jax.block_until_ready(fcn_forward(x, params))
    ref = fcn_reference(x, params)

    assert out.shape == (N, NUM_CLASSES, H, W), out.shape
    max_err = float(jnp.max(jnp.abs(out - ref)))
    # bf16 MXU operands with f32 accumulation -> tolerance loosened vs f32.
    assert jnp.allclose(out, ref, atol=2e-2, rtol=2e-2), max_err

    print("KERNEL_OK")
</pallas_src>

<mosaic_0001>
module attributes {stable_mosaic.version = 11 : i64} {
  func.func @_fcn_fused_kernel(%arg0: i32, %arg1: memref<1x16x16x4xf32, #tpu.memory_space<vmem>>, %arg2: memref<5x288x32xbf16, #tpu.memory_space<vmem>>, %arg3: memref<5x1x32xf32, #tpu.memory_space<vmem>>, %arg4: memref<10x32xbf16, #tpu.memory_space<vmem>>, %arg5: memref<10x1xf32, #tpu.memory_space<vmem>>, %arg6: memref<1x10x256xf32, #tpu.memory_space<vmem>>, %arg7: memref<18x18x32xf32, #tpu.memory_space<vmem>>, %arg8: memref<256x288xbf16, #tpu.memory_space<vmem>>) attributes {dimension_semantics = [#tpu.dimension_semantics<parallel>], iteration_bounds = array<i64: 2>, scalar_prefetch = 0 : i64, scratch_operands = 2 : i64, tpu.core_type = #tpu.core_type<tc>, window_params = [{transform_indices = @transform_0, window_bounds = array<i64: 1, 16, 16, 4>}, {pipeline_mode = #tpu.pipeline_mode<synchronous>, transform_indices = @transform_1, window_bounds = array<i64: 5, 288, 32>}, {pipeline_mode = #tpu.pipeline_mode<synchronous>, transform_indices = @transform_2, window_bounds = array<i64: 5, 1, 32>}, {pipeline_mode = #tpu.pipeline_mode<synchronous>, transform_indices = @transform_3, window_bounds = array<i64: 10, 32>}, {pipeline_mode = #tpu.pipeline_mode<synchronous>, transform_indices = @transform_4, window_bounds = array<i64: 10, 1>}, {transform_indices = @transform_5, window_bounds = array<i64: 1, 10, 256>}]} {
    %cst = arith.constant 0.000000e+00 : f32
    %0 = vector.broadcast %cst : f32 to vector<18x18x32xf32>
    %c0 = arith.constant 0 : index
    %c0_0 = arith.constant 0 : index
    %c0_1 = arith.constant 0 : index
    %1 = vector.load %arg7[%c0, %c0_0, %c0_1] : memref<18x18x32xf32, #tpu.memory_space<vmem>>, vector<18x18x32xf32>
    tpu.vector_store %arg7[%c0, %c0_0, %c0_1], %0 {strides = array<i32>} : memref<18x18x32xf32, #tpu.memory_space<vmem>>, vector<18x18x32xf32>,
    %c0_2 = arith.constant 0 : index
    %c0_3 = arith.constant 0 : index
    %c0_4 = arith.constant 0 : index
    %c0_5 = arith.constant 0 : index
    %2 = vector.load %arg1[%c0_2, %c0_3, %c0_4, %c0_5] : memref<1x16x16x4xf32, #tpu.memory_space<vmem>>, vector<1x16x16x4xf32>
    %3 = vector.shape_cast %2 : vector<1x16x16x4xf32> to vector<16x16x4xf32>
    %c1 = arith.constant 1 : index
    %c1_6 = arith.constant 1 : index
    %c0_7 = arith.constant 0 : index
    %4 = vector.load %arg7[%c1, %c1_6, %c0_7] : memref<18x18x32xf32, #tpu.memory_space<vmem>>, vector<16x16x4xf32>
    tpu.vector_store %arg7[%c1, %c1_6, %c0_7], %3 {strides = array<i32>} : memref<18x18x32xf32, #tpu.memory_space<vmem>>, vector<16x16x4xf32>,
    %c0_8 = arith.constant 0 : index
    %c0_9 = arith.constant 0 : index
    %c0_10 = arith.constant 0 : index
    %5 = vector.load %arg7[%c0_8, %c0_9, %c0_10] : memref<18x18x32xf32, #tpu.memory_space<vmem>>, vector<18x18x32xf32>
    %6 = vector.extract_strided_slice %5 {offsets = [0, 0, 0], sizes = [16, 16, 32], strides = [1, 1, 1]} : vector<18x18x32xf32> to vector<16x16x32xf32>
    %7 = vector.shape_cast %6 : vector<16x16x32xf32> to vector<256x32xf32>
    %8 = arith.truncf %7 : vector<256x32xf32> to vector<256x32xbf16>
    %c0_11 = arith.constant 0 : index
    %c0_12 = arith.constant 0 : index
    %9 = vector.load %arg8[%c0_11, %c0_12] : memref<256x288xbf16, #tpu.memory_space<vmem>>, vector<256x32xbf16>
    tpu.vector_store %arg8[%c0_11, %c0_12], %8 {strides = array<i32>} : memref<256x288xbf16, #tpu.memory_space<vmem>>, vector<256x32xbf16>,
    %10 = vector.extract_strided_slice %5 {offsets = [0, 1, 0], sizes = [16, 16, 32], strides = [1, 1, 1]} : vector<18x18x32xf32> to vector<16x16x32xf32>
    %11 = vector.shape_cast %10 : vector<16x16x32xf32> to vector<256x32xf32>
    %12 = arith.truncf %11 : vector<256x32xf32> to vector<256x32xbf16>
    %c0_13 = arith.constant 0 : index
    %c32 = arith.constant 32 : index
    %13 = vector.load %arg8[%c0_13, %c32] : memref<256x288xbf16, #tpu.memory_space<vmem>>, vector<256x32xbf16>
    tpu.vector_store %arg8[%c0_13, %c32], %12 {strides = array<i32>} : memref<256x288xbf16, #tpu.memory_space<vmem>>, vector<256x32xbf16>,
    %14 = vector.extract_strided_slice %5 {offsets = [0, 2, 0], sizes = [16, 16, 32], strides = [1, 1, 1]} : vector<18x18x32xf32> to vector<16x16x32xf32>
    %15 = vector.shape_cast %14 : vector<16x16x32xf32> to vector<256x32xf32>
    %16 = arith.truncf %15 : vector<256x32xf32> to vector<256x32xbf16>
    %c0_14 = arith.constant 0 : index
    %c64 = arith.constant 64 : index
    %17 = vector.load %arg8[%c0_14, %c64] : memref<256x288xbf16, #tpu.memory_space<vmem>>, vector<256x32xbf16>
    tpu.vector_store %arg8[%c0_14, %c64], %16 {strides = array<i32>} : memref<256x288xbf16, #tpu.memory_space<vmem>>, vector<256x32xbf16>,
    %18 = vector.extract_strided_slice %5 {offsets = [1, 0, 0], sizes = [16, 16, 32], strides = [1, 1, 1]} : vector<18x18x32xf32> to vector<16x16x32xf32>
    %19 = vector.shape_cast %18 : vector<16x16x32xf32> to vector<256x32xf32>
    %20 = arith.truncf %19 : vector<256x32xf32> to vector<256x32xbf16>
    %c0_15 = arith.constant 0 : index
    %c96 = arith.constant 96 : index
    %21 = vector.load %arg8[%c0_15, %c96] : memref<256x288xbf16, #tpu.memory_space<vmem>>, vector<256x32xbf16>
    tpu.vector_store %arg8[%c0_15, %c96], %20 {strides = array<i32>} : memref<256x288xbf16, #tpu.memory_space<vmem>>, vector<256x32xbf16>,
    %22 = vector.extract_strided_slice %5 {offsets = [1, 1, 0], sizes = [16, 16, 32], strides = [1, 1, 1]} : vector<18x18x32xf32> to vector<16x16x32xf32>
    %23 = vector.shape_cast %22 : vector<16x16x32xf32> to vector<256x32xf32>
    %24 = arith.truncf %23 : vector<256x32xf32> to vector<256x32xbf16>
    %c0_16 = arith.constant 0 : index
    %c128 = arith.constant 128 : index
    %25 = vector.load %arg8[%c0_16, %c128] : memref<256x288xbf16, #tpu.memory_space<vmem>>, vector<256x32xbf16>
    tpu.vector_store %arg8[%c0_16, %c128], %24 {strides = array<i32>} : memref<256x288xbf16, #tpu.memory_space<vmem>>, vector<256x32xbf16>,
    %26 = vector.extract_strided_slice %5 {offsets = [1, 2, 0], sizes = [16, 16, 32], strides = [1, 1, 1]} : vector<18x18x32xf32> to vector<16x16x32xf32>
    %27 = vector.shape_cast %26 : vector<16x16x32xf32> to vector<256x32xf32>
    %28 = arith.truncf %27 : vector<256x32xf32> to vector<256x32xbf16>
    %c0_17 = arith.constant 0 : index
    %c160 = arith.constant 160 : index
    %29 = vector.load %arg8[%c0_17, %c160] : memref<256x288xbf16, #tpu.memory_space<vmem>>, vector<256x32xbf16>
    tpu.vector_store %arg8[%c0_17, %c160], %28 {strides = array<i32>} : memref<256x288xbf16, #tpu.memory_space<vmem>>, vector<256x32xbf16>,
    %30 = vector.extract_strided_slice %5 {offsets = [2, 0, 0], sizes = [16, 16, 32], strides = [1, 1, 1]} : vector<18x18x32xf32> to vector<16x16x32xf32>
    %31 = vector.shape_cast %30 : vector<16x16x32xf32> to vector<256x32xf32>
    %32 = arith.truncf %31 : vector<256x32xf32> to vector<256x32xbf16>
    %c0_18 = arith.constant 0 : index
    %c192 = arith.constant 192 : index
    %33 = vector.load %arg8[%c0_18, %c192] : memref<256x288xbf16, #tpu.memory_space<vmem>>, vector<256x32xbf16>
    tpu.vector_store %arg8[%c0_18, %c192], %32 {strides = array<i32>} : memref<256x288xbf16, #tpu.memory_space<vmem>>, vector<256x32xbf16>,
    %34 = vector.extract_strided_slice %5 {offsets = [2, 1, 0], sizes = [16, 16, 32], strides = [1, 1, 1]} : vector<18x18x32xf32> to vector<16x16x32xf32>
    %35 = vector.shape_cast %34 : vector<16x16x32xf32> to vector<256x32xf32>
    %36 = arith.truncf %35 : vector<256x32xf32> to vector<256x32xbf16>
    %c0_19 = arith.constant 0 : index
    %c224 = arith.constant 224 : index
    %37 = vector.load %arg8[%c0_19, %c224] : memref<256x288xbf16, #tpu.memory_space<vmem>>, vector<256x32xbf16>
    tpu.vector_store %arg8[%c0_19, %c224], %36 {strides = array<i32>} : memref<256x288xbf16, #tpu.memory_space<vmem>>, vector<256x32xbf16>,
    %38 = vector.extract_strided_slice %5 {offsets = [2, 2, 0], sizes = [16, 16, 32], strides = [1, 1, 1]} : vector<18x18x32xf32> to vector<16x16x32xf32>
    %39 = vector.shape_cast %38 : vector<16x16x32xf32> to vector<256x32xf32>
    %40 = arith.truncf %39 : vector<256x32xf32> to vector<256x32xbf16>
    %c0_20 = arith.constant 0 : index
    %c256 = arith.constant 256 : index
    %41 = vector.load %arg8[%c0_20, %c256] : memref<256x288xbf16, #tpu.memory_space<vmem>>, vector<256x32xbf16>
    tpu.vector_store %arg8[%c0_20, %c256], %40 {strides = array<i32>} : memref<256x288xbf16, #tpu.memory_space<vmem>>, vector<256x32xbf16>,
    %c0_21 = arith.constant 0 : index
    %c0_22 = arith.constant 0 : index
    %42 = vector.load %arg8[%c0_21, %c0_22] : memref<256x288xbf16, #tpu.memory_space<vmem>>, vector<256x288xbf16>
    %c0_23 = arith.constant 0 : index
    %c0_24 = arith.constant 0 : index
    %c0_25 = arith.constant 0 : index
    %43 = vector.load %arg2[%c0_23, %c0_24, %c0_25] : memref<5x288x32xbf16, #tpu.memory_space<vmem>>, vector<1x288x32xbf16>
    %44 = vector.shape_cast %43 : vector<1x288x32xbf16> to vector<288x32xbf16>
    %cst_26 = arith.constant dense<0.000000e+00> : vector<256x32xf32>
    %45 = tpu.matmul %42, %44, %cst_26 {dimension_numbers = #tpu.dot_dimension_numbers<[1], [0], [0], [1], [0, 0, 1, 1], [], []>} : vector<256x288xbf16>, vector<288x32xbf16>, vector<256x32xf32> -> vector<256x32xf32>
    %c0_27 = arith.constant 0 : index
    %c0_28 = arith.constant 0 : index
    %c0_29 = arith.constant 0 : index
    %46 = vector.load %arg3[%c0_27, %c0_28, %c0_29] : memref<5x1x32xf32, #tpu.memory_space<vmem>>, vector<1x1x32xf32>
    %47 = vector.shape_cast %46 : vector<1x1x32xf32> to vector<1x32xf32>
    %48 = vector.broadcast %47 : vector<1x32xf32> to vector<256x32xf32>
    %49 = arith.addf %45, %48 : vector<256x32xf32>
    %cst_30 = arith.constant 0.000000e+00 : f32
    %50 = vector.broadcast %cst_30 : f32 to vector<256x32xf32>
    %51 = arith.maximumf %49, %50 : vector<256x32xf32>
    %52 = vector.shape_cast %51 : vector<256x32xf32> to vector<16x16x32xf32>
    %c1_31 = arith.constant 1 : index
    %c1_32 = arith.constant 1 : index
    %c0_33 = arith.constant 0 : index
    %53 = vector.load %arg7[%c1_31, %c1_32, %c0_33] : memref<18x18x32xf32, #tpu.memory_space<vmem>>, vector<16x16x32xf32>
    tpu.vector_store %arg7[%c1_31, %c1_32, %c0_33], %52 {strides = array<i32>} : memref<18x18x32xf32, #tpu.memory_space<vmem>>, vector<16x16x32xf32>,
    %c0_34 = arith.constant 0 : index
    %c0_35 = arith.constant 0 : index
    %c0_36 = arith.constant 0 : index
    %54 = vector.load %arg7[%c0_34, %c0_35, %c0_36] : memref<18x18x32xf32, #tpu.memory_space<vmem>>, vector<18x18x32xf32>
    %55 = vector.extract_strided_slice %54 {offsets = [0, 0, 0], sizes = [16, 16, 32], strides = [1, 1, 1]} : vector<18x18x32xf32> to vector<16x16x32xf32>
    %56 = vector.shape_cast %55 : vector<16x16x32xf32> to vector<256x32xf32>
    %57 = arith.truncf %56 : vector<256x32xf32> to vector<256x32xbf16>
    %c0_37 = arith.constant 0 : index
    %c0_38 = arith.constant 0 : index
    %58 = vector.load %arg8[%c0_37, %c0_38] : memref<256x288xbf16, #tpu.memory_space<vmem>>, vector<256x32xbf16>
    tpu.vector_store %arg8[%c0_37, %c0_38], %57 {strides = array<i32>} : memref<256x288xbf16, #tpu.memory_space<vmem>>, vector<256x32xbf16>,
    %59 = vector.extract_strided_slice %54 {offsets = [0, 1, 0], sizes = [16, 16, 32], strides = [1, 1, 1]} : vector<18x18x32xf32> to vector<16x16x32xf32>
    %60 = vector.shape_cast %59 : vector<16x16x32xf32> to vector<256x32xf32>
    %61 = arith.truncf %60 : vector<256x32xf32> to vector<256x32xbf16>
    %c0_39 = arith.constant 0 : index
    %c32_40 = arith.constant 32 : index
    %62 = vector.load %arg8[%c0_39, %c32_40] : memref<256x288xbf16, #tpu.memory_space<vmem>>, vector<256x32xbf16>
    tpu.vector_store %arg8[%c0_39, %c32_40], %61 {strides = array<i32>} : memref<256x288xbf16, #tpu.memory_space<vmem>>, vector<256x32xbf16>,
    %63 = vector.extract_strided_slice %54 {offsets = [0, 2, 0], sizes = [16, 16, 32], strides = [1, 1, 1]} : vector<18x18x32xf32> to vector<16x16x32xf32>
    %64 = vector.shape_cast %63 : vector<16x16x32xf32> to vector<256x32xf32>
    %65 = arith.truncf %64 : vector<256x32xf32> to vector<256x32xbf16>
    %c0_41 = arith.constant 0 : index
    %c64_42 = arith.constant 64 : index
    %66 = vector.load %arg8[%c0_41, %c64_42] : memref<256x288xbf16, #tpu.memory_space<vmem>>, vector<256x32xbf16>
    tpu.vector_store %arg8[%c0_41, %c64_42], %65 {strides = array<i32>} : memref<256x288xbf16, #tpu.memory_space<vmem>>, vector<256x32xbf16>,
    %67 = vector.extract_strided_slice %54 {offsets = [1, 0, 0], sizes = [16, 16, 32], strides = [1, 1, 1]} : vector<18x18x32xf32> to vector<16x16x32xf32>
    %68 = vector.shape_cast %67 : vector<16x16x32xf32> to vector<256x32xf32>
    %69 = arith.truncf %68 : vector<256x32xf32> to vector<256x32xbf16>
    %c0_43 = arith.constant 0 : index
    %c96_44 = arith.constant 96 : index
    %70 = vector.load %arg8[%c0_43, %c96_44] : memref<256x288xbf16, #tpu.memory_space<vmem>>, vector<256x32xbf16>
    tpu.vector_store %arg8[%c0_43, %c96_44], %69 {strides = array<i32>} : memref<256x288xbf16, #tpu.memory_space<vmem>>, vector<256x32xbf16>,
    %71 = vector.extract_strided_slice %54 {offsets = [1, 1, 0], sizes = [16, 16, 32], strides = [1, 1, 1]} : vector<18x18x32xf32> to vector<16x16x32xf32>
    %72 = vector.shape_cast %71 : vector<16x16x32xf32> to vector<256x32xf32>
    %73 = arith.truncf %72 : vector<256x32xf32> to vector<256x32xbf16>
    %c0_45 = arith.constant 0 : index
    %c128_46 = arith.constant 128 : index
    %74 = vector.load %arg8[%c0_45, %c128_46] : memref<256x288xbf16, #tpu.memory_space<vmem>>, vector<256x32xbf16>
    tpu.vector_store %arg8[%c0_45, %c128_46], %73 {strides = array<i32>} : memref<256x288xbf16, #tpu.memory_space<vmem>>, vector<256x32xbf16>,
    %75 = vector.extract_strided_slice %54 {offsets = [1, 2, 0], sizes = [16, 16, 32], strides = [1, 1, 1]} : vector<18x18x32xf32> to vector<16x16x32xf32>
    %76 = vector.shape_cast %75 : vector<16x16x32xf32> to vector<256x32xf32>
    %77 = arith.truncf %76 : vector<256x32xf32> to vector<256x32xbf16>
    %c0_47 = arith.constant 0 : index
    %c160_48 = arith.constant 160 : index
    %78 = vector.load %arg8[%c0_47, %c160_48] : memref<256x288xbf16, #tpu.memory_space<vmem>>, vector<256x32xbf16>
    tpu.vector_store %arg8[%c0_47, %c160_48], %77 {strides = array<i32>} : memref<256x288xbf16, #tpu.memory_space<vmem>>, vector<256x32xbf16>,
    %79 = vector.extract_strided_slice %54 {offsets = [2, 0, 0], sizes = [16, 16, 32], strides = [1, 1, 1]} : vector<18x18x32xf32> to vector<16x16x32xf32>
    %80 = vector.shape_cast %79 : vector<16x16x32xf32> to vector<256x32xf32>
    %81 = arith.truncf %80 : vector<256x32xf32> to vector<256x32xbf16>
    %c0_49 = arith.constant 0 : index
    %c192_50 = arith.constant 192 : index
    %82 = vector.load %arg8[%c0_49, %c192_50] : memref<256x288xbf16, #tpu.memory_space<vmem>>, vector<256x32xbf16>
    tpu.vector_store %arg8[%c0_49, %c192_50], %81 {strides = array<i32>} : memref<256x288xbf16, #tpu.memory_space<vmem>>, vector<256x32xbf16>,
    %83 = vector.extract_strided_slice %54 {offsets = [2, 1, 0], sizes = [16, 16, 32], strides = [1, 1, 1]} : vector<18x18x32xf32> to vector<16x16x32xf32>
    %84 = vector.shape_cast %83 : vector<16x16x32xf32> to vector<256x32xf32>
    %85 = arith.truncf %84 : vector<256x32xf32> to vector<256x32xbf16>
    %c0_51 = arith.constant 0 : index
    %c224_52 = arith.constant 224 : index
    %86 = vector.load %arg8[%c0_51, %c224_52] : memref<256x288xbf16, #tpu.memory_space<vmem>>, vector<256x32xbf16>
    tpu.vector_store %arg8[%c0_51, %c224_52], %85 {strides = array<i32>} : memref<256x288xbf16, #tpu.memory_space<vmem>>, vector<256x32xbf16>,
    %87 = vector.extract_strided_slice %54 {offsets = [2, 2, 0], sizes = [16, 16, 32], strides = [1, 1, 1]} : vector<18x18x32xf32> to vector<16x16x32xf32>
    %88 = vector.shape_cast %87 : vector<16x16x32xf32> to vector<256x32xf32>
    %89 = arith.truncf %88 : vector<256x32xf32> to vector<256x32xbf16>
    %c0_53 = arith.constant 0 : index
    %c256_54 = arith.constant 256 : index
    %90 = vector.load %arg8[%c0_53, %c256_54] : memref<256x288xbf16, #tpu.memory_space<vmem>>, vector<256x32xbf16>
    tpu.vector_store %arg8[%c0_53, %c256_54], %89 {strides = array<i32>} : memref<256x288xbf16, #tpu.memory_space<vmem>>, vector<256x32xbf16>,
    %c0_55 = arith.constant 0 : index
    %c0_56 = arith.constant 0 : index
    %91 = vector.load %arg8[%c0_55, %c0_56] : memref<256x288xbf16, #tpu.memory_space<vmem>>, vector<256x288xbf16>
    %c1_57 = arith.constant 1 : index
    %c0_58 = arith.constant 0 : index
    %c0_59 = arith.constant 0 : index
    %92 = vector.load %arg2[%c1_57, %c0_58, %c0_59] : memref<5x288x32xbf16, #tpu.memory_space<vmem>>, vector<1x288x32xbf16>
    %93 = vector.shape_cast %92 : vector<1x288x32xbf16> to vector<288x32xbf16>
    %cst_60 = arith.constant dense<0.000000e+00> : vector<256x32xf32>
    %94 = tpu.matmul %91, %93, %cst_60 {dimension_numbers = #tpu.dot_dimension_numbers<[1], [0], [0], [1], [0, 0, 1, 1], [], []>} : vector<256x288xbf16>, vector<288x32xbf16>, vector<256x32xf32> -> vector<256x32xf32>
    %c1_61 = arith.constant 1 : index
    %c0_62 = arith.constant 0 : index
    %c0_63 = arith.constant 0 : index
    %95 = vector.load %arg3[%c1_61, %c0_62, %c0_63] : memref<5x1x32xf32, #tpu.memory_space<vmem>>, vector<1x1x32xf32>
    %96 = vector.shape_cast %95 : vector<1x1x32xf32> to vector<1x32xf32>
    %97 = vector.broadcast %96 : vector<1x32xf32> to vector<256x32xf32>
    %98 = arith.addf %94, %97 : vector<256x32xf32>
    %cst_64 = arith.constant 0.000000e+00 : f32
    %99 = vector.broadcast %cst_64 : f32 to vector<256x32xf32>
    %100 = arith.maximumf %98, %99 : vector<256x32xf32>
    %101 = vector.shape_cast %100 : vector<256x32xf32> to vector<16x16x32xf32>
    %c1_65 = arith.constant 1 : index
    %c1_66 = arith.constant 1 : index
    %c0_67 = arith.constant 0 : index
    %102 = vector.load %arg7[%c1_65, %c1_66, %c0_67] : memref<18x18x32xf32, #tpu.memory_space<vmem>>, vector<16x16x32xf32>
    tpu.vector_store %arg7[%c1_65, %c1_66, %c0_67], %101 {strides = array<i32>} : memref<18x18x32xf32, #tpu.memory_space<vmem>>, vector<16x16x32xf32>,
    %c0_68 = arith.constant 0 : index
    %c0_69 = arith.constant 0 : index
    %c0_70 = arith.constant 0 : index
    %103 = vector.load %arg7[%c0_68, %c0_69, %c0_70] : memref<18x18x32xf32, #tpu.memory_space<vmem>>, vector<18x18x32xf32>
    %104 = vector.extract_strided_slice %103 {offsets = [0, 0, 0], sizes = [16, 16, 32], strides = [1, 1, 1]} : vector<18x18x32xf32> to vector<16x16x32xf32>
    %105 = vector.shape_cast %104 : vector<16x16x32xf32> to vector<256x32xf32>
    %106 = arith.truncf %105 : vector<256x32xf32> to vector<256x32xbf16>
    %c0_71 = arith.constant 0 : index
    %c0_72 = arith.constant 0 : index
    %107 = vector.load %arg8[%c0_71, %c0_72] : memref<256x288xbf16, #tpu.memory_space<vmem>>, vector<256x32xbf16>
    tpu.vector_store %arg8[%c0_71, %c0_72], %106 {strides = array<i32>} : memref<256x288xbf16, #tpu.memory_space<vmem>>, vector<256x32xbf16>,
    %108 = vector.extract_strided_slice %103 {offsets = [0, 1, 0], sizes = [16, 16, 32], strides = [1, 1, 1]} : vector<18x18x32xf32> to vector<16x16x32xf32>
    %109 = vector.shape_cast %108 : vector<16x16x32xf32> to vector<256x32xf32>
    %110 = arith.truncf %109 : vector<256x32xf32> to vector<256x32xbf16>
    %c0_73 = arith.constant 0 : index
    %c32_74 = arith.constant 32 : index
    %111 = vector.load %arg8[%c0_73, %c32_74] : memref<256x288xbf16, #tpu.memory_space<vmem>>, vector<256x32xbf16>
    tpu.vector_store %arg8[%c0_73, %c32_74], %110 {strides = array<i32>} : memref<256x288xbf16, #tpu.memory_space<vmem>>, vector<256x32xbf16>,
    %112 = vector.extract_strided_slice %103 {offsets = [0, 2, 0], sizes = [16, 16, 32], strides = [1, 1, 1]} : vector<18x18x32xf32> to vector<16x16x32xf32>
    %113 = vector.shape_cast %112 : vector<16x16x32xf32> to vector<256x32xf32>
    %114 = arith.truncf %113 : vector<256x32xf32> to vector<256x32xbf16>
    %c0_75 = arith.constant 0 : index
    %c64_76 = arith.constant 64 : index
    %115 = vector.load %arg8[%c0_75, %c64_76] : memref<256x288xbf16, #tpu.memory_space<vmem>>, vector<256x32xbf16>
    tpu.vector_store %arg8[%c0_75, %c64_76], %114 {strides = array<i32>} : memref<256x288xbf16, #tpu.memory_space<vmem>>, vector<256x32xbf16>,
    %116 = vector.extract_strided_slice %103 {offsets = [1, 0, 0], sizes = [16, 16, 32], strides = [1, 1, 1]} : vector<18x18x32xf32> to vector<16x16x32xf32>
    %117 = vector.shape_cast %116 : vector<16x16x32xf32> to vector<256x32xf32>
    %118 = arith.truncf %117 : vector<256x32xf32> to vector<256x32xbf16>
    %c0_77 = arith.constant 0 : index
    %c96_78 = arith.constant 96 : index
    %119 = vector.load %arg8[%c0_77, %c96_78] : memref<256x288xbf16, #tpu.memory_space<vmem>>, vector<256x32xbf16>
    tpu.vector_store %arg8[%c0_77, %c96_78], %118 {strides = array<i32>} : memref<256x288xbf16, #tpu.memory_space<vmem>>, vector<256x32xbf16>,
    %120 = vector.extract_strided_slice %103 {offsets = [1, 1, 0], sizes = [16, 16, 32], strides = [1, 1, 1]} : vector<18x18x32xf32> to vector<16x16x32xf32>
    %121 = vector.shape_cast %120 : vector<16x16x32xf32> to vector<256x32xf32>
    %122 = arith.truncf %121 : vector<256x32xf32> to vector<256x32xbf16>
    %c0_79 = arith.constant 0 : index
    %c128_80 = arith.constant 128 : index
    %123 = vector.load %arg8[%c0_79, %c128_80] : memref<256x288xbf16, #tpu.memory_space<vmem>>, vector<256x32xbf16>
    tpu.vector_store %arg8[%c0_79, %c128_80], %122 {strides = array<i32>} : memref<256x288xbf16, #tpu.memory_space<vmem>>, vector<256x32xbf16>,
    %124 = vector.extract_strided_slice %103 {offsets = [1, 2, 0], sizes = [16, 16, 32], strides = [1, 1, 1]} : vector<18x18x32xf32> to vector<16x16x32xf32>
    %125 = vector.shape_cast %124 : vector<16x16x32xf32> to vector<256x32xf32>
    %126 = arith.truncf %125 : vector<256x32xf32> to vector<256x32xbf16>
    %c0_81 = arith.constant 0 : index
    %c160_82 = arith.constant 160 : index
    %127 = vector.load %arg8[%c0_81, %c160_82] : memref<256x288xbf16, #tpu.memory_space<vmem>>, vector<256x32xbf16>
    tpu.vector_store %arg8[%c0_81, %c160_82], %126 {strides = array<i32>} : memref<256x288xbf16, #tpu.memory_space<vmem>>, vector<256x32xbf16>,
    %128 = vector.extract_strided_slice %103 {offsets = [2, 0, 0], sizes = [16, 16, 32], strides = [1, 1, 1]} : vector<18x18x32xf32> to vector<16x16x32xf32>
    %129 = vector.shape_cast %128 : vector<16x16x32xf32> to vector<256x32xf32>
    %130 = arith.truncf %129 : vector<256x32xf32> to vector<256x32xbf16>
    %c0_83 = arith.constant 0 : index
    %c192_84 = arith.constant 192 : index
    %131 = vector.load %arg8[%c0_83, %c192_84] : memref<256x288xbf16, #tpu.memory_space<vmem>>, vector<256x32xbf16>
    tpu.vector_store %arg8[%c0_83, %c192_84], %130 {strides = array<i32>} : memref<256x288xbf16, #tpu.memory_space<vmem>>, vector<256x32xbf16>,
    %132 = vector.extract_strided_slice %103 {offsets = [2, 1, 0], sizes = [16, 16, 32], strides = [1, 1, 1]} : vector<18x18x32xf32> to vector<16x16x32xf32>
    %133 = vector.shape_cast %132 : vector<16x16x32xf32> to vector<256x32xf32>
    %134 = arith.truncf %133 : vector<256x32xf32> to vector<256x32xbf16>
    %c0_85 = arith.constant 0 : index
    %c224_86 = arith.constant 224 : index
    %135 = vector.load %arg8[%c0_85, %c224_86] : memref<256x288xbf16, #tpu.memory_space<vmem>>, vector<256x32xbf16>
    tpu.vector_store %arg8[%c0_85, %c224_86], %134 {strides = array<i32>} : memref<256x288xbf16, #tpu.memory_space<vmem>>, vector<256x32xbf16>,
    %136 = vector.extract_strided_slice %103 {offsets = [2, 2, 0], sizes = [16, 16, 32], strides = [1, 1, 1]} : vector<18x18x32xf32> to vector<16x16x32xf32>
    %137 = vector.shape_cast %136 : vector<16x16x32xf32> to vector<256x32xf32>
    %138 = arith.truncf %137 : vector<256x32xf32> to vector<256x32xbf16>
    %c0_87 = arith.constant 0 : index
    %c256_88 = arith.constant 256 : index
    %139 = vector.load %arg8[%c0_87, %c256_88] : memref<256x288xbf16, #tpu.memory_space<vmem>>, vector<256x32xbf16>
    tpu.vector_store %arg8[%c0_87, %c256_88], %138 {strides = array<i32>} : memref<256x288xbf16, #tpu.memory_space<vmem>>, vector<256x32xbf16>,
    %c0_89 = arith.constant 0 : index
    %c0_90 = arith.constant 0 : index
    %140 = vector.load %arg8[%c0_89, %c0_90] : memref<256x288xbf16, #tpu.memory_space<vmem>>, vector<256x288xbf16>
    %c2 = arith.constant 2 : index
    %c0_91 = arith.constant 0 : index
    %c0_92 = arith.constant 0 : index
    %141 = vector.load %arg2[%c2, %c0_91, %c0_92] : memref<5x288x32xbf16, #tpu.memory_space<vmem>>, vector<1x288x32xbf16>
    %142 = vector.shape_cast %141 : vector<1x288x32xbf16> to vector<288x32xbf16>
    %cst_93 = arith.constant dense<0.000000e+00> : vector<256x32xf32>
    %143 = tpu.matmul %140, %142, %cst_93 {dimension_numbers = #tpu.dot_dimension_numbers<[1], [0], [0], [1], [0, 0, 1, 1], [], []>} : vector<256x288xbf16>, vector<288x32xbf16>, vector<256x32xf32> -> vector<256x32xf32>
    %c2_94 = arith.constant 2 : index
    %c0_95 = arith.constant 0 : index
    %c0_96 = arith.constant 0 : index
    %144 = vector.load %arg3[%c2_94, %c0_95, %c0_96] : memref<5x1x32xf32, #tpu.memory_space<vmem>>, vector<1x1x32xf32>
    %145 = vector.shape_cast %144 : vector<1x1x32xf32> to vector<1x32xf32>
    %146 = vector.broadcast %145 : vector<1x32xf32> to vector<256x32xf32>
    %147 = arith.addf %143, %146 : vector<256x32xf32>
    %cst_97 = arith.constant 0.000000e+00 : f32
    %148 = vector.broadcast %cst_97 : f32 to vector<256x32xf32>
    %149 = arith.maximumf %147, %148 : vector<256x32xf32>
    %150 = vector.shape_cast %149 : vector<256x32xf32> to vector<16x16x32xf32>
    %c1_98 = arith.constant 1 : index
    %c1_99 = arith.constant 1 : index
    %c0_100 = arith.constant 0 : index
    %151 = vector.load %arg7[%c1_98, %c1_99, %c0_100] : memref<18x18x32xf32, #tpu.memory_space<vmem>>, vector<16x16x32xf32>
    tpu.vector_store %arg7[%c1_98, %c1_99, %c0_100], %150 {strides = array<i32>} : memref<18x18x32xf32, #tpu.memory_space<vmem>>, vector<16x16x32xf32>,
    %c0_101 = arith.constant 0 : index
    %c0_102 = arith.constant 0 : index
    %c0_103 = arith.constant 0 : index
    %152 = vector.load %arg7[%c0_101, %c0_102, %c0_103] : memref<18x18x32xf32, #tpu.memory_space<vmem>>, vector<18x18x32xf32>
    %153 = vector.extract_strided_slice %152 {offsets = [0, 0, 0], sizes = [16, 16, 32], strides = [1, 1, 1]} : vector<18x18x32xf32> to vector<16x16x32xf32>
    %154 = vector.shape_cast %153 : vector<16x16x32xf32> to vector<256x32xf32>
    %155 = arith.truncf %154 : vector<256x32xf32> to vector<256x32xbf16>
    %c0_104 = arith.constant 0 : index
    %c0_105 = arith.constant 0 : index
    %156 = vector.load %arg8[%c0_104, %c0_105] : memref<256x288xbf16, #tpu.memory_space<vmem>>, vector<256x32xbf16>
    tpu.vector_store %arg8[%c0_104, %c0_105], %155 {strides = array<i32>} : memref<256x288xbf16, #tpu.memory_space<vmem>>, vector<256x32xbf16>,
    %157 = vector.extract_strided_slice %152 {offsets = [0, 1, 0], sizes = [16, 16, 32], strides = [1, 1, 1]} : vector<18x18x32xf32> to vector<16x16x32xf32>
    %158 = vector.shape_cast %157 : vector<16x16x32xf32> to vector<256x32xf32>
    %159 = arith.truncf %158 : vector<256x32xf32> to vector<256x32xbf16>
    %c0_106 = arith.constant 0 : index
    %c32_107 = arith.constant 32 : index
    %160 = vector.load %arg8[%c0_106, %c32_107] : memref<256x288xbf16, #tpu.memory_space<vmem>>, vector<256x32xbf16>
    tpu.vector_store %arg8[%c0_106, %c32_107], %159 {strides = array<i32>} : memref<256x288xbf16, #tpu.memory_space<vmem>>, vector<256x32xbf16>,
    %161 = vector.extract_strided_slice %152 {offsets = [0, 2, 0], sizes = [16, 16, 32], strides = [1, 1, 1]} : vector<18x18x32xf32> to vector<16x16x32xf32>
    %162 = vector.shape_cast %161 : vector<16x16x32xf32> to vector<256x32xf32>
    %163 = arith.truncf %162 : vector<256x32xf32> to vector<256x32xbf16>
    %c0_108 = arith.constant 0 : index
    %c64_109 = arith.constant 64 : index
    %164 = vector.load %arg8[%c0_108, %c64_109] : memref<256x288xbf16, #tpu.memory_space<vmem>>, vector<256x32xbf16>
    tpu.vector_store %arg8[%c0_108, %c64_109], %163 {strides = array<i32>} : memref<256x288xbf16, #tpu.memory_space<vmem>>, vector<256x32xbf16>,
    %165 = vector.extract_strided_slice %152 {offsets = [1, 0, 0], sizes = [16, 16, 32], strides = [1, 1, 1]} : vector<18x18x32xf32> to vector<16x16x32xf32>
    %166 = vector.shape_cast %165 : vector<16x16x32xf32> to vector<256x32xf32>
    %167 = arith.truncf %166 : vector<256x32xf32> to vector<256x32xbf16>
    %c0_110 = arith.constant 0 : index
    %c96_111 = arith.constant 96 : index
    %168 = vector.load %arg8[%c0_110, %c96_111] : memref<256x288xbf16, #tpu.memory_space<vmem>>, vector<256x32xbf16>
    tpu.vector_store %arg8[%c0_110, %c96_111], %167 {strides = array<i32>} : memref<256x288xbf16, #tpu.memory_space<vmem>>, vector<256x32xbf16>,
    %169 = vector.extract_strided_slice %152 {offsets = [1, 1, 0], sizes = [16, 16, 32], strides = [1, 1, 1]} : vector<18x18x32xf32> to vector<16x16x32xf32>
    %170 = vector.shape_cast %169 : vector<16x16x32xf32> to vector<256x32xf32>
    %171 = arith.truncf %170 : vector<256x32xf32> to vector<256x32xbf16>
    %c0_112 = arith.constant 0 : index
    %c128_113 = arith.constant 128 : index
    %172 = vector.load %arg8[%c0_112, %c128_113] : memref<256x288xbf16, #tpu.memory_space<vmem>>, vector<256x32xbf16>
    tpu.vector_store %arg8[%c0_112, %c128_113], %171 {strides = array<i32>} : memref<256x288xbf16, #tpu.memory_space<vmem>>, vector<256x32xbf16>,
    %173 = vector.extract_strided_slice %152 {offsets = [1, 2, 0], sizes = [16, 16, 32], strides = [1, 1, 1]} : vector<18x18x32xf32> to vector<16x16x32xf32>
    %174 = vector.shape_cast %173 : vector<16x16x32xf32> to vector<256x32xf32>
    %175 = arith.truncf %174 : vector<256x32xf32> to vector<256x32xbf16>
    %c0_114 = arith.constant 0 : index
    %c160_115 = arith.constant 160 : index
    %176 = vector.load %arg8[%c0_114, %c160_115] : memref<256x288xbf16, #tpu.memory_space<vmem>>, vector<256x32xbf16>
    tpu.vector_store %arg8[%c0_114, %c160_115], %175 {strides = array<i32>} : memref<256x288xbf16, #tpu.memory_space<vmem>>, vector<256x32xbf16>,
    %177 = vector.extract_strided_slice %152 {offsets = [2, 0, 0], sizes = [16, 16, 32], strides = [1, 1, 1]} : vector<18x18x32xf32> to vector<16x16x32xf32>
    %178 = vector.shape_cast %177 : vector<16x16x32xf32> to vector<256x32xf32>
    %179 = arith.truncf %178 : vector<256x32xf32> to vector<256x32xbf16>
    %c0_116 = arith.constant 0 : index
    %c192_117 = arith.constant 192 : index
    %180 = vector.load %arg8[%c0_116, %c192_117] : memref<256x288xbf16, #tpu.memory_space<vmem>>, vector<256x32xbf16>
    tpu.vector_store %arg8[%c0_116, %c192_117], %179 {strides = array<i32>} : memref<256x288xbf16, #tpu.memory_space<vmem>>, vector<256x32xbf16>,
    %181 = vector.extract_strided_slice %152 {offsets = [2, 1, 0], sizes = [16, 16, 32], strides = [1, 1, 1]} : vector<18x18x32xf32> to vector<16x16x32xf32>
    %182 = vector.shape_cast %181 : vector<16x16x32xf32> to vector<256x32xf32>
    %183 = arith.truncf %182 : vector<256x32xf32> to vector<256x32xbf16>
    %c0_118 = arith.constant 0 : index
    %c224_119 = arith.constant 224 : index
    %184 = vector.load %arg8[%c0_118, %c224_119] : memref<256x288xbf16, #tpu.memory_space<vmem>>, vector<256x32xbf16>
    tpu.vector_store %arg8[%c0_118, %c224_119], %183 {strides = array<i32>} : memref<256x288xbf16, #tpu.memory_space<vmem>>, vector<256x32xbf16>,
    %185 = vector.extract_strided_slice %152 {offsets = [2, 2, 0], sizes = [16, 16, 32], strides = [1, 1, 1]} : vector<18x18x32xf32> to vector<16x16x32xf32>
    %186 = vector.shape_cast %185 : vector<16x16x32xf32> to vector<256x32xf32>
    %187 = arith.truncf %186 : vector<256x32xf32> to vector<256x32xbf16>
    %c0_120 = arith.constant 0 : index
    %c256_121 = arith.constant 256 : index
    %188 = vector.load %arg8[%c0_120, %c256_121] : memref<256x288xbf16, #tpu.memory_space<vmem>>, vector<256x32xbf16>
    tpu.vector_store %arg8[%c0_120, %c256_121], %187 {strides = array<i32>} : memref<256x288xbf16, #tpu.memory_space<vmem>>, vector<256x32xbf16>,
    %c0_122 = arith.constant 0 : index
    %c0_123 = arith.constant 0 : index
    %189 = vector.load %arg8[%c0_122, %c0_123] : memref<256x288xbf16, #tpu.memory_space<vmem>>, vector<256x288xbf16>
    %c3 = arith.constant 3 : index
    %c0_124 = arith.constant 0 : index
    %c0_125 = arith.constant 0 : index
    %190 = vector.load %arg2[%c3, %c0_124, %c0_125] : memref<5x288x32xbf16, #tpu.memory_space<vmem>>, vector<1x288x32xbf16>
    %191 = vector.shape_cast %190 : vector<1x288x32xbf16> to vector<288x32xbf16>
    %cst_126 = arith.constant dense<0.000000e+00> : vector<256x32xf32>
    %192 = tpu.matmul %189, %191, %cst_126 {dimension_numbers = #tpu.dot_dimension_numbers<[1], [0], [0], [1], [0, 0, 1, 1], [], []>} : vector<256x288xbf16>, vector<288x32xbf16>, vector<256x32xf32> -> vector<256x32xf32>
    %c3_127 = arith.constant 3 : index
    %c0_128 = arith.constant 0 : index
    %c0_129 = arith.constant 0 : index
    %193 = vector.load %arg3[%c3_127, %c0_128, %c0_129] : memref<5x1x32xf32, #tpu.memory_space<vmem>>, vector<1x1x32xf32>
    %194 = vector.shape_cast %193 : vector<1x1x32xf32> to vector<1x32xf32>
    %195 = vector.broadcast %194 : vector<1x32xf32> to vector<256x32xf32>
    %196 = arith.addf %192, %195 : vector<256x32xf32>
    %cst_130 = arith.constant 0.000000e+00 : f32
    %197 = vector.broadcast %cst_130 : f32 to vector<256x32xf32>
    %198 = arith.maximumf %196, %197 : vector<256x32xf32>
    %199 = vector.shape_cast %198 : vector<256x32xf32> to vector<16x16x32xf32>
    %c1_131 = arith.constant 1 : index
    %c1_132 = arith.constant 1 : index
    %c0_133 = arith.constant 0 : index
    %200 = vector.load %arg7[%c1_131, %c1_132, %c0_133] : memref<18x18x32xf32, #tpu.memory_space<vmem>>, vector<16x16x32xf32>
    tpu.vector_store %arg7[%c1_131, %c1_132, %c0_133], %199 {strides = array<i32>} : memref<18x18x32xf32, #tpu.memory_space<vmem>>, vector<16x16x32xf32>,
    %c0_134 = arith.constant 0 : index
    %c0_135 = arith.constant 0 : index
    %c0_136 = arith.constant 0 : index
    %201 = vector.load %arg7[%c0_134, %c0_135, %c0_136] : memref<18x18x32xf32, #tpu.memory_space<vmem>>, vector<18x18x32xf32>
    %202 = vector.extract_strided_slice %201 {offsets = [0, 0, 0], sizes = [16, 16, 32], strides = [1, 1, 1]} : vector<18x18x32xf32> to vector<16x16x32xf32>
    %203 = vector.shape_cast %202 : vector<16x16x32xf32> to vector<256x32xf32>
    %204 = arith.truncf %203 : vector<256x32xf32> to vector<256x32xbf16>
    %c0_137 = arith.constant 0 : index
    %c0_138 = arith.constant 0 : index
    %205 = vector.load %arg8[%c0_137, %c0_138] : memref<256x288xbf16, #tpu.memory_space<vmem>>, vector<256x32xbf16>
    tpu.vector_store %arg8[%c0_137, %c0_138], %204 {strides = array<i32>} : memref<256x288xbf16, #tpu.memory_space<vmem>>, vector<256x32xbf16>,
    %206 = vector.extract_strided_slice %201 {offsets = [0, 1, 0], sizes = [16, 16, 32], strides = [1, 1, 1]} : vector<18x18x32xf32> to vector<16x16x32xf32>
    %207 = vector.shape_cast %206 : vector<16x16x32xf32> to vector<256x32xf32>
    %208 = arith.truncf %207 : vector<256x32xf32> to vector<256x32xbf16>
    %c0_139 = arith.constant 0 : index
    %c32_140 = arith.constant 32 : index
    %209 = vector.load %arg8[%c0_139, %c32_140] : memref<256x288xbf16, #tpu.memory_space<vmem>>, vector<256x32xbf16>
    tpu.vector_store %arg8[%c0_139, %c32_140], %208 {strides = array<i32>} : memref<256x288xbf16, #tpu.memory_space<vmem>>, vector<256x32xbf16>,
    %210 = vector.extract_strided_slice %201 {offsets = [0, 2, 0], sizes = [16, 16, 32], strides = [1, 1, 1]} : vector<18x18x32xf32> to vector<16x16x32xf32>
    %211 = vector.shape_cast %210 : vector<16x16x32xf32> to vector<256x32xf32>
    %212 = arith.truncf %211 : vector<256x32xf32> to vector<256x32xbf16>
    %c0_141 = arith.constant 0 : index
    %c64_142 = arith.constant 64 : index
    %213 = vector.load %arg8[%c0_141, %c64_142] : memref<256x288xbf16, #tpu.memory_space<vmem>>, vector<256x32xbf16>
    tpu.vector_store %arg8[%c0_141, %c64_142], %212 {strides = array<i32>} : memref<256x288xbf16, #tpu.memory_space<vmem>>, vector<256x32xbf16>,
    %214 = vector.extract_strided_slice %201 {offsets = [1, 0, 0], sizes = [16, 16, 32], strides = [1, 1, 1]} : vector<18x18x32xf32> to vector<16x16x32xf32>
    %215 = vector.shape_cast %214 : vector<16x16x32xf32> to vector<256x32xf32>
    %216 = arith.truncf %215 : vector<256x32xf32> to vector<256x32xbf16>
    %c0_143 = arith.constant 0 : index
    %c96_144 = arith.constant 96 : index
    %217 = vector.load %arg8[%c0_143, %c96_144] : memref<256x288xbf16, #tpu.memory_space<vmem>>, vector<256x32xbf16>
    tpu.vector_store %arg8[%c0_143, %c96_144], %216 {strides = array<i32>} : memref<256x288xbf16, #tpu.memory_space<vmem>>, vector<256x32xbf16>,
    %218 = vector.extract_strided_slice %201 {offsets = [1, 1, 0], sizes = [16, 16, 32], strides = [1, 1, 1]} : vector<18x18x32xf32> to vector<16x16x32xf32>
    %219 = vector.shape_cast %218 : vector<16x16x32xf32> to vector<256x32xf32>
    %220 = arith.truncf %219 : vector<256x32xf32> to vector<256x32xbf16>
    %c0_145 = arith.constant 0 : index
    %c128_146 = arith.constant 128 : index
    %221 = vector.load %arg8[%c0_145, %c128_146] : memref<256x288xbf16, #tpu.memory_space<vmem>>, vector<256x32xbf16>
    tpu.vector_store %arg8[%c0_145, %c128_146], %220 {strides = array<i32>} : memref<256x288xbf16, #tpu.memory_space<vmem>>, vector<256x32xbf16>,
    %222 = vector.extract_strided_slice %201 {offsets = [1, 2, 0], sizes = [16, 16, 32], strides = [1, 1, 1]} : vector<18x18x32xf32> to vector<16x16x32xf32>
    %223 = vector.shape_cast %222 : vector<16x16x32xf32> to vector<256x32xf32>
    %224 = arith.truncf %223 : vector<256x32xf32> to vector<256x32xbf16>
    %c0_147 = arith.constant 0 : index
    %c160_148 = arith.constant 160 : index
    %225 = vector.load %arg8[%c0_147, %c160_148] : memref<256x288xbf16, #tpu.memory_space<vmem>>, vector<256x32xbf16>
    tpu.vector_store %arg8[%c0_147, %c160_148], %224 {strides = array<i32>} : memref<256x288xbf16, #tpu.memory_space<vmem>>, vector<256x32xbf16>,
    %226 = vector.extract_strided_slice %201 {offsets = [2, 0, 0], sizes = [16, 16, 32], strides = [1, 1, 1]} : vector<18x18x32xf32> to vector<16x16x32xf32>
    %227 = vector.shape_cast %226 : vector<16x16x32xf32> to vector<256x32xf32>
    %228 = arith.truncf %227 : vector<256x32xf32> to vector<256x32xbf16>
    %c0_149 = arith.constant 0 : index
    %c192_150 = arith.constant 192 : index
    %229 = vector.load %arg8[%c0_149, %c192_150] : memref<256x288xbf16, #tpu.memory_space<vmem>>, vector<256x32xbf16>
    tpu.vector_store %arg8[%c0_149, %c192_150], %228 {strides = array<i32>} : memref<256x288xbf16, #tpu.memory_space<vmem>>, vector<256x32xbf16>,
    %230 = vector.extract_strided_slice %201 {offsets = [2, 1, 0], sizes = [16, 16, 32], strides = [1, 1, 1]} : vector<18x18x32xf32> to vector<16x16x32xf32>
    %231 = vector.shape_cast %230 : vector<16x16x32xf32> to vector<256x32xf32>
    %232 = arith.truncf %231 : vector<256x32xf32> to vector<256x32xbf16>
    %c0_151 = arith.constant 0 : index
    %c224_152 = arith.constant 224 : index
    %233 = vector.load %arg8[%c0_151, %c224_152] : memref<256x288xbf16, #tpu.memory_space<vmem>>, vector<256x32xbf16>
    tpu.vector_store %arg8[%c0_151, %c224_152], %232 {strides = array<i32>} : memref<256x288xbf16, #tpu.memory_space<vmem>>, vector<256x32xbf16>,
    %234 = vector.extract_strided_slice %201 {offsets = [2, 2, 0], sizes = [16, 16, 32], strides = [1, 1, 1]} : vector<18x18x32xf32> to vector<16x16x32xf32>
    %235 = vector.shape_cast %234 : vector<16x16x32xf32> to vector<256x32xf32>
    %236 = arith.truncf %235 : vector<256x32xf32> to vector<256x32xbf16>
    %c0_153 = arith.constant 0 : index
    %c256_154 = arith.constant 256 : index
    %237 = vector.load %arg8[%c0_153, %c256_154] : memref<256x288xbf16, #tpu.memory_space<vmem>>, vector<256x32xbf16>
    tpu.vector_store %arg8[%c0_153, %c256_154], %236 {strides = array<i32>} : memref<256x288xbf16, #tpu.memory_space<vmem>>, vector<256x32xbf16>,
    %c0_155 = arith.constant 0 : index
    %c0_156 = arith.constant 0 : index
    %238 = vector.load %arg8[%c0_155, %c0_156] : memref<256x288xbf16, #tpu.memory_space<vmem>>, vector<256x288xbf16>
    %c4 = arith.constant 4 : index
    %c0_157 = arith.constant 0 : index
    %c0_158 = arith.constant 0 : index
    %239 = vector.load %arg2[%c4, %c0_157, %c0_158] : memref<5x288x32xbf16, #tpu.memory_space<vmem>>, vector<1x288x32xbf16>
    %240 = vector.shape_cast %239 : vector<1x288x32xbf16> to vector<288x32xbf16>
    %cst_159 = arith.constant dense<0.000000e+00> : vector<256x32xf32>
    %241 = tpu.matmul %238, %240, %cst_159 {dimension_numbers = #tpu.dot_dimension_numbers<[1], [0], [0], [1], [0, 0, 1, 1], [], []>} : vector<256x288xbf16>, vector<288x32xbf16>, vector<256x32xf32> -> vector<256x32xf32>
    %c4_160 = arith.constant 4 : index
    %c0_161 = arith.constant 0 : index
    %c0_162 = arith.constant 0 : index
    %242 = vector.load %arg3[%c4_160, %c0_161, %c0_162] : memref<5x1x32xf32, #tpu.memory_space<vmem>>, vector<1x1x32xf32>
    %243 = vector.shape_cast %242 : vector<1x1x32xf32> to vector<1x32xf32>
    %244 = vector.broadcast %243 : vector<1x32xf32> to vector<256x32xf32>
    %245 = arith.addf %241, %244 : vector<256x32xf32>
    %cst_163 = arith.constant 0.000000e+00 : f32
    %246 = vector.broadcast %cst_163 : f32 to vector<256x32xf32>
    %247 = arith.maximumf %245, %246 : vector<256x32xf32>
    %248 = arith.truncf %247 : vector<256x32xf32> to vector<256x32xbf16>
    %c0_164 = arith.constant 0 : index
    %c0_165 = arith.constant 0 : index
    %249 = vector.load %arg4[%c0_164, %c0_165] : memref<10x32xbf16, #tpu.memory_space<vmem>>, vector<10x32xbf16>
    %250 = tpu.transpose %248, [1, 0] : vector<256x32xbf16> -> vector<32x256xbf16>
    %cst_166 = arith.constant dense<0.000000e+00> : vector<10x256xf32>
    %251 = tpu.matmul %249, %250, %cst_166 {dimension_numbers = #tpu.dot_dimension_numbers<[1], [0], [0], [1], [0, 0, 1, 1], [], []>} : vector<10x32xbf16>, vector<32x256xbf16>, vector<10x256xf32> -> vector<10x256xf32>
    %c0_167 = arith.constant 0 : index
    %c0_168 = arith.constant 0 : index
    %252 = vector.load %arg5[%c0_167, %c0_168] : memref<10x1xf32, #tpu.memory_space<vmem>>, vector<10x1xf32>
    %253 = vector.broadcast %252 : vector<10x1xf32> to vector<10x256xf32>
    %254 = arith.addf %251, %253 : vector<10x256xf32>
    %c0_169 = arith.constant 0 : index
    %c0_170 = arith.constant 0 : index
    %c0_171 = arith.constant 0 : index
    %255 = vector.load %arg6[%c0_169, %c0_170, %c0_171] : memref<1x10x256xf32, #tpu.memory_space<vmem>>, vector<1x10x256xf32>
    %256 = vector.shape_cast %255 : vector<1x10x256xf32> to vector<10x256xf32>
    %257 = vector.shape_cast %254 : vector<10x256xf32> to vector<1x10x256xf32>
    tpu.vector_store %arg6[%c0_169, %c0_170, %c0_171], %257 {strides = array<i32>} : memref<1x10x256xf32, #tpu.memory_space<vmem>>, vector<1x10x256xf32>,
    return
  }
  func.func @transform_0(%arg0: i32) -> (i32, i32, i32, i32) {
    %c0_i32 = arith.constant 0 : i32
    %c0_i32_0 = arith.constant 0 : i32
    %c0_i32_1 = arith.constant 0 : i32
    %c0_i32_2 = arith.constant 0 : i32
    return %arg0, %c0_i32, %c0_i32_0, %c0_i32_1 : i32, i32, i32, i32
  }
  func.func @transform_1(%arg0: i32) -> (i32, i32, i32) {
    %c0_i32 = arith.constant 0 : i32
    %c0_i32_0 = arith.constant 0 : i32
    %c0_i32_1 = arith.constant 0 : i32
    %c0_i32_2 = arith.constant 0 : i32
    return %c0_i32, %c0_i32_0, %c0_i32_1 : i32, i32, i32
  }
  func.func @transform_2(%arg0: i32) -> (i32, i32, i32) {
    %c0_i32 = arith.constant 0 : i32
    %c0_i32_0 = arith.constant 0 : i32
    %c0_i32_1 = arith.constant 0 : i32
    %c0_i32_2 = arith.constant 0 : i32
    return %c0_i32, %c0_i32_0, %c0_i32_1 : i32, i32, i32
  }
  func.func @transform_3(%arg0: i32) -> (i32, i32) {
    %c0_i32 = arith.constant 0 : i32
    %c0_i32_0 = arith.constant 0 : i32
    %c0_i32_1 = arith.constant 0 : i32
    return %c0_i32, %c0_i32_0 : i32, i32
  }
  func.func @transform_4(%arg0: i32) -> (i32, i32) {
    %c0_i32 = arith.constant 0 : i32
    %c0_i32_0 = arith.constant 0 : i32
    %c0_i32_1 = arith.constant 0 : i32
    return %c0_i32, %c0_i32_0 : i32, i32
  }
  func.func @transform_5(%arg0: i32) -> (i32, i32, i32) {
    %c0_i32 = arith.constant 0 : i32
    %c0_i32_0 = arith.constant 0 : i32
    %c0_i32_1 = arith.constant 0 : i32
    return %arg0, %c0_i32, %c0_i32_0 : i32, i32, i32
  }
}

</mosaic_0001>

<llo_original>
// kernel: fcn_forward.1
$region0: #{fcn_forward.1}
  #allocation0 [shape = 'u32[]', space=smem, size = 0x4, offset = 0x4, fixed_abs, tag = 'smem constant byte address 0x4 - core index']
  #allocation1 [shape = 'u32[144,128]{1,0:T(1,128)}', space=vmem, size = 0x12000, scoped, tag = 'internal scratch']
  #allocation2 [shape = 'f32[18,18,32]{2,1,0:T(8,128)}', space=vmem, size = 0x36000, scoped, tag = 'scratch operand']
  #allocation3 [shape = 'bf16[256,288]{1,0:T(16,128)(2,1)}', space=vmem, size = 0x30000, scoped, tag = 'scratch operand']
  %s0 = inlined_call_operand.vmem [shape: f32[2,16,16,4], index: 0, kind: input, shape index: {}]
  %s1 = inlined_call_operand.vmem [shape: bf16[5,288,32], index: 1, kind: input, shape index: {}]
  %s2 = inlined_call_operand.vmem [shape: f32[5,1,32], index: 2, kind: input, shape index: {}]
  %s3 = inlined_call_operand.vmem [shape: bf16[10,32], index: 3, kind: input, shape index: {}]
  %s4 = inlined_call_operand.vmem [shape: f32[10,1], index: 4, kind: input, shape index: {}]
  %s5 = inlined_call_operand.vmem [shape: f32[2,10,256], index: 5, kind: output, shape index: {}]
  %s6 = sld [smem:[#allocation0]]
  $region53: #{fcn_forward.1} parent=0
    _
  %s8 = ssub.s32 1, %s6
  %s9 = scalar_select 0, %s8, %s6
  loop: start=0, step=1, limit=4
  $region2: #{fcn_forward.1} parent=0 // loop_pre_header
    _
  $region3: #{fcn_forward.1} parent=0 // loop_header
    %s11 = sphi 0, %s15
    %p12 = scmp.ge.s32.totalorder %s11, 4
    %s21 = sphi 0, %s23
    %s24 = sphi 0, %s21
    %s25 = sphi 0, %s24
    %s41 = sphi 0, %s25
    %s45 = sphi 0, %s45
    %s47 = sphi 0, %s45
    %s48 = sphi 0, %s47
    %s62 = sphi 0, %s48
    %s66 = sphi 0, %s66
    %s68 = sphi 0, %s66
    %s69 = sphi 0, %s68
    %s83 = sphi 0, %s69
    %s87 = sphi 0, %s87
    %s89 = sphi 0, %s87
    %s90 = sphi 0, %s89
    %s104 = sphi 0, %s90
    %s108 = sphi 0, %s108
    %s110 = sphi 0, %s108
    %s111 = sphi 0, %s110
    %s125 = sphi 0, %s111
    %s131 = sphi 0, %s133
    %s134 = sphi 0, %s131
    %s135 = sphi 0, %s134
    %s151 = sphi 0, %s135
  $region4: #{fcn_forward.1} parent=0 // loop_header_branch
    %14 = sbr.rel (%p12) target = $region8
  $region5: #{fcn_forward.1} parent=0 // loop_body
    %s16 = ssub.s32 %s11, 1
    %s17 = ssub.s32 %s11, 2
    %s18 = sadd.s32 %s11, 1
    %s19 = ssub.s32 %s11, %s18
    %p20 = scmp.eq.s32.totalorder %s19, 0
    %s22 = sadd.s32 %s21, 1
    %s23 = scalar_select %p20, %s21, %s22
    %p26 = pneg %p20
    %p27 = scmp.eq.s32.totalorder %s11, 1
    %p28 = por %p26, %p27
    %p29 = scmp.ne.s32.totalorder %s21, %s24
    %p30 = scmp.eq.s32.totalorder %s11, 0
    %p31 = por %p29, %p30
    %p32 = scmp.ne.s32.totalorder %s21, %s24
    %p33 = scmp.eq.s32.totalorder %s16, 1
    %p34 = por %p32, %p33
    %p35 = scmp.ne.s32.totalorder %s24, %s25
    %p36 = scmp.eq.s32.totalorder %s16, 0
    %p37 = por %p35, %p36
    %p38 = scmp.ne.s32.totalorder %s24, %s25
    %p39 = scmp.eq.s32.totalorder %s17, 1
    %p40 = por %p38, %p39
    %p42 = scmp.ne.s32.totalorder %s25, %s41
    %p43 = scmp.eq.s32.totalorder %s17, 0
    %p44 = por %p42, %p43
    %s46 = sadd.s32 %s45, 1
    %p49 = scmp.eq.s32.totalorder %s11, 1
    %p50 = scmp.ne.s32.totalorder %s45, %s47
    %p51 = scmp.eq.s32.totalorder %s11, 0
    %p52 = por %p50, %p51
    %p53 = scmp.ne.s32.totalorder %s45, %s47
    %p54 = scmp.eq.s32.totalorder %s16, 1
    %p55 = por %p53, %p54
    %p56 = scmp.ne.s32.totalorder %s47, %s48
    %p57 = scmp.eq.s32.totalorder %s16, 0
    %p58 = por %p56, %p57
    %p59 = scmp.ne.s32.totalorder %s47, %s48
    %p60 = scmp.eq.s32.totalorder %s17, 1
    %p61 = por %p59, %p60
    %p63 = scmp.ne.s32.totalorder %s48, %s62
    %p64 = scmp.eq.s32.totalorder %s17, 0
    %p65 = por %p63, %p64
    %s67 = sadd.s32 %s66, 1
    %p70 = scmp.eq.s32.totalorder %s11, 1
    %p71 = scmp.ne.s32.totalorder %s66, %s68
    %p72 = scmp.eq.s32.totalorder %s11, 0
    %p73 = por %p71, %p72
    %p74 = scmp.ne.s32.totalorder %s66, %s68
    %p75 = scmp.eq.s32.totalorder %s16, 1
    %p76 = por %p74, %p75
    %p77 = scmp.ne.s32.totalorder %s68, %s69
    %p78 = scmp.eq.s32.totalorder %s16, 0
    %p79 = por %p77, %p78
    %p80 = scmp.ne.s32.totalorder %s68, %s69
    %p81 = scmp.eq.s32.totalorder %s17, 1
    %p82 = por %p80, %p81
    %p84 = scmp.ne.s32.totalorder %s69, %s83
    %p85 = scmp.eq.s32.totalorder %s17, 0
    %p86 = por %p84, %p85
    %s88 = sadd.s32 %s87, 1
    %p91 = scmp.eq.s32.totalorder %s11, 1
    %p92 = scmp.ne.s32.totalorder %s87, %s89
    %p93 = scmp.eq.s32.totalorder %s11, 0
    %p94 = por %p92, %p93
    %p95 = scmp.ne.s32.totalorder %s87, %s89
    %p96 = scmp.eq.s32.totalorder %s16, 1
    %p97 = por %p95, %p96
    %p98 = scmp.ne.s32.totalorder %s89, %s90
    %p99 = scmp.eq.s32.totalorder %s16, 0
    %p100 = por %p98, %p99
    %p101 = scmp.ne.s32.totalorder %s89, %s90
    %p102 = scmp.eq.s32.totalorder %s17, 1
    %p103 = por %p101, %p102
    %p105 = scmp.ne.s32.totalorder %s90, %s104
    %p106 = scmp.eq.s32.totalorder %s17, 0
    %p107 = por %p105, %p106
    %s109 = sadd.s32 %s108, 1
    %p112 = scmp.eq.s32.totalorder %s11, 1
    %p113 = scmp.ne.s32.totalorder %s108, %s110
    %p114 = scmp.eq.s32.totalorder %s11, 0
    %p115 = por %p113, %p114
    %p116 = scmp.ne.s32.totalorder %s108, %s110
    %p117 = scmp.eq.s32.totalorder %s16, 1
    %p118 = por %p116, %p117
    %p119 = scmp.ne.s32.totalorder %s110, %s111
    %p120 = scmp.eq.s32.totalorder %s16, 0
    %p121 = por %p119, %p120
    %p122 = scmp.ne.s32.totalorder %s110, %s111
    %p123 = scmp.eq.s32.totalorder %s17, 1
    %p124 = por %p122, %p123
    %p126 = scmp.ne.s32.totalorder %s111, %s125
    %p127 = scmp.eq.s32.totalorder %s17, 0
    %p128 = por %p126, %p127
    %s129 = ssub.s32 %s11, %s18
    %p130 = scmp.eq.s32.totalorder %s129, 0
    %s132 = sadd.s32 %s131, 1
    %s133 = scalar_select %p130, %s131, %s132
    %p136 = pneg %p130
    %p137 = scmp.eq.s32.totalorder %s11, 1
    %p138 = por %p136, %p137
    %p139 = scmp.ne.s32.totalorder %s131, %s134
    %p140 = scmp.eq.s32.totalorder %s11, 0
    %p141 = por %p139, %p140
    %p142 = scmp.ne.s32.totalorder %s131, %s134
    %p143 = scmp.eq.s32.totalorder %s16, 1
    %p144 = por %p142, %p143
    %p145 = scmp.ne.s32.totalorder %s134, %s135
    %p146 = scmp.eq.s32.totalorder %s16, 0
    %p147 = por %p145, %p146
    %p148 = scmp.ne.s32.totalorder %s134, %s135
    %p149 = scmp.eq.s32.totalorder %s17, 1
    %p150 = por %p148, %p149
    %p152 = scmp.ne.s32.totalorder %s135, %s151
    %p153 = scmp.eq.s32.totalorder %s17, 0
    %p154 = por %p152, %p153
    %p155 = scmp.le.s32.totalorder 1, %s11
    %p156 = scmp.lt.s32.totalorder %s11, 3
    %p157 = pnand %p155, %p156
    %p158 = pneg %p157
    // Predicated region
    $region9: #{fcn_forward.1} parent=5 // pred_check
      _
    $region10: #{fcn_forward.1} parent=5 // pred_check_branch
      %160 = sbr.rel (%p157) target = $region12
    $region11: #{fcn_forward.1} parent=5 // pred_region
      %s161 = ssub.s32 %s11, 1
      // Predicated region
      $region13: #{fcn_forward.1} parent=11 // pred_check
        %p162 = pneg %p58
      $region14: #{fcn_forward.1} parent=11 // pred_check_branch
        %164 = sbr.rel (%p162) target = $region16
      $region15: #{fcn_forward.1} parent=11 // pred_region
        _
      $region16: #{fcn_forward.1} parent=11 // pred_fallthru
        _
      // Predicated region
      $region17: #{fcn_forward.1} parent=11 // pred_check
        %p165 = pneg %p79
      $region18: #{fcn_forward.1} parent=11 // pred_check_branch
        %167 = sbr.rel (%p165) target = $region20
      $region19: #{fcn_forward.1} parent=11 // pred_region
        _
      $region20: #{fcn_forward.1} parent=11 // pred_fallthru
        _
      // Predicated region
      $region21: #{fcn_forward.1} parent=11 // pred_check
        %p168 = pneg %p100
      $region22: #{fcn_forward.1} parent=11 // pred_check_branch
        %170 = sbr.rel (%p168) target = $region24
      $region23: #{fcn_forward.1} parent=11 // pred_region
        _
      $region24: #{fcn_forward.1} parent=11 // pred_fallthru
        _
      // Predicated region
      $region25: #{fcn_forward.1} parent=11 // pred_check
        %p171 = pneg %p121
      $region26: #{fcn_forward.1} parent=11 // pred_check_branch
        %173 = sbr.rel (%p171) target = $region28
      $region27: #{fcn_forward.1} parent=11 // pred_region
        _
      $region28: #{fcn_forward.1} parent=11 // pred_fallthru
        _
    $region12: #{fcn_forward.1} parent=5 // pred_fallthru
      _
    %p174 = scmp.lt.s32.totalorder %s11, 2
    // Predicated region
    $region29: #{fcn_forward.1} parent=5 // pred_check
      %p175 = pneg %p174
    $region30: #{fcn_forward.1} parent=5 // pred_check_branch
      %177 = sbr.rel (%p175) target = $region32
    $region31: #{fcn_forward.1} parent=5 // pred_region
      // Predicated region
      $region33: #{fcn_forward.1} parent=31 // pred_check
        %p178 = pneg %p31
      $region34: #{fcn_forward.1} parent=31 // pred_check_branch
        %180 = sbr.rel (%p178) target = $region36
      $region35: #{fcn_forward.1} parent=31 // pred_region
        %p181 = scmp.lt.s32.totalorder %s11, 1
        %s182 = scalar_select %p181, %s11, 1
        %s183 = smul.addr %s182, 32
        %s184 = smul.addr %s183, 8
        %s185 = scalar_lea.vmem %s0, %s184
      $region36: #{fcn_forward.1} parent=31 // pred_fallthru
        _
    $region32: #{fcn_forward.1} parent=5 // pred_fallthru
      _
    %p186 = scmp.le.s32.totalorder 1, %s11
    %p187 = scmp.lt.s32.totalorder %s11, 3
    %p188 = pnand %p186, %p187
    %p189 = pneg %p188
    // Predicated region
    $region37: #{fcn_forward.1} parent=5 // pred_check
      _
    $region38: #{fcn_forward.1} parent=5 // pred_check_branch
      %191 = sbr.rel (%p188) target = $region40
    $region39: #{fcn_forward.1} parent=5 // pred_region
      %s192 = ssub.s32 %s11, 1
      %p193 = scmp.lt.s32.totalorder %s16, 1
      %s194 = scalar_select %p193, %s16, 1
      %s195 = smul.addr %s194, 32
      %s196 = smul.addr %s195, 8
      %s197 = scalar_lea.vmem %s0, %s196
      %p198 = pneg %p37
      %p199 = pneg %p34
      %p200 = pneg %p58
      %p201 = pneg %p55
      %p202 = pneg %p79
      %p203 = pneg %p76
      %p204 = pneg %p100
      %p205 = pneg %p97
      %p206 = pneg %p121
      %p207 = pneg %p118
      %p208 = pneg %p147
      %p209 = pneg %p144
      %p210 = scmp.lt.s32.totalorder %s16, 1
      %s211 = scalar_select %p210, %s16, 1
      %s212 = smul.addr %s211, 4
      %s213 = smul.addr %s212, 8
      %s214 = scalar_lea.vmem %s5, %s213
      %p215 = scmp.lt.s32.totalorder %s16, 1
      %s216 = scalar_select %p215, %s16, 1
      %s217 = smul.addr %s216, 32
      %s218 = smul.addr %s217, 8
      %s219 = scalar_lea.vmem %s0, %s218
      %p220 = scmp.lt.s32.totalorder %s16, 1
      %s221 = scalar_select %p220, %s16, 1
      %s222 = smul.addr %s221, 4
      %s223 = smul.addr %s222, 8
      %s224 = scalar_lea.vmem %s5, %s223
      %vm226 = vcmask 261120
      %227 = vst.msk [vmem:[#allocation2] sm:$0xff] %vm226, 0.0
      %228 = vst.msk [vmem:[#allocation2 + $0x8] sm:$0xff] %vm226, 0.0
      %vm229 = vcmask 254976
      %230 = vst.msk [vmem:[#allocation2 + $0x10] sm:$0x3] %vm229, 0.0
      %231 = vst.msk [vmem:[#allocation2 + $0x18] sm:$0xff] %vm226, 0.0
      %232 = vst.msk [vmem:[#allocation2 + $0x20] sm:$0xff] %vm226, 0.0
      %233 = vst.msk [vmem:[#allocation2 + $0x28] sm:$0x3] %vm229, 0.0
      %234 = vst.msk [vmem:[#allocation2 + $0x30] sm:$0xff] %vm226, 0.0
      %235 = vst.msk [vmem:[#allocation2 + $0x38] sm:$0xff] %vm226, 0.0
      %236 = vst.msk [vmem:[#allocation2 + $0x40] sm:$0x3] %vm229, 0.0
      %237 = vst.msk [vmem:[#allocation2 + $0x48] sm:$0xff] %vm226, 0.0
      %238 = vst.msk [vmem:[#allocation2 + $0x50] sm:$0xff] %vm226, 0.0
      %239 = vst.msk [vmem:[#allocation2 + $0x58] sm:$0x3] %vm229, 0.0
      %240 = vst.msk [vmem:[#allocation2 + $0x60] sm:$0xff] %vm226, 0.0
      %241 = vst.msk [vmem:[#allocation2 + $0x68] sm:$0xff] %vm226, 0.0
      %242 = vst.msk [vmem:[#allocation2 + $0x70] sm:$0x3] %vm229, 0.0
      %243 = vst.msk [vmem:[#allocation2 + $0x78] sm:$0xff] %vm226, 0.0
      %244 = vst.msk [vmem:[#allocation2 + $0x80] sm:$0xff] %vm226, 0.0
      %245 = vst.msk [vmem:[#allocation2 + $0x88] sm:$0x3] %vm229, 0.0
      %246 = vst.msk [vmem:[#allocation2 + $0x90] sm:$0xff] %vm226, 0.0
      %247 = vst.msk [vmem:[#allocation2 + $0x98] sm:$0xff] %vm226, 0.0
      %248 = vst.msk [vmem:[#allocation2 + $0xa0] sm:$0x3] %vm229, 0.0
      %249 = vst.msk [vmem:[#allocation2 + $0xa8] sm:$0xff] %vm226, 0.0
      %250 = vst.msk [vmem:[#allocation2 + $0xb0] sm:$0xff] %vm226, 0.0
      %251 = vst.msk [vmem:[#allocation2 + $0xb8] sm:$0x3] %vm229, 0.0
      %252 = vst.msk [vmem:[#allocation2 + $0xc0] sm:$0xff] %vm226, 0.0
      %253 = vst.msk [vmem:[#allocation2 + $0xc8] sm:$0xff] %vm226, 0.0
      %254 = vst.msk [vmem:[#allocation2 + $0xd0] sm:$0x3] %vm229, 0.0
      %255 = vst.msk [vmem:[#allocation2 + $0xd8] sm:$0xff] %vm226, 0.0
      %256 = vst.msk [vmem:[#allocation2 + $0xe0] sm:$0xff] %vm226, 0.0
      %257 = vst.msk [vmem:[#allocation2 + $0xe8] sm:$0x3] %vm229, 0.0
      %258 = vst.msk [vmem:[#allocation2 + $0xf0] sm:$0xff] %vm226, 0.0
      %259 = vst.msk [vmem:[#allocation2 + $0xf8] sm:$0xff] %vm226, 0.0
      %260 = vst.msk [vmem:[#allocation2 + $0x100] sm:$0x3] %vm229, 0.0
      %261 = vst.msk [vmem:[#allocation2 + $0x108] sm:$0xff] %vm226, 0.0
      %262 = vst.msk [vmem:[#allocation2 + $0x110] sm:$0xff] %vm226, 0.0
      %263 = vst.msk [vmem:[#allocation2 + $0x118] sm:$0x3] %vm229, 0.0
      %264 = vst.msk [vmem:[#allocation2 + $0x120] sm:$0xff] %vm226, 0.0
      %265 = vst.msk [vmem:[#allocation2 + $0x128] sm:$0xff] %vm226, 0.0
      %266 = vst.msk [vmem:[#allocation2 + $0x130] sm:$0x3] %vm229, 0.0
      %267 = vst.msk [vmem:[#allocation2 + $0x138] sm:$0xff] %vm226, 0.0
      %268 = vst.msk [vmem:[#allocation2 + $0x140] sm:$0xff] %vm226, 0.0
      %269 = vst.msk [vmem:[#allocation2 + $0x148] sm:$0x3] %vm229, 0.0
      %270 = vst.msk [vmem:[#allocation2 + $0x150] sm:$0xff] %vm226, 0.0
      %271 = vst.msk [vmem:[#allocation2 + $0x158] sm:$0xff] %vm226, 0.0
      %272 = vst.msk [vmem:[#allocation2 + $0x160] sm:$0x3] %vm229, 0.0
      %273 = vst.msk [vmem:[#allocation2 + $0x168] sm:$0xff] %vm226, 0.0
      %274 = vst.msk [vmem:[#allocation2 + $0x170] sm:$0xff] %vm226, 0.0
      %275 = vst.msk [vmem:[#allocation2 + $0x178] sm:$0x3] %vm229, 0.0
      %276 = vst.msk [vmem:[#allocation2 + $0x180] sm:$0xff] %vm226, 0.0
      %277 = vst.msk [vmem:[#allocation2 + $0x188] sm:$0xff] %vm226, 0.0
      %278 = vst.msk [vmem:[#allocation2 + $0x190] sm:$0x3] %vm229, 0.0
      %279 = vst.msk [vmem:[#allocation2 + $0x198] sm:$0xff] %vm226, 0.0
      %280 = vst.msk [vmem:[#allocation2 + $0x1a0] sm:$0xff] %vm226, 0.0
      %281 = vst.msk [vmem:[#allocation2 + $0x1a8] sm:$0x3] %vm229, 0.0
      %v282 = vld [vmem:[%s219] sm:$0xff]
      %v283 = vld [vmem:[%s219 + $0x8] sm:$0xff]
      %v284 = vld [vmem:[%s219 + $0x10] sm:$0xff]
      %v285 = vld [vmem:[%s219 + $0x18] sm:$0xff]
      %v286 = vld [vmem:[%s219 + $0x20] sm:$0xff]
      %v287 = vld [vmem:[%s219 + $0x28] sm:$0xff]
      %v288 = vld [vmem:[%s219 + $0x30] sm:$0xff]
      %v289 = vld [vmem:[%s219 + $0x38] sm:$0xff]
      %v290 = vld [vmem:[%s219 + $0x40] sm:$0xff]
      %v291 = vld [vmem:[%s219 + $0x48] sm:$0xff]
      %v292 = vld [vmem:[%s219 + $0x50] sm:$0xff]
      %v293 = vld [vmem:[%s219 + $0x58] sm:$0xff]
      %v294 = vld [vmem:[%s219 + $0x60] sm:$0xff]
      %v295 = vld [vmem:[%s219 + $0x68] sm:$0xff]
      %v296 = vld [vmem:[%s219 + $0x70] sm:$0xff]
      %v297 = vld [vmem:[%s219 + $0x78] sm:$0xff]
      %v298 = vld [vmem:[%s219 + $0x80] sm:$0xff]
      %v299 = vld [vmem:[%s219 + $0x88] sm:$0xff]
      %v300 = vld [vmem:[%s219 + $0x90] sm:$0xff]
      %v301 = vld [vmem:[%s219 + $0x98] sm:$0xff]
      %v302 = vld [vmem:[%s219 + $0xa0] sm:$0xff]
      %v303 = vld [vmem:[%s219 + $0xa8] sm:$0xff]
      %v304 = vld [vmem:[%s219 + $0xb0] sm:$0xff]
      %v305 = vld [vmem:[%s219 + $0xb8] sm:$0xff]
      %v306 = vld [vmem:[%s219 + $0xc0] sm:$0xff]
      %v307 = vld [vmem:[%s219 + $0xc8] sm:$0xff]
      %v308 = vld [vmem:[%s219 + $0xd0] sm:$0xff]
      %v309 = vld [vmem:[%s219 + $0xd8] sm:$0xff]
      %v310 = vld [vmem:[%s219 + $0xe0] sm:$0xff]
      %v311 = vld [vmem:[%s219 + $0xe8] sm:$0xff]
      %v312 = vld [vmem:[%s219 + $0xf0] sm:$0xff]
      %v313 = vld [vmem:[%s219 + $0xf8] sm:$0xff]
      %s314 = scalar_lea.vmem [#allocation2], 24
      %vm315 = vcmask 31744
      %316 = vst.msk [vmem:[%s314 + $0x1] sm:$0xff] %vm315, %v282
      %317 = vst.msk [vmem:[%s314 + $0x9] sm:$0xff] %vm315, %v283
      %318 = vst.msk [vmem:[%s314 + $0x19] sm:$0xff] %vm315, %v284
      %319 = vst.msk [vmem:[%s314 + $0x21] sm:$0xff] %vm315, %v285
      %320 = vst.msk [vmem:[%s314 + $0x31] sm:$0xff] %vm315, %v286
      %321 = vst.msk [vmem:[%s314 + $0x39] sm:$0xff] %vm315, %v287
      %322 = vst.msk [vmem:[%s314 + $0x49] sm:$0xff] %vm315, %v288
      %323 = vst.msk [vmem:[%s314 + $0x51] sm:$0xff] %vm315, %v289
      %324 = vst.msk [vmem:[%s314 + $0x61] sm:$0xff] %vm315, %v290
      %325 = vst.msk [vmem:[%s314 + $0x69] sm:$0xff] %vm315, %v291
      %326 = vst.msk [vmem:[%s314 + $0x79] sm:$0xff] %vm315, %v292
      %327 = vst.msk [vmem:[%s314 + $0x81] sm:$0xff] %vm315, %v293
      %328 = vst.msk [vmem:[%s314 + $0x91] sm:$0xff] %vm315, %v294
      %329 = vst.msk [vmem:[%s314 + $0x99] sm:$0xff] %vm315, %v295
      %330 = vst.msk [vmem:[%s314 + $0xa9] sm:$0xff] %vm315, %v296
      %331 = vst.msk [vmem:[%s314 + $0xb1] sm:$0xff] %vm315, %v297
      %332 = vst.msk [vmem:[%s314 + $0xc1] sm:$0xff] %vm315, %v298
      %333 = vst.msk [vmem:[%s314 + $0xc9] sm:$0xff] %vm315, %v299
      %334 = vst.msk [vmem:[%s314 + $0xd9] sm:$0xff] %vm315, %v300
      %335 = vst.msk [vmem:[%s314 + $0xe1] sm:$0xff] %vm315, %v301
      %336 = vst.msk [vmem:[%s314 + $0xf1] sm:$0xff] %vm315, %v302
      %337 = vst.msk [vmem:[%s314 + $0xf9] sm:$0xff] %vm315, %v303
      %338 = vst.msk [vmem:[%s314 + $0x109] sm:$0xff] %vm315, %v304
      %339 = vst.msk [vmem:[%s314 + $0x111] sm:$0xff] %vm315, %v305
      %340 = vst.msk [vmem:[%s314 + $0x121] sm:$0xff] %vm315, %v306
      %341 = vst.msk [vmem:[%s314 + $0x129] sm:$0xff] %vm315, %v307
      %342 = vst.msk [vmem:[%s314 + $0x139] sm:$0xff] %vm315, %v308
      %343 = vst.msk [vmem:[%s314 + $0x141] sm:$0xff] %vm315, %v309
      %344 = vst.msk [vmem:[%s314 + $0x151] sm:$0xff] %vm315, %v310
      %345 = vst.msk [vmem:[%s314 + $0x159] sm:$0xff] %vm315, %v311
      %346 = vst.msk [vmem:[%s314 + $0x169] sm:$0xff] %vm315, %v312
      %347 = vst.msk [vmem:[%s314 + $0x171] sm:$0xff] %vm315, %v313
      %v348 = vld [vmem:[#allocation2] sm:$0xff]
      %v349 = vld [vmem:[#allocation2 + $0x8] sm:$0xff]
      %v350 = vld [vmem:[#allocation2 + $0x10] sm:$0x3]
      %v351 = vld [vmem:[#allocation2 + $0x18] sm:$0xff]
      %v352 = vld [vmem:[#allocation2 + $0x20] sm:$0xff]
      %v353 = vld [vmem:[#allocation2 + $0x28] sm:$0x3]
      %v354 = vld [vmem:[#allocation2 + $0x30] sm:$0xff]
      %v355 = vld [vmem:[#allocation2 + $0x38] sm:$0xff]
      %v356 = vld [vmem:[#allocation2 + $0x40] sm:$0x3]
      %v357 = vld [vmem:[#allocation2 + $0x48] sm:$0xff]
      %v358 = vld [vmem:[#allocation2 + $0x50] sm:$0xff]
      %v359 = vld [vmem:[#allocation2 + $0x58] sm:$0x3]
      %v360 = vld [vmem:[#allocation2 + $0x60] sm:$0xff]
      %v361 = vld [vmem:[#allocation2 + $0x68] sm:$0xff]
      %v362 = vld [vmem:[#allocation2 + $0x70] sm:$0x3]
      %v363 = vld [vmem:[#allocation2 + $0x78] sm:$0xff]
      %v364 = vld [vmem:[#allocation2 + $0x80] sm:$0xff]
      %v365 = vld [vmem:[#allocation2 + $0x88] sm:$0x3]
      %v366 = vld [vmem:[#allocation2 + $0x90] sm:$0xff]
      %v367 = vld [vmem:[#allocation2 + $0x98] sm:$0xff]
      %v368 = vld [vmem:[#allocation2 + $0xa0] sm:$0x3]
      %v369 = vld [vmem:[#allocation2 + $0xa8] sm:$0xff]
      %v370 = vld [vmem:[#allocation2 + $0xb0] sm:$0xff]
      %v371 = vld [vmem:[#allocation2 + $0xb8] sm:$0x3]
      %v372 = vld [vmem:[#allocation2 + $0xc0] sm:$0xff]
      %v373 = vld [vmem:[#allocation2 + $0xc8] sm:$0xff]
      %v374 = vld [vmem:[#allocation2 + $0xd0] sm:$0x3]
      %v375 = vld [vmem:[#allocation2 + $0xd8] sm:$0xff]
      %v376 = vld [vmem:[#allocation2 + $0xe0] sm:$0xff]
      %v377 = vld [vmem:[#allocation2 + $0xe8] sm:$0x3]
      %v378 = vld [vmem:[#allocation2 + $0xf0] sm:$0xff]
      %v379 = vld [vmem:[#allocation2 + $0xf8] sm:$0xff]
      %v380 = vld [vmem:[#allocation2 + $0x100] sm:$0x3]
      %v381 = vld [vmem:[#allocation2 + $0x108] sm:$0xff]
      %v382 = vld [vmem:[#allocation2 + $0x110] sm:$0xff]
      %v383 = vld [vmem:[#allocation2 + $0x118] sm:$0x3]
      %v384 = vld [vmem:[#allocation2 + $0x120] sm:$0xff]
      %v385 = vld [vmem:[#allocation2 + $0x128] sm:$0xff]
      %v386 = vld [vmem:[#allocation2 + $0x130] sm:$0x3]
      %v387 = vld [vmem:[#allocation2 + $0x138] sm:$0xff]
      %v388 = vld [vmem:[#allocation2 + $0x140] sm:$0xff]
      %v389 = vld [vmem:[#allocation2 + $0x148] sm:$0x3]
      %v390 = vld [vmem:[#allocation2 + $0x150] sm:$0xff]
      %v391 = vld [vmem:[#allocation2 + $0x158] sm:$0xff]
      %v392 = vld [vmem:[#allocation2 + $0x160] sm:$0x3]
      %v393 = vld [vmem:[#allocation2 + $0x168] sm:$0xff]
      %v394 = vld [vmem:[#allocation2 + $0x170] sm:$0xff]
      %v395 = vld [vmem:[#allocation2 + $0x178] sm:$0x3]
      %v396 = vld [vmem:[#allocation2 + $0x180] sm:$0xff]
      %v397 = vld [vmem:[#allocation2 + $0x188] sm:$0xff]
      %v398 = vld [vmem:[#allocation2 + $0x190] sm:$0x3]
      %v399 = vld [vmem:[#allocation2 + $0x198] sm:$0xff]
      %v400 = vld [vmem:[#allocation2 + $0x1a0] sm:$0xff]
      %v401 = vld [vmem:[#allocation2 + $0x1a8] sm:$0x3]
      %v402 = vpack.c.bf16 %v349, %v348
      %v403 = vpack.c.bf16 %v352, %v351
      %v404 = vpack.c.bf16 %v355, %v354
      %v405 = vpack.c.bf16 %v358, %v357
      %v406 = vpack.c.bf16 %v361, %v360
      %v407 = vpack.c.bf16 %v364, %v363
      %v408 = vpack.c.bf16 %v367, %v366
      %v409 = vpack.c.bf16 %v370, %v369
      %v410 = vpack.c.bf16 %v373, %v372
      %v411 = vpack.c.bf16 %v376, %v375
      %v412 = vpack.c.bf16 %v379, %v378
      %v413 = vpack.c.bf16 %v382, %v381
      %v414 = vpack.c.bf16 %v385, %v384
      %v415 = vpack.c.bf16 %v388, %v387
      %v416 = vpack.c.bf16 %v391, %v390
      %v417 = vpack.c.bf16 %v394, %v393
      %418 = vst.msk [vmem:[#allocation3] sm:$0xff] %vm226, %v402
      %419 = vst.msk [vmem:[#allocation3 + $0x18] sm:$0xff] %vm226, %v403
      %420 = vst.msk [vmem:[#allocation3 + $0x30] sm:$0xff] %vm226, %v404
      %421 = vst.msk [vmem:[#allocation3 + $0x48] sm:$0xff] %vm226, %v405
      %422 = vst.msk [vmem:[#allocation3 + $0x60] sm:$0xff] %vm226, %v406
      %423 = vst.msk [vmem:[#allocation3 + $0x78] sm:$0xff] %vm226, %v407
      %424 = vst.msk [vmem:[#allocation3 + $0x90] sm:$0xff] %vm226, %v408
      %425 = vst.msk [vmem:[#allocation3 + $0xa8] sm:$0xff] %vm226, %v409
      %426 = vst.msk [vmem:[#allocation3 + $0xc0] sm:$0xff] %vm226, %v410
      %427 = vst.msk [vmem:[#allocation3 + $0xd8] sm:$0xff] %vm226, %v411
      %428 = vst.msk [vmem:[#allocation3 + $0xf0] sm:$0xff] %vm226, %v412
      %429 = vst.msk [vmem:[#allocation3 + $0x108] sm:$0xff] %vm226, %v413
      %430 = vst.msk [vmem:[#allocation3 + $0x120] sm:$0xff] %vm226, %v414
      %431 = vst.msk [vmem:[#allocation3 + $0x138] sm:$0xff] %vm226, %v415
      %432 = vst.msk [vmem:[#allocation3 + $0x150] sm:$0xff] %vm226, %v416
      %433 = vst.msk [vmem:[#allocation3 + $0x168] sm:$0xff] %vm226, %v417
      %vm482 = vcmask 1046528
      %v483 = vrot.slane %v348, 1
      %v484 = vrot.slane %v349, 1
      %v485 = vsel %vm482, %v483, %v484
      %v486 = vrot.slane %v350, 1
      %v487 = vsel %vm482, %v484, %v486
      %v488 = vrot.slane %v351, 1
      %v489 = vrot.slane %v352, 1
      %v490 = vsel %vm482, %v488, %v489
      %v491 = vrot.slane %v353, 1
      %v492 = vsel %vm482, %v489, %v491
      %v493 = vrot.slane %v354, 1
      %v494 = vrot.slane %v355, 1
      %v495 = vsel %vm482, %v493, %v494
      %v496 = vrot.slane %v356, 1
      %v497 = vsel %vm482, %v494, %v496
      %v498 = vrot.slane %v357, 1
      %v499 = vrot.slane %v358, 1
      %v500 = vsel %vm482, %v498, %v499
      %v501 = vrot.slane %v359, 1
      %v502 = vsel %vm482, %v499, %v501
      %v503 = vrot.slane %v360, 1
      %v504 = vrot.slane %v361, 1
      %v505 = vsel %vm482, %v503, %v504
      %v506 = vrot.slane %v362, 1
      %v507 = vsel %vm482, %v504, %v506
      %v508 = vrot.slane %v363, 1
      %v509 = vrot.slane %v364, 1
      %v510 = vsel %vm482, %v508, %v509
      %v511 = vrot.slane %v365, 1
      %v512 = vsel %vm482, %v509, %v511
      %v513 = vrot.slane %v366, 1
      %v514 = vrot.slane %v367, 1
      %v515 = vsel %vm482, %v513, %v514
      %v516 = vrot.slane %v368, 1
      %v517 = vsel %vm482, %v514, %v516
      %v518 = vrot.slane %v369, 1
      %v519 = vrot.slane %v370, 1
      %v520 = vsel %vm482, %v518, %v519
      %v521 = vrot.slane %v371, 1
      %v522 = vsel %vm482, %v519, %v521
      %v523 = vrot.slane %v372, 1
      %v524 = vrot.slane %v373, 1
      %v525 = vsel %vm482, %v523, %v524
      %v526 = vrot.slane %v374, 1
      %v527 = vsel %vm482, %v524, %v526
      %v528 = vrot.slane %v375, 1
      %v529 = vrot.slane %v376, 1
      %v530 = vsel %vm482, %v528, %v529
      %v531 = vrot.slane %v377, 1
      %v532 = vsel %vm482, %v529, %v531
      %v533 = vrot.slane %v378, 1
      %v534 = vrot.slane %v379, 1
      %v535 = vsel %vm482, %v533, %v534
      %v536 = vrot.slane %v380, 1
      %v537 = vsel %vm482, %v534, %v536
      %v538 = vrot.slane %v381, 1
      %v539 = vrot.slane %v382, 1
      %v540 = vsel %vm482, %v538, %v539
      %v541 = vrot.slane %v383, 1
      %v542 = vsel %vm482, %v539, %v541
      %v543 = vrot.slane %v384, 1
      %v544 = vrot.slane %v385, 1
      %v545 = vsel %vm482, %v543, %v544
      %v546 = vrot.slane %v386, 1
      %v547 = vsel %vm482, %v544, %v546
      %v548 = vrot.slane %v387, 1
      %v549 = vrot.slane %v388, 1
      %v550 = vsel %vm482, %v548, %v549
      %v551 = vrot.slane %v389, 1
      %v552 = vsel %vm482, %v549, %v551
      %v553 = vrot.slane %v390, 1
      %v554 = vrot.slane %v391, 1
      %v555 = vsel %vm482, %v553, %v554
      %v556 = vrot.slane %v392, 1
      %v557 = vsel %vm482, %v554, %v556
      %v558 = vrot.slane %v393, 1
      %v559 = vrot.slane %v394, 1
      %v560 = vsel %vm482, %v558, %v559
      %v561 = vrot.slane %v395, 1
      %v562 = vsel %vm482, %v559, %v561
      %v595 = vpack.c.bf16 %v487, %v485
      %v596 = vpack.c.bf16 %v492, %v490
      %v597 = vpack.c.bf16 %v497, %v495
      %v598 = vpack.c.bf16 %v502, %v500
      %v599 = vpack.c.bf16 %v507, %v505
      %v600 = vpack.c.bf16 %v512, %v510
      %v601 = vpack.c.bf16 %v517, %v515
      %v602 = vpack.c.bf16 %v522, %v520
      %v603 = vpack.c.bf16 %v527, %v525
      %v604 = vpack.c.bf16 %v532, %v530
      %v605 = vpack.c.bf16 %v537, %v535
      %v606 = vpack.c.bf16 %v542, %v540
      %v607 = vpack.c.bf16 %v547, %v545
      %v608 = vpack.c.bf16 %v552, %v550
      %v609 = vpack.c.bf16 %v557, %v555
      %v610 = vpack.c.bf16 %v562, %v560
      %627 = vrot.lane.b32.xlu0 %v595, 32
      %v628 = vpop.permute.xlu0 %627
      %629 = vrot.lane.b32.xlu0 %v596, 32
      %v630 = vpop.permute.xlu0 %629
      %631 = vrot.lane.b32.xlu0 %v597, 32
      %v632 = vpop.permute.xlu0 %631
      %633 = vrot.lane.b32.xlu0 %v598, 32
      %v634 = vpop.permute.xlu0 %633
      %635 = vrot.lane.b32.xlu0 %v599, 32
      %v636 = vpop.permute.xlu0 %635
      %637 = vrot.lane.b32.xlu0 %v600, 32
      %v638 = vpop.permute.xlu0 %637
      %639 = vrot.lane.b32.xlu0 %v601, 32
      %v640 = vpop.permute.xlu0 %639
      %641 = vrot.lane.b32.xlu0 %v602, 32
      %v642 = vpop.permute.xlu0 %641
      %643 = vrot.lane.b32.xlu0 %v603, 32
      %v644 = vpop.permute.xlu0 %643
      %645 = vrot.lane.b32.xlu0 %v604, 32
      %v646 = vpop.permute.xlu0 %645
      %647 = vrot.lane.b32.xlu0 %v605, 32
      %v648 = vpop.permute.xlu0 %647
      %649 = vrot.lane.b32.xlu0 %v606, 32
      %v650 = vpop.permute.xlu0 %649
      %651 = vrot.lane.b32.xlu0 %v607, 32
      %v652 = vpop.permute.xlu0 %651
      %653 = vrot.lane.b32.xlu0 %v608, 32
      %v654 = vpop.permute.xlu0 %653
      %655 = vrot.lane.b32.xlu0 %v609, 32
      %v656 = vpop.permute.xlu0 %655
      %657 = vrot.lane.b32.xlu0 %v610, 32
      %v658 = vpop.permute.xlu0 %657
      %vm675 = vcmask 523520
      %676 = vst.msk [vmem:[#allocation3] sm:$0xff] %vm675, %v628
      %677 = vst.msk [vmem:[#allocation3 + $0x18] sm:$0xff] %vm675, %v630
      %678 = vst.msk [vmem:[#allocation3 + $0x30] sm:$0xff] %vm675, %v632
      %679 = vst.msk [vmem:[#allocation3 + $0x48] sm:$0xff] %vm675, %v634
      %680 = vst.msk [vmem:[#allocation3 + $0x60] sm:$0xff] %vm675, %v636
      %681 = vst.msk [vmem:[#allocation3 + $0x78] sm:$0xff] %vm675, %v638
      %682 = vst.msk [vmem:[#allocation3 + $0x90] sm:$0xff] %vm675, %v640
      %683 = vst.msk [vmem:[#allocation3 + $0xa8] sm:$0xff] %vm675, %v642
      %684 = vst.msk [vmem:[#allocation3 + $0xc0] sm:$0xff] %vm675, %v644
      %685 = vst.msk [vmem:[#allocation3 + $0xd8] sm:$0xff] %vm675, %v646
      %686 = vst.msk [vmem:[#allocation3 + $0xf0] sm:$0xff] %vm675, %v648
      %687 = vst.msk [vmem:[#allocation3 + $0x108] sm:$0xff] %vm675, %v650
      %688 = vst.msk [vmem:[#allocation3 + $0x120] sm:$0xff] %vm675, %v652
      %689 = vst.msk [vmem:[#allocation3 + $0x138] sm:$0xff] %vm675, %v654
      %690 = vst.msk [vmem:[#allocation3 + $0x150] sm:$0xff] %vm675, %v656
      %691 = vst.msk [vmem:[#allocation3 + $0x168] sm:$0xff] %vm675, %v658
      %vm692 = vcmask 1045504
      %v693 = vrot.slane %v348, 2
      %v694 = vrot.slane %v349, 2
      %v695 = vsel %vm692, %v693, %v694
      %v696 = vrot.slane %v350, 2
      %v697 = vsel %vm692, %v694, %v696
      %v698 = vrot.slane %v351, 2
      %v699 = vrot.slane %v352, 2
      %v700 = vsel %vm692, %v698, %v699
      %v701 = vrot.slane %v353, 2
      %v702 = vsel %vm692, %v699, %v701
      %v703 = vrot.slane %v354, 2
      %v704 = vrot.slane %v355, 2
      %v705 = vsel %vm692, %v703, %v704
      %v706 = vrot.slane %v356, 2
      %v707 = vsel %vm692, %v704, %v706
      %v708 = vrot.slane %v357, 2
      %v709 = vrot.slane %v358, 2
      %v710 = vsel %vm692, %v708, %v709
      %v711 = vrot.slane %v359, 2
      %v712 = vsel %vm692, %v709, %v711
      %v713 = vrot.slane %v360, 2
      %v714 = vrot.slane %v361, 2
      %v715 = vsel %vm692, %v713, %v714
      %v716 = vrot.slane %v362, 2
      %v717 = vsel %vm692, %v714, %v716
      %v718 = vrot.slane %v363, 2
      %v719 = vrot.slane %v364, 2
      %v720 = vsel %vm692, %v718, %v719
      %v721 = vrot.slane %v365, 2
      %v722 = vsel %vm692, %v719, %v721
      %v723 = vrot.slane %v366, 2
      %v724 = vrot.slane %v367, 2
      %v725 = vsel %vm692, %v723, %v724
      %v726 = vrot.slane %v368, 2
      %v727 = vsel %vm692, %v724, %v726
      %v728 = vrot.slane %v369, 2
      %v729 = vrot.slane %v370, 2
      %v730 = vsel %vm692, %v728, %v729
      %v731 = vrot.slane %v371, 2
      %v732 = vsel %vm692, %v729, %v731
      %v733 = vrot.slane %v372, 2
      %v734 = vrot.slane %v373, 2
      %v735 = vsel %vm692, %v733, %v734
      %v736 = vrot.slane %v374, 2
      %v737 = vsel %vm692, %v734, %v736
      %v738 = vrot.slane %v375, 2
      %v739 = vrot.slane %v376, 2
      %v740 = vsel %vm692, %v738, %v739
      %v741 = vrot.slane %v377, 2
      %v742 = vsel %vm692, %v739, %v741
      %v743 = vrot.slane %v378, 2
      %v744 = vrot.slane %v379, 2
      %v745 = vsel %vm692, %v743, %v744
      %v746 = vrot.slane %v380, 2
      %v747 = vsel %vm692, %v744, %v746
      %v748 = vrot.slane %v381, 2
      %v749 = vrot.slane %v382, 2
      %v750 = vsel %vm692, %v748, %v749
      %v751 = vrot.slane %v383, 2
      %v752 = vsel %vm692, %v749, %v751
      %v753 = vrot.slane %v384, 2
      %v754 = vrot.slane %v385, 2
      %v755 = vsel %vm692, %v753, %v754
      %v756 = vrot.slane %v386, 2
      %v757 = vsel %vm692, %v754, %v756
      %v758 = vrot.slane %v387, 2
      %v759 = vrot.slane %v388, 2
      %v760 = vsel %vm692, %v758, %v759
      %v761 = vrot.slane %v389, 2
      %v762 = vsel %vm692, %v759, %v761
      %v763 = vrot.slane %v390, 2
      %v764 = vrot.slane %v391, 2
      %v765 = vsel %vm692, %v763, %v764
      %v766 = vrot.slane %v392, 2
      %v767 = vsel %vm692, %v764, %v766
      %v768 = vrot.slane %v393, 2
      %v769 = vrot.slane %v394, 2
      %v770 = vsel %vm692, %v768, %v769
      %v771 = vrot.slane %v395, 2
      %v772 = vsel %vm692, %v769, %v771
      %v805 = vpack.c.bf16 %v697, %v695
      %v806 = vpack.c.bf16 %v702, %v700
      %v807 = vpack.c.bf16 %v707, %v705
      %v808 = vpack.c.bf16 %v712, %v710
      %v809 = vpack.c.bf16 %v717, %v715
      %v810 = vpack.c.bf16 %v722, %v720
      %v811 = vpack.c.bf16 %v727, %v725
      %v812 = vpack.c.bf16 %v732, %v730
      %v813 = vpack.c.bf16 %v737, %v735
      %v814 = vpack.c.bf16 %v742, %v740
      %v815 = vpack.c.bf16 %v747, %v745
      %v816 = vpack.c.bf16 %v752, %v750
      %v817 = vpack.c.bf16 %v757, %v755
      %v818 = vpack.c.bf16 %v762, %v760
      %v819 = vpack.c.bf16 %v767, %v765
      %v820 = vpack.c.bf16 %v772, %v770
      %837 = vrot.lane.b32.xlu0 %v805, 64
      %v838 = vpop.permute.xlu0 %837
      %839 = vrot.lane.b32.xlu0 %v806, 64
      %v840 = vpop.permute.xlu0 %839
      %841 = vrot.lane.b32.xlu0 %v807, 64
      %v842 = vpop.permute.xlu0 %841
      %843 = vrot.lane.b32.xlu0 %v808, 64
      %v844 = vpop.permute.xlu0 %843
      %845 = vrot.lane.b32.xlu0 %v809, 64
      %v846 = vpop.permute.xlu0 %845
      %847 = vrot.lane.b32.xlu0 %v810, 64
      %v848 = vpop.permute.xlu0 %847
      %849 = vrot.lane.b32.xlu0 %v811, 64
      %v850 = vpop.permute.xlu0 %849
      %851 = vrot.lane.b32.xlu0 %v812, 64
      %v852 = vpop.permute.xlu0 %851
      %853 = vrot.lane.b32.xlu0 %v813, 64
      %v854 = vpop.permute.xlu0 %853
      %855 = vrot.lane.b32.xlu0 %v814, 64
      %v856 = vpop.permute.xlu0 %855
      %857 = vrot.lane.b32.xlu0 %v815, 64
      %v858 = vpop.permute.xlu0 %857
      %859 = vrot.lane.b32.xlu0 %v816, 64
      %v860 = vpop.permute.xlu0 %859
      %861 = vrot.lane.b32.xlu0 %v817, 64
      %v862 = vpop.permute.xlu0 %861
      %863 = vrot.lane.b32.xlu0 %v818, 64
      %v864 = vpop.permute.xlu0 %863
      %865 = vrot.lane.b32.xlu0 %v819, 64
      %v866 = vpop.permute.xlu0 %865
      %867 = vrot.lane.b32.xlu0 %v820, 64
      %v868 = vpop.permute.xlu0 %867
      %vm885 = vcmask 785920
      %886 = vst.msk [vmem:[#allocation3] sm:$0xff] %vm885, %v838
      %887 = vst.msk [vmem:[#allocation3 + $0x18] sm:$0xff] %vm885, %v840
      %888 = vst.msk [vmem:[#allocation3 + $0x30] sm:$0xff] %vm885, %v842
      %889 = vst.msk [vmem:[#allocation3 + $0x48] sm:$0xff] %vm885, %v844
      %890 = vst.msk [vmem:[#allocation3 + $0x60] sm:$0xff] %vm885, %v846
      %891 = vst.msk [vmem:[#allocation3 + $0x78] sm:$0xff] %vm885, %v848
      %892 = vst.msk [vmem:[#allocation3 + $0x90] sm:$0xff] %vm885, %v850
      %893 = vst.msk [vmem:[#allocation3 + $0xa8] sm:$0xff] %vm885, %v852
      %894 = vst.msk [vmem:[#allocation3 + $0xc0] sm:$0xff] %vm885, %v854
      %895 = vst.msk [vmem:[#allocation3 + $0xd8] sm:$0xff] %vm885, %v856
      %896 = vst.msk [vmem:[#allocation3 + $0xf0] sm:$0xff] %vm885, %v858
      %897 = vst.msk [vmem:[#allocation3 + $0x108] sm:$0xff] %vm885, %v860
      %898 = vst.msk [vmem:[#allocation3 + $0x120] sm:$0xff] %vm885, %v862
      %899 = vst.msk [vmem:[#allocation3 + $0x138] sm:$0xff] %vm885, %v864
      %900 = vst.msk [vmem:[#allocation3 + $0x150] sm:$0xff] %vm885, %v866
      %901 = vst.msk [vmem:[#allocation3 + $0x168] sm:$0xff] %vm885, %v868
      %v902 = vpack.c.bf16 %v397, %v396
      %919 = vrot.lane.b32.xlu0 %v403, 96
      %v920 = vpop.permute.xlu0 %919
      %921 = vrot.lane.b32.xlu0 %v404, 96
      %v922 = vpop.permute.xlu0 %921
      %923 = vrot.lane.b32.xlu0 %v405, 96
      %v924 = vpop.permute.xlu0 %923
      %925 = vrot.lane.b32.xlu0 %v406, 96
      %v926 = vpop.permute.xlu0 %925
      %927 = vrot.lane.b32.xlu0 %v407, 96
      %v928 = vpop.permute.xlu0 %927
      %929 = vrot.lane.b32.xlu0 %v408, 96
      %v930 = vpop.permute.xlu0 %929
      %931 = vrot.lane.b32.xlu0 %v409, 96
      %v932 = vpop.permute.xlu0 %931
      %933 = vrot.lane.b32.xlu0 %v410, 96
      %v934 = vpop.permute.xlu0 %933
      %935 = vrot.lane.b32.xlu0 %v411, 96
      %v936 = vpop.permute.xlu0 %935
      %937 = vrot.lane.b32.xlu0 %v412, 96
      %v938 = vpop.permute.xlu0 %937
      %939 = vrot.lane.b32.xlu0 %v413, 96
      %v940 = vpop.permute.xlu0 %939
      %941 = vrot.lane.b32.xlu0 %v414, 96
      %v942 = vpop.permute.xlu0 %941
      %943 = vrot.lane.b32.xlu0 %v415, 96
      %v944 = vpop.permute.xlu0 %943
      %945 = vrot.lane.b32.xlu0 %v416, 96
      %v946 = vpop.permute.xlu0 %945
      %947 = vrot.lane.b32.xlu0 %v417, 96
      %v948 = vpop.permute.xlu0 %947
      %949 = vrot.lane.b32.xlu0 %v902, 96
      %v950 = vpop.permute.xlu0 %949
      %vm967 = vcmask 1048320
      %968 = vst.msk [vmem:[#allocation3] sm:$0xff] %vm967, %v920
      %969 = vst.msk [vmem:[#allocation3 + $0x18] sm:$0xff] %vm967, %v922
      %970 = vst.msk [vmem:[#allocation3 + $0x30] sm:$0xff] %vm967, %v924
      %971 = vst.msk [vmem:[#allocation3 + $0x48] sm:$0xff] %vm967, %v926
      %972 = vst.msk [vmem:[#allocation3 + $0x60] sm:$0xff] %vm967, %v928
      %973 = vst.msk [vmem:[#allocation3 + $0x78] sm:$0xff] %vm967, %v930
      %974 = vst.msk [vmem:[#allocation3 + $0x90] sm:$0xff] %vm967, %v932
      %975 = vst.msk [vmem:[#allocation3 + $0xa8] sm:$0xff] %vm967, %v934
      %976 = vst.msk [vmem:[#allocation3 + $0xc0] sm:$0xff] %vm967, %v936
      %977 = vst.msk [vmem:[#allocation3 + $0xd8] sm:$0xff] %vm967, %v938
      %978 = vst.msk [vmem:[#allocation3 + $0xf0] sm:$0xff] %vm967, %v940
      %979 = vst.msk [vmem:[#allocation3 + $0x108] sm:$0xff] %vm967, %v942
      %980 = vst.msk [vmem:[#allocation3 + $0x120] sm:$0xff] %vm967, %v944
      %981 = vst.msk [vmem:[#allocation3 + $0x138] sm:$0xff] %vm967, %v946
      %982 = vst.msk [vmem:[#allocation3 + $0x150] sm:$0xff] %vm967, %v948
      %983 = vst.msk [vmem:[#allocation3 + $0x168] sm:$0xff] %vm967, %v950
      %v987 = vrot.slane %v396, 1
      %v988 = vrot.slane %v397, 1
      %v989 = vsel %vm482, %v987, %v988
      %v990 = vrot.slane %v398, 1
      %v991 = vsel %vm482, %v988, %v990
      %v994 = vpack.c.bf16 %v991, %v989
      %995 = vst.msk [vmem:[#allocation3 + $0x8] sm:$0xff] %vm226, %v596
      %996 = vst.msk [vmem:[#allocation3 + $0x20] sm:$0xff] %vm226, %v597
      %997 = vst.msk [vmem:[#allocation3 + $0x38] sm:$0xff] %vm226, %v598
      %998 = vst.msk [vmem:[#allocation3 + $0x50] sm:$0xff] %vm226, %v599
      %999 = vst.msk [vmem:[#allocation3 + $0x68] sm:$0xff] %vm226, %v600
      %1000 = vst.msk [vmem:[#allocation3 + $0x80] sm:$0xff] %vm226, %v601
      %1001 = vst.msk [vmem:[#allocation3 + $0x98] sm:$0xff] %vm226, %v602
      %1002 = vst.msk [vmem:[#allocation3 + $0xb0] sm:$0xff] %vm226, %v603
      %1003 = vst.msk [vmem:[#allocation3 + $0xc8] sm:$0xff] %vm226, %v604
      %1004 = vst.msk [vmem:[#allocation3 + $0xe0] sm:$0xff] %vm226, %v605
      %1005 = vst.msk [vmem:[#allocation3 + $0xf8] sm:$0xff] %vm226, %v606
      %1006 = vst.msk [vmem:[#allocation3 + $0x110] sm:$0xff] %vm226, %v607
      %1007 = vst.msk [vmem:[#allocation3 + $0x128] sm:$0xff] %vm226, %v608
      %1008 = vst.msk [vmem:[#allocation3 + $0x140] sm:$0xff] %vm226, %v609
      %1009 = vst.msk [vmem:[#allocation3 + $0x158] sm:$0xff] %vm226, %v610
      %1010 = vst.msk [vmem:[#allocation3 + $0x170] sm:$0xff] %vm226, %v994
      %v1011 = vrot.slane %v396, 2
      %v1012 = vrot.slane %v397, 2
      %v1013 = vsel %vm692, %v1011, %v1012
      %v1014 = vrot.slane %v398, 2
      %v1015 = vsel %vm692, %v1012, %v1014
      %v1018 = vpack.c.bf16 %v1015, %v1013
      %1020 = vrot.lane.b32.xlu0 %v806, 32
      %v1021 = vpop.permute.xlu0 %1020
      %1022 = vrot.lane.b32.xlu0 %v807, 32
      %v1023 = vpop.permute.xlu0 %1022
      %1024 = vrot.lane.b32.xlu0 %v808, 32
      %v1025 = vpop.permute.xlu0 %1024
      %1026 = vrot.lane.b32.xlu0 %v809, 32
      %v1027 = vpop.permute.xlu0 %1026
      %1028 = vrot.lane.b32.xlu0 %v810, 32
      %v1029 = vpop.permute.xlu0 %1028
      %1030 = vrot.lane.b32.xlu0 %v811, 32
      %v1031 = vpop.permute.xlu0 %1030
      %1032 = vrot.lane.b32.xlu0 %v812, 32
      %v1033 = vpop.permute.xlu0 %1032
      %1034 = vrot.lane.b32.xlu0 %v813, 32
      %v1035 = vpop.permute.xlu0 %1034
      %1036 = vrot.lane.b32.xlu0 %v814, 32
      %v1037 = vpop.permute.xlu0 %1036
      %1038 = vrot.lane.b32.xlu0 %v815, 32
      %v1039 = vpop.permute.xlu0 %1038
      %1040 = vrot.lane.b32.xlu0 %v816, 32
      %v1041 = vpop.permute.xlu0 %1040
      %1042 = vrot.lane.b32.xlu0 %v817, 32
      %v1043 = vpop.permute.xlu0 %1042
      %1044 = vrot.lane.b32.xlu0 %v818, 32
      %v1045 = vpop.permute.xlu0 %1044
      %1046 = vrot.lane.b32.xlu0 %v819, 32
      %v1047 = vpop.permute.xlu0 %1046
      %1048 = vrot.lane.b32.xlu0 %v820, 32
      %v1049 = vpop.permute.xlu0 %1048
      %1050 = vrot.lane.b32.xlu0 %v1018, 32
      %v1051 = vpop.permute.xlu0 %1050
      %1068 = vst.msk [vmem:[#allocation3 + $0x8] sm:$0xff] %vm675, %v1021
      %1069 = vst.msk [vmem:[#allocation3 + $0x20] sm:$0xff] %vm675, %v1023
      %1070 = vst.msk [vmem:[#allocation3 + $0x38] sm:$0xff] %vm675, %v1025
      %1071 = vst.msk [vmem:[#allocation3 + $0x50] sm:$0xff] %vm675, %v1027
      %1072 = vst.msk [vmem:[#allocation3 + $0x68] sm:$0xff] %vm675, %v1029
      %1073 = vst.msk [vmem:[#allocation3 + $0x80] sm:$0xff] %vm675, %v1031
      %1074 = vst.msk [vmem:[#allocation3 + $0x98] sm:$0xff] %vm675, %v1033
      %1075 = vst.msk [vmem:[#allocation3 + $0xb0] sm:$0xff] %vm675, %v1035
      %1076 = vst.msk [vmem:[#allocation3 + $0xc8] sm:$0xff] %vm675, %v1037
      %1077 = vst.msk [vmem:[#allocation3 + $0xe0] sm:$0xff] %vm675, %v1039
      %1078 = vst.msk [vmem:[#allocation3 + $0xf8] sm:$0xff] %vm675, %v1041
      %1079 = vst.msk [vmem:[#allocation3 + $0x110] sm:$0xff] %vm675, %v1043
      %1080 = vst.msk [vmem:[#allocation3 + $0x128] sm:$0xff] %vm675, %v1045
      %1081 = vst.msk [vmem:[#allocation3 + $0x140] sm:$0xff] %vm675, %v1047
      %1082 = vst.msk [vmem:[#allocation3 + $0x158] sm:$0xff] %vm675, %v1049
      %1083 = vst.msk [vmem:[#allocation3 + $0x170] sm:$0xff] %vm675, %v1051
      %v1084 = vpack.c.bf16 %v400, %v399
      %1086 = vrot.lane.b32.xlu0 %v404, 64
      %v1087 = vpop.permute.xlu0 %1086
      %1088 = vrot.lane.b32.xlu0 %v405, 64
      %v1089 = vpop.permute.xlu0 %1088
      %1090 = vrot.lane.b32.xlu0 %v406, 64
      %v1091 = vpop.permute.xlu0 %1090
      %1092 = vrot.lane.b32.xlu0 %v407, 64
      %v1093 = vpop.permute.xlu0 %1092
      %1094 = vrot.lane.b32.xlu0 %v408, 64
      %v1095 = vpop.permute.xlu0 %1094
      %1096 = vrot.lane.b32.xlu0 %v409, 64
      %v1097 = vpop.permute.xlu0 %1096
      %1098 = vrot.lane.b32.xlu0 %v410, 64
      %v1099 = vpop.permute.xlu0 %1098
      %1100 = vrot.lane.b32.xlu0 %v411, 64
      %v1101 = vpop.permute.xlu0 %1100
      %1102 = vrot.lane.b32.xlu0 %v412, 64
      %v1103 = vpop.permute.xlu0 %1102
      %1104 = vrot.lane.b32.xlu0 %v413, 64
      %v1105 = vpop.permute.xlu0 %1104
      %1106 = vrot.lane.b32.xlu0 %v414, 64
      %v1107 = vpop.permute.xlu0 %1106
      %1108 = vrot.lane.b32.xlu0 %v415, 64
      %v1109 = vpop.permute.xlu0 %1108
      %1110 = vrot.lane.b32.xlu0 %v416, 64
      %v1111 = vpop.permute.xlu0 %1110
      %1112 = vrot.lane.b32.xlu0 %v417, 64
      %v1113 = vpop.permute.xlu0 %1112
      %1114 = vrot.lane.b32.xlu0 %v902, 64
      %v1115 = vpop.permute.xlu0 %1114
      %1116 = vrot.lane.b32.xlu0 %v1084, 64
      %v1117 = vpop.permute.xlu0 %1116
      %1134 = vst.msk [vmem:[#allocation3 + $0x8] sm:$0xff] %vm885, %v1087
      %1135 = vst.msk [vmem:[#allocation3 + $0x20] sm:$0xff] %vm885, %v1089
      %1136 = vst.msk [vmem:[#allocation3 + $0x38] sm:$0xff] %vm885, %v1091
      %1137 = vst.msk [vmem:[#allocation3 + $0x50] sm:$0xff] %vm885, %v1093
      %1138 = vst.msk [vmem:[#allocation3 + $0x68] sm:$0xff] %vm885, %v1095
      %1139 = vst.msk [vmem:[#allocation3 + $0x80] sm:$0xff] %vm885, %v1097
      %1140 = vst.msk [vmem:[#allocation3 + $0x98] sm:$0xff] %vm885, %v1099
      %1141 = vst.msk [vmem:[#allocation3 + $0xb0] sm:$0xff] %vm885, %v1101
      %1142 = vst.msk [vmem:[#allocation3 + $0xc8] sm:$0xff] %vm885, %v1103
      %1143 = vst.msk [vmem:[#allocation3 + $0xe0] sm:$0xff] %vm885, %v1105
      %1144 = vst.msk [vmem:[#allocation3 + $0xf8] sm:$0xff] %vm885, %v1107
      %1145 = vst.msk [vmem:[#allocation3 + $0x110] sm:$0xff] %vm885, %v1109
      %1146 = vst.msk [vmem:[#allocation3 + $0x128] sm:$0xff] %vm885, %v1111
      %1147 = vst.msk [vmem:[#allocation3 + $0x140] sm:$0xff] %vm885, %v1113
      %1148 = vst.msk [vmem:[#allocation3 + $0x158] sm:$0xff] %vm885, %v1115
      %1149 = vst.msk [vmem:[#allocation3 + $0x170] sm:$0xff] %vm885, %v1117
      %v1153 = vrot.slane %v399, 1
      %v1154 = vrot.slane %v400, 1
      %v1155 = vsel %vm482, %v1153, %v1154
      %v1156 = vrot.slane %v401, 1
      %v1157 = vsel %vm482, %v1154, %v1156
      %v1160 = vpack.c.bf16 %v1157, %v1155
      %1163 = vrot.lane.b32.xlu0 %v597, 96
      %v1164 = vpop.permute.xlu0 %1163
      %1165 = vrot.lane.b32.xlu0 %v598, 96
      %v1166 = vpop.permute.xlu0 %1165
      %1167 = vrot.lane.b32.xlu0 %v599, 96
      %v1168 = vpop.permute.xlu0 %1167
      %1169 = vrot.lane.b32.xlu0 %v600, 96
      %v1170 = vpop.permute.xlu0 %1169
      %1171 = vrot.lane.b32.xlu0 %v601, 96
      %v1172 = vpop.permute.xlu0 %1171
      %1173 = vrot.lane.b32.xlu0 %v602, 96
      %v1174 = vpop.permute.xlu0 %1173
      %1175 = vrot.lane.b32.xlu0 %v603, 96
      %v1176 = vpop.permute.xlu0 %1175
      %1177 = vrot.lane.b32.xlu0 %v604, 96
      %v1178 = vpop.permute.xlu0 %1177
      %1179 = vrot.lane.b32.xlu0 %v605, 96
      %v1180 = vpop.permute.xlu0 %1179
      %1181 = vrot.lane.b32.xlu0 %v606, 96
      %v1182 = vpop.permute.xlu0 %1181
      %1183 = vrot.lane.b32.xlu0 %v607, 96
      %v1184 = vpop.permute.xlu0 %1183
      %1185 = vrot.lane.b32.xlu0 %v608, 96
      %v1186 = vpop.permute.xlu0 %1185
      %1187 = vrot.lane.b32.xlu0 %v609, 96
      %v1188 = vpop.permute.xlu0 %1187
      %1189 = vrot.lane.b32.xlu0 %v610, 96
      %v1190 = vpop.permute.xlu0 %1189
      %1191 = vrot.lane.b32.xlu0 %v994, 96
      %v1192 = vpop.permute.xlu0 %1191
      %1193 = vrot.lane.b32.xlu0 %v1160, 96
      %v1194 = vpop.permute.xlu0 %1193
      %1211 = vst.msk [vmem:[#allocation3 + $0x8] sm:$0xff] %vm967, %v1164
      %1212 = vst.msk [vmem:[#allocation3 + $0x20] sm:$0xff] %vm967, %v1166
      %1213 = vst.msk [vmem:[#allocation3 + $0x38] sm:$0xff] %vm967, %v1168
      %1214 = vst.msk [vmem:[#allocation3 + $0x50] sm:$0xff] %vm967, %v1170
      %1215 = vst.msk [vmem:[#allocation3 + $0x68] sm:$0xff] %vm967, %v1172
      %1216 = vst.msk [vmem:[#allocation3 + $0x80] sm:$0xff] %vm967, %v1174
      %1217 = vst.msk [vmem:[#allocation3 + $0x98] sm:$0xff] %vm967, %v1176
      %1218 = vst.msk [vmem:[#allocation3 + $0xb0] sm:$0xff] %vm967, %v1178
      %1219 = vst.msk [vmem:[#allocation3 + $0xc8] sm:$0xff] %vm967, %v1180
      %1220 = vst.msk [vmem:[#allocation3 + $0xe0] sm:$0xff] %vm967, %v1182
      %1221 = vst.msk [vmem:[#allocation3 + $0xf8] sm:$0xff] %vm967, %v1184
      %1222 = vst.msk [vmem:[#allocation3 + $0x110] sm:$0xff] %vm967, %v1186
      %1223 = vst.msk [vmem:[#allocation3 + $0x128] sm:$0xff] %vm967, %v1188
      %1224 = vst.msk [vmem:[#allocation3 + $0x140] sm:$0xff] %vm967, %v1190
      %1225 = vst.msk [vmem:[#allocation3 + $0x158] sm:$0xff] %vm967, %v1192
      %1226 = vst.msk [vmem:[#allocation3 + $0x170] sm:$0xff] %vm967, %v1194
      %v1227 = vrot.slane %v399, 2
      %v1228 = vrot.slane %v400, 2
      %v1229 = vsel %vm692, %v1227, %v1228
      %v1230 = vrot.slane %v401, 2
      %v1231 = vsel %vm692, %v1228, %v1230
      %v1234 = vpack.c.bf16 %v1231, %v1229
      %1235 = vst.msk [vmem:[#allocation3 + $0x10] sm:$0xff] %vm226, %v807
      %1236 = vst.msk [vmem:[#allocation3 + $0x28] sm:$0xff] %vm226, %v808
      %1237 = vst.msk [vmem:[#allocation3 + $0x40] sm:$0xff] %vm226, %v809
      %1238 = vst.msk [vmem:[#allocation3 + $0x58] sm:$0xff] %vm226, %v810
      %1239 = vst.msk [vmem:[#allocation3 + $0x70] sm:$0xff] %vm226, %v811
      %1240 = vst.msk [vmem:[#allocation3 + $0x88] sm:$0xff] %vm226, %v812
      %1241 = vst.msk [vmem:[#allocation3 + $0xa0] sm:$0xff] %vm226, %v813
      %1242 = vst.msk [vmem:[#allocation3 + $0xb8] sm:$0xff] %vm226, %v814
      %1243 = vst.msk [vmem:[#allocation3 + $0xd0] sm:$0xff] %vm226, %v815
      %1244 = vst.msk [vmem:[#allocation3 + $0xe8] sm:$0xff] %vm226, %v816
      %1245 = vst.msk [vmem:[#allocation3 + $0x100] sm:$0xff] %vm226, %v817
      %1246 = vst.msk [vmem:[#allocation3 + $0x118] sm:$0xff] %vm226, %v818
      %1247 = vst.msk [vmem:[#allocation3 + $0x130] sm:$0xff] %vm226, %v819
      %1248 = vst.msk [vmem:[#allocation3 + $0x148] sm:$0xff] %vm226, %v820
      %1249 = vst.msk [vmem:[#allocation3 + $0x160] sm:$0xff] %vm226, %v1018
      %1250 = vst.msk [vmem:[#allocation3 + $0x178] sm:$0xff] %vm226, %v1234
      %v1251 = vld [vmem:[#allocation3] sm:$0xff]
      %v1252 = vld [vmem:[#allocation3 + $0x8] sm:$0xff]
      %v1253 = vld [vmem:[#allocation3 + $0x10] sm:$0xff]
      %v1254 = vld [vmem:[#allocation3 + $0x18] sm:$0xff]
      %v1255 = vld [vmem:[#allocation3 + $0x20] sm:$0xff]
      %v1256 = vld [vmem:[#allocation3 + $0x28] sm:$0xff]
      %v1257 = vld [vmem:[#allocation3 + $0x30] sm:$0xff]
      %v1258 = vld [vmem:[#allocation3 + $0x38] sm:$0xff]
      %v1259 = vld [vmem:[#allocation3 + $0x40] sm:$0xff]
      %v1260 = vld [vmem:[#allocation3 + $0x48] sm:$0xff]
      %v1261 = vld [vmem:[#allocation3 + $0x50] sm:$0xff]
      %v1262 = vld [vmem:[#allocation3 + $0x58] sm:$0xff]
      %v1263 = vld [vmem:[#allocation3 + $0x60] sm:$0xff]
      %v1264 = vld [vmem:[#allocation3 + $0x68] sm:$0xff]
      %v1265 = vld [vmem:[#allocation3 + $0x70] sm:$0xff]
      %v1266 = vld [vmem:[#allocation3 + $0x78] sm:$0xff]
      %v1267 = vld [vmem:[#allocation3 + $0x80] sm:$0xff]
      %v1268 = vld [vmem:[#allocation3 + $0x88] sm:$0xff]
      %v1269 = vld [vmem:[#allocation3 + $0x90] sm:$0xff]
      %v1270 = vld [vmem:[#allocation3 + $0x98] sm:$0xff]
      %v1271 = vld [vmem:[#allocation3 + $0xa0] sm:$0xff]
      %v1272 = vld [vmem:[#allocation3 + $0xa8] sm:$0xff]
      %v1273 = vld [vmem:[#allocation3 + $0xb0] sm:$0xff]
      %v1274 = vld [vmem:[#allocation3 + $0xb8] sm:$0xff]
      %v1275 = vld [vmem:[#allocation3 + $0xc0] sm:$0xff]
      %v1276 = vld [vmem:[#allocation3 + $0xc8] sm:$0xff]
      %v1277 = vld [vmem:[#allocation3 + $0xd0] sm:$0xff]
      %v1278 = vld [vmem:[#allocation3 + $0xd8] sm:$0xff]
      %v1279 = vld [vmem:[#allocation3 + $0xe0] sm:$0xff]
      %v1280 = vld [vmem:[#allocation3 + $0xe8] sm:$0xff]
      %v1281 = vld [vmem:[#allocation3 + $0xf0] sm:$0xff]
      %v1282 = vld [vmem:[#allocation3 + $0xf8] sm:$0xff]
      %v1283 = vld [vmem:[#allocation3 + $0x100] sm:$0xff]
      %v1284 = vld [vmem:[#allocation3 + $0x108] sm:$0xff]
      %v1285 = vld [vmem:[#allocation3 + $0x110] sm:$0xff]
      %v1286 = vld [vmem:[#allocation3 + $0x118] sm:$0xff]
      %v1287 = vld [vmem:[#allocation3 + $0x120] sm:$0xff]
      %v1288 = vld [vmem:[#allocation3 + $0x128] sm:$0xff]
      %v1289 = vld [vmem:[#allocation3 + $0x130] sm:$0xff]
      %v1290 = vld [vmem:[#allocation3 + $0x138] sm:$0xff]
      %v1291 = vld [vmem:[#allocation3 + $0x140] sm:$0xff]
      %v1292 = vld [vmem:[#allocation3 + $0x148] sm:$0xff]
      %v1293 = vld [vmem:[#allocation3 + $0x150] sm:$0xff]
      %v1294 = vld [vmem:[#allocation3 + $0x158] sm:$0xff]
      %v1295 = vld [vmem:[#allocation3 + $0x160] sm:$0xff]
      %v1296 = vld [vmem:[#allocation3 + $0x168] sm:$0xff]
      %v1297 = vld [vmem:[#allocation3 + $0x170] sm:$0xff]
      %v1298 = vld [vmem:[#allocation3 + $0x178] sm:$0xff]
      %v1299 = vld [vmem:[%s1] sm:$0xf]
      %v1300 = vld [vmem:[%s1 + $0x4] sm:$0xf]
      %v1301 = vld [vmem:[%s1 + $0x8] sm:$0xf]
      %v1302 = vld [vmem:[%s1 + $0xc] sm:$0xf]
      %v1303 = vld [vmem:[%s1 + $0x10] sm:$0xf]
      %v1304 = vld [vmem:[%s1 + $0x14] sm:$0xf]
      %v1305 = vld [vmem:[%s1 + $0x18] sm:$0xf]
      %v1306 = vld [vmem:[%s1 + $0x1c] sm:$0xf]
      %v1307 = vld [vmem:[%s1 + $0x20] sm:$0xf]
      %v1308 = vld [vmem:[%s1 + $0x24] sm:$0xf]
      %v1309 = vld [vmem:[%s1 + $0x28] sm:$0xf]
      %v1310 = vld [vmem:[%s1 + $0x2c] sm:$0xf]
      %v1311 = vld [vmem:[%s1 + $0x30] sm:$0xf]
      %v1312 = vld [vmem:[%s1 + $0x34] sm:$0xf]
      %v1313 = vld [vmem:[%s1 + $0x38] sm:$0xf]
      %v1314 = vld [vmem:[%s1 + $0x3c] sm:$0xf]
      %v1315 = vld [vmem:[%s1 + $0x40] sm:$0xf]
      %v1316 = vld [vmem:[%s1 + $0x44] sm:$0xf]
      %v1317 = vld [vmem:[%s1 + $0x48] sm:$0xf]
      %v1318 = vld [vmem:[%s1 + $0x4c] sm:$0xf]
      %v1319 = vld [vmem:[%s1 + $0x50] sm:$0xf]
      %v1320 = vld [vmem:[%s1 + $0x54] sm:$0xf]
      %v1321 = vld [vmem:[%s1 + $0x58] sm:$0xf]
      %v1322 = vld [vmem:[%s1 + $0x5c] sm:$0xf]
      %v1323 = vld [vmem:[%s1 + $0x60] sm:$0xf]
      %v1324 = vld [vmem:[%s1 + $0x64] sm:$0xf]
      %v1325 = vld [vmem:[%s1 + $0x68] sm:$0xf]
      %v1326 = vld [vmem:[%s1 + $0x6c] sm:$0xf]
      %v1327 = vld [vmem:[%s1 + $0x70] sm:$0xf]
      %v1328 = vld [vmem:[%s1 + $0x74] sm:$0xf]
      %v1329 = vld [vmem:[%s1 + $0x78] sm:$0xf]
      %v1330 = vld [vmem:[%s1 + $0x7c] sm:$0xf]
      %v1331 = vld [vmem:[%s1 + $0x80] sm:$0xf]
      %v1332 = vld [vmem:[%s1 + $0x84] sm:$0xf]
      %v1333 = vld [vmem:[%s1 + $0x88] sm:$0xf]
      %v1334 = vld [vmem:[%s1 + $0x8c] sm:$0xf]
      %v1335 = vld [vmem:[%s2] sm:$0x1]
      %v1337 = vlaneseq
      %v1338 = vshrl.u32 %v1337, 7
      %v1339 = vsub.s32 0, %v1338
      %v1340 = vrot.slane %v1335, %v1339
      %v1378 = vunpack.c.l.b16 %v1299
      %v1379 = vunpack.c.l.b16 %v1300
      %v1380 = vunpack.c.l.b16 %v1301
      %v1381 = vunpack.c.l.b16 %v1302
      %v1382 = vunpack.c.l.b16 %v1303
      %v1383 = vunpack.c.l.b16 %v1304
      %v1384 = vunpack.c.l.b16 %v1305
      %v1385 = vunpack.c.l.b16 %v1306
      %v1386 = vunpack.c.l.b16 %v1307
      %v1387 = vunpack.c.l.b16 %v1308
      %v1388 = vunpack.c.l.b16 %v1309
      %v1389 = vunpack.c.l.b16 %v1310
      %v1390 = vunpack.c.l.b16 %v1311
      %v1391 = vunpack.c.l.b16 %v1312
      %v1392 = vunpack.c.l.b16 %v1313
      %v1393 = vunpack.c.l.b16 %v1314
      %v1394 = vunpack.c.l.b16 %v1315
      %v1395 = vunpack.c.l.b16 %v1316
      %v1396 = vunpack.c.l.b16 %v1317
      %v1397 = vunpack.c.l.b16 %v1318
      %v1398 = vunpack.c.l.b16 %v1319
      %v1399 = vunpack.c.l.b16 %v1320
      %v1400 = vunpack.c.l.b16 %v1321
      %v1401 = vunpack.c.l.b16 %v1322
      %v1402 = vunpack.c.l.b16 %v1323
      %v1403 = vunpack.c.l.b16 %v1324
      %v1404 = vunpack.c.l.b16 %v1325
      %v1405 = vunpack.c.l.b16 %v1326
      %v1406 = vunpack.c.l.b16 %v1327
      %v1407 = vunpack.c.l.b16 %v1328
      %v1408 = vunpack.c.l.b16 %v1329
      %v1409 = vunpack.c.l.b16 %v1330
      %v1410 = vunpack.c.l.b16 %v1331
      %v1411 = vunpack.c.l.b16 %v1332
      %v1412 = vunpack.c.l.b16 %v1333
      %v1413 = vunpack.c.l.b16 %v1334
      %v1414 = vpack.c.b16 %v1379, %v1378
      %v1415 = vpack.c.b16 %v1381, %v1380
      %v1416 = vpack.c.b16 %v1383, %v1382
      %v1417 = vpack.c.b16 %v1385, %v1384
      %v1418 = vpack.c.b16 %v1387, %v1386
      %v1419 = vpack.c.b16 %v1389, %v1388
      %v1420 = vpack.c.b16 %v1391, %v1390
      %v1421 = vpack.c.b16 %v1393, %v1392
      %v1422 = vpack.c.b16 %v1395, %v1394
      %v1423 = vpack.c.b16 %v1397, %v1396
      %v1424 = vpack.c.b16 %v1399, %v1398
      %v1425 = vpack.c.b16 %v1401, %v1400
      %v1426 = vpack.c.b16 %v1403, %v1402
      %v1427 = vpack.c.b16 %v1405, %v1404
      %v1428 = vpack.c.b16 %v1407, %v1406
      %v1429 = vpack.c.b16 %v1409, %v1408
      %v1430 = vpack.c.b16 %v1411, %v1410
      %v1431 = vpack.c.b16 %v1413, %v1412
      %v1451 = vsel %vm226, %v1253, 0
      %v1454 = vsel %vm226, %v1256, 0
      %v1457 = vsel %vm226, %v1259, 0
      %v1460 = vsel %vm226, %v1262, 0
      %v1463 = vsel %vm226, %v1265, 0
      %v1466 = vsel %vm226, %v1268, 0
      %v1469 = vsel %vm226, %v1271, 0
      %v1472 = vsel %vm226, %v1274, 0
      %v1475 = vsel %vm226, %v1277, 0
      %v1478 = vsel %vm226, %v1280, 0
      %v1481 = vsel %vm226, %v1283, 0
      %v1484 = vsel %vm226, %v1286, 0
      %v1487 = vsel %vm226, %v1289, 0
      %v1490 = vsel %vm226, %v1292, 0
      %v1493 = vsel %vm226, %v1295, 0
      %v1496 = vsel %vm226, %v1298, 0
      %1498 = vmatprep.subr.bf16.mxu0 0
      %1499 = vmatpush1.bf16.msra.mxu0 %v1414
      %1500 = vmatprep.subr.bf16.mxu0 0
      %1501 = vmatpush1.bf16.msra.mxu0 %v1415
      %1502 = vmatprep.subr.bf16.mxu0 0
      %1503 = vmatpush1.bf16.msra.mxu0 %v1416
      %1504 = vmatprep.subr.bf16.mxu0 0
      %1505 = vmatpush1.bf16.msra.mxu0 %v1417
      %1506 = vmatprep.subr.bf16.mxu0 0
      %1507 = vmatpush1.bf16.msra.mxu0 %v1418
      %1508 = vmatprep.subr.bf16.mxu0 0
      %1509 = vmatpush1.bf16.msra.mxu0 %v1419
      %1510 = vmatprep.subr.bf16.mxu0 0
      %1511 = vmatpush1.bf16.msra.mxu0 %v1420
      %1512 = vmatprep.subr.bf16.mxu0 0
      %1513 = vmatpush1.bf16.msra.mxu0 %v1421
      %1514 = vmatprep.subr.bf16.mxu0 0
      %1515 = vmatpush1.bf16.msra.mxu0 %v1422
      %1516 = vmatprep.subr.bf16.mxu0 0
      %1517 = vmatpush1.bf16.msra.mxu0 %v1423
      %1518 = vmatprep.subr.bf16.mxu0 0
      %1519 = vmatpush1.bf16.msra.mxu0 %v1424
      %1520 = vmatprep.subr.bf16.mxu0 0
      %1521 = vmatpush1.bf16.msra.mxu0 %v1425
      %1522 = vmatprep.subr.bf16.mxu0 0
      %1523 = vmatpush1.bf16.msra.mxu0 %v1426
      %1524 = vmatprep.subr.bf16.mxu0 0
      %1525 = vmatpush1.bf16.msra.mxu0 %v1427
      %1526 = vmatprep.subr.bf16.mxu0 0
      %1527 = vmatpush1.bf16.msra.mxu0 %v1428
      %1528 = vmatprep.subr.bf16.mxu0 0
      %1529 = vmatpush1.bf16.msra.mxu0 %v1429
      %1530 = vmatprep.mubr.bf16.mxu0 %v1252
      %1531 = vmatmul.mubr.bf16.gmra.mrb[0].mxu0 %v1251
      %v1532 = vpop.f32.mrb[0].mxu0
      %v1533 = vadd.f32 %v1340, %v1532
      %v1534 = vpop.f32.mrb[0].mxu0
      %v1535 = vpop.f32.mrb[0].mxu0
      %v1536 = vadd.f32 %v1340, %v1535
      %v1537 = vpop.f32.mrb[0].mxu0
      %1538 = vmatprep.mubr.bf16.mxu0 %v1255
      %1539 = vmatmul.mubr.bf16.gmra.mrb[0].mxu0 %v1254
      %v1540 = vpop.f32.mrb[0].mxu0
      %v1541 = vadd.f32 %v1340, %v1540
      %v1542 = vpop.f32.mrb[0].mxu0
      %v1543 = vpop.f32.mrb[0].mxu0
      %v1544 = vadd.f32 %v1340, %v1543
      %v1545 = vpop.f32.mrb[0].mxu0
      %1546 = vmatprep.mubr.bf16.mxu0 %v1258
      %1547 = vmatmul.mubr.bf16.gmra.mrb[0].mxu0 %v1257
      %v1548 = vpop.f32.mrb[0].mxu0
      %v1549 = vadd.f32 %v1340, %v1548
      %v1550 = vpop.f32.mrb[0].mxu0
      %v1551 = vpop.f32.mrb[0].mxu0
      %v1552 = vadd.f32 %v1340, %v1551
      %v1553 = vpop.f32.mrb[0].mxu0
      %1554 = vmatprep.mubr.bf16.mxu0 %v1261
      %1555 = vmatmul.mubr.bf16.gmra.mrb[0].mxu0 %v1260
      %v1556 = vpop.f32.mrb[0].mxu0
      %v1557 = vadd.f32 %v1340, %v1556
      %v1558 = vpop.f32.mrb[0].mxu0
      %v1559 = vpop.f32.mrb[0].mxu0
      %v1560 = vadd.f32 %v1340, %v1559
      %v1561 = vpop.f32.mrb[0].mxu0
      %1562 = vmatprep.mubr.bf16.mxu0 %v1264
      %1563 = vmatmul.mubr.bf16.gmra.mrb[0].mxu0 %v1263
      %v1564 = vpop.f32.mrb[0].mxu0
      %v1565 = vadd.f32 %v1340, %v1564
      %v1566 = vpop.f32.mrb[0].mxu0
      %v1567 = vpop.f32.mrb[0].mxu0
      %v1568 = vadd.f32 %v1340, %v1567
      %v1569 = vpop.f32.mrb[0].mxu0
      %1570 = vmatprep.mubr.bf16.mxu0 %v1267
      %1571 = vmatmul.mubr.bf16.gmra.mrb[0].mxu0 %v1266
      %v1572 = vpop.f32.mrb[0].mxu0
      %v1573 = vadd.f32 %v1340, %v1572
      %v1574 = vpop.f32.mrb[0].mxu0
      %v1575 = vpop.f32.mrb[0].mxu0
      %v1576 = vadd.f32 %v1340, %v1575
      %v1577 = vpop.f32.mrb[0].mxu0
      %1578 = vmatprep.mubr.bf16.mxu0 %v1270
      %1579 = vmatmul.mubr.bf16.gmra.mrb[0].mxu0 %v1269
      %v1580 = vpop.f32.mrb[0].mxu0
      %v1581 = vadd.f32 %v1340, %v1580
      %v1582 = vpop.f32.mrb[0].mxu0
      %v1583 = vpop.f32.mrb[0].mxu0
      %v1584 = vadd.f32 %v1340, %v1583
      %v1585 = vpop.f32.mrb[0].mxu0
      %1586 = vmatprep.mubr.bf16.mxu0 %v1273
      %1587 = vmatmul.mubr.bf16.gmra.mrb[0].mxu0 %v1272
      %v1588 = vpop.f32.mrb[0].mxu0
      %v1589 = vadd.f32 %v1340, %v1588
      %v1590 = vpop.f32.mrb[0].mxu0
      %v1591 = vpop.f32.mrb[0].mxu0
      %v1592 = vadd.f32 %v1340, %v1591
      %v1593 = vpop.f32.mrb[0].mxu0
      %1594 = vmatprep.mubr.bf16.mxu0 %v1276
      %1595 = vmatmul.mubr.bf16.gmra.mrb[0].mxu0 %v1275
      %v1596 = vpop.f32.mrb[0].mxu0
      %v1597 = vadd.f32 %v1340, %v1596
      %v1598 = vpop.f32.mrb[0].mxu0
      %v1599 = vpop.f32.mrb[0].mxu0
      %v1600 = vadd.f32 %v1340, %v1599
      %v1601 = vpop.f32.mrb[0].mxu0
      %1602 = vmatprep.mubr.bf16.mxu0 %v1279
      %1603 = vmatmul.mubr.bf16.gmra.mrb[0].mxu0 %v1278
      %v1604 = vpop.f32.mrb[0].mxu0
      %v1605 = vadd.f32 %v1340, %v1604
      %v1606 = vpop.f32.mrb[0].mxu0
      %v1607 = vpop.f32.mrb[0].mxu0
      %v1608 = vadd.f32 %v1340, %v1607
      %v1609 = vpop.f32.mrb[0].mxu0
      %1610 = vmatprep.mubr.bf16.mxu0 %v1282
      %1611 = vmatmul.mubr.bf16.gmra.mrb[0].mxu0 %v1281
      %v1612 = vpop.f32.mrb[0].mxu0
      %v1613 = vadd.f32 %v1340, %v1612
      %v1614 = vpop.f32.mrb[0].mxu0
      %v1615 = vpop.f32.mrb[0].mxu0
      %v1616 = vadd.f32 %v1340, %v1615
      %v1617 = vpop.f32.mrb[0].mxu0
      %1618 = vmatprep.mubr.bf16.mxu0 %v1285
      %1619 = vmatmul.mubr.bf16.gmra.mrb[0].mxu0 %v1284
      %v1620 = vpop.f32.mrb[0].mxu0
      %v1621 = vadd.f32 %v1340, %v1620
      %v1622 = vpop.f32.mrb[0].mxu0
      %v1623 = vpop.f32.mrb[0].mxu0
      %v1624 = vadd.f32 %v1340, %v1623
      %v1625 = vpop.f32.mrb[0].mxu0
      %1626 = vmatprep.mubr.bf16.mxu0 %v1288
      %1627 = vmatmul.mubr.bf16.gmra.mrb[0].mxu0 %v1287
      %v1628 = vpop.f32.mrb[0].mxu0
      %v1629 = vadd.f32 %v1340, %v1628
      %v1630 = vpop.f32.mrb[0].mxu0
      %v1631 = vpop.f32.mrb[0].mxu0
      %v1632 = vadd.f32 %v1340, %v1631
      %v1633 = vpop.f32.mrb[0].mxu0
      %1634 = vmatprep.mubr.bf16.mxu0 %v1291
      %1635 = vmatmul.mubr.bf16.gmra.mrb[0].mxu0 %v1290
      %v1636 = vpop.f32.mrb[0].mxu0
      %v1637 = vadd.f32 %v1340, %v1636
      %v1638 = vpop.f32.mrb[0].mxu0
      %v1639 = vpop.f32.mrb[0].mxu0
      %v1640 = vadd.f32 %v1340, %v1639
      %v1641 = vpop.f32.mrb[0].mxu0
      %1642 = vmatprep.mubr.bf16.mxu0 %v1294
      %1643 = vmatmul.mubr.bf16.gmra.mrb[0].mxu0 %v1293
      %v1644 = vpop.f32.mrb[0].mxu0
      %v1645 = vadd.f32 %v1340, %v1644
      %v1646 = vpop.f32.mrb[0].mxu0
      %v1647 = vpop.f32.mrb[0].mxu0
      %v1648 = vadd.f32 %v1340, %v1647
      %v1649 = vpop.f32.mrb[0].mxu0
      %1650 = vmatprep.mubr.bf16.mxu0 %v1297
      %1651 = vmatmul.mubr.bf16.gmra.mrb[0].mxu0 %v1296
      %v1652 = vpop.f32.mrb[0].mxu0
      %v1653 = vadd.f32 %v1340, %v1652
      %v1654 = vpop.f32.mrb[0].mxu0
      %v1655 = vpop.f32.mrb[0].mxu0
      %v1656 = vadd.f32 %v1340, %v1655
      %v1657 = vpop.f32.mrb[0].mxu0
      %1658 = vdwg.mxu0
      %1659 = vmatprep.subr.bf16.mxu0 0
      %1660 = vmatpush1.bf16.msra.mxu0 %v1430
      %1661 = vmatprep.subr.bf16.mxu0 0
      %1662 = vmatpush1.bf16.msra.mxu0 %v1431
      %1663 = vmatprep.subr.bf16.mxu0 0
      %1664 = vmatpush1.bf16.msra.mxu0 0
      %1665 = vmatprep.subr.bf16.mxu0 0
      %1666 = vmatpush1.bf16.msra.mxu0 0
      %1667 = vmatprep.subr.bf16.mxu0 0
      %1668 = vmatpush1.bf16.msra.mxu0 0
      %1669 = vmatprep.subr.bf16.mxu0 0
      %1670 = vmatpush1.bf16.msra.mxu0 0
      %1671 = vmatprep.subr.bf16.mxu0 0
      %1672 = vmatpush1.bf16.msra.mxu0 0
      %1673 = vmatprep.subr.bf16.mxu0 0
      %1674 = vmatpush1.bf16.msra.mxu0 0
      %1675 = vmatprep.subr.bf16.mxu0 0
      %1676 = vmatpush1.bf16.msra.mxu0 0
      %1677 = vmatprep.subr.bf16.mxu0 0
      %1678 = vmatpush1.bf16.msra.mxu0 0
      %1679 = vmatprep.subr.bf16.mxu0 0
      %1680 = vmatpush1.bf16.msra.mxu0 0
      %1681 = vmatprep.subr.bf16.mxu0 0
      %1682 = vmatpush1.bf16.msra.mxu0 0
      %1683 = vmatprep.subr.bf16.mxu0 0
      %1684 = vmatpush1.bf16.msra.mxu0 0
      %1685 = vmatprep.subr.bf16.mxu0 0
      %1686 = vmatpush1.bf16.msra.mxu0 0
      %1687 = vmatprep.subr.bf16.mxu0 0
      %1688 = vmatpush1.bf16.msra.mxu0 0
      %1689 = vmatprep.subr.bf16.mxu0 0
      %1690 = vmatpush1.bf16.msra.mxu0 0
      %1691 = vmatprep.mubr.bf16.mxu0 0
      %1692 = vmatmul.mubr.bf16.gmra.mrb[0].mxu0 %v1451
      %v1693 = vpop.f32.mrb[0].mxu0
      %v1694 = vadd.f32 %v1533, %v1693
      %v1695 = vpop.f32.mrb[0].mxu0
      %v1696 = vpop.f32.mrb[0].mxu0
      %v1697 = vadd.f32 %v1536, %v1696
      %v1698 = vpop.f32.mrb[0].mxu0
      %1699 = vmatprep.mubr.bf16.mxu0 0
      %1700 = vmatmul.mubr.bf16.gmra.mrb[0].mxu0 %v1454
      %v1701 = vpop.f32.mrb[0].mxu0
      %v1702 = vadd.f32 %v1541, %v1701
      %v1703 = vpop.f32.mrb[0].mxu0
      %v1704 = vpop.f32.mrb[0].mxu0
      %v1705 = vadd.f32 %v1544, %v1704
      %v1706 = vpop.f32.mrb[0].mxu0
      %1707 = vmatprep.mubr.bf16.mxu0 0
      %1708 = vmatmul.mubr.bf16.gmra.mrb[0].mxu0 %v1457
      %v1709 = vpop.f32.mrb[0].mxu0
      %v1710 = vadd.f32 %v1549, %v1709
      %v1711 = vpop.f32.mrb[0].mxu0
      %v1712 = vpop.f32.mrb[0].mxu0
      %v1713 = vadd.f32 %v1552, %v1712
      %v1714 = vpop.f32.mrb[0].mxu0
      %1715 = vmatprep.mubr.bf16.mxu0 0
      %1716 = vmatmul.mubr.bf16.gmra.mrb[0].mxu0 %v1460
      %v1717 = vpop.f32.mrb[0].mxu0
      %v1718 = vadd.f32 %v1557, %v1717
      %v1719 = vpop.f32.mrb[0].mxu0
      %v1720 = vpop.f32.mrb[0].mxu0
      %v1721 = vadd.f32 %v1560, %v1720
      %v1722 = vpop.f32.mrb[0].mxu0
      %1723 = vmatprep.mubr.bf16.mxu0 0
      %1724 = vmatmul.mubr.bf16.gmra.mrb[0].mxu0 %v1463
      %v1725 = vpop.f32.mrb[0].mxu0
      %v1726 = vadd.f32 %v1565, %v1725
      %v1727 = vpop.f32.mrb[0].mxu0
      %v1728 = vpop.f32.mrb[0].mxu0
      %v1729 = vadd.f32 %v1568, %v1728
      %v1730 = vpop.f32.mrb[0].mxu0
      %1731 = vmatprep.mubr.bf16.mxu0 0
      %1732 = vmatmul.mubr.bf16.gmra.mrb[0].mxu0 %v1466
      %v1733 = vpop.f32.mrb[0].mxu0
      %v1734 = vadd.f32 %v1573, %v1733
      %v1735 = vpop.f32.mrb[0].mxu0
      %v1736 = vpop.f32.mrb[0].mxu0
      %v1737 = vadd.f32 %v1576, %v1736
      %v1738 = vpop.f32.mrb[0].mxu0
      %1739 = vmatprep.mubr.bf16.mxu0 0
      %1740 = vmatmul.mubr.bf16.gmra.mrb[0].mxu0 %v1469
      %v1741 = vpop.f32.mrb[0].mxu0
      %v1742 = vadd.f32 %v1581, %v1741
      %v1743 = vpop.f32.mrb[0].mxu0
      %v1744 = vpop.f32.mrb[0].mxu0
      %v1745 = vadd.f32 %v1584, %v1744
      %v1746 = vpop.f32.mrb[0].mxu0
      %1747 = vmatprep.mubr.bf16.mxu0 0
      %1748 = vmatmul.mubr.bf16.gmra.mrb[0].mxu0 %v1472
      %v1749 = vpop.f32.mrb[0].mxu0
      %v1750 = vadd.f32 %v1589, %v1749
      %v1751 = vpop.f32.mrb[0].mxu0
      %v1752 = vpop.f32.mrb[0].mxu0
      %v1753 = vadd.f32 %v1592, %v1752
      %v1754 = vpop.f32.mrb[0].mxu0
      %1755 = vmatprep.mubr.bf16.mxu0 0
      %1756 = vmatmul.mubr.bf16.gmra.mrb[0].mxu0 %v1475
      %v1757 = vpop.f32.mrb[0].mxu0
      %v1758 = vadd.f32 %v1597, %v1757
      %v1759 = vpop.f32.mrb[0].mxu0
      %v1760 = vpop.f32.mrb[0].mxu0
      %v1761 = vadd.f32 %v1600, %v1760
      %v1762 = vpop.f32.mrb[0].mxu0
      %1763 = vmatprep.mubr.bf16.mxu0 0
      %1764 = vmatmul.mubr.bf16.gmra.mrb[0].mxu0 %v1478
      %v1765 = vpop.f32.mrb[0].mxu0
      %v1766 = vadd.f32 %v1605, %v1765
      %v1767 = vpop.f32.mrb[0].mxu0
      %v1768 = vpop.f32.mrb[0].mxu0
      %v1769 = vadd.f32 %v1608, %v1768
      %v1770 = vpop.f32.mrb[0].mxu0
      %1771 = vmatprep.mubr.bf16.mxu0 0
      %1772 = vmatmul.mubr.bf16.gmra.mrb[0].mxu0 %v1481
      %v1773 = vpop.f32.mrb[0].mxu0
      %v1774 = vadd.f32 %v1613, %v1773
      %v1775 = vpop.f32.mrb[0].mxu0
      %v1776 = vpop.f32.mrb[0].mxu0
      %v1777 = vadd.f32 %v1616, %v1776
      %v1778 = vpop.f32.mrb[0].mxu0
      %1779 = vmatprep.mubr.bf16.mxu0 0
      %1780 = vmatmul.mubr.bf16.gmra.mrb[0].mxu0 %v1484
      %v1781 = vpop.f32.mrb[0].mxu0
      %v1782 = vadd.f32 %v1621, %v1781
      %v1783 = vpop.f32.mrb[0].mxu0
      %v1784 = vpop.f32.mrb[0].mxu0
      %v1785 = vadd.f32 %v1624, %v1784
      %v1786 = vpop.f32.mrb[0].mxu0
      %1787 = vmatprep.mubr.bf16.mxu0 0
      %1788 = vmatmul.mubr.bf16.gmra.mrb[0].mxu0 %v1487
      %v1789 = vpop.f32.mrb[0].mxu0
      %v1790 = vadd.f32 %v1629, %v1789
      %v1791 = vpop.f32.mrb[0].mxu0
      %v1792 = vpop.f32.mrb[0].mxu0
      %v1793 = vadd.f32 %v1632, %v1792
      %v1794 = vpop.f32.mrb[0].mxu0
      %1795 = vmatprep.mubr.bf16.mxu0 0
      %1796 = vmatmul.mubr.bf16.gmra.mrb[0].mxu0 %v1490
      %v1797 = vpop.f32.mrb[0].mxu0
      %v1798 = vadd.f32 %v1637, %v1797
      %v1799 = vpop.f32.mrb[0].mxu0
      %v1800 = vpop.f32.mrb[0].mxu0
      %v1801 = vadd.f32 %v1640, %v1800
      %v1802 = vpop.f32.mrb[0].mxu0
      %1803 = vmatprep.mubr.bf16.mxu0 0
      %1804 = vmatmul.mubr.bf16.gmra.mrb[0].mxu0 %v1493
      %v1805 = vpop.f32.mrb[0].mxu0
      %v1806 = vadd.f32 %v1645, %v1805
      %v1807 = vpop.f32.mrb[0].mxu0
      %v1808 = vpop.f32.mrb[0].mxu0
      %v1809 = vadd.f32 %v1648, %v1808
      %v1810 = vpop.f32.mrb[0].mxu0
      %1811 = vmatprep.mubr.bf16.mxu0 0
      %1812 = vmatmul.mubr.bf16.gmra.mrb[0].mxu0 %v1496
      %v1813 = vpop.f32.mrb[0].mxu0
      %v1814 = vadd.f32 %v1653, %v1813
      %v1815 = vpop.f32.mrb[0].mxu0
      %v1816 = vpop.f32.mrb[0].mxu0
      %v1817 = vadd.f32 %v1656, %v1816
      %v1818 = vpop.f32.mrb[0].mxu0
      %1819 = vdwg.mxu0
      %v1820 = vmax.f32 %v1694, 0.0
      %v1821 = vmax.f32 %v1697, 0.0
      %v1822 = vmax.f32 %v1702, 0.0
      %v1823 = vmax.f32 %v1705, 0.0
      %v1824 = vmax.f32 %v1710, 0.0
      %v1825 = vmax.f32 %v1713, 0.0
      %v1826 = vmax.f32 %v1718, 0.0
      %v1827 = vmax.f32 %v1721, 0.0
      %v1828 = vmax.f32 %v1726, 0.0
      %v1829 = vmax.f32 %v1729, 0.0
      %v1830 = vmax.f32 %v1734, 0.0
      %v1831 = vmax.f32 %v1737, 0.0
      %v1832 = vmax.f32 %v1742, 0.0
      %v1833 = vmax.f32 %v1745, 0.0
      %v1834 = vmax.f32 %v1750, 0.0
      %v1835 = vmax.f32 %v1753, 0.0
      %v1836 = vmax.f32 %v1758, 0.0
      %v1837 = vmax.f32 %v1761, 0.0
      %v1838 = vmax.f32 %v1766, 0.0
      %v1839 = vmax.f32 %v1769, 0.0
      %v1840 = vmax.f32 %v1774, 0.0
      %v1841 = vmax.f32 %v1777, 0.0
      %v1842 = vmax.f32 %v1782, 0.0
      %v1843 = vmax.f32 %v1785, 0.0
      %v1844 = vmax.f32 %v1790, 0.0
      %v1845 = vmax.f32 %v1793, 0.0
      %v1846 = vmax.f32 %v1798, 0.0
      %v1847 = vmax.f32 %v1801, 0.0
      %v1848 = vmax.f32 %v1806, 0.0
      %v1849 = vmax.f32 %v1809, 0.0
      %v1850 = vmax.f32 %v1814, 0.0
      %v1851 = vmax.f32 %v1817, 0.0
      %1852 = vst.msk [vmem:[%s314 + $0x1] sm:$0xff] %vm226, %v1820
      %1853 = vst.msk [vmem:[%s314 + $0x9] sm:$0xff] %vm226, %v1821
      %1854 = vst.msk [vmem:[%s314 + $0x19] sm:$0xff] %vm226, %v1822
      %1855 = vst.msk [vmem:[%s314 + $0x21] sm:$0xff] %vm226, %v1823
      %1856 = vst.msk [vmem:[%s314 + $0x31] sm:$0xff] %vm226, %v1824
      %1857 = vst.msk [vmem:[%s314 + $0x39] sm:$0xff] %vm226, %v1825
      %1858 = vst.msk [vmem:[%s314 + $0x49] sm:$0xff] %vm226, %v1826
      %1859 = vst.msk [vmem:[%s314 + $0x51] sm:$0xff] %vm226, %v1827
      %1860 = vst.msk [vmem:[%s314 + $0x61] sm:$0xff] %vm226, %v1828
      %1861 = vst.msk [vmem:[%s314 + $0x69] sm:$0xff] %vm226, %v1829
      %1862 = vst.msk [vmem:[%s314 + $0x79] sm:$0xff] %vm226, %v1830
      %1863 = vst.msk [vmem:[%s314 + $0x81] sm:$0xff] %vm226, %v1831
      %1864 = vst.msk [vmem:[%s314 + $0x91] sm:$0xff] %vm226, %v1832
      %1865 = vst.msk [vmem:[%s314 + $0x99] sm:$0xff] %vm226, %v1833
      %1866 = vst.msk [vmem:[%s314 + $0xa9] sm:$0xff] %vm226, %v1834
      %1867 = vst.msk [vmem:[%s314 + $0xb1] sm:$0xff] %vm226, %v1835
      %1868 = vst.msk [vmem:[%s314 + $0xc1] sm:$0xff] %vm226, %v1836
      %1869 = vst.msk [vmem:[%s314 + $0xc9] sm:$0xff] %vm226, %v1837
      %1870 = vst.msk [vmem:[%s314 + $0xd9] sm:$0xff] %vm226, %v1838
      %1871 = vst.msk [vmem:[%s314 + $0xe1] sm:$0xff] %vm226, %v1839
      %1872 = vst.msk [vmem:[%s314 + $0xf1] sm:$0xff] %vm226, %v1840
      %1873 = vst.msk [vmem:[%s314 + $0xf9] sm:$0xff] %vm226, %v1841
      %1874 = vst.msk [vmem:[%s314 + $0x109] sm:$0xff] %vm226, %v1842
      %1875 = vst.msk [vmem:[%s314 + $0x111] sm:$0xff] %vm226, %v1843
      %1876 = vst.msk [vmem:[%s314 + $0x121] sm:$0xff] %vm226, %v1844
      %1877 = vst.msk [vmem:[%s314 + $0x129] sm:$0xff] %vm226, %v1845
      %1878 = vst.msk [vmem:[%s314 + $0x139] sm:$0xff] %vm226, %v1846
      %1879 = vst.msk [vmem:[%s314 + $0x141] sm:$0xff] %vm226, %v1847
      %1880 = vst.msk [vmem:[%s314 + $0x151] sm:$0xff] %vm226, %v1848
      %1881 = vst.msk [vmem:[%s314 + $0x159] sm:$0xff] %vm226, %v1849
      %1882 = vst.msk [vmem:[%s314 + $0x169] sm:$0xff] %vm226, %v1850
      %1883 = vst.msk [vmem:[%s314 + $0x171] sm:$0xff] %vm226, %v1851
      %v1884 = vld [vmem:[#allocation2] sm:$0xff]
      %v1885 = vld [vmem:[#allocation2 + $0x8] sm:$0xff]
      %v1886 = vld [vmem:[#allocation2 + $0x10] sm:$0x3]
      %v1887 = vld [vmem:[#allocation2 + $0x18] sm:$0xff]
      %v1888 = vld [vmem:[#allocation2 + $0x20] sm:$0xff]
      %v1889 = vld [vmem:[#allocation2 + $0x28] sm:$0x3]
      %v1890 = vld [vmem:[#allocation2 + $0x30] sm:$0xff]
      %v1891 = vld [vmem:[#allocation2 + $0x38] sm:$0xff]
      %v1892 = vld [vmem:[#allocation2 + $0x40] sm:$0x3]
      %v1893 = vld [vmem:[#allocation2 + $0x48] sm:$0xff]
      %v1894 = vld [vmem:[#allocation2 + $0x50] sm:$0xff]
      %v1895 = vld [vmem:[#allocation2 + $0x58] sm:$0x3]
      %v1896 = vld [vmem:[#allocation2 + $0x60] sm:$0xff]
      %v1897 = vld [vmem:[#allocation2 + $0x68] sm:$0xff]
      %v1898 = vld [vmem:[#allocation2 + $0x70] sm:$0x3]
      %v1899 = vld [vmem:[#allocation2 + $0x78] sm:$0xff]
      %v1900 = vld [vmem:[#allocation2 + $0x80] sm:$0xff]
      %v1901 = vld [vmem:[#allocation2 + $0x88] sm:$0x3]
      %v1902 = vld [vmem:[#allocation2 + $0x90] sm:$0xff]
      %v1903 = vld [vmem:[#allocation2 + $0x98] sm:$0xff]
      %v1904 = vld [vmem:[#allocation2 + $0xa0] sm:$0x3]
      %v1905 = vld [vmem:[#allocation2 + $0xa8] sm:$0xff]
      %v1906 = vld [vmem:[#allocation2 + $0xb0] sm:$0xff]
      %v1907 = vld [vmem:[#allocation2 + $0xb8] sm:$0x3]
      %v1908 = vld [vmem:[#allocation2 + $0xc0] sm:$0xff]
      %v1909 = vld [vmem:[#allocation2 + $0xc8] sm:$0xff]
      %v1910 = vld [vmem:[#allocation2 + $0xd0] sm:$0x3]
      %v1911 = vld [vmem:[#allocation2 + $0xd8] sm:$0xff]
      %v1912 = vld [vmem:[#allocation2 + $0xe0] sm:$0xff]
      %v1913 = vld [vmem:[#allocation2 + $0xe8] sm:$0x3]
      %v1914 = vld [vmem:[#allocation2 + $0xf0] sm:$0xff]
      %v1915 = vld [vmem:[#allocation2 + $0xf8] sm:$0xff]
      %v1916 = vld [vmem:[#allocation2 + $0x100] sm:$0x3]
      %v1917 = vld [vmem:[#allocation2 + $0x108] sm:$0xff]
      %v1918 = vld [vmem:[#allocation2 + $0x110] sm:$0xff]
      %v1919 = vld [vmem:[#allocation2 + $0x118] sm:$0x3]
      %v1920 = vld [vmem:[#allocation2 + $0x120] sm:$0xff]
      %v1921 = vld [vmem:[#allocation2 + $0x128] sm:$0xff]
      %v1922 = vld [vmem:[#allocation2 + $0x130] sm:$0x3]
      %v1923 = vld [vmem:[#allocation2 + $0x138] sm:$0xff]
      %v1924 = vld [vmem:[#allocation2 + $0x140] sm:$0xff]
      %v1925 = vld [vmem:[#allocation2 + $0x148] sm:$0x3]
      %v1926 = vld [vmem:[#allocation2 + $0x150] sm:$0xff]
      %v1927 = vld [vmem:[#allocation2 + $0x158] sm:$0xff]
      %v1928 = vld [vmem:[#allocation2 + $0x160] sm:$0x3]
      %v1929 = vld [vmem:[#allocation2 + $0x168] sm:$0xff]
      %v1930 = vld [vmem:[#allocation2 + $0x170] sm:$0xff]
      %v1931 = vld [vmem:[#allocation2 + $0x178] sm:$0x3]
      %v1932 = vld [vmem:[#allocation2 + $0x180] sm:$0xff]
      %v1933 = vld [vmem:[#allocation2 + $0x188] sm:$0xff]
      %v1934 = vld [vmem:[#allocation2 + $0x190] sm:$0x3]
      %v1935 = vld [vmem:[#allocation2 + $0x198] sm:$0xff]
      %v1936 = vld [vmem:[#allocation2 + $0x1a0] sm:$0xff]
      %v1937 = vld [vmem:[#allocation2 + $0x1a8] sm:$0x3]
      %v1938 = vpack.c.bf16 %v1885, %v1884
      %v1939 = vpack.c.bf16 %v1888, %v1887
      %v1940 = vpack.c.bf16 %v1891, %v1890
      %v1941 = vpack.c.bf16 %v1894, %v1893
      %v1942 = vpack.c.bf16 %v1897, %v1896
      %v1943 = vpack.c.bf16 %v1900, %v1899
      %v1944 = vpack.c.bf16 %v1903, %v1902
      %v1945 = vpack.c.bf16 %v1906, %v1905
      %v1946 = vpack.c.bf16 %v1909, %v1908
      %v1947 = vpack.c.bf16 %v1912, %v1911
      %v1948 = vpack.c.bf16 %v1915, %v1914
      %v1949 = vpack.c.bf16 %v1918, %v1917
      %v1950 = vpack.c.bf16 %v1921, %v1920
      %v1951 = vpack.c.bf16 %v1924, %v1923
      %v1952 = vpack.c.bf16 %v1927, %v1926
      %v1953 = vpack.c.bf16 %v1930, %v1929
      %1954 = vst.msk [vmem:[#allocation3] sm:$0xff] %vm226, %v1938
      %1955 = vst.msk [vmem:[#allocation3 + $0x18] sm:$0xff] %vm226, %v1939
      %1956 = vst.msk [vmem:[#allocation3 + $0x30] sm:$0xff] %vm226, %v1940
      %1957 = vst.msk [vmem:[#allocation3 + $0x48] sm:$0xff] %vm226, %v1941
      %1958 = vst.msk [vmem:[#allocation3 + $0x60] sm:$0xff] %vm226, %v1942
      %1959 = vst.msk [vmem:[#allocation3 + $0x78] sm:$0xff] %vm226, %v1943
      %1960 = vst.msk [vmem:[#allocation3 + $0x90] sm:$0xff] %vm226, %v1944
      %1961 = vst.msk [vmem:[#allocation3 + $0xa8] sm:$0xff] %vm226, %v1945
      %1962 = vst.msk [vmem:[#allocation3 + $0xc0] sm:$0xff] %vm226, %v1946
      %1963 = vst.msk [vmem:[#allocation3 + $0xd8] sm:$0xff] %vm226, %v1947
      %1964 = vst.msk [vmem:[#allocation3 + $0xf0] sm:$0xff] %vm226, %v1948
      %1965 = vst.msk [vmem:[#allocation3 + $0x108] sm:$0xff] %vm226, %v1949
      %1966 = vst.msk [vmem:[#allocation3 + $0x120] sm:$0xff] %vm226, %v1950
      %1967 = vst.msk [vmem:[#allocation3 + $0x138] sm:$0xff] %vm226, %v1951
      %1968 = vst.msk [vmem:[#allocation3 + $0x150] sm:$0xff] %vm226, %v1952
      %1969 = vst.msk [vmem:[#allocation3 + $0x168] sm:$0xff] %vm226, %v1953
      %v2018 = vrot.slane %v1884, 1
      %v2019 = vrot.slane %v1885, 1
      %v2020 = vsel %vm482, %v2018, %v2019
      %v2021 = vrot.slane %v1886, 1
      %v2022 = vsel %vm482, %v2019, %v2021
      %v2023 = vrot.slane %v1887, 1
      %v2024 = vrot.slane %v1888, 1
      %v2025 = vsel %vm482, %v2023, %v2024
      %v2026 = vrot.slane %v1889, 1
      %v2027 = vsel %vm482, %v2024, %v2026
      %v2028 = vrot.slane %v1890, 1
      %v2029 = vrot.slane %v1891, 1
      %v2030 = vsel %vm482, %v2028, %v2029
      %v2031 = vrot.slane %v1892, 1
      %v2032 = vsel %vm482, %v2029, %v2031
      %v2033 = vrot.slane %v1893, 1
      %v2034 = vrot.slane %v1894, 1
      %v2035 = vsel %vm482, %v2033, %v2034
      %v2036 = vrot.slane %v1895, 1
      %v2037 = vsel %vm482, %v2034, %v2036
      %v2038 = vrot.slane %v1896, 1
      %v2039 = vrot.slane %v1897, 1
      %v2040 = vsel %vm482, %v2038, %v2039
      %v2041 = vrot.slane %v1898, 1
      %v2042 = vsel %vm482, %v2039, %v2041
      %v2043 = vrot.slane %v1899, 1
      %v2044 = vrot.slane %v1900, 1
      %v2045 = vsel %vm482, %v2043, %v2044
      %v2046 = vrot.slane %v1901, 1
      %v2047 = vsel %vm482, %v2044, %v2046
      %v2048 = vrot.slane %v1902, 1
      %v2049 = vrot.slane %v1903, 1
      %v2050 = vsel %vm482, %v2048, %v2049
      %v2051 = vrot.slane %v1904, 1
      %v2052 = vsel %vm482, %v2049, %v2051
      %v2053 = vrot.slane %v1905, 1
      %v2054 = vrot.slane %v1906, 1
      %v2055 = vsel %vm482, %v2053, %v2054
      %v2056 = vrot.slane %v1907, 1
      %v2057 = vsel %vm482, %v2054, %v2056
      %v2058 = vrot.slane %v1908, 1
      %v2059 = vrot.slane %v1909, 1
      %v2060 = vsel %vm482, %v2058, %v2059
      %v2061 = vrot.slane %v1910, 1
      %v2062 = vsel %vm482, %v2059, %v2061
      %v2063 = vrot.slane %v1911, 1
      %v2064 = vrot.slane %v1912, 1
      %v2065 = vsel %vm482, %v2063, %v2064
      %v2066 = vrot.slane %v1913, 1
      %v2067 = vsel %vm482, %v2064, %v2066
      %v2068 = vrot.slane %v1914, 1
      %v2069 = vrot.slane %v1915, 1
      %v2070 = vsel %vm482, %v2068, %v2069
      %v2071 = vrot.slane %v1916, 1
      %v2072 = vsel %vm482, %v2069, %v2071
      %v2073 = vrot.slane %v1917, 1
      %v2074 = vrot.slane %v1918, 1
      %v2075 = vsel %vm482, %v2073, %v2074
      %v2076 = vrot.slane %v1919, 1
      %v2077 = vsel %vm482, %v2074, %v2076
      %v2078 = vrot.slane %v1920, 1
      %v2079 = vrot.slane %v1921, 1
      %v2080 = vsel %vm482, %v2078, %v2079
      %v2081 = vrot.slane %v1922, 1
      %v2082 = vsel %vm482, %v2079, %v2081
      %v2083 = vrot.slane %v1923, 1
      %v2084 = vrot.slane %v1924, 1
      %v2085 = vsel %vm482, %v2083, %v2084
      %v2086 = vrot.slane %v1925, 1
      %v2087 = vsel %vm482, %v2084, %v2086
      %v2088 = vrot.slane %v1926, 1
      %v2089 = vrot.slane %v1927, 1
      %v2090 = vsel %vm482, %v2088, %v2089
      %v2091 = vrot.slane %v1928, 1
      %v2092 = vsel %vm482, %v2089, %v2091
      %v2093 = vrot.slane %v1929, 1
      %v2094 = vrot.slane %v1930, 1
      %v2095 = vsel %vm482, %v2093, %v2094
      %v2096 = vrot.slane %v1931, 1
      %v2097 = vsel %vm482, %v2094, %v2096
      %v2130 = vpack.c.bf16 %v2022, %v2020
      %v2131 = vpack.c.bf16 %v2027, %v2025
      %v2132 = vpack.c.bf16 %v2032, %v2030
      %v2133 = vpack.c.bf16 %v2037, %v2035
      %v2134 = vpack.c.bf16 %v2042, %v2040
      %v2135 = vpack.c.bf16 %v2047, %v2045
      %v2136 = vpack.c.bf16 %v2052, %v2050
      %v2137 = vpack.c.bf16 %v2057, %v2055
      %v2138 = vpack.c.bf16 %v2062, %v2060
      %v2139 = vpack.c.bf16 %v2067, %v2065
      %v2140 = vpack.c.bf16 %v2072, %v2070
      %v2141 = vpack.c.bf16 %v2077, %v2075
      %v2142 = vpack.c.bf16 %v2082, %v2080
      %v2143 = vpack.c.bf16 %v2087, %v2085
      %v2144 = vpack.c.bf16 %v2092, %v2090
      %v2145 = vpack.c.bf16 %v2097, %v2095
      %2162 = vrot.lane.b32.xlu0 %v2130, 32
      %v2163 = vpop.permute.xlu0 %2162
      %2164 = vrot.lane.b32.xlu0 %v2131, 32
      %v2165 = vpop.permute.xlu0 %2164
      %2166 = vrot.lane.b32.xlu0 %v2132, 32
      %v2167 = vpop.permute.xlu0 %2166
      %2168 = vrot.lane.b32.xlu0 %v2133, 32
      %v2169 = vpop.permute.xlu0 %2168
      %2170 = vrot.lane.b32.xlu0 %v2134, 32
      %v2171 = vpop.permute.xlu0 %2170
      %2172 = vrot.lane.b32.xlu0 %v2135, 32
      %v2173 = vpop.permute.xlu0 %2172
      %2174 = vrot.lane.b32.xlu0 %v2136, 32
      %v2175 = vpop.permute.xlu0 %2174
      %2176 = vrot.lane.b32.xlu0 %v2137, 32
      %v2177 = vpop.permute.xlu0 %2176
      %2178 = vrot.lane.b32.xlu0 %v2138, 32
      %v2179 = vpop.permute.xlu0 %2178
      %2180 = vrot.lane.b32.xlu0 %v2139, 32
      %v2181 = vpop.permute.xlu0 %2180
      %2182 = vrot.lane.b32.xlu0 %v2140, 32
      %v2183 = vpop.permute.xlu0 %2182
      %2184 = vrot.lane.b32.xlu0 %v2141, 32
      %v2185 = vpop.permute.xlu0 %2184
      %2186 = vrot.lane.b32.xlu0 %v2142, 32
      %v2187 = vpop.permute.xlu0 %2186
      %2188 = vrot.lane.b32.xlu0 %v2143, 32
      %v2189 = vpop.permute.xlu0 %2188
      %2190 = vrot.lane.b32.xlu0 %v2144, 32
      %v2191 = vpop.permute.xlu0 %2190
      %2192 = vrot.lane.b32.xlu0 %v2145, 32
      %v2193 = vpop.permute.xlu0 %2192
      %2210 = vst.msk [vmem:[#allocation3] sm:$0xff] %vm675, %v2163
      %2211 = vst.msk [vmem:[#allocation3 + $0x18] sm:$0xff] %vm675, %v2165
      %2212 = vst.msk [vmem:[#allocation3 + $0x30] sm:$0xff] %vm675, %v2167
      %2213 = vst.msk [vmem:[#allocation3 + $0x48] sm:$0xff] %vm675, %v2169
      %2214 = vst.msk [vmem:[#allocation3 + $0x60] sm:$0xff] %vm675, %v2171
      %2215 = vst.msk [vmem:[#allocation3 + $0x78] sm:$0xff] %vm675, %v2173
      %2216 = vst.msk [vmem:[#allocation3 + $0x90] sm:$0xff] %vm675, %v2175
      %2217 = vst.msk [vmem:[#allocation3 + $0xa8] sm:$0xff] %vm675, %v2177
      %2218 = vst.msk [vmem:[#allocation3 + $0xc0] sm:$0xff] %vm675, %v2179
      %2219 = vst.msk [vmem:[#allocation3 + $0xd8] sm:$0xff] %vm675, %v2181
      %2220 = vst.msk [vmem:[#allocation3 + $0xf0] sm:$0xff] %vm675, %v2183
      %2221 = vst.msk [vmem:[#allocation3 + $0x108] sm:$0xff] %vm675, %v2185
      %2222 = vst.msk [vmem:[#allocation3 + $0x120] sm:$0xff] %vm675, %v2187
      %2223 = vst.msk [vmem:[#allocation3 + $0x138] sm:$0xff] %vm675, %v2189
      %2224 = vst.msk [vmem:[#allocation3 + $0x150] sm:$0xff] %vm675, %v2191
      %2225 = vst.msk [vmem:[#allocation3 + $0x168] sm:$0xff] %vm675, %v2193
      %v2226 = vrot.slane %v1884, 2
      %v2227 = vrot.slane %v1885, 2
      %v2228 = vsel %vm692, %v2226, %v2227
      %v2229 = vrot.slane %v1886, 2
      %v2230 = vsel %vm692, %v2227, %v2229
      %v2231 = vrot.slane %v1887, 2
      %v2232 = vrot.slane %v1888, 2
      %v2233 = vsel %vm692, %v2231, %v2232
      %v2234 = vrot.slane %v1889, 2
      %v2235 = vsel %vm692, %v2232, %v2234
      %v2236 = vrot.slane %v1890, 2
      %v2237 = vrot.slane %v1891, 2
      %v2238 = vsel %vm692, %v2236, %v2237
      %v2239 = vrot.slane %v1892, 2
      %v2240 = vsel %vm692, %v2237, %v2239
      %v2241 = vrot.slane %v1893, 2
      %v2242 = vrot.slane %v1894, 2
      %v2243 = vsel %vm692, %v2241, %v2242
      %v2244 = vrot.slane %v1895, 2
      %v2245 = vsel %vm692, %v2242, %v2244
      %v2246 = vrot.slane %v1896, 2
      %v2247 = vrot.slane %v1897, 2
      %v2248 = vsel %vm692, %v2246, %v2247
      %v2249 = vrot.slane %v1898, 2
      %v2250 = vsel %vm692, %v2247, %v2249
      %v2251 = vrot.slane %v1899, 2
      %v2252 = vrot.slane %v1900, 2
      %v2253 = vsel %vm692, %v2251, %v2252
      %v2254 = vrot.slane %v1901, 2
      %v2255 = vsel %vm692, %v2252, %v2254
      %v2256 = vrot.slane %v1902, 2
      %v2257 = vrot.slane %v1903, 2
      %v2258 = vsel %vm692, %v2256, %v2257
      %v2259 = vrot.slane %v1904, 2
      %v2260 = vsel %vm692, %v2257, %v2259
      %v2261 = vrot.slane %v1905, 2
      %v2262 = vrot.slane %v1906, 2
      %v2263 = vsel %vm692, %v2261, %v2262
      %v2264 = vrot.slane %v1907, 2
      %v2265 = vsel %vm692, %v2262, %v2264
      %v2266 = vrot.slane %v1908, 2
      %v2267 = vrot.slane %v1909, 2
      %v2268 = vsel %vm692, %v2266, %v2267
      %v2269 = vrot.slane %v1910, 2
      %v2270 = vsel %vm692, %v2267, %v2269
      %v2271 = vrot.slane %v1911, 2
      %v2272 = vrot.slane %v1912, 2
      %v2273 = vsel %vm692, %v2271, %v2272
      %v2274 = vrot.slane %v1913, 2
      %v2275 = vsel %vm692, %v2272, %v2274
      %v2276 = vrot.slane %v1914, 2
      %v2277 = vrot.slane %v1915, 2
      %v2278 = vsel %vm692, %v2276, %v2277
      %v2279 = vrot.slane %v1916, 2
      %v2280 = vsel %vm692, %v2277, %v2279
      %v2281 = vrot.slane %v1917, 2
      %v2282 = vrot.slane %v1918, 2
      %v2283 = vsel %vm692, %v2281, %v2282
      %v2284 = vrot.slane %v1919, 2
      %v2285 = vsel %vm692, %v2282, %v2284
      %v2286 = vrot.slane %v1920, 2
      %v2287 = vrot.slane %v1921, 2
      %v2288 = vsel %vm692, %v2286, %v2287
      %v2289 = vrot.slane %v1922, 2
      %v2290 = vsel %vm692, %v2287, %v2289
      %v2291 = vrot.slane %v1923, 2
      %v2292 = vrot.slane %v1924, 2
      %v2293 = vsel %vm692, %v2291, %v2292
      %v2294 = vrot.slane %v1925, 2
      %v2295 = vsel %vm692, %v2292, %v2294
      %v2296 = vrot.slane %v1926, 2
      %v2297 = vrot.slane %v1927, 2
      %v2298 = vsel %vm692, %v2296, %v2297
      %v2299 = vrot.slane %v1928, 2
      %v2300 = vsel %vm692, %v2297, %v2299
      %v2301 = vrot.slane %v1929, 2
      %v2302 = vrot.slane %v1930, 2
      %v2303 = vsel %vm692, %v2301, %v2302
      %v2304 = vrot.slane %v1931, 2
      %v2305 = vsel %vm692, %v2302, %v2304
      %v2338 = vpack.c.bf16 %v2230, %v2228
      %v2339 = vpack.c.bf16 %v2235, %v2233
      %v2340 = vpack.c.bf16 %v2240, %v2238
      %v2341 = vpack.c.bf16 %v2245, %v2243
      %v2342 = vpack.c.bf16 %v2250, %v2248
      %v2343 = vpack.c.bf16 %v2255, %v2253
      %v2344 = vpack.c.bf16 %v2260, %v2258
      %v2345 = vpack.c.bf16 %v2265, %v2263
      %v2346 = vpack.c.bf16 %v2270, %v2268
      %v2347 = vpack.c.bf16 %v2275, %v2273
      %v2348 = vpack.c.bf16 %v2280, %v2278
      %v2349 = vpack.c.bf16 %v2285, %v2283
      %v2350 = vpack.c.bf16 %v2290, %v2288
      %v2351 = vpack.c.bf16 %v2295, %v2293
      %v2352 = vpack.c.bf16 %v2300, %v2298
      %v2353 = vpack.c.bf16 %v2305, %v2303
      %2370 = vrot.lane.b32.xlu0 %v2338, 64
      %v2371 = vpop.permute.xlu0 %2370
      %2372 = vrot.lane.b32.xlu0 %v2339, 64
      %v2373 = vpop.permute.xlu0 %2372
      %2374 = vrot.lane.b32.xlu0 %v2340, 64
      %v2375 = vpop.permute.xlu0 %2374
      %2376 = vrot.lane.b32.xlu0 %v2341, 64
      %v2377 = vpop.permute.xlu0 %2376
      %2378 = vrot.lane.b32.xlu0 %v2342, 64
      %v2379 = vpop.permute.xlu0 %2378
      %2380 = vrot.lane.b32.xlu0 %v2343, 64
      %v2381 = vpop.permute.xlu0 %2380
      %2382 = vrot.lane.b32.xlu0 %v2344, 64
      %v2383 = vpop.permute.xlu0 %2382
      %2384 = vrot.lane.b32.xlu0 %v2345, 64
      %v2385 = vpop.permute.xlu0 %2384
      %2386 = vrot.lane.b32.xlu0 %v2346, 64
      %v2387 = vpop.permute.xlu0 %2386
      %2388 = vrot.lane.b32.xlu0 %v2347, 64
      %v2389 = vpop.permute.xlu0 %2388
      %2390 = vrot.lane.b32.xlu0 %v2348, 64
      %v2391 = vpop.permute.xlu0 %2390
      %2392 = vrot.lane.b32.xlu0 %v2349, 64
      %v2393 = vpop.permute.xlu0 %2392
      %2394 = vrot.lane.b32.xlu0 %v2350, 64
      %v2395 = vpop.permute.xlu0 %2394
      %2396 = vrot.lane.b32.xlu0 %v2351, 64
      %v2397 = vpop.permute.xlu0 %2396
      %2398 = vrot.lane.b32.xlu0 %v2352, 64
      %v2399 = vpop.permute.xlu0 %2398
      %2400 = vrot.lane.b32.xlu0 %v2353, 64
      %v2401 = vpop.permute.xlu0 %2400
      %2418 = vst.msk [vmem:[#allocation3] sm:$0xff] %vm885, %v2371
      %2419 = vst.msk [vmem:[#allocation3 + $0x18] sm:$0xff] %vm885, %v2373
      %2420 = vst.msk [vmem:[#allocation3 + $0x30] sm:$0xff] %vm885, %v2375
      %2421 = vst.msk [vmem:[#allocation3 + $0x48] sm:$0xff] %vm885, %v2377
      %2422 = vst.msk [vmem:[#allocation3 + $0x60] sm:$0xff] %vm885, %v2379
      %2423 = vst.msk [vmem:[#allocation3 + $0x78] sm:$0xff] %vm885, %v2381
      %2424 = vst.msk [vmem:[#allocation3 + $0x90] sm:$0xff] %vm885, %v2383
      %2425 = vst.msk [vmem:[#allocation3 + $0xa8] sm:$0xff] %vm885, %v2385
      %2426 = vst.msk [vmem:[#allocation3 + $0xc0] sm:$0xff] %vm885, %v2387
      %2427 = vst.msk [vmem:[#allocation3 + $0xd8] sm:$0xff] %vm885, %v2389
      %2428 = vst.msk [vmem:[#allocation3 + $0xf0] sm:$0xff] %vm885, %v2391
      %2429 = vst.msk [vmem:[#allocation3 + $0x108] sm:$0xff] %vm885, %v2393
      %2430 = vst.msk [vmem:[#allocation3 + $0x120] sm:$0xff] %vm885, %v2395
      %2431 = vst.msk [vmem:[#allocation3 + $0x138] sm:$0xff] %vm885, %v2397
      %2432 = vst.msk [vmem:[#allocation3 + $0x150] sm:$0xff] %vm885, %v2399
      %2433 = vst.msk [vmem:[#allocation3 + $0x168] sm:$0xff] %vm885, %v2401
      %v2434 = vpack.c.bf16 %v1933, %v1932
      %2451 = vrot.lane.b32.xlu0 %v1939, 96
      %v2452 = vpop.permute.xlu0 %2451
      %2453 = vrot.lane.b32.xlu0 %v1940, 96
      %v2454 = vpop.permute.xlu0 %2453
      %2455 = vrot.lane.b32.xlu0 %v1941, 96
      %v2456 = vpop.permute.xlu0 %2455
      %2457 = vrot.lane.b32.xlu0 %v1942, 96
      %v2458 = vpop.permute.xlu0 %2457
      %2459 = vrot.lane.b32.xlu0 %v1943, 96
      %v2460 = vpop.permute.xlu0 %2459
      %2461 = vrot.lane.b32.xlu0 %v1944, 96
      %v2462 = vpop.permute.xlu0 %2461
      %2463 = vrot.lane.b32.xlu0 %v1945, 96
      %v2464 = vpop.permute.xlu0 %2463
      %2465 = vrot.lane.b32.xlu0 %v1946, 96
      %v2466 = vpop.permute.xlu0 %2465
      %2467 = vrot.lane.b32.xlu0 %v1947, 96
      %v2468 = vpop.permute.xlu0 %2467
      %2469 = vrot.lane.b32.xlu0 %v1948, 96
      %v2470 = vpop.permute.xlu0 %2469
      %2471 = vrot.lane.b32.xlu0 %v1949, 96
      %v2472 = vpop.permute.xlu0 %2471
      %2473 = vrot.lane.b32.xlu0 %v1950, 96
      %v2474 = vpop.permute.xlu0 %2473
      %2475 = vrot.lane.b32.xlu0 %v1951, 96
      %v2476 = vpop.permute.xlu0 %2475
      %2477 = vrot.lane.b32.xlu0 %v1952, 96
      %v2478 = vpop.permute.xlu0 %2477
      %2479 = vrot.lane.b32.xlu0 %v1953, 96
      %v2480 = vpop.permute.xlu0 %2479
      %2481 = vrot.lane.b32.xlu0 %v2434, 96
      %v2482 = vpop.permute.xlu0 %2481
      %2499 = vst.msk [vmem:[#allocation3] sm:$0xff] %vm967, %v2452
      %2500 = vst.msk [vmem:[#allocation3 + $0x18] sm:$0xff] %vm967, %v2454
      %2501 = vst.msk [vmem:[#allocation3 + $0x30] sm:$0xff] %vm967, %v2456
      %2502 = vst.msk [vmem:[#allocation3 + $0x48] sm:$0xff] %vm967, %v2458
      %2503 = vst.msk [vmem:[#allocation3 + $0x60] sm:$0xff] %vm967, %v2460
      %2504 = vst.msk [vmem:[#allocation3 + $0x78] sm:$0xff] %vm967, %v2462
      %2505 = vst.msk [vmem:[#allocation3 + $0x90] sm:$0xff] %vm967, %v2464
      %2506 = vst.msk [vmem:[#allocation3 + $0xa8] sm:$0xff] %vm967, %v2466
      %2507 = vst.msk [vmem:[#allocation3 + $0xc0] sm:$0xff] %vm967, %v2468
      %2508 = vst.msk [vmem:[#allocation3 + $0xd8] sm:$0xff] %vm967, %v2470
      %2509 = vst.msk [vmem:[#allocation3 + $0xf0] sm:$0xff] %vm967, %v2472
      %2510 = vst.msk [vmem:[#allocation3 + $0x108] sm:$0xff] %vm967, %v2474
      %2511 = vst.msk [vmem:[#allocation3 + $0x120] sm:$0xff] %vm967, %v2476
      %2512 = vst.msk [vmem:[#allocation3 + $0x138] sm:$0xff] %vm967, %v2478
      %2513 = vst.msk [vmem:[#allocation3 + $0x150] sm:$0xff] %vm967, %v2480
      %2514 = vst.msk [vmem:[#allocation3 + $0x168] sm:$0xff] %vm967, %v2482
      %v2518 = vrot.slane %v1932, 1
      %v2519 = vrot.slane %v1933, 1
      %v2520 = vsel %vm482, %v2518, %v2519
      %v2521 = vrot.slane %v1934, 1
      %v2522 = vsel %vm482, %v2519, %v2521
      %v2525 = vpack.c.bf16 %v2522, %v2520
      %2526 = vst.msk [vmem:[#allocation3 + $0x8] sm:$0xff] %vm226, %v2131
      %2527 = vst.msk [vmem:[#allocation3 + $0x20] sm:$0xff] %vm226, %v2132
      %2528 = vst.msk [vmem:[#allocation3 + $0x38] sm:$0xff] %vm226, %v2133
      %2529 = vst.msk [vmem:[#allocation3 + $0x50] sm:$0xff] %vm226, %v2134
      %2530 = vst.msk [vmem:[#allocation3 + $0x68] sm:$0xff] %vm226, %v2135
      %2531 = vst.msk [vmem:[#allocation3 + $0x80] sm:$0xff] %vm226, %v2136
      %2532 = vst.msk [vmem:[#allocation3 + $0x98] sm:$0xff] %vm226, %v2137
      %2533 = vst.msk [vmem:[#allocation3 + $0xb0] sm:$0xff] %vm226, %v2138
      %2534 = vst.msk [vmem:[#allocation3 + $0xc8] sm:$0xff] %vm226, %v2139
      %2535 = vst.msk [vmem:[#allocation3 + $0xe0] sm:$0xff] %vm226, %v2140
      %2536 = vst.msk [vmem:[#allocation3 + $0xf8] sm:$0xff] %vm226, %v2141
      %2537 = vst.msk [vmem:[#allocation3 + $0x110] sm:$0xff] %vm226, %v2142
      %2538 = vst.msk [vmem:[#allocation3 + $0x128] sm:$0xff] %vm226, %v2143
      %2539 = vst.msk [vmem:[#allocation3 + $0x140] sm:$0xff] %vm226, %v2144
      %2540 = vst.msk [vmem:[#allocation3 + $0x158] sm:$0xff] %vm226, %v2145
      %2541 = vst.msk [vmem:[#allocation3 + $0x170] sm:$0xff] %vm226, %v2525
      %v2542 = vrot.slane %v1932, 2
      %v2543 = vrot.slane %v1933, 2
      %v2544 = vsel %vm692, %v2542, %v2543
      %v2545 = vrot.slane %v1934, 2
      %v2546 = vsel %vm692, %v2543, %v2545
      %v2549 = vpack.c.bf16 %v2546, %v2544
      %2551 = vrot.lane.b32.xlu0 %v2339, 32
      %v2552 = vpop.permute.xlu0 %2551
      %2553 = vrot.lane.b32.xlu0 %v2340, 32
      %v2554 = vpop.permute.xlu0 %2553
      %2555 = vrot.lane.b32.xlu0 %v2341, 32
      %v2556 = vpop.permute.xlu0 %2555
      %2557 = vrot.lane.b32.xlu0 %v2342, 32
      %v2558 = vpop.permute.xlu0 %2557
      %2559 = vrot.lane.b32.xlu0 %v2343, 32
      %v2560 = vpop.permute.xlu0 %2559
      %2561 = vrot.lane.b32.xlu0 %v2344, 32
      %v2562 = vpop.permute.xlu0 %2561
      %2563 = vrot.lane.b32.xlu0 %v2345, 32
      %v2564 = vpop.permute.xlu0 %2563
      %2565 = vrot.lane.b32.xlu0 %v2346, 32
      %v2566 = vpop.permute.xlu0 %2565
      %2567 = vrot.lane.b32.xlu0 %v2347, 32
      %v2568 = vpop.permute.xlu0 %2567
      %2569 = vrot.lane.b32.xlu0 %v2348, 32
      %v2570 = vpop.permute.xlu0 %2569
      %2571 = vrot.lane.b32.xlu0 %v2349, 32
      %v2572 = vpop.permute.xlu0 %2571
      %2573 = vrot.lane.b32.xlu0 %v2350, 32
      %v2574 = vpop.permute.xlu0 %2573
      %2575 = vrot.lane.b32.xlu0 %v2351, 32
      %v2576 = vpop.permute.xlu0 %2575
      %2577 = vrot.lane.b32.xlu0 %v2352, 32
      %v2578 = vpop.permute.xlu0 %2577
      %2579 = vrot.lane.b32.xlu0 %v2353, 32
      %v2580 = vpop.permute.xlu0 %2579
      %2581 = vrot.lane.b32.xlu0 %v2549, 32
      %v2582 = vpop.permute.xlu0 %2581
      %2599 = vst.msk [vmem:[#allocation3 + $0x8] sm:$0xff] %vm675, %v2552
      %2600 = vst.msk [vmem:[#allocation3 + $0x20] sm:$0xff] %vm675, %v2554
      %2601 = vst.msk [vmem:[#allocation3 + $0x38] sm:$0xff] %vm675, %v2556
      %2602 = vst.msk [vmem:[#allocation3 + $0x50] sm:$0xff] %vm675, %v2558
      %2603 = vst.msk [vmem:[#allocation3 + $0x68] sm:$0xff] %vm675, %v2560
      %2604 = vst.msk [vmem:[#allocation3 + $0x80] sm:$0xff] %vm675, %v2562
      %2605 = vst.msk [vmem:[#allocation3 + $0x98] sm:$0xff] %vm675, %v2564
      %2606 = vst.msk [vmem:[#allocation3 + $0xb0] sm:$0xff] %vm675, %v2566
      %2607 = vst.msk [vmem:[#allocation3 + $0xc8] sm:$0xff] %vm675, %v2568
      %2608 = vst.msk [vmem:[#allocation3 + $0xe0] sm:$0xff] %vm675, %v2570
      %2609 = vst.msk [vmem:[#allocation3 + $0xf8] sm:$0xff] %vm675, %v2572
      %2610 = vst.msk [vmem:[#allocation3 + $0x110] sm:$0xff] %vm675, %v2574
      %2611 = vst.msk [vmem:[#allocation3 + $0x128] sm:$0xff] %vm675, %v2576
      %2612 = vst.msk [vmem:[#allocation3 + $0x140] sm:$0xff] %vm675, %v2578
      %2613 = vst.msk [vmem:[#allocation3 + $0x158] sm:$0xff] %vm675, %v2580
      %2614 = vst.msk [vmem:[#allocation3 + $0x170] sm:$0xff] %vm675, %v2582
      %v2615 = vpack.c.bf16 %v1936, %v1935
      %2617 = vrot.lane.b32.xlu0 %v1940, 64
      %v2618 = vpop.permute.xlu0 %2617
      %2619 = vrot.lane.b32.xlu0 %v1941, 64
      %v2620 = vpop.permute.xlu0 %2619
      %2621 = vrot.lane.b32.xlu0 %v1942, 64
      %v2622 = vpop.permute.xlu0 %2621
      %2623 = vrot.lane.b32.xlu0 %v1943, 64
      %v2624 = vpop.permute.xlu0 %2623
      %2625 = vrot.lane.b32.xlu0 %v1944, 64
      %v2626 = vpop.permute.xlu0 %2625
      %2627 = vrot.lane.b32.xlu0 %v1945, 64
      %v2628 = vpop.permute.xlu0 %2627
      %2629 = vrot.lane.b32.xlu0 %v1946, 64
      %v2630 = vpop.permute.xlu0 %2629
      %2631 = vrot.lane.b32.xlu0 %v1947, 64
      %v2632 = vpop.permute.xlu0 %2631
      %2633 = vrot.lane.b32.xlu0 %v1948, 64
      %v2634 = vpop.permute.xlu0 %2633
      %2635 = vrot.lane.b32.xlu0 %v1949, 64
      %v2636 = vpop.permute.xlu0 %2635
      %2637 = vrot.lane.b32.xlu0 %v1950, 64
      %v2638 = vpop.permute.xlu0 %2637
      %2639 = vrot.lane.b32.xlu0 %v1951, 64
      %v2640 = vpop.permute.xlu0 %2639
      %2641 = vrot.lane.b32.xlu0 %v1952, 64
      %v2642 = vpop.permute.xlu0 %2641
      %2643 = vrot.lane.b32.xlu0 %v1953, 64
      %v2644 = vpop.permute.xlu0 %2643
      %2645 = vrot.lane.b32.xlu0 %v2434, 64
      %v2646 = vpop.permute.xlu0 %2645
      %2647 = vrot.lane.b32.xlu0 %v2615, 64
      %v2648 = vpop.permute.xlu0 %2647
      %2665 = vst.msk [vmem:[#allocation3 + $0x8] sm:$0xff] %vm885, %v2618
      %2666 = vst.msk [vmem:[#allocation3 + $0x20] sm:$0xff] %vm885, %v2620
      %2667 = vst.msk [vmem:[#allocation3 + $0x38] sm:$0xff] %vm885, %v2622
      %2668 = vst.msk [vmem:[#allocation3 + $0x50] sm:$0xff] %vm885, %v2624
      %2669 = vst.msk [vmem:[#allocation3 + $0x68] sm:$0xff] %vm885, %v2626
      %2670 = vst.msk [vmem:[#allocation3 + $0x80] sm:$0xff] %vm885, %v2628
      %2671 = vst.msk [vmem:[#allocation3 + $0x98] sm:$0xff] %vm885, %v2630
      %2672 = vst.msk [vmem:[#allocation3 + $0xb0] sm:$0xff] %vm885, %v2632
      %2673 = vst.msk [vmem:[#allocation3 + $0xc8] sm:$0xff] %vm885, %v2634
      %2674 = vst.msk [vmem:[#allocation3 + $0xe0] sm:$0xff] %vm885, %v2636
      %2675 = vst.msk [vmem:[#allocation3 + $0xf8] sm:$0xff] %vm885, %v2638
      %2676 = vst.msk [vmem:[#allocation3 + $0x110] sm:$0xff] %vm885, %v2640
      %2677 = vst.msk [vmem:[#allocation3 + $0x128] sm:$0xff] %vm885, %v2642
      %2678 = vst.msk [vmem:[#allocation3 + $0x140] sm:$0xff] %vm885, %v2644
      %2679 = vst.msk [vmem:[#allocation3 + $0x158] sm:$0xff] %vm885, %v2646
      %2680 = vst.msk [vmem:[#allocation3 + $0x170] sm:$0xff] %vm885, %v2648
      %v2684 = vrot.slane %v1935, 1
      %v2685 = vrot.slane %v1936, 1
      %v2686 = vsel %vm482, %v2684, %v2685
      %v2687 = vrot.slane %v1937, 1
      %v2688 = vsel %vm482, %v2685, %v2687
      %v2691 = vpack.c.bf16 %v2688, %v2686
      %2694 = vrot.lane.b32.xlu0 %v2132, 96
      %v2695 = vpop.permute.xlu0 %2694
      %2696 = vrot.lane.b32.xlu0 %v2133, 96
      %v2697 = vpop.permute.xlu0 %2696
      %2698 = vrot.lane.b32.xlu0 %v2134, 96
      %v2699 = vpop.permute.xlu0 %2698
      %2700 = vrot.lane.b32.xlu0 %v2135, 96
      %v2701 = vpop.permute.xlu0 %2700
      %2702 = vrot.lane.b32.xlu0 %v2136, 96
      %v2703 = vpop.permute.xlu0 %2702
      %2704 = vrot.lane.b32.xlu0 %v2137, 96
      %v2705 = vpop.permute.xlu0 %2704
      %2706 = vrot.lane.b32.xlu0 %v2138, 96
      %v2707 = vpop.permute.xlu0 %2706
      %2708 = vrot.lane.b32.xlu0 %v2139, 96
      %v2709 = vpop.permute.xlu0 %2708
      %2710 = vrot.lane.b32.xlu0 %v2140, 96
      %v2711 = vpop.permute.xlu0 %2710
      %2712 = vrot.lane.b32.xlu0 %v2141, 96
      %v2713 = vpop.permute.xlu0 %2712
      %2714 = vrot.lane.b32.xlu0 %v2142, 96
      %v2715 = vpop.permute.xlu0 %2714
      %2716 = vrot.lane.b32.xlu0 %v2143, 96
      %v2717 = vpop.permute.xlu0 %2716
      %2718 = vrot.lane.b32.xlu0 %v2144, 96
      %v2719 = vpop.permute.xlu0 %2718
      %2720 = vrot.lane.b32.xlu0 %v2145, 96
      %v2721 = vpop.permute.xlu0 %2720
      %2722 = vrot.lane.b32.xlu0 %v2525, 96
      %v2723 = vpop.permute.xlu0 %2722
      %2724 = vrot.lane.b32.xlu0 %v2691, 96
      %v2725 = vpop.permute.xlu0 %2724
      %2742 = vst.msk [vmem:[#allocation3 + $0x8] sm:$0xff] %vm967, %v2695
      %2743 = vst.msk [vmem:[#allocation3 + $0x20] sm:$0xff] %vm967, %v2697
      %2744 = vst.msk [vmem:[#allocation3 + $0x38] sm:$0xff] %vm967, %v2699
      %2745 = vst.msk [vmem:[#allocation3 + $0x50] sm:$0xff] %vm967, %v2701
      %2746 = vst.msk [vmem:[#allocation3 + $0x68] sm:$0xff] %vm967, %v2703
      %2747 = vst.msk [vmem:[#allocation3 + $0x80] sm:$0xff] %vm967, %v2705
      %2748 = vst.msk [vmem:[#allocation3 + $0x98] sm:$0xff] %vm967, %v2707
      %2749 = vst.msk [vmem:[#allocation3 + $0xb0] sm:$0xff] %vm967, %v2709
      %2750 = vst.msk [vmem:[#allocation3 + $0xc8] sm:$0xff] %vm967, %v2711
      %2751 = vst.msk [vmem:[#allocation3 + $0xe0] sm:$0xff] %vm967, %v2713
      %2752 = vst.msk [vmem:[#allocation3 + $0xf8] sm:$0xff] %vm967, %v2715
      %2753 = vst.msk [vmem:[#allocation3 + $0x110] sm:$0xff] %vm967, %v2717
      %2754 = vst.msk [vmem:[#allocation3 + $0x128] sm:$0xff] %vm967, %v2719
      %2755 = vst.msk [vmem:[#allocation3 + $0x140] sm:$0xff] %vm967, %v2721
      %2756 = vst.msk [vmem:[#allocation3 + $0x158] sm:$0xff] %vm967, %v2723
      %2757 = vst.msk [vmem:[#allocation3 + $0x170] sm:$0xff] %vm967, %v2725
      %v2758 = vrot.slane %v1935, 2
      %v2759 = vrot.slane %v1936, 2
      %v2760 = vsel %vm692, %v2758, %v2759
      %v2761 = vrot.slane %v1937, 2
      %v2762 = vsel %vm692, %v2759, %v2761
      %v2765 = vpack.c.bf16 %v2762, %v2760
      %2766 = vst.msk [vmem:[#allocation3 + $0x10] sm:$0xff] %vm226, %v2340
      %2767 = vst.msk [vmem:[#allocation3 + $0x28] sm:$0xff] %vm226, %v2341
      %2768 = vst.msk [vmem:[#allocation3 + $0x40] sm:$0xff] %vm226, %v2342
      %2769 = vst.msk [vmem:[#allocation3 + $0x58] sm:$0xff] %vm226, %v2343
      %2770 = vst.msk [vmem:[#allocation3 + $0x70] sm:$0xff] %vm226, %v2344
      %2771 = vst.msk [vmem:[#allocation3 + $0x88] sm:$0xff] %vm226, %v2345
      %2772 = vst.msk [vmem:[#allocation3 + $0xa0] sm:$0xff] %vm226, %v2346
      %2773 = vst.msk [vmem:[#allocation3 + $0xb8] sm:$0xff] %vm226, %v2347
      %2774 = vst.msk [vmem:[#allocation3 + $0xd0] sm:$0xff] %vm226, %v2348
      %2775 = vst.msk [vmem:[#allocation3 + $0xe8] sm:$0xff] %vm226, %v2349
      %2776 = vst.msk [vmem:[#allocation3 + $0x100] sm:$0xff] %vm226, %v2350
      %2777 = vst.msk [vmem:[#allocation3 + $0x118] sm:$0xff] %vm226, %v2351
      %2778 = vst.msk [vmem:[#allocation3 + $0x130] sm:$0xff] %vm226, %v2352
      %2779 = vst.msk [vmem:[#allocation3 + $0x148] sm:$0xff] %vm226, %v2353
      %2780 = vst.msk [vmem:[#allocation3 + $0x160] sm:$0xff] %vm226, %v2549
      %2781 = vst.msk [vmem:[#allocation3 + $0x178] sm:$0xff] %vm226, %v2765
      %v2782 = vld [vmem:[#allocation3] sm:$0xff]
      %v2783 = vld [vmem:[#allocation3 + $0x8] sm:$0xff]
      %v2784 = vld [vmem:[#allocation3 + $0x10] sm:$0xff]
      %v2785 = vld [vmem:[#allocation3 + $0x18] sm:$0xff]
      %v2786 = vld [vmem:[#allocation3 + $0x20] sm:$0xff]
      %v2787 = vld [vmem:[#allocation3 + $0x28] sm:$0xff]
      %v2788 = vld [vmem:[#allocation3 + $0x30] sm:$0xff]
      %v2789 = vld [vmem:[#allocation3 + $0x38] sm:$0xff]
      %v2790 = vld [vmem:[#allocation3 + $0x40] sm:$0xff]
      %v2791 = vld [vmem:[#allocation3 + $0x48] sm:$0xff]
      %v2792 = vld [vmem:[#allocation3 + $0x50] sm:$0xff]
      %v2793 = vld [vmem:[#allocation3 + $0x58] sm:$0xff]
      %v2794 = vld [vmem:[#allocation3 + $0x60] sm:$0xff]
      %v2795 = vld [vmem:[#allocation3 + $0x68] sm:$0xff]
      %v2796 = vld [vmem:[#allocation3 + $0x70] sm:$0xff]
      %v2797 = vld [vmem:[#allocation3 + $0x78] sm:$0xff]
      %v2798 = vld [vmem:[#allocation3 + $0x80] sm:$0xff]
      %v2799 = vld [vmem:[#allocation3 + $0x88] sm:$0xff]
      %v2800 = vld [vmem:[#allocation3 + $0x90] sm:$0xff]
      %v2801 = vld [vmem:[#allocation3 + $0x98] sm:$0xff]
      %v2802 = vld [vmem:[#allocation3 + $0xa0] sm:$0xff]
      %v2803 = vld [vmem:[#allocation3 + $0xa8] sm:$0xff]
      %v2804 = vld [vmem:[#allocation3 + $0xb0] sm:$0xff]
      %v2805 = vld [vmem:[#allocation3 + $0xb8] sm:$0xff]
      %v2806 = vld [vmem:[#allocation3 + $0xc0] sm:$0xff]
      %v2807 = vld [vmem:[#allocation3 + $0xc8] sm:$0xff]
      %v2808 = vld [vmem:[#allocation3 + $0xd0] sm:$0xff]
      %v2809 = vld [vmem:[#allocation3 + $0xd8] sm:$0xff]
      %v2810 = vld [vmem:[#allocation3 + $0xe0] sm:$0xff]
      %v2811 = vld [vmem:[#allocation3 + $0xe8] sm:$0xff]
      %v2812 = vld [vmem:[#allocation3 + $0xf0] sm:$0xff]
      %v2813 = vld [vmem:[#allocation3 + $0xf8] sm:$0xff]
      %v2814 = vld [vmem:[#allocation3 + $0x100] sm:$0xff]
      %v2815 = vld [vmem:[#allocation3 + $0x108] sm:$0xff]
      %v2816 = vld [vmem:[#allocation3 + $0x110] sm:$0xff]
      %v2817 = vld [vmem:[#allocation3 + $0x118] sm:$0xff]
      %v2818 = vld [vmem:[#allocation3 + $0x120] sm:$0xff]
      %v2819 = vld [vmem:[#allocation3 + $0x128] sm:$0xff]
      %v2820 = vld [vmem:[#allocation3 + $0x130] sm:$0xff]
      %v2821 = vld [vmem:[#allocation3 + $0x138] sm:$0xff]
      %v2822 = vld [vmem:[#allocation3 + $0x140] sm:$0xff]
      %v2823 = vld [vmem:[#allocation3 + $0x148] sm:$0xff]
      %v2824 = vld [vmem:[#allocation3 + $0x150] sm:$0xff]
      %v2825 = vld [vmem:[#allocation3 + $0x158] sm:$0xff]
      %v2826 = vld [vmem:[#allocation3 + $0x160] sm:$0xff]
      %v2827 = vld [vmem:[#allocation3 + $0x168] sm:$0xff]
      %v2828 = vld [vmem:[#allocation3 + $0x170] sm:$0xff]
      %v2829 = vld [vmem:[#allocation3 + $0x178] sm:$0xff]
      %s2830 = scalar_lea.vmem %s1, 144
      %v2831 = vld [vmem:[%s2830] sm:$0xf]
      %v2832 = vld [vmem:[%s2830 + $0x4] sm:$0xf]
      %v2833 = vld [vmem:[%s2830 + $0x8] sm:$0xf]
      %v2834 = vld [vmem:[%s2830 + $0xc] sm:$0xf]
      %v2835 = vld [vmem:[%s2830 + $0x10] sm:$0xf]
      %v2836 = vld [vmem:[%s2830 + $0x14] sm:$0xf]
      %v2837 = vld [vmem:[%s2830 + $0x18] sm:$0xf]
      %v2838 = vld [vmem:[%s2830 + $0x1c] sm:$0xf]
      %v2839 = vld [vmem:[%s2830 + $0x20] sm:$0xf]
      %v2840 = vld [vmem:[%s2830 + $0x24] sm:$0xf]
      %v2841 = vld [vmem:[%s2830 + $0x28] sm:$0xf]
      %v2842 = vld [vmem:[%s2830 + $0x2c] sm:$0xf]
      %v2843 = vld [vmem:[%s2830 + $0x30] sm:$0xf]
      %v2844 = vld [vmem:[%s2830 + $0x34] sm:$0xf]
      %v2845 = vld [vmem:[%s2830 + $0x38] sm:$0xf]
      %v2846 = vld [vmem:[%s2830 + $0x3c] sm:$0xf]
      %v2847 = vld [vmem:[%s2830 + $0x40] sm:$0xf]
      %v2848 = vld [vmem:[%s2830 + $0x44] sm:$0xf]
      %v2849 = vld [vmem:[%s2830 + $0x48] sm:$0xf]
      %v2850 = vld [vmem:[%s2830 + $0x4c] sm:$0xf]
      %v2851 = vld [vmem:[%s2830 + $0x50] sm:$0xf]
      %v2852 = vld [vmem:[%s2830 + $0x54] sm:$0xf]
      %v2853 = vld [vmem:[%s2830 + $0x58] sm:$0xf]
      %v2854 = vld [vmem:[%s2830 + $0x5c] sm:$0xf]
      %v2855 = vld [vmem:[%s2830 + $0x60] sm:$0xf]
      %v2856 = vld [vmem:[%s2830 + $0x64] sm:$0xf]
      %v2857 = vld [vmem:[%s2830 + $0x68] sm:$0xf]
      %v2858 = vld [vmem:[%s2830 + $0x6c] sm:$0xf]
      %v2859 = vld [vmem:[%s2830 + $0x70] sm:$0xf]
      %v2860 = vld [vmem:[%s2830 + $0x74] sm:$0xf]
      %v2861 = vld [vmem:[%s2830 + $0x78] sm:$0xf]
      %v2862 = vld [vmem:[%s2830 + $0x7c] sm:$0xf]
      %v2863 = vld [vmem:[%s2830 + $0x80] sm:$0xf]
      %v2864 = vld [vmem:[%s2830 + $0x84] sm:$0xf]
      %v2865 = vld [vmem:[%s2830 + $0x88] sm:$0xf]
      %v2866 = vld [vmem:[%s2830 + $0x8c] sm:$0xf]
      %s2867 = scalar_lea.vmem %s2, 1
      %v2868 = vld [vmem:[%s2867] sm:$0x1]
      %v2870 = vlaneseq
      %v2871 = vshrl.u32 %v2870, 7
      %v2872 = vsub.s32 0, %v2871
      %v2873 = vrot.slane %v2868, %v2872
      %v2911 = vunpack.c.l.b16 %v2831
      %v2912 = vunpack.c.l.b16 %v2832
      %v2913 = vunpack.c.l.b16 %v2833
      %v2914 = vunpack.c.l.b16 %v2834
      %v2915 = vunpack.c.l.b16 %v2835
      %v2916 = vunpack.c.l.b16 %v2836
      %v2917 = vunpack.c.l.b16 %v2837
      %v2918 = vunpack.c.l.b16 %v2838
      %v2919 = vunpack.c.l.b16 %v2839
      %v2920 = vunpack.c.l.b16 %v2840
      %v2921 = vunpack.c.l.b16 %v2841
      %v2922 = vunpack.c.l.b16 %v2842
      %v2923 = vunpack.c.l.b16 %v2843
      %v2924 = vunpack.c.l.b16 %v2844
      %v2925 = vunpack.c.l.b16 %v2845
      %v2926 = vunpack.c.l.b16 %v2846
      %v2927 = vunpack.c.l.b16 %v2847
      %v2928 = vunpack.c.l.b16 %v2848
      %v2929 = vunpack.c.l.b16 %v2849
      %v2930 = vunpack.c.l.b16 %v2850
      %v2931 = vunpack.c.l.b16 %v2851
      %v2932 = vunpack.c.l.b16 %v2852
      %v2933 = vunpack.c.l.b16 %v2853
      %v2934 = vunpack.c.l.b16 %v2854
      %v2935 = vunpack.c.l.b16 %v2855
      %v2936 = vunpack.c.l.b16 %v2856
      %v2937 = vunpack.c.l.b16 %v2857
      %v2938 = vunpack.c.l.b16 %v2858
      %v2939 = vunpack.c.l.b16 %v2859
      %v2940 = vunpack.c.l.b16 %v2860
      %v2941 = vunpack.c.l.b16 %v2861
      %v2942 = vunpack.c.l.b16 %v2862
      %v2943 = vunpack.c.l.b16 %v2863
      %v2944 = vunpack.c.l.b16 %v2864
      %v2945 = vunpack.c.l.b16 %v2865
      %v2946 = vunpack.c.l.b16 %v2866
      %v2947 = vpack.c.b16 %v2912, %v2911
      %v2948 = vpack.c.b16 %v2914, %v2913
      %v2949 = vpack.c.b16 %v2916, %v2915
      %v2950 = vpack.c.b16 %v2918, %v2917
      %v2951 = vpack.c.b16 %v2920, %v2919
      %v2952 = vpack.c.b16 %v2922, %v2921
      %v2953 = vpack.c.b16 %v2924, %v2923
      %v2954 = vpack.c.b16 %v2926, %v2925
      %v2955 = vpack.c.b16 %v2928, %v2927
      %v2956 = vpack.c.b16 %v2930, %v2929
      %v2957 = vpack.c.b16 %v2932, %v2931
      %v2958 = vpack.c.b16 %v2934, %v2933
      %v2959 = vpack.c.b16 %v2936, %v2935
      %v2960 = vpack.c.b16 %v2938, %v2937
      %v2961 = vpack.c.b16 %v2940, %v2939
      %v2962 = vpack.c.b16 %v2942, %v2941
      %v2963 = vpack.c.b16 %v2944, %v2943
      %v2964 = vpack.c.b16 %v2946, %v2945
      %v2984 = vsel %vm226, %v2784, 0
      %v2987 = vsel %vm226, %v2787, 0
      %v2990 = vsel %vm226, %v2790, 0
      %v2993 = vsel %vm226, %v2793, 0
      %v2996 = vsel %vm226, %v2796, 0
      %v2999 = vsel %vm226, %v2799, 0
      %v3002 = vsel %vm226, %v2802, 0
      %v3005 = vsel %vm226, %v2805, 0
      %v3008 = vsel %vm226, %v2808, 0
      %v3011 = vsel %vm226, %v2811, 0
      %v3014 = vsel %vm226, %v2814, 0
      %v3017 = vsel %vm226, %v2817, 0
      %v3020 = vsel %vm226, %v2820, 0
      %v3023 = vsel %vm226, %v2823, 0
      %v3026 = vsel %vm226, %v2826, 0
      %v3029 = vsel %vm226, %v2829, 0
      %3031 = vmatprep.subr.bf16.mxu0 0
      %3032 = vmatpush1.bf16.msra.mxu0 %v2947
      %3033 = vmatprep.subr.bf16.mxu0 0
      %3034 = vmatpush1.bf16.msra.mxu0 %v2948
      %3035 = vmatprep.subr.bf16.mxu0 0
      %3036 = vmatpush1.bf16.msra.mxu0 %v2949
      %3037 = vmatprep.subr.bf16.mxu0 0
      %3038 = vmatpush1.bf16.msra.mxu0 %v2950
      %3039 = vmatprep.subr.bf16.mxu0 0
      %3040 = vmatpush1.bf16.msra.mxu0 %v2951
      %3041 = vmatprep.subr.bf16.mxu0 0
      %3042 = vmatpush1.bf16.msra.mxu0 %v2952
      %3043 = vmatprep.subr.bf16.mxu0 0
      %3044 = vmatpush1.bf16.msra.mxu0 %v2953
      %3045 = vmatprep.subr.bf16.mxu0 0
      %3046 = vmatpush1.bf16.msra.mxu0 %v2954
      %3047 = vmatprep.subr.bf16.mxu0 0
      %3048 = vmatpush1.bf16.msra.mxu0 %v2955
      %3049 = vmatprep.subr.bf16.mxu0 0
      %3050 = vmatpush1.bf16.msra.mxu0 %v2956
      %3051 = vmatprep.subr.bf16.mxu0 0
      %3052 = vmatpush1.bf16.msra.mxu0 %v2957
      %3053 = vmatprep.subr.bf16.mxu0 0
      %3054 = vmatpush1.bf16.msra.mxu0 %v2958
      %3055 = vmatprep.subr.bf16.mxu0 0
      %3056 = vmatpush1.bf16.msra.mxu0 %v2959
      %3057 = vmatprep.subr.bf16.mxu0 0
      %3058 = vmatpush1.bf16.msra.mxu0 %v2960
      %3059 = vmatprep.subr.bf16.mxu0 0
      %3060 = vmatpush1.bf16.msra.mxu0 %v2961
      %3061 = vmatprep.subr.bf16.mxu0 0
      %3062 = vmatpush1.bf16.msra.mxu0 %v2962
      %3063 = vmatprep.mubr.bf16.mxu0 %v2783
      %3064 = vmatmul.mubr.bf16.gmra.mrb[0].mxu0 %v2782
      %v3065 = vpop.f32.mrb[0].mxu0
      %v3066 = vadd.f32 %v2873, %v3065
      %v3067 = vpop.f32.mrb[0].mxu0
      %v3068 = vpop.f32.mrb[0].mxu0
      %v3069 = vadd.f32 %v2873, %v3068
      %v3070 = vpop.f32.mrb[0].mxu0
      %3071 = vmatprep.mubr.bf16.mxu0 %v2786
      %3072 = vmatmul.mubr.bf16.gmra.mrb[0].mxu0 %v2785
      %v3073 = vpop.f32.mrb[0].mxu0
      %v3074 = vadd.f32 %v2873, %v3073
      %v3075 = vpop.f32.mrb[0].mxu0
      %v3076 = vpop.f32.mrb[0].mxu0
      %v3077 = vadd.f32 %v2873, %v3076
      %v3078 = vpop.f32.mrb[0].mxu0
      %3079 = vmatprep.mubr.bf16.mxu0 %v2789
      %3080 = vmatmul.mubr.bf16.gmra.mrb[0].mxu0 %v2788
      %v3081 = vpop.f32.mrb[0].mxu0
      %v3082 = vadd.f32 %v2873, %v3081
      %v3083 = vpop.f32.mrb[0].mxu0
      %v3084 = vpop.f32.mrb[0].mxu0
      %v3085 = vadd.f32 %v2873, %v3084
      %v3086 = vpop.f32.mrb[0].mxu0
      %3087 = vmatprep.mubr.bf16.mxu0 %v2792
      %3088 = vmatmul.mubr.bf16.gmra.mrb[0].mxu0 %v2791
      %v3089 = vpop.f32.mrb[0].mxu0
      %v3090 = vadd.f32 %v2873, %v3089
      %v3091 = vpop.f32.mrb[0].mxu0
      %v3092 = vpop.f32.mrb[0].mxu0
      %v3093 = vadd.f32 %v2873, %v3092
      %v3094 = vpop.f32.mrb[0].mxu0
      %3095 = vmatprep.mubr.bf16.mxu0 %v2795
      %3096 = vmatmul.mubr.bf16.gmra.mrb[0].mxu0 %v2794
      %v3097 = vpop.f32.mrb[0].mxu0
      %v3098 = vadd.f32 %v2873, %v3097
      %v3099 = vpop.f32.mrb[0].mxu0
      %v3100 = vpop.f32.mrb[0].mxu0
      %v3101 = vadd.f32 %v2873, %v3100
      %v3102 = vpop.f32.mrb[0].mxu0
      %3103 = vmatprep.mubr.bf16.mxu0 %v2798
      %3104 = vmatmul.mubr.bf16.gmra.mrb[0].mxu0 %v2797
      %v3105 = vpop.f32.mrb[0].mxu0
      %v3106 = vadd.f32 %v2873, %v3105
      %v3107 = vpop.f32.mrb[0].mxu0
      %v3108 = vpop.f32.mrb[0].mxu0
      %v3109 = vadd.f32 %v2873, %v3108
      %v3110 = vpop.f32.mrb[0].mxu0
      %3111 = vmatprep.mubr.bf16.mxu0 %v2801
      %3112 = vmatmul.mubr.bf16.gmra.mrb[0].mxu0 %v2800
      %v3113 = vpop.f32.mrb[0].mxu0
      %v3114 = vadd.f32 %v2873, %v3113
      %v3115 = vpop.f32.mrb[0].mxu0
      %v3116 = vpop.f32.mrb[0].mxu0
      %v3117 = vadd.f32 %v2873, %v3116
      %v3118 = vpop.f32.mrb[0].mxu0
      %3119 = vmatprep.mubr.bf16.mxu0 %v2804
      %3120 = vmatmul.mubr.bf16.gmra.mrb[0].mxu0 %v2803
      %v3121 = vpop.f32.mrb[0].mxu0
      %v3122 = vadd.f32 %v2873, %v3121
      %v3123 = vpop.f32.mrb[0].mxu0
      %v3124 = vpop.f32.mrb[0].mxu0
      %v3125 = vadd.f32 %v2873, %v3124
      %v3126 = vpop.f32.mrb[0].mxu0
      %3127 = vmatprep.mubr.bf16.mxu0 %v2807
      %3128 = vmatmul.mubr.bf16.gmra.mrb[0].mxu0 %v2806
      %v3129 = vpop.f32.mrb[0].mxu0
      %v3130 = vadd.f32 %v2873, %v3129
      %v3131 = vpop.f32.mrb[0].mxu0
      %v3132 = vpop.f32.mrb[0].mxu0
      %v3133 = vadd.f32 %v2873, %v3132
      %v3134 = vpop.f32.mrb[0].mxu0
      %3135 = vmatprep.mubr.bf16.mxu0 %v2810
      %3136 = vmatmul.mubr.bf16.gmra.mrb[0].mxu0 %v2809
      %v3137 = vpop.f32.mrb[0].mxu0
      %v3138 = vadd.f32 %v2873, %v3137
      %v3139 = vpop.f32.mrb[0].mxu0
      %v3140 = vpop.f32.mrb[0].mxu0
      %v3141 = vadd.f32 %v2873, %v3140
      %v3142 = vpop.f32.mrb[0].mxu0
      %3143 = vmatprep.mubr.bf16.mxu0 %v2813
      %3144 = vmatmul.mubr.bf16.gmra.mrb[0].mxu0 %v2812
      %v3145 = vpop.f32.mrb[0].mxu0
      %v3146 = vadd.f32 %v2873, %v3145
      %v3147 = vpop.f32.mrb[0].mxu0
      %v3148 = vpop.f32.mrb[0].mxu0
      %v3149 = vadd.f32 %v2873, %v3148
      %v3150 = vpop.f32.mrb[0].mxu0
      %3151 = vmatprep.mubr.bf16.mxu0 %v2816
      %3152 = vmatmul.mubr.bf16.gmra.mrb[0].mxu0 %v2815
      %v3153 = vpop.f32.mrb[0].mxu0
      %v3154 = vadd.f32 %v2873, %v3153
      %v3155 = vpop.f32.mrb[0].mxu0
      %v3156 = vpop.f32.mrb[0].mxu0
      %v3157 = vadd.f32 %v2873, %v3156
      %v3158 = vpop.f32.mrb[0].mxu0
      %3159 = vmatprep.mubr.bf16.mxu0 %v2819
      %3160 = vmatmul.mubr.bf16.gmra.mrb[0].mxu0 %v2818
      %v3161 = vpop.f32.mrb[0].mxu0
      %v3162 = vadd.f32 %v2873, %v3161
      %v3163 = vpop.f32.mrb[0].mxu0
      %v3164 = vpop.f32.mrb[0].mxu0
      %v3165 = vadd.f32 %v2873, %v3164
      %v3166 = vpop.f32.mrb[0].mxu0
      %3167 = vmatprep.mubr.bf16.mxu0 %v2822
      %3168 = vmatmul.mubr.bf16.gmra.mrb[0].mxu0 %v2821
      %v3169 = vpop.f32.mrb[0].mxu0
      %v3170 = vadd.f32 %v2873, %v3169
      %v3171 = vpop.f32.mrb[0].mxu0
      %v3172 = vpop.f32.mrb[0].mxu0
      %v3173 = vadd.f32 %v2873, %v3172
      %v3174 = vpop.f32.mrb[0].mxu0
      %3175 = vmatprep.mubr.bf16.mxu0 %v2825
      %3176 = vmatmul.mubr.bf16.gmra.mrb[0].mxu0 %v2824
      %v3177 = vpop.f32.mrb[0].mxu0
      %v3178 = vadd.f32 %v2873, %v3177
      %v3179 = vpop.f32.mrb[0].mxu0
      %v3180 = vpop.f32.mrb[0].mxu0
      %v3181 = vadd.f32 %v2873, %v3180
      %v3182 = vpop.f32.mrb[0].mxu0
      %3183 = vmatprep.mubr.bf16.mxu0 %v2828
      %3184 = vmatmul.mubr.bf16.gmra.mrb[0].mxu0 %v2827
      %v3185 = vpop.f32.mrb[0].mxu0
      %v3186 = vadd.f32 %v2873, %v3185
      %v3187 = vpop.f32.mrb[0].mxu0
      %v3188 = vpop.f32.mrb[0].mxu0
      %v3189 = vadd.f32 %v2873, %v3188
      %v3190 = vpop.f32.mrb[0].mxu0
      %3191 = vdwg.mxu0
      %3192 = vmatprep.subr.bf16.mxu0 0
      %3193 = vmatpush1.bf16.msra.mxu0 %v2963
      %3194 = vmatprep.subr.bf16.mxu0 0
      %3195 = vmatpush1.bf16.msra.mxu0 %v2964
      %3196 = vmatprep.subr.bf16.mxu0 0
      %3197 = vmatpush1.bf16.msra.mxu0 0
      %3198 = vmatprep.subr.bf16.mxu0 0
      %3199 = vmatpush1.bf16.msra.mxu0 0
      %3200 = vmatprep.subr.bf16.mxu0 0
      %3201 = vmatpush1.bf16.msra.mxu0 0
      %3202 = vmatprep.subr.bf16.mxu0 0
      %3203 = vmatpush1.bf16.msra.mxu0 0
      %3204 = vmatprep.subr.bf16.mxu0 0
      %3205 = vmatpush1.bf16.msra.mxu0 0
      %3206 = vmatprep.subr.bf16.mxu0 0
      %3207 = vmatpush1.bf16.msra.mxu0 0
      %3208 = vmatprep.subr.bf16.mxu0 0
      %3209 = vmatpush1.bf16.msra.mxu0 0
      %3210 = vmatprep.subr.bf16.mxu0 0
      %3211 = vmatpush1.bf16.msra.mxu0 0
      %3212 = vmatprep.subr.bf16.mxu0 0
      %3213 = vmatpush1.bf16.msra.mxu0 0
      %3214 = vmatprep.subr.bf16.mxu0 0
      %3215 = vmatpush1.bf16.msra.mxu0 0
      %3216 = vmatprep.subr.bf16.mxu0 0
      %3217 = vmatpush1.bf16.msra.mxu0 0
      %3218 = vmatprep.subr.bf16.mxu0 0
      %3219 = vmatpush1.bf16.msra.mxu0 0
      %3220 = vmatprep.subr.bf16.mxu0 0
      %3221 = vmatpush1.bf16.msra.mxu0 0
      %3222 = vmatprep.subr.bf16.mxu0 0
      %3223 = vmatpush1.bf16.msra.mxu0 0
      %3224 = vmatprep.mubr.bf16.mxu0 0
      %3225 = vmatmul.mubr.bf16.gmra.mrb[0].mxu0 %v2984
      %v3226 = vpop.f32.mrb[0].mxu0
      %v3227 = vadd.f32 %v3066, %v3226
      %v3228 = vpop.f32.mrb[0].mxu0
      %v3229 = vpop.f32.mrb[0].mxu0
      %v3230 = vadd.f32 %v3069, %v3229
      %v3231 = vpop.f32.mrb[0].mxu0
      %3232 = vmatprep.mubr.bf16.mxu0 0
      %3233 = vmatmul.mubr.bf16.gmra.mrb[0].mxu0 %v2987
      %v3234 = vpop.f32.mrb[0].mxu0
      %v3235 = vadd.f32 %v3074, %v3234
      %v3236 = vpop.f32.mrb[0].mxu0
      %v3237 = vpop.f32.mrb[0].mxu0
      %v3238 = vadd.f32 %v3077, %v3237
      %v3239 = vpop.f32.mrb[0].mxu0
      %3240 = vmatprep.mubr.bf16.mxu0 0
      %3241 = vmatmul.mubr.bf16.gmra.mrb[0].mxu0 %v2990
      %v3242 = vpop.f32.mrb[0].mxu0
      %v3243 = vadd.f32 %v3082, %v3242
      %v3244 = vpop.f32.mrb[0].mxu0
      %v3245 = vpop.f32.mrb[0].mxu0
      %v3246 = vadd.f32 %v3085, %v3245
      %v3247 = vpop.f32.mrb[0].mxu0
      %3248 = vmatprep.mubr.bf16.mxu0 0
      %3249 = vmatmul.mubr.bf16.gmra.mrb[0].mxu0 %v2993
      %v3250 = vpop.f32.mrb[0].mxu0
      %v3251 = vadd.f32 %v3090, %v3250
      %v3252 = vpop.f32.mrb[0].mxu0
      %v3253 = vpop.f32.mrb[0].mxu0
      %v3254 = vadd.f32 %v3093, %v3253
      %v3255 = vpop.f32.mrb[0].mxu0
      %3256 = vmatprep.mubr.bf16.mxu0 0
      %3257 = vmatmul.mubr.bf16.gmra.mrb[0].mxu0 %v2996
      %v3258 = vpop.f32.mrb[0].mxu0
      %v3259 = vadd.f32 %v3098, %v3258
      %v3260 = vpop.f32.mrb[0].mxu0
      %v3261 = vpop.f32.mrb[0].mxu0
      %v3262 = vadd.f32 %v3101, %v3261
      %v3263 = vpop.f32.mrb[0].mxu0
      %3264 = vmatprep.mubr.bf16.mxu0 0
      %3265 = vmatmul.mubr.bf16.gmra.mrb[0].mxu0 %v2999
      %v3266 = vpop.f32.mrb[0].mxu0
      %v3267 = vadd.f32 %v3106, %v3266
      %v3268 = vpop.f32.mrb[0].mxu0
      %v3269 = vpop.f32.mrb[0].mxu0
      %v3270 = vadd.f32 %v3109, %v3269
      %v3271 = vpop.f32.mrb[0].mxu0
      %3272 = vmatprep.mubr.bf16.mxu0 0
      %3273 = vmatmul.mubr.bf16.gmra.mrb[0].mxu0 %v3002
      %v3274 = vpop.f32.mrb[0].mxu0
      %v3275 = vadd.f32 %v3114, %v3274
      %v3276 = vpop.f32.mrb[0].mxu0
      %v3277 = vpop.f32.mrb[0].mxu0
      %v3278 = vadd.f32 %v3117, %v3277
      %v3279 = vpop.f32.mrb[0].mxu0
      %3280 = vmatprep.mubr.bf16.mxu0 0
      %3281 = vmatmul.mubr.bf16.gmra.mrb[0].mxu0 %v3005
      %v3282 = vpop.f32.mrb[0].mxu0
      %v3283 = vadd.f32 %v3122, %v3282
      %v3284 = vpop.f32.mrb[0].mxu0
      %v3285 = vpop.f32.mrb[0].mxu0
      %v3286 = vadd.f32 %v3125, %v3285
      %v3287 = vpop.f32.mrb[0].mxu0
      %3288 = vmatprep.mubr.bf16.mxu0 0
      %3289 = vmatmul.mubr.bf16.gmra.mrb[0].mxu0 %v3008
      %v3290 = vpop.f32.mrb[0].mxu0
      %v3291 = vadd.f32 %v3130, %v3290
      %v3292 = vpop.f32.mrb[0].mxu0
      %v3293 = vpop.f32.mrb[0].mxu0
      %v3294 = vadd.f32 %v3133, %v3293
      %v3295 = vpop.f32.mrb[0].mxu0
      %3296 = vmatprep.mubr.bf16.mxu0 0
      %3297 = vmatmul.mubr.bf16.gmra.mrb[0].mxu0 %v3011
      %v3298 = vpop.f32.mrb[0].mxu0
      %v3299 = vadd.f32 %v3138, %v3298
      %v3300 = vpop.f32.mrb[0].mxu0
      %v3301 = vpop.f32.mrb[0].mxu0
      %v3302 = vadd.f32 %v3141, %v3301
      %v3303 = vpop.f32.mrb[0].mxu0
      %3304 = vmatprep.mubr.bf16.mxu0 0
      %3305 = vmatmul.mubr.bf16.gmra.mrb[0].mxu0 %v3014
      %v3306 = vpop.f32.mrb[0].mxu0
      %v3307 = vadd.f32 %v3146, %v3306
      %v3308 = vpop.f32.mrb[0].mxu0
      %v3309 = vpop.f32.mrb[0].mxu0
      %v3310 = vadd.f32 %v3149, %v3309
      %v3311 = vpop.f32.mrb[0].mxu0
      %3312 = vmatprep.mubr.bf16.mxu0 0
      %3313 = vmatmul.mubr.bf16.gmra.mrb[0].mxu0 %v3017
      %v3314 = vpop.f32.mrb[0].mxu0
      %v3315 = vadd.f32 %v3154, %v3314
      %v3316 = vpop.f32.mrb[0].mxu0
      %v3317 = vpop.f32.mrb[0].mxu0
      %v3318 = vadd.f32 %v3157, %v3317
      %v3319 = vpop.f32.mrb[0].mxu0
      %3320 = vmatprep.mubr.bf16.mxu0 0
      %3321 = vmatmul.mubr.bf16.gmra.mrb[0].mxu0 %v3020
      %v3322 = vpop.f32.mrb[0].mxu0
      %v3323 = vadd.f32 %v3162, %v3322
      %v3324 = vpop.f32.mrb[0].mxu0
      %v3325 = vpop.f32.mrb[0].mxu0
      %v3326 = vadd.f32 %v3165, %v3325
      %v3327 = vpop.f32.mrb[0].mxu0
      %3328 = vmatprep.mubr.bf16.mxu0 0
      %3329 = vmatmul.mubr.bf16.gmra.mrb[0].mxu0 %v3023
      %v3330 = vpop.f32.mrb[0].mxu0
      %v3331 = vadd.f32 %v3170, %v3330
      %v3332 = vpop.f32.mrb[0].mxu0
      %v3333 = vpop.f32.mrb[0].mxu0
      %v3334 = vadd.f32 %v3173, %v3333
      %v3335 = vpop.f32.mrb[0].mxu0
      %3336 = vmatprep.mubr.bf16.mxu0 0
      %3337 = vmatmul.mubr.bf16.gmra.mrb[0].mxu0 %v3026
      %v3338 = vpop.f32.mrb[0].mxu0
      %v3339 = vadd.f32 %v3178, %v3338
      %v3340 = vpop.f32.mrb[0].mxu0
      %v3341 = vpop.f32.mrb[0].mxu0
      %v3342 = vadd.f32 %v3181, %v3341
      %v3343 = vpop.f32.mrb[0].mxu0
      %3344 = vmatprep.mubr.bf16.mxu0 0
      %3345 = vmatmul.mubr.bf16.gmra.mrb[0].mxu0 %v3029
      %v3346 = vpop.f32.mrb[0].mxu0
      %v3347 = vadd.f32 %v3186, %v3346
      %v3348 = vpop.f32.mrb[0].mxu0
      %v3349 = vpop.f32.mrb[0].mxu0
      %v3350 = vadd.f32 %v3189, %v3349
      %v3351 = vpop.f32.mrb[0].mxu0
      %3352 = vdwg.mxu0
      %v3353 = vmax.f32 %v3227, 0.0
      %v3354 = vmax.f32 %v3230, 0.0
      %v3355 = vmax.f32 %v3235, 0.0
      %v3356 = vmax.f32 %v3238, 0.0
      %v3357 = vmax.f32 %v3243, 0.0
      %v3358 = vmax.f32 %v3246, 0.0
      %v3359 = vmax.f32 %v3251, 0.0
      %v3360 = vmax.f32 %v3254, 0.0
      %v3361 = vmax.f32 %v3259, 0.0
      %v3362 = vmax.f32 %v3262, 0.0
      %v3363 = vmax.f32 %v3267, 0.0
      %v3364 = vmax.f32 %v3270, 0.0
      %v3365 = vmax.f32 %v3275, 0.0
      %v3366 = vmax.f32 %v3278, 0.0
      %v3367 = vmax.f32 %v3283, 0.0
      %v3368 = vmax.f32 %v3286, 0.0
      %v3369 = vmax.f32 %v3291, 0.0
      %v3370 = vmax.f32 %v3294, 0.0
      %v3371 = vmax.f32 %v3299, 0.0
      %v3372 = vmax.f32 %v3302, 0.0
      %v3373 = vmax.f32 %v3307, 0.0
      %v3374 = vmax.f32 %v3310, 0.0
      %v3375 = vmax.f32 %v3315, 0.0
      %v3376 = vmax.f32 %v3318, 0.0
      %v3377 = vmax.f32 %v3323, 0.0
      %v3378 = vmax.f32 %v3326, 0.0
      %v3379 = vmax.f32 %v3331, 0.0
      %v3380 = vmax.f32 %v3334, 0.0
      %v3381 = vmax.f32 %v3339, 0.0
      %v3382 = vmax.f32 %v3342, 0.0
      %v3383 = vmax.f32 %v3347, 0.0
      %v3384 = vmax.f32 %v3350, 0.0
      %3385 = vst.msk [vmem:[%s314 + $0x1] sm:$0xff] %vm226, %v3353
      %3386 = vst.msk [vmem:[%s314 + $0x9] sm:$0xff] %vm226, %v3354
      %3387 = vst.msk [vmem:[%s314 + $0x19] sm:$0xff] %vm226, %v3355
      %3388 = vst.msk [vmem:[%s314 + $0x21] sm:$0xff] %vm226, %v3356
      %3389 = vst.msk [vmem:[%s314 + $0x31] sm:$0xff] %vm226, %v3357
      %3390 = vst.msk [vmem:[%s314 + $0x39] sm:$0xff] %vm226, %v3358
      %3391 = vst.msk [vmem:[%s314 + $0x49] sm:$0xff] %vm226, %v3359
      %3392 = vst.msk [vmem:[%s314 + $0x51] sm:$0xff] %vm226, %v3360
      %3393 = vst.msk [vmem:[%s314 + $0x61] sm:$0xff] %vm226, %v3361
      %3394 = vst.msk [vmem:[%s314 + $0x69] sm:$0xff] %vm226, %v3362
      %3395 = vst.msk [vmem:[%s314 + $0x79] sm:$0xff] %vm226, %v3363
      %3396 = vst.msk [vmem:[%s314 + $0x81] sm:$0xff] %vm226, %v3364
      %3397 = vst.msk [vmem:[%s314 + $0x91] sm:$0xff] %vm226, %v3365
      %3398 = vst.msk [vmem:[%s314 + $0x99] sm:$0xff] %vm226, %v3366
      %3399 = vst.msk [vmem:[%s314 + $0xa9] sm:$0xff] %vm226, %v3367
      %3400 = vst.msk [vmem:[%s314 + $0xb1] sm:$0xff] %vm226, %v3368
      %3401 = vst.msk [vmem:[%s314 + $0xc1] sm:$0xff] %vm226, %v3369
      %3402 = vst.msk [vmem:[%s314 + $0xc9] sm:$0xff] %vm226, %v3370
      %3403 = vst.msk [vmem:[%s314 + $0xd9] sm:$0xff] %vm226, %v3371
      %3404 = vst.msk [vmem:[%s314 + $0xe1] sm:$0xff] %vm226, %v3372
      %3405 = vst.msk [vmem:[%s314 + $0xf1] sm:$0xff] %vm226, %v3373
      %3406 = vst.msk [vmem:[%s314 + $0xf9] sm:$0xff] %vm226, %v3374
      %3407 = vst.msk [vmem:[%s314 + $0x109] sm:$0xff] %vm226, %v3375
      %3408 = vst.msk [vmem:[%s314 + $0x111] sm:$0xff] %vm226, %v3376
      %3409 = vst.msk [vmem:[%s314 + $0x121] sm:$0xff] %vm226, %v3377
      %3410 = vst.msk [vmem:[%s314 + $0x129] sm:$0xff] %vm226, %v3378
      %3411 = vst.msk [vmem:[%s314 + $0x139] sm:$0xff] %vm226, %v3379
      %3412 = vst.msk [vmem:[%s314 + $0x141] sm:$0xff] %vm226, %v3380
      %3413 = vst.msk [vmem:[%s314 + $0x151] sm:$0xff] %vm226, %v3381
      %3414 = vst.msk [vmem:[%s314 + $0x159] sm:$0xff] %vm226, %v3382
      %3415 = vst.msk [vmem:[%s314 + $0x169] sm:$0xff] %vm226, %v3383
      %3416 = vst.msk [vmem:[%s314 + $0x171] sm:$0xff] %vm226, %v3384
      %v3417 = vld [vmem:[#allocation2] sm:$0xff]
      %v3418 = vld [vmem:[#allocation2 + $0x8] sm:$0xff]
      %v3419 = vld [vmem:[#allocation2 + $0x10] sm:$0x3]
      %v3420 = vld [vmem:[#allocation2 + $0x18] sm:$0xff]
      %v3421 = vld [vmem:[#allocation2 + $0x20] sm:$0xff]
      %v3422 = vld [vmem:[#allocation2 + $0x28] sm:$0x3]
      %v3423 = vld [vmem:[#allocation2 + $0x30] sm:$0xff]
      %v3424 = vld [vmem:[#allocation2 + $0x38] sm:$0xff]
      %v3425 = vld [vmem:[#allocation2 + $0x40] sm:$0x3]
      %v3426 = vld [vmem:[#allocation2 + $0x48] sm:$0xff]
      %v3427 = vld [vmem:[#allocation2 + $0x50] sm:$0xff]
      %v3428 = vld [vmem:[#allocation2 + $0x58] sm:$0x3]
      %v3429 = vld [vmem:[#allocation2 + $0x60] sm:$0xff]
      %v3430 = vld [vmem:[#allocation2 + $0x68] sm:$0xff]
      %v3431 = vld [vmem:[#allocation2 + $0x70] sm:$0x3]
      %v3432 = vld [vmem:[#allocation2 + $0x78] sm:$0xff]
      %v3433 = vld [vmem:[#allocation2 + $0x80] sm:$0xff]
      %v3434 = vld [vmem:[#allocation2 + $0x88] sm:$0x3]
      %v3435 = vld [vmem:[#allocation2 + $0x90] sm:$0xff]
      %v3436 = vld [vmem:[#allocation2 + $0x98] sm:$0xff]
      %v3437 = vld [vmem:[#allocation2 + $0xa0] sm:$0x3]
      %v3438 = vld [vmem:[#allocation2 + $0xa8] sm:$0xff]
      %v3439 = vld [vmem:[#allocation2 + $0xb0] sm:$0xff]
      %v3440 = vld [vmem:[#allocation2 + $0xb8] sm:$0x3]
      %v3441 = vld [vmem:[#allocation2 + $0xc0] sm:$0xff]
      %v3442 = vld [vmem:[#allocation2 + $0xc8] sm:$0xff]
      %v3443 = vld [vmem:[#allocation2 + $0xd0] sm:$0x3]
      %v3444 = vld [vmem:[#allocation2 + $0xd8] sm:$0xff]
      %v3445 = vld [vmem:[#allocation2 + $0xe0] sm:$0xff]
      %v3446 = vld [vmem:[#allocation2 + $0xe8] sm:$0x3]
      %v3447 = vld [vmem:[#allocation2 + $0xf0] sm:$0xff]
      %v3448 = vld [vmem:[#allocation2 + $0xf8] sm:$0xff]
      %v3449 = vld [vmem:[#allocation2 + $0x100] sm:$0x3]
      %v3450 = vld [vmem:[#allocation2 + $0x108] sm:$0xff]
      %v3451 = vld [vmem:[#allocation2 + $0x110] sm:$0xff]
      %v3452 = vld [vmem:[#allocation2 + $0x118] sm:$0x3]
      %v3453 = vld [vmem:[#allocation2 + $0x120] sm:$0xff]
      %v3454 = vld [vmem:[#allocation2 + $0x128] sm:$0xff]
      %v3455 = vld [vmem:[#allocation2 + $0x130] sm:$0x3]
      %v3456 = vld [vmem:[#allocation2 + $0x138] sm:$0xff]
      %v3457 = vld [vmem:[#allocation2 + $0x140] sm:$0xff]
      %v3458 = vld [vmem:[#allocation2 + $0x148] sm:$0x3]
      %v3459 = vld [vmem:[#allocation2 + $0x150] sm:$0xff]
      %v3460 = vld [vmem:[#allocation2 + $0x158] sm:$0xff]
      %v3461 = vld [vmem:[#allocation2 + $0x160] sm:$0x3]
      %v3462 = vld [vmem:[#allocation2 + $0x168] sm:$0xff]
      %v3463 = vld [vmem:[#allocation2 + $0x170] sm:$0xff]
      %v3464 = vld [vmem:[#allocation2 + $0x178] sm:$0x3]
      %v3465 = vld [vmem:[#allocation2 + $0x180] sm:$0xff]
      %v3466 = vld [vmem:[#allocation2 + $0x188] sm:$0xff]
      %v3467 = vld [vmem:[#allocation2 + $0x190] sm:$0x3]
      %v3468 = vld [vmem:[#allocation2 + $0x198] sm:$0xff]
      %v3469 = vld [vmem:[#allocation2 + $0x1a0] sm:$0xff]
      %v3470 = vld [vmem:[#allocation2 + $0x1a8] sm:$0x3]
      %v3471 = vpack.c.bf16 %v3418, %v3417
      %v3472 = vpack.c.bf16 %v3421, %v3420
      %v3473 = vpack.c.bf16 %v3424, %v3423
      %v3474 = vpack.c.bf16 %v3427, %v3426
      %v3475 = vpack.c.bf16 %v3430, %v3429
      %v3476 = vpack.c.bf16 %v3433, %v3432
      %v3477 = vpack.c.bf16 %v3436, %v3435
      %v3478 = vpack.c.bf16 %v3439, %v3438
      %v3479 = vpack.c.bf16 %v3442, %v3441
      %v3480 = vpack.c.bf16 %v3445, %v3444
      %v3481 = vpack.c.bf16 %v3448, %v3447
      %v3482 = vpack.c.bf16 %v3451, %v3450
      %v3483 = vpack.c.bf16 %v3454, %v3453
      %v3484 = vpack.c.bf16 %v3457, %v3456
      %v3485 = vpack.c.bf16 %v3460, %v3459
      %v3486 = vpack.c.bf16 %v3463, %v3462
      %3487 = vst.msk [vmem:[#allocation3] sm:$0xff] %vm226, %v3471
      %3488 = vst.msk [vmem:[#allocation3 + $0x18] sm:$0xff] %vm226, %v3472
      %3489 = vst.msk [vmem:[#allocation3 + $0x30] sm:$0xff] %vm226, %v3473
      %3490 = vst.msk [vmem:[#allocation3 + $0x48] sm:$0xff] %vm226, %v3474
      %3491 = vst.msk [vmem:[#allocation3 + $0x60] sm:$0xff] %vm226, %v3475
      %3492 = vst.msk [vmem:[#allocation3 + $0x78] sm:$0xff] %vm226, %v3476
      %3493 = vst.msk [vmem:[#allocation3 + $0x90] sm:$0xff] %vm226, %v3477
      %3494 = vst.msk [vmem:[#allocation3 + $0xa8] sm:$0xff] %vm226, %v3478
      %3495 = vst.msk [vmem:[#allocation3 + $0xc0] sm:$0xff] %vm226, %v3479
      %3496 = vst.msk [vmem:[#allocation3 + $0xd8] sm:$0xff] %vm226, %v3480
      %3497 = vst.msk [vmem:[#allocation3 + $0xf0] sm:$0xff] %vm226, %v3481
      %3498 = vst.msk [vmem:[#allocation3 + $0x108] sm:$0xff] %vm226, %v3482
      %3499 = vst.msk [vmem:[#allocation3 + $0x120] sm:$0xff] %vm226, %v3483
      %3500 = vst.msk [vmem:[#allocation3 + $0x138] sm:$0xff] %vm226, %v3484
      %3501 = vst.msk [vmem:[#allocation3 + $0x150] sm:$0xff] %vm226, %v3485
      %3502 = vst.msk [vmem:[#allocation3 + $0x168] sm:$0xff] %vm226, %v3486
      %v3551 = vrot.slane %v3417, 1
      %v3552 = vrot.slane %v3418, 1
      %v3553 = vsel %vm482, %v3551, %v3552
      %v3554 = vrot.slane %v3419, 1
      %v3555 = vsel %vm482, %v3552, %v3554
      %v3556 = vrot.slane %v3420, 1
      %v3557 = vrot.slane %v3421, 1
      %v3558 = vsel %vm482, %v3556, %v3557
      %v3559 = vrot.slane %v3422, 1
      %v3560 = vsel %vm482, %v3557, %v3559
      %v3561 = vrot.slane %v3423, 1
      %v3562 = vrot.slane %v3424, 1
      %v3563 = vsel %vm482, %v3561, %v3562
      %v3564 = vrot.slane %v3425, 1
      %v3565 = vsel %vm482, %v3562, %v3564
      %v3566 = vrot.slane %v3426, 1
      %v3567 = vrot.slane %v3427, 1
      %v3568 = vsel %vm482, %v3566, %v3567
      %v3569 = vrot.slane %v3428, 1
      %v3570 = vsel %vm482, %v3567, %v3569
      %v3571 = vrot.slane %v3429, 1
      %v3572 = vrot.slane %v3430, 1
      %v3573 = vsel %vm482, %v3571, %v3572
      %v3574 = vrot.slane %v3431, 1
      %v3575 = vsel %vm482, %v3572, %v3574
      %v3576 = vrot.slane %v3432, 1
      %v3577 = vrot.slane %v3433, 1
      %v3578 = vsel %vm482, %v3576, %v3577
      %v3579 = vrot.slane %v3434, 1
      %v3580 = vsel %vm482, %v3577, %v3579
      %v3581 = vrot.slane %v3435, 1
      %v3582 = vrot.slane %v3436, 1
      %v3583 = vsel %vm482, %v3581, %v3582
      %v3584 = vrot.slane %v3437, 1
      %v3585 = vsel %vm482, %v3582, %v3584
      %v3586 = vrot.slane %v3438, 1
      %v3587 = vrot.slane %v3439, 1
      %v3588 = vsel %vm482, %v3586, %v3587
      %v3589 = vrot.slane %v3440, 1
      %v3590 = vsel %vm482, %v3587, %v3589
      %v3591 = vrot.slane %v3441, 1
      %v3592 = vrot.slane %v3442, 1
      %v3593 = vsel %vm482, %v3591, %v3592
      %v3594 = vrot.slane %v3443, 1
      %v3595 = vsel %vm482, %v3592, %v3594
      %v3596 = vrot.slane %v3444, 1
      %v3597 = vrot.slane %v3445, 1
      %v3598 = vsel %vm482, %v3596, %v3597
      %v3599 = vrot.slane %v3446, 1
      %v3600 = vsel %vm482, %v3597, %v3599
      %v3601 = vrot.slane %v3447, 1
      %v3602 = vrot.slane %v3448, 1
      %v3603 = vsel %vm482, %v3601, %v3602
      %v3604 = vrot.slane %v3449, 1
      %v3605 = vsel %vm482, %v3602, %v3604
      %v3606 = vrot.slane %v3450, 1
      %v3607 = vrot.slane %v3451, 1
      %v3608 = vsel %vm482, %v3606, %v3607
      %v3609 = vrot.slane %v3452, 1
      %v3610 = vsel %vm482, %v3607, %v3609
      %v3611 = vrot.slane %v3453, 1
      %v3612 = vrot.slane %v3454, 1
      %v3613 = vsel %vm482, %v3611, %v3612
      %v3614 = vrot.slane %v3455, 1
      %v3615 = vsel %vm482, %v3612, %v3614
      %v3616 = vrot.slane %v3456, 1
      %v3617 = vrot.slane %v3457, 1
      %v3618 = vsel %vm482, %v3616, %v3617
      %v3619 = vrot.slane %v3458, 1
      %v3620 = vsel %vm482, %v3617, %v3619
      %v3621 = vrot.slane %v3459, 1
      %v3622 = vrot.slane %v3460, 1
      %v3623 = vsel %vm482, %v3621, %v3622
      %v3624 = vrot.slane %v3461, 1
      %v3625 = vsel %vm482, %v3622, %v3624
      %v3626 = vrot.slane %v3462, 1
      %v3627 = vrot.slane %v3463, 1
      %v3628 = vsel %vm482, %v3626, %v3627
      %v3629 = vrot.slane %v3464, 1
      %v3630 = vsel %vm482, %v3627, %v3629
      %v3663 = vpack.c.bf16 %v3555, %v3553
      %v3664 = vpack.c.bf16 %v3560, %v3558
      %v3665 = vpack.c.bf16 %v3565, %v3563
      %v3666 = vpack.c.bf16 %v3570, %v3568
      %v3667 = vpack.c.bf16 %v3575, %v3573
      %v3668 = vpack.c.bf16 %v3580, %v3578
      %v3669 = vpack.c.bf16 %v3585, %v3583
      %v3670 = vpack.c.bf16 %v3590, %v3588
      %v3671 = vpack.c.bf16 %v3595, %v3593
      %v3672 = vpack.c.bf16 %v3600, %v3598
      %v3673 = vpack.c.bf16 %v3605, %v3603
      %v3674 = vpack.c.bf16 %v3610, %v3608
      %v3675 = vpack.c.bf16 %v3615, %v3613
      %v3676 = vpack.c.bf16 %v3620, %v3618
      %v3677 = vpack.c.bf16 %v3625, %v3623
      %v3678 = vpack.c.bf16 %v3630, %v3628
      %3695 = vrot.lane.b32.xlu0 %v3663, 32
      %v3696 = vpop.permute.xlu0 %3695
      %3697 = vrot.lane.b32.xlu0 %v3664, 32
      %v3698 = vpop.permute.xlu0 %3697
      %3699 = vrot.lane.b32.xlu0 %v3665, 32
      %v3700 = vpop.permute.xlu0 %3699
      %3701 = vrot.lane.b32.xlu0 %v3666, 32
      %v3702 = vpop.permute.xlu0 %3701
      %3703 = vrot.lane.b32.xlu0 %v3667, 32
      %v3704 = vpop.permute.xlu0 %3703
      %3705 = vrot.lane.b32.xlu0 %v3668, 32
      %v3706 = vpop.permute.xlu0 %3705
      %3707 = vrot.lane.b32.xlu0 %v3669, 32
      %v3708 = vpop.permute.xlu0 %3707
      %3709 = vrot.lane.b32.xlu0 %v3670, 32
      %v3710 = vpop.permute.xlu0 %3709
      %3711 = vrot.lane.b32.xlu0 %v3671, 32
      %v3712 = vpop.permute.xlu0 %3711
      %3713 = vrot.lane.b32.xlu0 %v3672, 32
      %v3714 = vpop.permute.xlu0 %3713
      %3715 = vrot.lane.b32.xlu0 %v3673, 32
      %v3716 = vpop.permute.xlu0 %3715
      %3717 = vrot.lane.b32.xlu0 %v3674, 32
      %v3718 = vpop.permute.xlu0 %3717
      %3719 = vrot.lane.b32.xlu0 %v3675, 32
      %v3720 = vpop.permute.xlu0 %3719
      %3721 = vrot.lane.b32.xlu0 %v3676, 32
      %v3722 = vpop.permute.xlu0 %3721
      %3723 = vrot.lane.b32.xlu0 %v3677, 32
      %v3724 = vpop.permute.xlu0 %3723
      %3725 = vrot.lane.b32.xlu0 %v3678, 32
      %v3726 = vpop.permute.xlu0 %3725
      %3743 = vst.msk [vmem:[#allocation3] sm:$0xff] %vm675, %v3696
      %3744 = vst.msk [vmem:[#allocation3 + $0x18] sm:$0xff] %vm675, %v3698
      %3745 = vst.msk [vmem:[#allocation3 + $0x30] sm:$0xff] %vm675, %v3700
      %3746 = vst.msk [vmem:[#allocation3 + $0x48] sm:$0xff] %vm675, %v3702
      %3747 = vst.msk [vmem:[#allocation3 + $0x60] sm:$0xff] %vm675, %v3704
      %3748 = vst.msk [vmem:[#allocation3 + $0x78] sm:$0xff] %vm675, %v3706
      %3749 = vst.msk [vmem:[#allocation3 + $0x90] sm:$0xff] %vm675, %v3708
      %3750 = vst.msk [vmem:[#allocation3 + $0xa8] sm:$0xff] %vm675, %v3710
      %3751 = vst.msk [vmem:[#allocation3 + $0xc0] sm:$0xff] %vm675, %v3712
      %3752 = vst.msk [vmem:[#allocation3 + $0xd8] sm:$0xff] %vm675, %v3714
      %3753 = vst.msk [vmem:[#allocation3 + $0xf0] sm:$0xff] %vm675, %v3716
      %3754 = vst.msk [vmem:[#allocation3 + $0x108] sm:$0xff] %vm675, %v3718
      %3755 = vst.msk [vmem:[#allocation3 + $0x120] sm:$0xff] %vm675, %v3720
      %3756 = vst.msk [vmem:[#allocation3 + $0x138] sm:$0xff] %vm675, %v3722
      %3757 = vst.msk [vmem:[#allocation3 + $0x150] sm:$0xff] %vm675, %v3724
      %3758 = vst.msk [vmem:[#allocation3 + $0x168] sm:$0xff] %vm675, %v3726
      %v3759 = vrot.slane %v3417, 2
      %v3760 = vrot.slane %v3418, 2
      %v3761 = vsel %vm692, %v3759, %v3760
      %v3762 = vrot.slane %v3419, 2
      %v3763 = vsel %vm692, %v3760, %v3762
      %v3764 = vrot.slane %v3420, 2
      %v3765 = vrot.slane %v3421, 2
      %v3766 = vsel %vm692, %v3764, %v3765
      %v3767 = vrot.slane %v3422, 2
      %v3768 = vsel %vm692, %v3765, %v3767
      %v3769 = vrot.slane %v3423, 2
      %v3770 = vrot.slane %v3424, 2
      %v3771 = vsel %vm692, %v3769, %v3770
      %v3772 = vrot.slane %v3425, 2
      %v3773 = vsel %vm692, %v3770, %v3772
      %v3774 = vrot.slane %v3426, 2
      %v3775 = vrot.slane %v3427, 2
      %v3776 = vsel %vm692, %v3774, %v3775
      %v3777 = vrot.slane %v3428, 2
      %v3778 = vsel %vm692, %v3775, %v3777
      %v3779 = vrot.slane %v3429, 2
      %v3780 = vrot.slane %v3430, 2
      %v3781 = vsel %vm692, %v3779, %v3780
      %v3782 = vrot.slane %v3431, 2
      %v3783 = vsel %vm692, %v3780, %v3782
      %v3784 = vrot.slane %v3432, 2
      %v3785 = vrot.slane %v3433, 2
      %v3786 = vsel %vm692, %v3784, %v3785
      %v3787 = vrot.slane %v3434, 2
      %v3788 = vsel %vm692, %v3785, %v3787
      %v3789 = vrot.slane %v3435, 2
      %v3790 = vrot.slane %v3436, 2
      %v3791 = vsel %vm692, %v3789, %v3790
      %v3792 = vrot.slane %v3437, 2
      %v3793 = vsel %vm692, %v3790, %v3792
      %v3794 = vrot.slane %v3438, 2
      %v3795 = vrot.slane %v3439, 2
      %v3796 = vsel %vm692, %v3794, %v3795
      %v3797 = vrot.slane %v3440, 2
      %v3798 = vsel %vm692, %v3795, %v3797
      %v3799 = vrot.slane %v3441, 2
      %v3800 = vrot.slane %v3442, 2
      %v3801 = vsel %vm692, %v3799, %v3800
      %v3802 = vrot.slane %v3443, 2
      %v3803 = vsel %vm692, %v3800, %v3802
      %v3804 = vrot.slane %v3444, 2
      %v3805 = vrot.slane %v3445, 2
      %v3806 = vsel %vm692, %v3804, %v3805
      %v3807 = vrot.slane %v3446, 2
      %v3808 = vsel %vm692, %v3805, %v3807
      %v3809 = vrot.slane %v3447, 2
      %v3810 = vrot.slane %v3448, 2
      %v3811 = vsel %vm692, %v3809, %v3810
      %v3812 = vrot.slane %v3449, 2
      %v3813 = vsel %vm692, %v3810, %v3812
      %v3814 = vrot.slane %v3450, 2
      %v3815 = vrot.slane %v3451, 2
      %v3816 = vsel %vm692, %v3814, %v3815
      %v3817 = vrot.slane %v3452, 2
      %v3818 = vsel %vm692, %v3815, %v3817
      %v3819 = vrot.slane %v3453, 2
      %v3820 = vrot.slane %v3454, 2
      %v3821 = vsel %vm692, %v3819, %v3820
      %v3822 = vrot.slane %v3455, 2
      %v3823 = vsel %vm692, %v3820, %v3822
      %v3824 = vrot.slane %v3456, 2
      %v3825 = vrot.slane %v3457, 2
      %v3826 = vsel %vm692, %v3824, %v3825
      %v3827 = vrot.slane %v3458, 2
      %v3828 = vsel %vm692, %v3825, %v3827
      %v3829 = vrot.slane %v3459, 2
      %v3830 = vrot.slane %v3460, 2
      %v3831 = vsel %vm692, %v3829, %v3830
      %v3832 = vrot.slane %v3461, 2
      %v3833 = vsel %vm692, %v3830, %v3832
      %v3834 = vrot.slane %v3462, 2
      %v3835 = vrot.slane %v3463, 2
      %v3836 = vsel %vm692, %v3834, %v3835
      %v3837 = vrot.slane %v3464, 2
      %v3838 = vsel %vm692, %v3835, %v3837
      %v3871 = vpack.c.bf16 %v3763, %v3761
      %v3872 = vpack.c.bf16 %v3768, %v3766
      %v3873 = vpack.c.bf16 %v3773, %v3771
      %v3874 = vpack.c.bf16 %v3778, %v3776
      %v3875 = vpack.c.bf16 %v3783, %v3781
      %v3876 = vpack.c.bf16 %v3788, %v3786
      %v3877 = vpack.c.bf16 %v3793, %v3791
      %v3878 = vpack.c.bf16 %v3798, %v3796
      %v3879 = vpack.c.bf16 %v3803, %v3801
      %v3880 = vpack.c.bf16 %v3808, %v3806
      %v3881 = vpack.c.bf16 %v3813, %v3811
      %v3882 = vpack.c.bf16 %v3818, %v3816
      %v3883 = vpack.c.bf16 %v3823, %v3821
      %v3884 = vpack.c.bf16 %v3828, %v3826
      %v3885 = vpack.c.bf16 %v3833, %v3831
      %v3886 = vpack.c.bf16 %v3838, %v3836
      %3903 = vrot.lane.b32.xlu0 %v3871, 64
      %v3904 = vpop.permute.xlu0 %3903
      %3905 = vrot.lane.b32.xlu0 %v3872, 64
      %v3906 = vpop.permute.xlu0 %3905
      %3907 = vrot.lane.b32.xlu0 %v3873, 64
      %v3908 = vpop.permute.xlu0 %3907
      %3909 = vrot.lane.b32.xlu0 %v3874, 64
      %v3910 = vpop.permute.xlu0 %3909
      %3911 = vrot.lane.b32.xlu0 %v3875, 64
      %v3912 = vpop.permute.xlu0 %3911
      %3913 = vrot.lane.b32.xlu0 %v3876, 64
      %v3914 = vpop.permute.xlu0 %3913
      %3915 = vrot.lane.b32.xlu0 %v3877, 64
      %v3916 = vpop.permute.xlu0 %3915
      %3917 = vrot.lane.b32.xlu0 %v3878, 64
      %v3918 = vpop.permute.xlu0 %3917
      %3919 = vrot.lane.b32.xlu0 %v3879, 64
      %v3920 = vpop.permute.xlu0 %3919
      %3921 = vrot.lane.b32.xlu0 %v3880, 64
      %v3922 = vpop.permute.xlu0 %3921
      %3923 = vrot.lane.b32.xlu0 %v3881, 64
      %v3924 = vpop.permute.xlu0 %3923
      %3925 = vrot.lane.b32.xlu0 %v3882, 64
      %v3926 = vpop.permute.xlu0 %3925
      %3927 = vrot.lane.b32.xlu0 %v3883, 64
      %v3928 = vpop.permute.xlu0 %3927
      %3929 = vrot.lane.b32.xlu0 %v3884, 64
      %v3930 = vpop.permute.xlu0 %3929
      %3931 = vrot.lane.b32.xlu0 %v3885, 64
      %v3932 = vpop.permute.xlu0 %3931
      %3933 = vrot.lane.b32.xlu0 %v3886, 64
      %v3934 = vpop.permute.xlu0 %3933
      %3951 = vst.msk [vmem:[#allocation3] sm:$0xff] %vm885, %v3904
      %3952 = vst.msk [vmem:[#allocation3 + $0x18] sm:$0xff] %vm885, %v3906
      %3953 = vst.msk [vmem:[#allocation3 + $0x30] sm:$0xff] %vm885, %v3908
      %3954 = vst.msk [vmem:[#allocation3 + $0x48] sm:$0xff] %vm885, %v3910
      %3955 = vst.msk [vmem:[#allocation3 + $0x60] sm:$0xff] %vm885, %v3912
      %3956 = vst.msk [vmem:[#allocation3 + $0x78] sm:$0xff] %vm885, %v3914
      %3957 = vst.msk [vmem:[#allocation3 + $0x90] sm:$0xff] %vm885, %v3916
      %3958 = vst.msk [vmem:[#allocation3 + $0xa8] sm:$0xff] %vm885, %v3918
      %3959 = vst.msk [vmem:[#allocation3 + $0xc0] sm:$0xff] %vm885, %v3920
      %3960 = vst.msk [vmem:[#allocation3 + $0xd8] sm:$0xff] %vm885, %v3922
      %3961 = vst.msk [vmem:[#allocation3 + $0xf0] sm:$0xff] %vm885, %v3924
      %3962 = vst.msk [vmem:[#allocation3 + $0x108] sm:$0xff] %vm885, %v3926
      %3963 = vst.msk [vmem:[#allocation3 + $0x120] sm:$0xff] %vm885, %v3928
      %3964 = vst.msk [vmem:[#allocation3 + $0x138] sm:$0xff] %vm885, %v3930
      %3965 = vst.msk [vmem:[#allocation3 + $0x150] sm:$0xff] %vm885, %v3932
      %3966 = vst.msk [vmem:[#allocation3 + $0x168] sm:$0xff] %vm885, %v3934
      %v3967 = vpack.c.bf16 %v3466, %v3465
      %3984 = vrot.lane.b32.xlu0 %v3472, 96
      %v3985 = vpop.permute.xlu0 %3984
      %3986 = vrot.lane.b32.xlu0 %v3473, 96
      %v3987 = vpop.permute.xlu0 %3986
      %3988 = vrot.lane.b32.xlu0 %v3474, 96
      %v3989 = vpop.permute.xlu0 %3988
      %3990 = vrot.lane.b32.xlu0 %v3475, 96
      %v3991 = vpop.permute.xlu0 %3990
      %3992 = vrot.lane.b32.xlu0 %v3476, 96
      %v3993 = vpop.permute.xlu0 %3992
      %3994 = vrot.lane.b32.xlu0 %v3477, 96
      %v3995 = vpop.permute.xlu0 %3994
      %3996 = vrot.lane.b32.xlu0 %v3478, 96
      %v3997 = vpop.permute.xlu0 %3996
      %3998 = vrot.lane.b32.xlu0 %v3479, 96
      %v3999 = vpop.permute.xlu0 %3998
      %4000 = vrot.lane.b32.xlu0 %v3480, 96
      %v4001 = vpop.permute.xlu0 %4000
      %4002 = vrot.lane.b32.xlu0 %v3481, 96
      %v4003 = vpop.permute.xlu0 %4002
      %4004 = vrot.lane.b32.xlu0 %v3482, 96
      %v4005 = vpop.permute.xlu0 %4004
      %4006 = vrot.lane.b32.xlu0 %v3483, 96
      %v4007 = vpop.permute.xlu0 %4006
      %4008 = vrot.lane.b32.xlu0 %v3484, 96
      %v4009 = vpop.permute.xlu0 %4008
      %4010 = vrot.lane.b32.xlu0 %v3485, 96
      %v4011 = vpop.permute.xlu0 %4010
      %4012 = vrot.lane.b32.xlu0 %v3486, 96
      %v4013 = vpop.permute.xlu0 %4012
      %4014 = vrot.lane.b32.xlu0 %v3967, 96
      %v4015 = vpop.permute.xlu0 %4014
      %4032 = vst.msk [vmem:[#allocation3] sm:$0xff] %vm967, %v3985
      %4033 = vst.msk [vmem:[#allocation3 + $0x18] sm:$0xff] %vm967, %v3987
      %4034 = vst.msk [vmem:[#allocation3 + $0x30] sm:$0xff] %vm967, %v3989
      %4035 = vst.msk [vmem:[#allocation3 + $0x48] sm:$0xff] %vm967, %v3991
      %4036 = vst.msk [vmem:[#allocation3 + $0x60] sm:$0xff] %vm967, %v3993
      %4037 = vst.msk [vmem:[#allocation3 + $0x78] sm:$0xff] %vm967, %v3995
      %4038 = vst.msk [vmem:[#allocation3 + $0x90] sm:$0xff] %vm967, %v3997
      %4039 = vst.msk [vmem:[#allocation3 + $0xa8] sm:$0xff] %vm967, %v3999
      %4040 = vst.msk [vmem:[#allocation3 + $0xc0] sm:$0xff] %vm967, %v4001
      %4041 = vst.msk [vmem:[#allocation3 + $0xd8] sm:$0xff] %vm967, %v4003
      %4042 = vst.msk [vmem:[#allocation3 + $0xf0] sm:$0xff] %vm967, %v4005
      %4043 = vst.msk [vmem:[#allocation3 + $0x108] sm:$0xff] %vm967, %v4007
      %4044 = vst.msk [vmem:[#allocation3 + $0x120] sm:$0xff] %vm967, %v4009
      %4045 = vst.msk [vmem:[#allocation3 + $0x138] sm:$0xff] %vm967, %v4011
      %4046 = vst.msk [vmem:[#allocation3 + $0x150] sm:$0xff] %vm967, %v4013
      %4047 = vst.msk [vmem:[#allocation3 + $0x168] sm:$0xff] %vm967, %v4015
      %v4051 = vrot.slane %v3465, 1
      %v4052 = vrot.slane %v3466, 1
      %v4053 = vsel %vm482, %v4051, %v4052
      %v4054 = vrot.slane %v3467, 1
      %v4055 = vsel %vm482, %v4052, %v4054
      %v4058 = vpack.c.bf16 %v4055, %v4053
      %4059 = vst.msk [vmem:[#allocation3 + $0x8] sm:$0xff] %vm226, %v3664
      %4060 = vst.msk [vmem:[#allocation3 + $0x20] sm:$0xff] %vm226, %v3665
      %4061 = vst.msk [vmem:[#allocation3 + $0x38] sm:$0xff] %vm226, %v3666
      %4062 = vst.msk [vmem:[#allocation3 + $0x50] sm:$0xff] %vm226, %v3667
      %4063 = vst.msk [vmem:[#allocation3 + $0x68] sm:$0xff] %vm226, %v3668
      %4064 = vst.msk [vmem:[#allocation3 + $0x80] sm:$0xff] %vm226, %v3669
      %4065 = vst.msk [vmem:[#allocation3 + $0x98] sm:$0xff] %vm226, %v3670
      %4066 = vst.msk [vmem:[#allocation3 + $0xb0] sm:$0xff] %vm226, %v3671
      %4067 = vst.msk [vmem:[#allocation3 + $0xc8] sm:$0xff] %vm226, %v3672
      %4068 = vst.msk [vmem:[#allocation3 + $0xe0] sm:$0xff] %vm226, %v3673
      %4069 = vst.msk [vmem:[#allocation3 + $0xf8] sm:$0xff] %vm226, %v3674
      %4070 = vst.msk [vmem:[#allocation3 + $0x110] sm:$0xff] %vm226, %v3675
      %4071 = vst.msk [vmem:[#allocation3 + $0x128] sm:$0xff] %vm226, %v3676
      %4072 = vst.msk [vmem:[#allocation3 + $0x140] sm:$0xff] %vm226, %v3677
      %4073 = vst.msk [vmem:[#allocation3 + $0x158] sm:$0xff] %vm226, %v3678
      %4074 = vst.msk [vmem:[#allocation3 + $0x170] sm:$0xff] %vm226, %v4058
      %v4075 = vrot.slane %v3465, 2
      %v4076 = vrot.slane %v3466, 2
      %v4077 = vsel %vm692, %v4075, %v4076
      %v4078 = vrot.slane %v3467, 2
      %v4079 = vsel %vm692, %v4076, %v4078
      %v4082 = vpack.c.bf16 %v4079, %v4077
      %4084 = vrot.lane.b32.xlu0 %v3872, 32
      %v4085 = vpop.permute.xlu0 %4084
      %4086 = vrot.lane.b32.xlu0 %v3873, 32
      %v4087 = vpop.permute.xlu0 %4086
      %4088 = vrot.lane.b32.xlu0 %v3874, 32
      %v4089 = vpop.permute.xlu0 %4088
      %4090 = vrot.lane.b32.xlu0 %v3875, 32
      %v4091 = vpop.permute.xlu0 %4090
      %4092 = vrot.lane.b32.xlu0 %v3876, 32
      %v4093 = vpop.permute.xlu0 %4092
      %4094 = vrot.lane.b32.xlu0 %v3877, 32
      %v4095 = vpop.permute.xlu0 %4094
      %4096 = vrot.lane.b32.xlu0 %v3878, 32
      %v4097 = vpop.permute.xlu0 %4096
      %4098 = vrot.lane.b32.xlu0 %v3879, 32
      %v4099 = vpop.permute.xlu0 %4098
      %4100 = vrot.lane.b32.xlu0 %v3880, 32
      %v4101 = vpop.permute.xlu0 %4100
      %4102 = vrot.lane.b32.xlu0 %v3881, 32
      %v4103 = vpop.permute.xlu0 %4102
      %4104 = vrot.lane.b32.xlu0 %v3882, 32
      %v4105 = vpop.permute.xlu0 %4104
      %4106 = vrot.lane.b32.xlu0 %v3883, 32
      %v4107 = vpop.permute.xlu0 %4106
      %4108 = vrot.lane.b32.xlu0 %v3884, 32
      %v4109 = vpop.permute.xlu0 %4108
      %4110 = vrot.lane.b32.xlu0 %v3885, 32
      %v4111 = vpop.permute.xlu0 %4110
      %4112 = vrot.lane.b32.xlu0 %v3886, 32
      %v4113 = vpop.permute.xlu0 %4112
      %4114 = vrot.lane.b32.xlu0 %v4082, 32
      %v4115 = vpop.permute.xlu0 %4114
      %4132 = vst.msk [vmem:[#allocation3 + $0x8] sm:$0xff] %vm675, %v4085
      %4133 = vst.msk [vmem:[#allocation3 + $0x20] sm:$0xff] %vm675, %v4087
      %4134 = vst.msk [vmem:[#allocation3 + $0x38] sm:$0xff] %vm675, %v4089
      %4135 = vst.msk [vmem:[#allocation3 + $0x50] sm:$0xff] %vm675, %v4091
      %4136 = vst.msk [vmem:[#allocation3 + $0x68] sm:$0xff] %vm675, %v4093
      %4137 = vst.msk [vmem:[#allocation3 + $0x80] sm:$0xff] %vm675, %v4095
      %4138 = vst.msk [vmem:[#allocation3 + $0x98] sm:$0xff] %vm675, %v4097
      %4139 = vst.msk [vmem:[#allocation3 + $0xb0] sm:$0xff] %vm675, %v4099
      %4140 = vst.msk [vmem:[#allocation3 + $0xc8] sm:$0xff] %vm675, %v4101
      %4141 = vst.msk [vmem:[#allocation3 + $0xe0] sm:$0xff] %vm675, %v4103
      %4142 = vst.msk [vmem:[#allocation3 + $0xf8] sm:$0xff] %vm675, %v4105
      %4143 = vst.msk [vmem:[#allocation3 + $0x110] sm:$0xff] %vm675, %v4107
      %4144 = vst.msk [vmem:[#allocation3 + $0x128] sm:$0xff] %vm675, %v4109
      %4145 = vst.msk [vmem:[#allocation3 + $0x140] sm:$0xff] %vm675, %v4111
      %4146 = vst.msk [vmem:[#allocation3 + $0x158] sm:$0xff] %vm675, %v4113
      %4147 = vst.msk [vmem:[#allocation3 + $0x170] sm:$0xff] %vm675, %v4115
      %v4148 = vpack.c.bf16 %v3469, %v3468
      %4150 = vrot.lane.b32.xlu0 %v3473, 64
      %v4151 = vpop.permute.xlu0 %4150
      %4152 = vrot.lane.b32.xlu0 %v3474, 64
      %v4153 = vpop.permute.xlu0 %4152
      %4154 = vrot.lane.b32.xlu0 %v3475, 64
      %v4155 = vpop.permute.xlu0 %4154
      %4156 = vrot.lane.b32.xlu0 %v3476, 64
      %v4157 = vpop.permute.xlu0 %4156
      %4158 = vrot.lane.b32.xlu0 %v3477, 64
      %v4159 = vpop.permute.xlu0 %4158
      %4160 = vrot.lane.b32.xlu0 %v3478, 64
      %v4161 = vpop.permute.xlu0 %4160
      %4162 = vrot.lane.b32.xlu0 %v3479, 64
      %v4163 = vpop.permute.xlu0 %4162
      %4164 = vrot.lane.b32.xlu0 %v3480, 64
      %v4165 = vpop.permute.xlu0 %4164
      %4166 = vrot.lane.b32.xlu0 %v3481, 64
      %v4167 = vpop.permute.xlu0 %4166
      %4168 = vrot.lane.b32.xlu0 %v3482, 64
      %v4169 = vpop.permute.xlu0 %4168
      %4170 = vrot.lane.b32.xlu0 %v3483, 64
      %v4171 = vpop.permute.xlu0 %4170
      %4172 = vrot.lane.b32.xlu0 %v3484, 64
      %v4173 = vpop.permute.xlu0 %4172
      %4174 = vrot.lane.b32.xlu0 %v3485, 64
      %v4175 = vpop.permute.xlu0 %4174
      %4176 = vrot.lane.b32.xlu0 %v3486, 64
      %v4177 = vpop.permute.xlu0 %4176
      %4178 = vrot.lane.b32.xlu0 %v3967, 64
      %v4179 = vpop.permute.xlu0 %4178
      %4180 = vrot.lane.b32.xlu0 %v4148, 64
      %v4181 = vpop.permute.xlu0 %4180
      %4198 = vst.msk [vmem:[#allocation3 + $0x8] sm:$0xff] %vm885, %v4151
      %4199 = vst.msk [vmem:[#allocation3 + $0x20] sm:$0xff] %vm885, %v4153
      %4200 = vst.msk [vmem:[#allocation3 + $0x38] sm:$0xff] %vm885, %v4155
      %4201 = vst.msk [vmem:[#allocation3 + $0x50] sm:$0xff] %vm885, %v4157
      %4202 = vst.msk [vmem:[#allocation3 + $0x68] sm:$0xff] %vm885, %v4159
      %4203 = vst.msk [vmem:[#allocation3 + $0x80] sm:$0xff] %vm885, %v4161
      %4204 = vst.msk [vmem:[#allocation3 + $0x98] sm:$0xff] %vm885, %v4163
      %4205 = vst.msk [vmem:[#allocation3 + $0xb0] sm:$0xff] %vm885, %v4165
      %4206 = vst.msk [vmem:[#allocation3 + $0xc8] sm:$0xff] %vm885, %v4167
      %4207 = vst.msk [vmem:[#allocation3 + $0xe0] sm:$0xff] %vm885, %v4169
      %4208 = vst.msk [vmem:[#allocation3 + $0xf8] sm:$0xff] %vm885, %v4171
      %4209 = vst.msk [vmem:[#allocation3 + $0x110] sm:$0xff] %vm885, %v4173
      %4210 = vst.msk [vmem:[#allocation3 + $0x128] sm:$0xff] %vm885, %v4175
      %4211 = vst.msk [vmem:[#allocation3 + $0x140] sm:$0xff] %vm885, %v4177
      %4212 = vst.msk [vmem:[#allocation3 + $0x158] sm:$0xff] %vm885, %v4179
      %4213 = vst.msk [vmem:[#allocation3 + $0x170] sm:$0xff] %vm885, %v4181
      %v4217 = vrot.slane %v3468, 1
      %v4218 = vrot.slane %v3469, 1
      %v4219 = vsel %vm482, %v4217, %v4218
      %v4220 = vrot.slane %v3470, 1
      %v4221 = vsel %vm482, %v4218, %v4220
      %v4224 = vpack.c.bf16 %v4221, %v4219
      %4227 = vrot.lane.b32.xlu0 %v3665, 96
      %v4228 = vpop.permute.xlu0 %4227
      %4229 = vrot.lane.b32.xlu0 %v3666, 96
      %v4230 = vpop.permute.xlu0 %4229
      %4231 = vrot.lane.b32.xlu0 %v3667, 96
      %v4232 = vpop.permute.xlu0 %4231
      %4233 = vrot.lane.b32.xlu0 %v3668, 96
      %v4234 = vpop.permute.xlu0 %4233
      %4235 = vrot.lane.b32.xlu0 %v3669, 96
      %v4236 = vpop.permute.xlu0 %4235
      %4237 = vrot.lane.b32.xlu0 %v3670, 96
      %v4238 = vpop.permute.xlu0 %4237
      %4239 = vrot.lane.b32.xlu0 %v3671, 96
      %v4240 = vpop.permute.xlu0 %4239
      %4241 = vrot.lane.b32.xlu0 %v3672, 96
      %v4242 = vpop.permute.xlu0 %4241
      %4243 = vrot.lane.b32.xlu0 %v3673, 96
      %v4244 = vpop.permute.xlu0 %4243
      %4245 = vrot.lane.b32.xlu0 %v3674, 96
      %v4246 = vpop.permute.xlu0 %4245
      %4247 = vrot.lane.b32.xlu0 %v3675, 96
      %v4248 = vpop.permute.xlu0 %4247
      %4249 = vrot.lane.b32.xlu0 %v3676, 96
      %v4250 = vpop.permute.xlu0 %4249
      %4251 = vrot.lane.b32.xlu0 %v3677, 96
      %v4252 = vpop.permute.xlu0 %4251
      %4253 = vrot.lane.b32.xlu0 %v3678, 96
      %v4254 = vpop.permute.xlu0 %4253
      %4255 = vrot.lane.b32.xlu0 %v4058, 96
      %v4256 = vpop.permute.xlu0 %4255
      %4257 = vrot.lane.b32.xlu0 %v4224, 96
      %v4258 = vpop.permute.xlu0 %4257
      %4275 = vst.msk [vmem:[#allocation3 + $0x8] sm:$0xff] %vm967, %v4228
      %4276 = vst.msk [vmem:[#allocation3 + $0x20] sm:$0xff] %vm967, %v4230
      %4277 = vst.msk [vmem:[#allocation3 + $0x38] sm:$0xff] %vm967, %v4232
      %4278 = vst.msk [vmem:[#allocation3 + $0x50] sm:$0xff] %vm967, %v4234
      %4279 = vst.msk [vmem:[#allocation3 + $0x68] sm:$0xff] %vm967, %v4236
      %4280 = vst.msk [vmem:[#allocation3 + $0x80] sm:$0xff] %vm967, %v4238
      %4281 = vst.msk [vmem:[#allocation3 + $0x98] sm:$0xff] %vm967, %v4240
      %4282 = vst.msk [vmem:[#allocation3 + $0xb0] sm:$0xff] %vm967, %v4242
      %4283 = vst.msk [vmem:[#allocation3 + $0xc8] sm:$0xff] %vm967, %v4244
      %4284 = vst.msk [vmem:[#allocation3 + $0xe0] sm:$0xff] %vm967, %v4246
      %4285 = vst.msk [vmem:[#allocation3 + $0xf8] sm:$0xff] %vm967, %v4248
      %4286 = vst.msk [vmem:[#allocation3 + $0x110] sm:$0xff] %vm967, %v4250
      %4287 = vst.msk [vmem:[#allocation3 + $0x128] sm:$0xff] %vm967, %v4252
      %4288 = vst.msk [vmem:[#allocation3 + $0x140] sm:$0xff] %vm967, %v4254
      %4289 = vst.msk [vmem:[#allocation3 + $0x158] sm:$0xff] %vm967, %v4256
      %4290 = vst.msk [vmem:[#allocation3 + $0x170] sm:$0xff] %vm967, %v4258
      %v4291 = vrot.slane %v3468, 2
      %v4292 = vrot.slane %v3469, 2
      %v4293 = vsel %vm692, %v4291, %v4292
      %v4294 = vrot.slane %v3470, 2
      %v4295 = vsel %vm692, %v4292, %v4294
      %v4298 = vpack.c.bf16 %v4295, %v4293
      %4299 = vst.msk [vmem:[#allocation3 + $0x10] sm:$0xff] %vm226, %v3873
      %4300 = vst.msk [vmem:[#allocation3 + $0x28] sm:$0xff] %vm226, %v3874
      %4301 = vst.msk [vmem:[#allocation3 + $0x40] sm:$0xff] %vm226, %v3875
      %4302 = vst.msk [vmem:[#allocation3 + $0x58] sm:$0xff] %vm226, %v3876
      %4303 = vst.msk [vmem:[#allocation3 + $0x70] sm:$0xff] %vm226, %v3877
      %4304 = vst.msk [vmem:[#allocation3 + $0x88] sm:$0xff] %vm226, %v3878
      %4305 = vst.msk [vmem:[#allocation3 + $0xa0] sm:$0xff] %vm226, %v3879
      %4306 = vst.msk [vmem:[#allocation3 + $0xb8] sm:$0xff] %vm226, %v3880
      %4307 = vst.msk [vmem:[#allocation3 + $0xd0] sm:$0xff] %vm226, %v3881
      %4308 = vst.msk [vmem:[#allocation3 + $0xe8] sm:$0xff] %vm226, %v3882
      %4309 = vst.msk [vmem:[#allocation3 + $0x100] sm:$0xff] %vm226, %v3883
      %4310 = vst.msk [vmem:[#allocation3 + $0x118] sm:$0xff] %vm226, %v3884
      %4311 = vst.msk [vmem:[#allocation3 + $0x130] sm:$0xff] %vm226, %v3885
      %4312 = vst.msk [vmem:[#allocation3 + $0x148] sm:$0xff] %vm226, %v3886
      %4313 = vst.msk [vmem:[#allocation3 + $0x160] sm:$0xff] %vm226, %v4082
      %4314 = vst.msk [vmem:[#allocation3 + $0x178] sm:$0xff] %vm226, %v4298
      %v4315 = vld [vmem:[#allocation3] sm:$0xff]
      %v4316 = vld [vmem:[#allocation3 + $0x8] sm:$0xff]
      %v4317 = vld [vmem:[#allocation3 + $0x10] sm:$0xff]
      %v4318 = vld [vmem:[#allocation3 + $0x18] sm:$0xff]
      %v4319 = vld [vmem:[#allocation3 + $0x20] sm:$0xff]
      %v4320 = vld [vmem:[#allocation3 + $0x28] sm:$0xff]
      %v4321 = vld [vmem:[#allocation3 + $0x30] sm:$0xff]
      %v4322 = vld [vmem:[#allocation3 + $0x38] sm:$0xff]
      %v4323 = vld [vmem:[#allocation3 + $0x40] sm:$0xff]
      %v4324 = vld [vmem:[#allocation3 + $0x48] sm:$0xff]
      %v4325 = vld [vmem:[#allocation3 + $0x50] sm:$0xff]
      %v4326 = vld [vmem:[#allocation3 + $0x58] sm:$0xff]
      %v4327 = vld [vmem:[#allocation3 + $0x60] sm:$0xff]
      %v4328 = vld [vmem:[#allocation3 + $0x68] sm:$0xff]
      %v4329 = vld [vmem:[#allocation3 + $0x70] sm:$0xff]
      %v4330 = vld [vmem:[#allocation3 + $0x78] sm:$0xff]
      %v4331 = vld [vmem:[#allocation3 + $0x80] sm:$0xff]
      %v4332 = vld [vmem:[#allocation3 + $0x88] sm:$0xff]
      %v4333 = vld [vmem:[#allocation3 + $0x90] sm:$0xff]
      %v4334 = vld [vmem:[#allocation3 + $0x98] sm:$0xff]
      %v4335 = vld [vmem:[#allocation3 + $0xa0] sm:$0xff]
      %v4336 = vld [vmem:[#allocation3 + $0xa8] sm:$0xff]
      %v4337 = vld [vmem:[#allocation3 + $0xb0] sm:$0xff]
      %v4338 = vld [vmem:[#allocation3 + $0xb8] sm:$0xff]
      %v4339 = vld [vmem:[#allocation3 + $0xc0] sm:$0xff]
      %v4340 = vld [vmem:[#allocation3 + $0xc8] sm:$0xff]
      %v4341 = vld [vmem:[#allocation3 + $0xd0] sm:$0xff]
      %v4342 = vld [vmem:[#allocation3 + $0xd8] sm:$0xff]
      %v4343 = vld [vmem:[#allocation3 + $0xe0] sm:$0xff]
      %v4344 = vld [vmem:[#allocation3 + $0xe8] sm:$0xff]
      %v4345 = vld [vmem:[#allocation3 + $0xf0] sm:$0xff]
      %v4346 = vld [vmem:[#allocation3 + $0xf8] sm:$0xff]
      %v4347 = vld [vmem:[#allocation3 + $0x100] sm:$0xff]
      %v4348 = vld [vmem:[#allocation3 + $0x108] sm:$0xff]
      %v4349 = vld [vmem:[#allocation3 + $0x110] sm:$0xff]
      %v4350 = vld [vmem:[#allocation3 + $0x118] sm:$0xff]
      %v4351 = vld [vmem:[#allocation3 + $0x120] sm:$0xff]
      %v4352 = vld [vmem:[#allocation3 + $0x128] sm:$0xff]
      %v4353 = vld [vmem:[#allocation3 + $0x130] sm:$0xff]
      %v4354 = vld [vmem:[#allocation3 + $0x138] sm:$0xff]
      %v4355 = vld [vmem:[#allocation3 + $0x140] sm:$0xff]
      %v4356 = vld [vmem:[#allocation3 + $0x148] sm:$0xff]
      %v4357 = vld [vmem:[#allocation3 + $0x150] sm:$0xff]
      %v4358 = vld [vmem:[#allocation3 + $0x158] sm:$0xff]
      %v4359 = vld [vmem:[#allocation3 + $0x160] sm:$0xff]
      %v4360 = vld [vmem:[#allocation3 + $0x168] sm:$0xff]
      %v4361 = vld [vmem:[#allocation3 + $0x170] sm:$0xff]
      %v4362 = vld [vmem:[#allocation3 + $0x178] sm:$0xff]
      %s4363 = scalar_lea.vmem %s1, 288
      %v4364 = vld [vmem:[%s4363] sm:$0xf]
      %v4365 = vld [vmem:[%s4363 + $0x4] sm:$0xf]
      %v4366 = vld [vmem:[%s4363 + $0x8] sm:$0xf]
      %v4367 = vld [vmem:[%s4363 + $0xc] sm:$0xf]
      %v4368 = vld [vmem:[%s4363 + $0x10] sm:$0xf]
      %v4369 = vld [vmem:[%s4363 + $0x14] sm:$0xf]
      %v4370 = vld [vmem:[%s4363 + $0x18] sm:$0xf]
      %v4371 = vld [vmem:[%s4363 + $0x1c] sm:$0xf]
      %v4372 = vld [vmem:[%s4363 + $0x20] sm:$0xf]
      %v4373 = vld [vmem:[%s4363 + $0x24] sm:$0xf]
      %v4374 = vld [vmem:[%s4363 + $0x28] sm:$0xf]
      %v4375 = vld [vmem:[%s4363 + $0x2c] sm:$0xf]
      %v4376 = vld [vmem:[%s4363 + $0x30] sm:$0xf]
      %v4377 = vld [vmem:[%s4363 + $0x34] sm:$0xf]
      %v4378 = vld [vmem:[%s4363 + $0x38] sm:$0xf]
      %v4379 = vld [vmem:[%s4363 + $0x3c] sm:$0xf]
      %v4380 = vld [vmem:[%s4363 + $0x40] sm:$0xf]
      %v4381 = vld [vmem:[%s4363 + $0x44] sm:$0xf]
      %v4382 = vld [vmem:[%s4363 + $0x48] sm:$0xf]
      %v4383 = vld [vmem:[%s4363 + $0x4c] sm:$0xf]
      %v4384 = vld [vmem:[%s4363 + $0x50] sm:$0xf]
      %v4385 = vld [vmem:[%s4363 + $0x54] sm:$0xf]
      %v4386 = vld [vmem:[%s4363 + $0x58] sm:$0xf]
      %v4387 = vld [vmem:[%s4363 + $0x5c] sm:$0xf]
      %v4388 = vld [vmem:[%s4363 + $0x60] sm:$0xf]
      %v4389 = vld [vmem:[%s4363 + $0x64] sm:$0xf]
      %v4390 = vld [vmem:[%s4363 + $0x68] sm:$0xf]
      %v4391 = vld [vmem:[%s4363 + $0x6c] sm:$0xf]
      %v4392 = vld [vmem:[%s4363 + $0x70] sm:$0xf]
      %v4393 = vld [vmem:[%s4363 + $0x74] sm:$0xf]
      %v4394 = vld [vmem:[%s4363 + $0x78] sm:$0xf]
      %v4395 = vld [vmem:[%s4363 + $0x7c] sm:$0xf]
      %v4396 = vld [vmem:[%s4363 + $0x80] sm:$0xf]
      %v4397 = vld [vmem:[%s4363 + $0x84] sm:$0xf]
      %v4398 = vld [vmem:[%s4363 + $0x88] sm:$0xf]
      %v4399 = vld [vmem:[%s4363 + $0x8c] sm:$0xf]
      %s4400 = scalar_lea.vmem %s2, 2
      %v4401 = vld [vmem:[%s4400] sm:$0x1]
      %v4403 = vlaneseq
      %v4404 = vshrl.u32 %v4403, 7
      %v4405 = vsub.s32 0, %v4404
      %v4406 = vrot.slane %v4401, %v4405
      %v4444 = vunpack.c.l.b16 %v4364
      %v4445 = vunpack.c.l.b16 %v4365
      %v4446 = vunpack.c.l.b16 %v4366
      %v4447 = vunpack.c.l.b16 %v4367
      %v4448 = vunpack.c.l.b16 %v4368
      %v4449 = vunpack.c.l.b16 %v4369
      %v4450 = vunpack.c.l.b16 %v4370
      %v4451 = vunpack.c.l.b16 %v4371
      %v4452 = vunpack.c.l.b16 %v4372
      %v4453 = vunpack.c.l.b16 %v4373
      %v4454 = vunpack.c.l.b16 %v4374
      %v4455 = vunpack.c.l.b16 %v4375
      %v4456 = vunpack.c.l.b16 %v4376
      %v4457 = vunpack.c.l.b16 %v4377
      %v4458 = vunpack.c.l.b16 %v4378
      %v4459 = vunpack.c.l.b16 %v4379
      %v4460 = vunpack.c.l.b16 %v4380
      %v4461 = vunpack.c.l.b16 %v4381
      %v4462 = vunpack.c.l.b16 %v4382
      %v4463 = vunpack.c.l.b16 %v4383
      %v4464 = vunpack.c.l.b16 %v4384
      %v4465 = vunpack.c.l.b16 %v4385
      %v4466 = vunpack.c.l.b16 %v4386
      %v4467 = vunpack.c.l.b16 %v4387
      %v4468 = vunpack.c.l.b16 %v4388
      %v4469 = vunpack.c.l.b16 %v4389
      %v4470 = vunpack.c.l.b16 %v4390
      %v4471 = vunpack.c.l.b16 %v4391
      %v4472 = vunpack.c.l.b16 %v4392
      %v4473 = vunpack.c.l.b16 %v4393
      %v4474 = vunpack.c.l.b16 %v4394
      %v4475 = vunpack.c.l.b16 %v4395
      %v4476 = vunpack.c.l.b16 %v4396
      %v4477 = vunpack.c.l.b16 %v4397
      %v4478 = vunpack.c.l.b16 %v4398
      %v4479 = vunpack.c.l.b16 %v4399
      %v4480 = vpack.c.b16 %v4445, %v4444
      %v4481 = vpack.c.b16 %v4447, %v4446
      %v4482 = vpack.c.b16 %v4449, %v4448
      %v4483 = vpack.c.b16 %v4451, %v4450
      %v4484 = vpack.c.b16 %v4453, %v4452
      %v4485 = vpack.c.b16 %v4455, %v4454
      %v4486 = vpack.c.b16 %v4457, %v4456
      %v4487 = vpack.c.b16 %v4459, %v4458
      %v4488 = vpack.c.b16 %v4461, %v4460
      %v4489 = vpack.c.b16 %v4463, %v4462
      %v4490 = vpack.c.b16 %v4465, %v4464
      %v4491 = vpack.c.b16 %v4467, %v4466
      %v4492 = vpack.c.b16 %v4469, %v4468
      %v4493 = vpack.c.b16 %v4471, %v4470
      %v4494 = vpack.c.b16 %v4473, %v4472
      %v4495 = vpack.c.b16 %v4475, %v4474
      %v4496 = vpack.c.b16 %v4477, %v4476
      %v4497 = vpack.c.b16 %v4479, %v4478
      %v4517 = vsel %vm226, %v4317, 0
      %v4520 = vsel %vm226, %v4320, 0
      %v4523 = vsel %vm226, %v4323, 0
      %v4526 = vsel %vm226, %v4326, 0
      %v4529 = vsel %vm226, %v4329, 0
      %v4532 = vsel %vm226, %v4332, 0
      %v4535 = vsel %vm226, %v4335, 0
      %v4538 = vsel %vm226, %v4338, 0
      %v4541 = vsel %vm226, %v4341, 0
      %v4544 = vsel %vm226, %v4344, 0
      %v4547 = vsel %vm226, %v4347, 0
      %v4550 = vsel %vm226, %v4350, 0
      %v4553 = vsel %vm226, %v4353, 0
      %v4556 = vsel %vm226, %v4356, 0
      %v4559 = vsel %vm226, %v4359, 0
      %v4562 = vsel %vm226, %v4362, 0
      %4564 = vmatprep.subr.bf16.mxu0 0
      %4565 = vmatpush1.bf16.msra.mxu0 %v4480
      %4566 = vmatprep.subr.bf16.mxu0 0
      %4567 = vmatpush1.bf16.msra.mxu0 %v4481
      %4568 = vmatprep.subr.bf16.mxu0 0
      %4569 = vmatpush1.bf16.msra.mxu0 %v4482
      %4570 = vmatprep.subr.bf16.mxu0 0
      %4571 = vmatpush1.bf16.msra.mxu0 %v4483
      %4572 = vmatprep.subr.bf16.mxu0 0
      %4573 = vmatpush1.bf16.msra.mxu0 %v4484
      %4574 = vmatprep.subr.bf16.mxu0 0
      %4575 = vmatpush1.bf16.msra.mxu0 %v4485
      %4576 = vmatprep.subr.bf16.mxu0 0
      %4577 = vmatpush1.bf16.msra.mxu0 %v4486
      %4578 = vmatprep.subr.bf16.mxu0 0
      %4579 = vmatpush1.bf16.msra.mxu0 %v4487
      %4580 = vmatprep.subr.bf16.mxu0 0
      %4581 = vmatpush1.bf16.msra.mxu0 %v4488
      %4582 = vmatprep.subr.bf16.mxu0 0
      %4583 = vmatpush1.bf16.msra.mxu0 %v4489
      %4584 = vmatprep.subr.bf16.mxu0 0
      %4585 = vmatpush1.bf16.msra.mxu0 %v4490
      %4586 = vmatprep.subr.bf16.mxu0 0
      %4587 = vmatpush1.bf16.msra.mxu0 %v4491
      %4588 = vmatprep.subr.bf16.mxu0 0
      %4589 = vmatpush1.bf16.msra.mxu0 %v4492
      %4590 = vmatprep.subr.bf16.mxu0 0
      %4591 = vmatpush1.bf16.msra.mxu0 %v4493
      %4592 = vmatprep.subr.bf16.mxu0 0
      %4593 = vmatpush1.bf16.msra.mxu0 %v4494
      %4594 = vmatprep.subr.bf16.mxu0 0
      %4595 = vmatpush1.bf16.msra.mxu0 %v4495
      %4596 = vmatprep.mubr.bf16.mxu0 %v4316
      %4597 = vmatmul.mubr.bf16.gmra.mrb[0].mxu0 %v4315
      %v4598 = vpop.f32.mrb[0].mxu0
      %v4599 = vadd.f32 %v4406, %v4598
      %v4600 = vpop.f32.mrb[0].mxu0
      %v4601 = vpop.f32.mrb[0].mxu0
      %v4602 = vadd.f32 %v4406, %v4601
      %v4603 = vpop.f32.mrb[0].mxu0
      %4604 = vmatprep.mubr.bf16.mxu0 %v4319
      %4605 = vmatmul.mubr.bf16.gmra.mrb[0].mxu0 %v4318
      %v4606 = vpop.f32.mrb[0].mxu0
      %v4607 = vadd.f32 %v4406, %v4606
      %v4608 = vpop.f32.mrb[0].mxu0
      %v4609 = vpop.f32.mrb[0].mxu0
      %v4610 = vadd.f32 %v4406, %v4609
      %v4611 = vpop.f32.mrb[0].mxu0
      %4612 = vmatprep.mubr.bf16.mxu0 %v4322
      %4613 = vmatmul.mubr.bf16.gmra.mrb[0].mxu0 %v4321
      %v4614 = vpop.f32.mrb[0].mxu0
      %v4615 = vadd.f32 %v4406, %v4614
      %v4616 = vpop.f32.mrb[0].mxu0
      %v4617 = vpop.f32.mrb[0].mxu0
      %v4618 = vadd.f32 %v4406, %v4617
      %v4619 = vpop.f32.mrb[0].mxu0
      %4620 = vmatprep.mubr.bf16.mxu0 %v4325
      %4621 = vmatmul.mubr.bf16.gmra.mrb[0].mxu0 %v4324
      %v4622 = vpop.f32.mrb[0].mxu0
      %v4623 = vadd.f32 %v4406, %v4622
      %v4624 = vpop.f32.mrb[0].mxu0
      %v4625 = vpop.f32.mrb[0].mxu0
      %v4626 = vadd.f32 %v4406, %v4625
      %v4627 = vpop.f32.mrb[0].mxu0
      %4628 = vmatprep.mubr.bf16.mxu0 %v4328
      %4629 = vmatmul.mubr.bf16.gmra.mrb[0].mxu0 %v4327
      %v4630 = vpop.f32.mrb[0].mxu0
      %v4631 = vadd.f32 %v4406, %v4630
      %v4632 = vpop.f32.mrb[0].mxu0
      %v4633 = vpop.f32.mrb[0].mxu0
      %v4634 = vadd.f32 %v4406, %v4633
      %v4635 = vpop.f32.mrb[0].mxu0
      %4636 = vmatprep.mubr.bf16.mxu0 %v4331
      %4637 = vmatmul.mubr.bf16.gmra.mrb[0].mxu0 %v4330
      %v4638 = vpop.f32.mrb[0].mxu0
      %v4639 = vadd.f32 %v4406, %v4638
      %v4640 = vpop.f32.mrb[0].mxu0
      %v4641 = vpop.f32.mrb[0].mxu0
      %v4642 = vadd.f32 %v4406, %v4641
      %v4643 = vpop.f32.mrb[0].mxu0
      %4644 = vmatprep.mubr.bf16.mxu0 %v4334
      %4645 = vmatmul.mubr.bf16.gmra.mrb[0].mxu0 %v4333
      %v4646 = vpop.f32.mrb[0].mxu0
      %v4647 = vadd.f32 %v4406, %v4646
      %v4648 = vpop.f32.mrb[0].mxu0
      %v4649 = vpop.f32.mrb[0].mxu0
      %v4650 = vadd.f32 %v4406, %v4649
      %v4651 = vpop.f32.mrb[0].mxu0
      %4652 = vmatprep.mubr.bf16.mxu0 %v4337
      %4653 = vmatmul.mubr.bf16.gmra.mrb[0].mxu0 %v4336
      %v4654 = vpop.f32.mrb[0].mxu0
      %v4655 = vadd.f32 %v4406, %v4654
      %v4656 = vpop.f32.mrb[0].mxu0
      %v4657 = vpop.f32.mrb[0].mxu0
      %v4658 = vadd.f32 %v4406, %v4657
      %v4659 = vpop.f32.mrb[0].mxu0
      %4660 = vmatprep.mubr.bf16.mxu0 %v4340
      %4661 = vmatmul.mubr.bf16.gmra.mrb[0].mxu0 %v4339
      %v4662 = vpop.f32.mrb[0].mxu0
      %v4663 = vadd.f32 %v4406, %v4662
      %v4664 = vpop.f32.mrb[0].mxu0
      %v4665 = vpop.f32.mrb[0].mxu0
      %v4666 = vadd.f32 %v4406, %v4665
      %v4667 = vpop.f32.mrb[0].mxu0
      %4668 = vmatprep.mubr.bf16.mxu0 %v4343
      %4669 = vmatmul.mubr.bf16.gmra.mrb[0].mxu0 %v4342
      %v4670 = vpop.f32.mrb[0].mxu0
      %v4671 = vadd.f32 %v4406, %v4670
      %v4672 = vpop.f32.mrb[0].mxu0
      %v4673 = vpop.f32.mrb[0].mxu0
      %v4674 = vadd.f32 %v4406, %v4673
      %v4675 = vpop.f32.mrb[0].mxu0
      %4676 = vmatprep.mubr.bf16.mxu0 %v4346
      %4677 = vmatmul.mubr.bf16.gmra.mrb[0].mxu0 %v4345
      %v4678 = vpop.f32.mrb[0].mxu0
      %v4679 = vadd.f32 %v4406, %v4678
      %v4680 = vpop.f32.mrb[0].mxu0
      %v4681 = vpop.f32.mrb[0].mxu0
      %v4682 = vadd.f32 %v4406, %v4681
      %v4683 = vpop.f32.mrb[0].mxu0
      %4684 = vmatprep.mubr.bf16.mxu0 %v4349
      %4685 = vmatmul.mubr.bf16.gmra.mrb[0].mxu0 %v4348
      %v4686 = vpop.f32.mrb[0].mxu0
      %v4687 = vadd.f32 %v4406, %v4686
      %v4688 = vpop.f32.mrb[0].mxu0
      %v4689 = vpop.f32.mrb[0].mxu0
      %v4690 = vadd.f32 %v4406, %v4689
      %v4691 = vpop.f32.mrb[0].mxu0
      %4692 = vmatprep.mubr.bf16.mxu0 %v4352
      %4693 = vmatmul.mubr.bf16.gmra.mrb[0].mxu0 %v4351
      %v4694 = vpop.f32.mrb[0].mxu0
      %v4695 = vadd.f32 %v4406, %v4694
      %v4696 = vpop.f32.mrb[0].mxu0
      %v4697 = vpop.f32.mrb[0].mxu0
      %v4698 = vadd.f32 %v4406, %v4697
      %v4699 = vpop.f32.mrb[0].mxu0
      %4700 = vmatprep.mubr.bf16.mxu0 %v4355
      %4701 = vmatmul.mubr.bf16.gmra.mrb[0].mxu0 %v4354
      %v4702 = vpop.f32.mrb[0].mxu0
      %v4703 = vadd.f32 %v4406, %v4702
      %v4704 = vpop.f32.mrb[0].mxu0
      %v4705 = vpop.f32.mrb[0].mxu0
      %v4706 = vadd.f32 %v4406, %v4705
      %v4707 = vpop.f32.mrb[0].mxu0
      %4708 = vmatprep.mubr.bf16.mxu0 %v4358
      %4709 = vmatmul.mubr.bf16.gmra.mrb[0].mxu0 %v4357
      %v4710 = vpop.f32.mrb[0].mxu0
      %v4711 = vadd.f32 %v4406, %v4710
      %v4712 = vpop.f32.mrb[0].mxu0
      %v4713 = vpop.f32.mrb[0].mxu0
      %v4714 = vadd.f32 %v4406, %v4713
      %v4715 = vpop.f32.mrb[0].mxu0
      %4716 = vmatprep.mubr.bf16.mxu0 %v4361
      %4717 = vmatmul.mubr.bf16.gmra.mrb[0].mxu0 %v4360
      %v4718 = vpop.f32.mrb[0].mxu0
      %v4719 = vadd.f32 %v4406, %v4718
      %v4720 = vpop.f32.mrb[0].mxu0
      %v4721 = vpop.f32.mrb[0].mxu0
      %v4722 = vadd.f32 %v4406, %v4721
      %v4723 = vpop.f32.mrb[0].mxu0
      %4724 = vdwg.mxu0
      %4725 = vmatprep.subr.bf16.mxu0 0
      %4726 = vmatpush1.bf16.msra.mxu0 %v4496
      %4727 = vmatprep.subr.bf16.mxu0 0
      %4728 = vmatpush1.bf16.msra.mxu0 %v4497
      %4729 = vmatprep.subr.bf16.mxu0 0
      %4730 = vmatpush1.bf16.msra.mxu0 0
      %4731 = vmatprep.subr.bf16.mxu0 0
      %4732 = vmatpush1.bf16.msra.mxu0 0
      %4733 = vmatprep.subr.bf16.mxu0 0
      %4734 = vmatpush1.bf16.msra.mxu0 0
      %4735 = vmatprep.subr.bf16.mxu0 0
      %4736 = vmatpush1.bf16.msra.mxu0 0
      %4737 = vmatprep.subr.bf16.mxu0 0
      %4738 = vmatpush1.bf16.msra.mxu0 0
      %4739 = vmatprep.subr.bf16.mxu0 0
      %4740 = vmatpush1.bf16.msra.mxu0 0
      %4741 = vmatprep.subr.bf16.mxu0 0
      %4742 = vmatpush1.bf16.msra.mxu0 0
      %4743 = vmatprep.subr.bf16.mxu0 0
      %4744 = vmatpush1.bf16.msra.mxu0 0
      %4745 = vmatprep.subr.bf16.mxu0 0
      %4746 = vmatpush1.bf16.msra.mxu0 0
      %4747 = vmatprep.subr.bf16.mxu0 0
      %4748 = vmatpush1.bf16.msra.mxu0 0
      %4749 = vmatprep.subr.bf16.mxu0 0
      %4750 = vmatpush1.bf16.msra.mxu0 0
      %4751 = vmatprep.subr.bf16.mxu0 0
      %4752 = vmatpush1.bf16.msra.mxu0 0
      %4753 = vmatprep.subr.bf16.mxu0 0
      %4754 = vmatpush1.bf16.msra.mxu0 0
      %4755 = vmatprep.subr.bf16.mxu0 0
      %4756 = vmatpush1.bf16.msra.mxu0 0
      %4757 = vmatprep.mubr.bf16.mxu0 0
      %4758 = vmatmul.mubr.bf16.gmra.mrb[0].mxu0 %v4517
      %v4759 = vpop.f32.mrb[0].mxu0
      %v4760 = vadd.f32 %v4599, %v4759
      %v4761 = vpop.f32.mrb[0].mxu0
      %v4762 = vpop.f32.mrb[0].mxu0
      %v4763 = vadd.f32 %v4602, %v4762
      %v4764 = vpop.f32.mrb[0].mxu0
      %4765 = vmatprep.mubr.bf16.mxu0 0
      %4766 = vmatmul.mubr.bf16.gmra.mrb[0].mxu0 %v4520
      %v4767 = vpop.f32.mrb[0].mxu0
      %v4768 = vadd.f32 %v4607, %v4767
      %v4769 = vpop.f32.mrb[0].mxu0
      %v4770 = vpop.f32.mrb[0].mxu0
      %v4771 = vadd.f32 %v4610, %v4770
      %v4772 = vpop.f32.mrb[0].mxu0
      %4773 = vmatprep.mubr.bf16.mxu0 0
      %4774 = vmatmul.mubr.bf16.gmra.mrb[0].mxu0 %v4523
      %v4775 = vpop.f32.mrb[0].mxu0
      %v4776 = vadd.f32 %v4615, %v4775
      %v4777 = vpop.f32.mrb[0].mxu0
      %v4778 = vpop.f32.mrb[0].mxu0
      %v4779 = vadd.f32 %v4618, %v4778
      %v4780 = vpop.f32.mrb[0].mxu0
      %4781 = vmatprep.mubr.bf16.mxu0 0
      %4782 = vmatmul.mubr.bf16.gmra.mrb[0].mxu0 %v4526
      %v4783 = vpop.f32.mrb[0].mxu0
      %v4784 = vadd.f32 %v4623, %v4783
      %v4785 = vpop.f32.mrb[0].mxu0
      %v4786 = vpop.f32.mrb[0].mxu0
      %v4787 = vadd.f32 %v4626, %v4786
      %v4788 = vpop.f32.mrb[0].mxu0
      %4789 = vmatprep.mubr.bf16.mxu0 0
      %4790 = vmatmul.mubr.bf16.gmra.mrb[0].mxu0 %v4529
      %v4791 = vpop.f32.mrb[0].mxu0
      %v4792 = vadd.f32 %v4631, %v4791
      %v4793 = vpop.f32.mrb[0].mxu0
      %v4794 = vpop.f32.mrb[0].mxu0
      %v4795 = vadd.f32 %v4634, %v4794
      %v4796 = vpop.f32.mrb[0].mxu0
      %4797 = vmatprep.mubr.bf16.mxu0 0
      %4798 = vmatmul.mubr.bf16.gmra.mrb[0].mxu0 %v4532
      %v4799 = vpop.f32.mrb[0].mxu0
      %v4800 = vadd.f32 %v4639, %v4799
      %v4801 = vpop.f32.mrb[0].mxu0
      %v4802 = vpop.f32.mrb[0].mxu0
      %v4803 = vadd.f32 %v4642, %v4802
      %v4804 = vpop.f32.mrb[0].mxu0
      %4805 = vmatprep.mubr.bf16.mxu0 0
      %4806 = vmatmul.mubr.bf16.gmra.mrb[0].mxu0 %v4535
      %v4807 = vpop.f32.mrb[0].mxu0
      %v4808 = vadd.f32 %v4647, %v4807
      %v4809 = vpop.f32.mrb[0].mxu0
      %v4810 = vpop.f32.mrb[0].mxu0
      %v4811 = vadd.f32 %v4650, %v4810
      %v4812 = vpop.f32.mrb[0].mxu0
      %4813 = vmatprep.mubr.bf16.mxu0 0
      %4814 = vmatmul.mubr.bf16.gmra.mrb[0].mxu0 %v4538
      %v4815 = vpop.f32.mrb[0].mxu0
      %v4816 = vadd.f32 %v4655, %v4815
      %v4817 = vpop.f32.mrb[0].mxu0
      %v4818 = vpop.f32.mrb[0].mxu0
      %v4819 = vadd.f32 %v4658, %v4818
      %v4820 = vpop.f32.mrb[0].mxu0
      %4821 = vmatprep.mubr.bf16.mxu0 0
      %4822 = vmatmul.mubr.bf16.gmra.mrb[0].mxu0 %v4541
      %v4823 = vpop.f32.mrb[0].mxu0
      %v4824 = vadd.f32 %v4663, %v4823
      %v4825 = vpop.f32.mrb[0].mxu0
      %v4826 = vpop.f32.mrb[0].mxu0
      %v4827 = vadd.f32 %v4666, %v4826
      %v4828 = vpop.f32.mrb[0].mxu0
      %4829 = vmatprep.mubr.bf16.mxu0 0
      %4830 = vmatmul.mubr.bf16.gmra.mrb[0].mxu0 %v4544
      %v4831 = vpop.f32.mrb[0].mxu0
      %v4832 = vadd.f32 %v4671, %v4831
      %v4833 = vpop.f32.mrb[0].mxu0
      %v4834 = vpop.f32.mrb[0].mxu0
      %v4835 = vadd.f32 %v4674, %v4834
      %v4836 = vpop.f32.mrb[0].mxu0
      %4837 = vmatprep.mubr.bf16.mxu0 0
      %4838 = vmatmul.mubr.bf16.gmra.mrb[0].mxu0 %v4547
      %v4839 = vpop.f32.mrb[0].mxu0
      %v4840 = vadd.f32 %v4679, %v4839
      %v4841 = vpop.f32.mrb[0].mxu0
      %v4842 = vpop.f32.mrb[0].mxu0
      %v4843 = vadd.f32 %v4682, %v4842
      %v4844 = vpop.f32.mrb[0].mxu0
      %4845 = vmatprep.mubr.bf16.mxu0 0
      %4846 = vmatmul.mubr.bf16.gmra.mrb[0].mxu0 %v4550
      %v4847 = vpop.f32.mrb[0].mxu0
      %v4848 = vadd.f32 %v4687, %v4847
      %v4849 = vpop.f32.mrb[0].mxu0
      %v4850 = vpop.f32.mrb[0].mxu0
      %v4851 = vadd.f32 %v4690, %v4850
      %v4852 = vpop.f32.mrb[0].mxu0
      %4853 = vmatprep.mubr.bf16.mxu0 0
      %4854 = vmatmul.mubr.bf16.gmra.mrb[0].mxu0 %v4553
      %v4855 = vpop.f32.mrb[0].mxu0
      %v4856 = vadd.f32 %v4695, %v4855
      %v4857 = vpop.f32.mrb[0].mxu0
      %v4858 = vpop.f32.mrb[0].mxu0
      %v4859 = vadd.f32 %v4698, %v4858
      %v4860 = vpop.f32.mrb[0].mxu0
      %4861 = vmatprep.mubr.bf16.mxu0 0
      %4862 = vmatmul.mubr.bf16.gmra.mrb[0].mxu0 %v4556
      %v4863 = vpop.f32.mrb[0].mxu0
      %v4864 = vadd.f32 %v4703, %v4863
      %v4865 = vpop.f32.mrb[0].mxu0
      %v4866 = vpop.f32.mrb[0].mxu0
      %v4867 = vadd.f32 %v4706, %v4866
      %v4868 = vpop.f32.mrb[0].mxu0
      %4869 = vmatprep.mubr.bf16.mxu0 0
      %4870 = vmatmul.mubr.bf16.gmra.mrb[0].mxu0 %v4559
      %v4871 = vpop.f32.mrb[0].mxu0
      %v4872 = vadd.f32 %v4711, %v4871
      %v4873 = vpop.f32.mrb[0].mxu0
      %v4874 = vpop.f32.mrb[0].mxu0
      %v4875 = vadd.f32 %v4714, %v4874
      %v4876 = vpop.f32.mrb[0].mxu0
      %4877 = vmatprep.mubr.bf16.mxu0 0
      %4878 = vmatmul.mubr.bf16.gmra.mrb[0].mxu0 %v4562
      %v4879 = vpop.f32.mrb[0].mxu0
      %v4880 = vadd.f32 %v4719, %v4879
      %v4881 = vpop.f32.mrb[0].mxu0
      %v4882 = vpop.f32.mrb[0].mxu0
      %v4883 = vadd.f32 %v4722, %v4882
      %v4884 = vpop.f32.mrb[0].mxu0
      %4885 = vdwg.mxu0
      %v4886 = vmax.f32 %v4760, 0.0
      %v4887 = vmax.f32 %v4763, 0.0
      %v4888 = vmax.f32 %v4768, 0.0
      %v4889 = vmax.f32 %v4771, 0.0
      %v4890 = vmax.f32 %v4776, 0.0
      %v4891 = vmax.f32 %v4779, 0.0
      %v4892 = vmax.f32 %v4784, 0.0
      %v4893 = vmax.f32 %v4787, 0.0
      %v4894 = vmax.f32 %v4792, 0.0
      %v4895 = vmax.f32 %v4795, 0.0
      %v4896 = vmax.f32 %v4800, 0.0
      %v4897 = vmax.f32 %v4803, 0.0
      %v4898 = vmax.f32 %v4808, 0.0
      %v4899 = vmax.f32 %v4811, 0.0
      %v4900 = vmax.f32 %v4816, 0.0
      %v4901 = vmax.f32 %v4819, 0.0
      %v4902 = vmax.f32 %v4824, 0.0
      %v4903 = vmax.f32 %v4827, 0.0
      %v4904 = vmax.f32 %v4832, 0.0
      %v4905 = vmax.f32 %v4835, 0.0
      %v4906 = vmax.f32 %v4840, 0.0
      %v4907 = vmax.f32 %v4843, 0.0
      %v4908 = vmax.f32 %v4848, 0.0
      %v4909 = vmax.f32 %v4851, 0.0
      %v4910 = vmax.f32 %v4856, 0.0
      %v4911 = vmax.f32 %v4859, 0.0
      %v4912 = vmax.f32 %v4864, 0.0
      %v4913 = vmax.f32 %v4867, 0.0
      %v4914 = vmax.f32 %v4872, 0.0
      %v4915 = vmax.f32 %v4875, 0.0
      %v4916 = vmax.f32 %v4880, 0.0
      %v4917 = vmax.f32 %v4883, 0.0
      %4918 = vst.msk [vmem:[%s314 + $0x1] sm:$0xff] %vm226, %v4886
      %4919 = vst.msk [vmem:[%s314 + $0x9] sm:$0xff] %vm226, %v4887
      %4920 = vst.msk [vmem:[%s314 + $0x19] sm:$0xff] %vm226, %v4888
      %4921 = vst.msk [vmem:[%s314 + $0x21] sm:$0xff] %vm226, %v4889
      %4922 = vst.msk [vmem:[%s314 + $0x31] sm:$0xff] %vm226, %v4890
      %4923 = vst.msk [vmem:[%s314 + $0x39] sm:$0xff] %vm226, %v4891
      %4924 = vst.msk [vmem:[%s314 + $0x49] sm:$0xff] %vm226, %v4892
      %4925 = vst.msk [vmem:[%s314 + $0x51] sm:$0xff] %vm226, %v4893
      %4926 = vst.msk [vmem:[%s314 + $0x61] sm:$0xff] %vm226, %v4894
      %4927 = vst.msk [vmem:[%s314 + $0x69] sm:$0xff] %vm226, %v4895
      %4928 = vst.msk [vmem:[%s314 + $0x79] sm:$0xff] %vm226, %v4896
      %4929 = vst.msk [vmem:[%s314 + $0x81] sm:$0xff] %vm226, %v4897
      %4930 = vst.msk [vmem:[%s314 + $0x91] sm:$0xff] %vm226, %v4898
      %4931 = vst.msk [vmem:[%s314 + $0x99] sm:$0xff] %vm226, %v4899
      %4932 = vst.msk [vmem:[%s314 + $0xa9] sm:$0xff] %vm226, %v4900
      %4933 = vst.msk [vmem:[%s314 + $0xb1] sm:$0xff] %vm226, %v4901
      %4934 = vst.msk [vmem:[%s314 + $0xc1] sm:$0xff] %vm226, %v4902
      %4935 = vst.msk [vmem:[%s314 + $0xc9] sm:$0xff] %vm226, %v4903
      %4936 = vst.msk [vmem:[%s314 + $0xd9] sm:$0xff] %vm226, %v4904
      %4937 = vst.msk [vmem:[%s314 + $0xe1] sm:$0xff] %vm226, %v4905
      %4938 = vst.msk [vmem:[%s314 + $0xf1] sm:$0xff] %vm226, %v4906
      %4939 = vst.msk [vmem:[%s314 + $0xf9] sm:$0xff] %vm226, %v4907
      %4940 = vst.msk [vmem:[%s314 + $0x109] sm:$0xff] %vm226, %v4908
      %4941 = vst.msk [vmem:[%s314 + $0x111] sm:$0xff] %vm226, %v4909
      %4942 = vst.msk [vmem:[%s314 + $0x121] sm:$0xff] %vm226, %v4910
      %4943 = vst.msk [vmem:[%s314 + $0x129] sm:$0xff] %vm226, %v4911
      %4944 = vst.msk [vmem:[%s314 + $0x139] sm:$0xff] %vm226, %v4912
      %4945 = vst.msk [vmem:[%s314 + $0x141] sm:$0xff] %vm226, %v4913
      %4946 = vst.msk [vmem:[%s314 + $0x151] sm:$0xff] %vm226, %v4914
      %4947 = vst.msk [vmem:[%s314 + $0x159] sm:$0xff] %vm226, %v4915
      %4948 = vst.msk [vmem:[%s314 + $0x169] sm:$0xff] %vm226, %v4916
      %4949 = vst.msk [vmem:[%s314 + $0x171] sm:$0xff] %vm226, %v4917
      %v4950 = vld [vmem:[#allocation2] sm:$0xff]
      %v4951 = vld [vmem:[#allocation2 + $0x8] sm:$0xff]
      %v4952 = vld [vmem:[#allocation2 + $0x10] sm:$0x3]
      %v4953 = vld [vmem:[#allocation2 + $0x18] sm:$0xff]
      %v4954 = vld [vmem:[#allocation2 + $0x20] sm:$0xff]
      %v4955 = vld [vmem:[#allocation2 + $0x28] sm:$0x3]
      %v4956 = vld [vmem:[#allocation2 + $0x30] sm:$0xff]
      %v4957 = vld [vmem:[#allocation2 + $0x38] sm:$0xff]
      %v4958 = vld [vmem:[#allocation2 + $0x40] sm:$0x3]
      %v4959 = vld [vmem:[#allocation2 + $0x48] sm:$0xff]
      %v4960 = vld [vmem:[#allocation2 + $0x50] sm:$0xff]
      %v4961 = vld [vmem:[#allocation2 + $0x58] sm:$0x3]
      %v4962 = vld [vmem:[#allocation2 + $0x60] sm:$0xff]
      %v4963 = vld [vmem:[#allocation2 + $0x68] sm:$0xff]
      %v4964 = vld [vmem:[#allocation2 + $0x70] sm:$0x3]
      %v4965 = vld [vmem:[#allocation2 + $0x78] sm:$0xff]
      %v4966 = vld [vmem:[#allocation2 + $0x80] sm:$0xff]
      %v4967 = vld [vmem:[#allocation2 + $0x88] sm:$0x3]
      %v4968 = vld [vmem:[#allocation2 + $0x90] sm:$0xff]
      %v4969 = vld [vmem:[#allocation2 + $0x98] sm:$0xff]
      %v4970 = vld [vmem:[#allocation2 + $0xa0] sm:$0x3]
      %v4971 = vld [vmem:[#allocation2 + $0xa8] sm:$0xff]
      %v4972 = vld [vmem:[#allocation2 + $0xb0] sm:$0xff]
      %v4973 = vld [vmem:[#allocation2 + $0xb8] sm:$0x3]
      %v4974 = vld [vmem:[#allocation2 + $0xc0] sm:$0xff]
      %v4975 = vld [vmem:[#allocation2 + $0xc8] sm:$0xff]
      %v4976 = vld [vmem:[#allocation2 + $0xd0] sm:$0x3]
      %v4977 = vld [vmem:[#allocation2 + $0xd8] sm:$0xff]
      %v4978 = vld [vmem:[#allocation2 + $0xe0] sm:$0xff]
      %v4979 = vld [vmem:[#allocation2 + $0xe8] sm:$0x3]
      %v4980 = vld [vmem:[#allocation2 + $0xf0] sm:$0xff]
      %v4981 = vld [vmem:[#allocation2 + $0xf8] sm:$0xff]
      %v4982 = vld [vmem:[#allocation2 + $0x100] sm:$0x3]
      %v4983 = vld [vmem:[#allocation2 + $0x108] sm:$0xff]
      %v4984 = vld [vmem:[#allocation2 + $0x110] sm:$0xff]
      %v4985 = vld [vmem:[#allocation2 + $0x118] sm:$0x3]
      %v4986 = vld [vmem:[#allocation2 + $0x120] sm:$0xff]
      %v4987 = vld [vmem:[#allocation2 + $0x128] sm:$0xff]
      %v4988 = vld [vmem:[#allocation2 + $0x130] sm:$0x3]
      %v4989 = vld [vmem:[#allocation2 + $0x138] sm:$0xff]
      %v4990 = vld [vmem:[#allocation2 + $0x140] sm:$0xff]
      %v4991 = vld [vmem:[#allocation2 + $0x148] sm:$0x3]
      %v4992 = vld [vmem:[#allocation2 + $0x150] sm:$0xff]
      %v4993 = vld [vmem:[#allocation2 + $0x158] sm:$0xff]
      %v4994 = vld [vmem:[#allocation2 + $0x160] sm:$0x3]
      %v4995 = vld [vmem:[#allocation2 + $0x168] sm:$0xff]
      %v4996 = vld [vmem:[#allocation2 + $0x170] sm:$0xff]
      %v4997 = vld [vmem:[#allocation2 + $0x178] sm:$0x3]
      %v4998 = vld [vmem:[#allocation2 + $0x180] sm:$0xff]
      %v4999 = vld [vmem:[#allocation2 + $0x188] sm:$0xff]
      %v5000 = vld [vmem:[#allocation2 + $0x190] sm:$0x3]
      %v5001 = vld [vmem:[#allocation2 + $0x198] sm:$0xff]
      %v5002 = vld [vmem:[#allocation2 + $0x1a0] sm:$0xff]
      %v5003 = vld [vmem:[#allocation2 + $0x1a8] sm:$0x3]
      %v5004 = vpack.c.bf16 %v4951, %v4950
      %v5005 = vpack.c.bf16 %v4954, %v4953
      %v5006 = vpack.c.bf16 %v4957, %v4956
      %v5007 = vpack.c.bf16 %v4960, %v4959
      %v5008 = vpack.c.bf16 %v4963, %v4962
      %v5009 = vpack.c.bf16 %v4966, %v4965
      %v5010 = vpack.c.bf16 %v4969, %v4968
      %v5011 = vpack.c.bf16 %v4972, %v4971
      %v5012 = vpack.c.bf16 %v4975, %v4974
      %v5013 = vpack.c.bf16 %v4978, %v4977
      %v5014 = vpack.c.bf16 %v4981, %v4980
      %v5015 = vpack.c.bf16 %v4984, %v4983
      %v5016 = vpack.c.bf16 %v4987, %v4986
      %v5017 = vpack.c.bf16 %v4990, %v4989
      %v5018 = vpack.c.bf16 %v4993, %v4992
      %v5019 = vpack.c.bf16 %v4996, %v4995
      %5020 = vst.msk [vmem:[#allocation3] sm:$0xff] %vm226, %v5004
      %5021 = vst.msk [vmem:[#allocation3 + $0x18] sm:$0xff] %vm226, %v5005
      %5022 = vst.msk [vmem:[#allocation3 + $0x30] sm:$0xff] %vm226, %v5006
      %5023 = vst.msk [vmem:[#allocation3 + $0x48] sm:$0xff] %vm226, %v5007
      %5024 = vst.msk [vmem:[#allocation3 + $0x60] sm:$0xff] %vm226, %v5008
      %5025 = vst.msk [vmem:[#allocation3 + $0x78] sm:$0xff] %vm226, %v5009
      %5026 = vst.msk [vmem:[#allocation3 + $0x90] sm:$0xff] %vm226, %v5010
      %5027 = vst.msk [vmem:[#allocation3 + $0xa8] sm:$0xff] %vm226, %v5011
      %5028 = vst.msk [vmem:[#allocation3 + $0xc0] sm:$0xff] %vm226, %v5012
      %5029 = vst.msk [vmem:[#allocation3 + $0xd8] sm:$0xff] %vm226, %v5013
      %5030 = vst.msk [vmem:[#allocation3 + $0xf0] sm:$0xff] %vm226, %v5014
      %5031 = vst.msk [vmem:[#allocation3 + $0x108] sm:$0xff] %vm226, %v5015
      %5032 = vst.msk [vmem:[#allocation3 + $0x120] sm:$0xff] %vm226, %v5016
      %5033 = vst.msk [vmem:[#allocation3 + $0x138] sm:$0xff] %vm226, %v5017
      %5034 = vst.msk [vmem:[#allocation3 + $0x150] sm:$0xff] %vm226, %v5018
      %5035 = vst.msk [vmem:[#allocation3 + $0x168] sm:$0xff] %vm226, %v5019
      %v5084 = vrot.slane %v4950, 1
      %v5085 = vrot.slane %v4951, 1
      %v5086 = vsel %vm482, %v5084, %v5085
      %v5087 = vrot.slane %v4952, 1
      %v5088 = vsel %vm482, %v5085, %v5087
      %v5089 = vrot.slane %v4953, 1
      %v5090 = vrot.slane %v4954, 1
      %v5091 = vsel %vm482, %v5089, %v5090
      %v5092 = vrot.slane %v4955, 1
      %v5093 = vsel %vm482, %v5090, %v5092
      %v5094 = vrot.slane %v4956, 1
      %v5095 = vrot.slane %v4957, 1
      %v5096 = vsel %vm482, %v5094, %v5095
      %v5097 = vrot.slane %v4958, 1
      %v5098 = vsel %vm482, %v5095, %v5097
      %v5099 = vrot.slane %v4959, 1
      %v5100 = vrot.slane %v4960, 1
      %v5101 = vsel %vm482, %v5099, %v5100
      %v5102 = vrot.slane %v4961, 1
      %v5103 = vsel %vm482, %v5100, %v5102
      %v5104 = vrot.slane %v4962, 1
      %v5105 = vrot.slane %v4963, 1
      %v5106 = vsel %vm482, %v5104, %v5105
      %v5107 = vrot.slane %v4964, 1
      %v5108 = vsel %vm482, %v5105, %v5107
      %v5109 = vrot.slane %v4965, 1
      %v5110 = vrot.slane %v4966, 1
      %v5111 = vsel %vm482, %v5109, %v5110
      %v5112 = vrot.slane %v4967, 1
      %v5113 = vsel %vm482, %v5110, %v5112
      %v5114 = vrot.slane %v4968, 1
      %v5115 = vrot.slane %v4969, 1
      %v5116 = vsel %vm482, %v5114, %v5115
      %v5117 = vrot.slane %v4970, 1
      %v5118 = vsel %vm482, %v5115, %v5117
      %v5119 = vrot.slane %v4971, 1
      %v5120 = vrot.slane %v4972, 1
      %v5121 = vsel %vm482, %v5119, %v5120
      %v5122 = vrot.slane %v4973, 1
      %v5123 = vsel %vm482, %v5120, %v5122
      %v5124 = vrot.slane %v4974, 1
      %v5125 = vrot.slane %v4975, 1
      %v5126 = vsel %vm482, %v5124, %v5125
      %v5127 = vrot.slane %v4976, 1
      %v5128 = vsel %vm482, %v5125, %v5127
      %v5129 = vrot.slane %v4977, 1
      %v5130 = vrot.slane %v4978, 1
      %v5131 = vsel %vm482, %v5129, %v5130
      %v5132 = vrot.slane %v4979, 1
      %v5133 = vsel %vm482, %v5130, %v5132
      %v5134 = vrot.slane %v4980, 1
      %v5135 = vrot.slane %v4981, 1
      %v5136 = vsel %vm482, %v5134, %v5135
      %v5137 = vrot.slane %v4982, 1
      %v5138 = vsel %vm482, %v5135, %v5137
      %v5139 = vrot.slane %v4983, 1
      %v5140 = vrot.slane %v4984, 1
      %v5141 = vsel %vm482, %v5139, %v5140
      %v5142 = vrot.slane %v4985, 1
      %v5143 = vsel %vm482, %v5140, %v5142
      %v5144 = vrot.slane %v4986, 1
      %v5145 = vrot.slane %v4987, 1
      %v5146 = vsel %vm482, %v5144, %v5145
      %v5147 = vrot.slane %v4988, 1
      %v5148 = vsel %vm482, %v5145, %v5147
      %v5149 = vrot.slane %v4989, 1
      %v5150 = vrot.slane %v4990, 1
      %v5151 = vsel %vm482, %v5149, %v5150
      %v5152 = vrot.slane %v4991, 1
      %v5153 = vsel %vm482, %v5150, %v5152
      %v5154 = vrot.slane %v4992, 1
      %v5155 = vrot.slane %v4993, 1
      %v5156 = vsel %vm482, %v5154, %v5155
      %v5157 = vrot.slane %v4994, 1
      %v5158 = vsel %vm482, %v5155, %v5157
      %v5159 = vrot.slane %v4995, 1
      %v5160 = vrot.slane %v4996, 1
      %v5161 = vsel %vm482, %v5159, %v5160
      %v5162 = vrot.slane %v4997, 1
      %v5163 = vsel %vm482, %v5160, %v5162
      %v5196 = vpack.c.bf16 %v5088, %v5086
      %v5197 = vpack.c.bf16 %v5093, %v5091
      %v5198 = vpack.c.bf16 %v5098, %v5096
      %v5199 = vpack.c.bf16 %v5103, %v5101
      %v5200 = vpack.c.bf16 %v5108, %v5106
      %v5201 = vpack.c.bf16 %v5113, %v5111
      %v5202 = vpack.c.bf16 %v5118, %v5116
      %v5203 = vpack.c.bf16 %v5123, %v5121
      %v5204 = vpack.c.bf16 %v5128, %v5126
      %v5205 = vpack.c.bf16 %v5133, %v5131
      %v5206 = vpack.c.bf16 %v5138, %v5136
      %v5207 = vpack.c.bf16 %v5143, %v5141
      %v5208 = vpack.c.bf16 %v5148, %v5146
      %v5209 = vpack.c.bf16 %v5153, %v5151
      %v5210 = vpack.c.bf16 %v5158, %v5156
      %v5211 = vpack.c.bf16 %v5163, %v5161
      %5228 = vrot.lane.b32.xlu0 %v5196, 32
      %v5229 = vpop.permute.xlu0 %5228
      %5230 = vrot.lane.b32.xlu0 %v5197, 32
      %v5231 = vpop.permute.xlu0 %5230
      %5232 = vrot.lane.b32.xlu0 %v5198, 32
      %v5233 = vpop.permute.xlu0 %5232
      %5234 = vrot.lane.b32.xlu0 %v5199, 32
      %v5235 = vpop.permute.xlu0 %5234
      %5236 = vrot.lane.b32.xlu0 %v5200, 32
      %v5237 = vpop.permute.xlu0 %5236
      %5238 = vrot.lane.b32.xlu0 %v5201, 32
      %v5239 = vpop.permute.xlu0 %5238
      %5240 = vrot.lane.b32.xlu0 %v5202, 32
      %v5241 = vpop.permute.xlu0 %5240
      %5242 = vrot.lane.b32.xlu0 %v5203, 32
      %v5243 = vpop.permute.xlu0 %5242
      %5244 = vrot.lane.b32.xlu0 %v5204, 32
      %v5245 = vpop.permute.xlu0 %5244
      %5246 = vrot.lane.b32.xlu0 %v5205, 32
      %v5247 = vpop.permute.xlu0 %5246
      %5248 = vrot.lane.b32.xlu0 %v5206, 32
      %v5249 = vpop.permute.xlu0 %5248
      %5250 = vrot.lane.b32.xlu0 %v5207, 32
      %v5251 = vpop.permute.xlu0 %5250
      %5252 = vrot.lane.b32.xlu0 %v5208, 32
      %v5253 = vpop.permute.xlu0 %5252
      %5254 = vrot.lane.b32.xlu0 %v5209, 32
      %v5255 = vpop.permute.xlu0 %5254
      %5256 = vrot.lane.b32.xlu0 %v5210, 32
      %v5257 = vpop.permute.xlu0 %5256
      %5258 = vrot.lane.b32.xlu0 %v5211, 32
      %v5259 = vpop.permute.xlu0 %5258
      %5276 = vst.msk [vmem:[#allocation3] sm:$0xff] %vm675, %v5229
      %5277 = vst.msk [vmem:[#allocation3 + $0x18] sm:$0xff] %vm675, %v5231
      %5278 = vst.msk [vmem:[#allocation3 + $0x30] sm:$0xff] %vm675, %v5233
      %5279 = vst.msk [vmem:[#allocation3 + $0x48] sm:$0xff] %vm675, %v5235
      %5280 = vst.msk [vmem:[#allocation3 + $0x60] sm:$0xff] %vm675, %v5237
      %5281 = vst.msk [vmem:[#allocation3 + $0x78] sm:$0xff] %vm675, %v5239
      %5282 = vst.msk [vmem:[#allocation3 + $0x90] sm:$0xff] %vm675, %v5241
      %5283 = vst.msk [vmem:[#allocation3 + $0xa8] sm:$0xff] %vm675, %v5243
      %5284 = vst.msk [vmem:[#allocation3 + $0xc0] sm:$0xff] %vm675, %v5245
      %5285 = vst.msk [vmem:[#allocation3 + $0xd8] sm:$0xff] %vm675, %v5247
      %5286 = vst.msk [vmem:[#allocation3 + $0xf0] sm:$0xff] %vm675, %v5249
      %5287 = vst.msk [vmem:[#allocation3 + $0x108] sm:$0xff] %vm675, %v5251
      %5288 = vst.msk [vmem:[#allocation3 + $0x120] sm:$0xff] %vm675, %v5253
      %5289 = vst.msk [vmem:[#allocation3 + $0x138] sm:$0xff] %vm675, %v5255
      %5290 = vst.msk [vmem:[#allocation3 + $0x150] sm:$0xff] %vm675, %v5257
      %5291 = vst.msk [vmem:[#allocation3 + $0x168] sm:$0xff] %vm675, %v5259
      %v5292 = vrot.slane %v4950, 2
      %v5293 = vrot.slane %v4951, 2
      %v5294 = vsel %vm692, %v5292, %v5293
      %v5295 = vrot.slane %v4952, 2
      %v5296 = vsel %vm692, %v5293, %v5295
      %v5297 = vrot.slane %v4953, 2
      %v5298 = vrot.slane %v4954, 2
      %v5299 = vsel %vm692, %v5297, %v5298
      %v5300 = vrot.slane %v4955, 2
      %v5301 = vsel %vm692, %v5298, %v5300
      %v5302 = vrot.slane %v4956, 2
      %v5303 = vrot.slane %v4957, 2
      %v5304 = vsel %vm692, %v5302, %v5303
      %v5305 = vrot.slane %v4958, 2
      %v5306 = vsel %vm692, %v5303, %v5305
      %v5307 = vrot.slane %v4959, 2
      %v5308 = vrot.slane %v4960, 2
      %v5309 = vsel %vm692, %v5307, %v5308
      %v5310 = vrot.slane %v4961, 2
      %v5311 = vsel %vm692, %v5308, %v5310
      %v5312 = vrot.slane %v4962, 2
      %v5313 = vrot.slane %v4963, 2
      %v5314 = vsel %vm692, %v5312, %v5313
      %v5315 = vrot.slane %v4964, 2
      %v5316 = vsel %vm692, %v5313, %v5315
      %v5317 = vrot.slane %v4965, 2
      %v5318 = vrot.slane %v4966, 2
      %v5319 = vsel %vm692, %v5317, %v5318
      %v5320 = vrot.slane %v4967, 2
      %v5321 = vsel %vm692, %v5318, %v5320
      %v5322 = vrot.slane %v4968, 2
      %v5323 = vrot.slane %v4969, 2
      %v5324 = vsel %vm692, %v5322, %v5323
      %v5325 = vrot.slane %v4970, 2
      %v5326 = vsel %vm692, %v5323, %v5325
      %v5327 = vrot.slane %v4971, 2
      %v5328 = vrot.slane %v4972, 2
      %v5329 = vsel %vm692, %v5327, %v5328
      %v5330 = vrot.slane %v4973, 2
      %v5331 = vsel %vm692, %v5328, %v5330
      %v5332 = vrot.slane %v4974, 2
      %v5333 = vrot.slane %v4975, 2
      %v5334 = vsel %vm692, %v5332, %v5333
      %v5335 = vrot.slane %v4976, 2
      %v5336 = vsel %vm692, %v5333, %v5335
      %v5337 = vrot.slane %v4977, 2
      %v5338 = vrot.slane %v4978, 2
      %v5339 = vsel %vm692, %v5337, %v5338
      %v5340 = vrot.slane %v4979, 2
      %v5341 = vsel %vm692, %v5338, %v5340
      %v5342 = vrot.slane %v4980, 2
      %v5343 = vrot.slane %v4981, 2
      %v5344 = vsel %vm692, %v5342, %v5343
      %v5345 = vrot.slane %v4982, 2
      %v5346 = vsel %vm692, %v5343, %v5345
      %v5347 = vrot.slane %v4983, 2
      %v5348 = vrot.slane %v4984, 2
      %v5349 = vsel %vm692, %v5347, %v5348
      %v5350 = vrot.slane %v4985, 2
      %v5351 = vsel %vm692, %v5348, %v5350
      %v5352 = vrot.slane %v4986, 2
      %v5353 = vrot.slane %v4987, 2
      %v5354 = vsel %vm692, %v5352, %v5353
      %v5355 = vrot.slane %v4988, 2
      %v5356 = vsel %vm692, %v5353, %v5355
      %v5357 = vrot.slane %v4989, 2
      %v5358 = vrot.slane %v4990, 2
      %v5359 = vsel %vm692, %v5357, %v5358
      %v5360 = vrot.slane %v4991, 2
      %v5361 = vsel %vm692, %v5358, %v5360
      %v5362 = vrot.slane %v4992, 2
      %v5363 = vrot.slane %v4993, 2
      %v5364 = vsel %vm692, %v5362, %v5363
      %v5365 = vrot.slane %v4994, 2
      %v5366 = vsel %vm692, %v5363, %v5365
      %v5367 = vrot.slane %v4995, 2
      %v5368 = vrot.slane %v4996, 2
      %v5369 = vsel %vm692, %v5367, %v5368
      %v5370 = vrot.slane %v4997, 2
      %v5371 = vsel %vm692, %v5368, %v5370
      %v5404 = vpack.c.bf16 %v5296, %v5294
      %v5405 = vpack.c.bf16 %v5301, %v5299
      %v5406 = vpack.c.bf16 %v5306, %v5304
      %v5407 = vpack.c.bf16 %v5311, %v5309
      %v5408 = vpack.c.bf16 %v5316, %v5314
      %v5409 = vpack.c.bf16 %v5321, %v5319
      %v5410 = vpack.c.bf16 %v5326, %v5324
      %v5411 = vpack.c.bf16 %v5331, %v5329
      %v5412 = vpack.c.bf16 %v5336, %v5334
      %v5413 = vpack.c.bf16 %v5341, %v5339
      %v5414 = vpack.c.bf16 %v5346, %v5344
      %v5415 = vpack.c.bf16 %v5351, %v5349
      %v5416 = vpack.c.bf16 %v5356, %v5354
      %v5417 = vpack.c.bf16 %v5361, %v5359
      %v5418 = vpack.c.bf16 %v5366, %v5364
      %v5419 = vpack.c.bf16 %v5371, %v5369
      %5436 = vrot.lane.b32.xlu0 %v5404, 64
      %v5437 = vpop.permute.xlu0 %5436
      %5438 = vrot.lane.b32.xlu0 %v5405, 64
      %v5439 = vpop.permute.xlu0 %5438
      %5440 = vrot.lane.b32.xlu0 %v5406, 64
      %v5441 = vpop.permute.xlu0 %5440
      %5442 = vrot.lane.b32.xlu0 %v5407, 64
      %v5443 = vpop.permute.xlu0 %5442
      %5444 = vrot.lane.b32.xlu0 %v5408, 64
      %v5445 = vpop.permute.xlu0 %5444
      %5446 = vrot.lane.b32.xlu0 %v5409, 64
      %v5447 = vpop.permute.xlu0 %5446
      %5448 = vrot.lane.b32.xlu0 %v5410, 64
      %v5449 = vpop.permute.xlu0 %5448
      %5450 = vrot.lane.b32.xlu0 %v5411, 64
      %v5451 = vpop.permute.xlu0 %5450
      %5452 = vrot.lane.b32.xlu0 %v5412, 64
      %v5453 = vpop.permute.xlu0 %5452
      %5454 = vrot.lane.b32.xlu0 %v5413, 64
      %v5455 = vpop.permute.xlu0 %5454
      %5456 = vrot.lane.b32.xlu0 %v5414, 64
      %v5457 = vpop.permute.xlu0 %5456
      %5458 = vrot.lane.b32.xlu0 %v5415, 64
      %v5459 = vpop.permute.xlu0 %5458
      %5460 = vrot.lane.b32.xlu0 %v5416, 64
      %v5461 = vpop.permute.xlu0 %5460
      %5462 = vrot.lane.b32.xlu0 %v5417, 64
      %v5463 = vpop.permute.xlu0 %5462
      %5464 = vrot.lane.b32.xlu0 %v5418, 64
      %v5465 = vpop.permute.xlu0 %5464
      %5466 = vrot.lane.b32.xlu0 %v5419, 64
      %v5467 = vpop.permute.xlu0 %5466
      %5484 = vst.msk [vmem:[#allocation3] sm:$0xff] %vm885, %v5437
      %5485 = vst.msk [vmem:[#allocation3 + $0x18] sm:$0xff] %vm885, %v5439
      %5486 = vst.msk [vmem:[#allocation3 + $0x30] sm:$0xff] %vm885, %v5441
      %5487 = vst.msk [vmem:[#allocation3 + $0x48] sm:$0xff] %vm885, %v5443
      %5488 = vst.msk [vmem:[#allocation3 + $0x60] sm:$0xff] %vm885, %v5445
      %5489 = vst.msk [vmem:[#allocation3 + $0x78] sm:$0xff] %vm885, %v5447
      %5490 = vst.msk [vmem:[#allocation3 + $0x90] sm:$0xff] %vm885, %v5449
      %5491 = vst.msk [vmem:[#allocation3 + $0xa8] sm:$0xff] %vm885, %v5451
      %5492 = vst.msk [vmem:[#allocation3 + $0xc0] sm:$0xff] %vm885, %v5453
      %5493 = vst.msk [vmem:[#allocation3 + $0xd8] sm:$0xff] %vm885, %v5455
      %5494 = vst.msk [vmem:[#allocation3 + $0xf0] sm:$0xff] %vm885, %v5457
      %5495 = vst.msk [vmem:[#allocation3 + $0x108] sm:$0xff] %vm885, %v5459
      %5496 = vst.msk [vmem:[#allocation3 + $0x120] sm:$0xff] %vm885, %v5461
      %5497 = vst.msk [vmem:[#allocation3 + $0x138] sm:$0xff] %vm885, %v5463
      %5498 = vst.msk [vmem:[#allocation3 + $0x150] sm:$0xff] %vm885, %v5465
      %5499 = vst.msk [vmem:[#allocation3 + $0x168] sm:$0xff] %vm885, %v5467
      %v5500 = vpack.c.bf16 %v4999, %v4998
      %5517 = vrot.lane.b32.xlu0 %v5005, 96
      %v5518 = vpop.permute.xlu0 %5517
      %5519 = vrot.lane.b32.xlu0 %v5006, 96
      %v5520 = vpop.permute.xlu0 %5519
      %5521 = vrot.lane.b32.xlu0 %v5007, 96
      %v5522 = vpop.permute.xlu0 %5521
      %5523 = vrot.lane.b32.xlu0 %v5008, 96
      %v5524 = vpop.permute.xlu0 %5523
      %5525 = vrot.lane.b32.xlu0 %v5009, 96
      %v5526 = vpop.permute.xlu0 %5525
      %5527 = vrot.lane.b32.xlu0 %v5010, 96
      %v5528 = vpop.permute.xlu0 %5527
      %5529 = vrot.lane.b32.xlu0 %v5011, 96
      %v5530 = vpop.permute.xlu0 %5529
      %5531 = vrot.lane.b32.xlu0 %v5012, 96
      %v5532 = vpop.permute.xlu0 %5531
      %5533 = vrot.lane.b32.xlu0 %v5013, 96
      %v5534 = vpop.permute.xlu0 %5533
      %5535 = vrot.lane.b32.xlu0 %v5014, 96
      %v5536 = vpop.permute.xlu0 %5535
      %5537 = vrot.lane.b32.xlu0 %v5015, 96
      %v5538 = vpop.permute.xlu0 %5537
      %5539 = vrot.lane.b32.xlu0 %v5016, 96
      %v5540 = vpop.permute.xlu0 %5539
      %5541 = vrot.lane.b32.xlu0 %v5017, 96
      %v5542 = vpop.permute.xlu0 %5541
      %5543 = vrot.lane.b32.xlu0 %v5018, 96
      %v5544 = vpop.permute.xlu0 %5543
      %5545 = vrot.lane.b32.xlu0 %v5019, 96
      %v5546 = vpop.permute.xlu0 %5545
      %5547 = vrot.lane.b32.xlu0 %v5500, 96
      %v5548 = vpop.permute.xlu0 %5547
      %5565 = vst.msk [vmem:[#allocation3] sm:$0xff] %vm967, %v5518
      %5566 = vst.msk [vmem:[#allocation3 + $0x18] sm:$0xff] %vm967, %v5520
      %5567 = vst.msk [vmem:[#allocation3 + $0x30] sm:$0xff] %vm967, %v5522
      %5568 = vst.msk [vmem:[#allocation3 + $0x48] sm:$0xff] %vm967, %v5524
      %5569 = vst.msk [vmem:[#allocation3 + $0x60] sm:$0xff] %vm967, %v5526
      %5570 = vst.msk [vmem:[#allocation3 + $0x78] sm:$0xff] %vm967, %v5528
      %5571 = vst.msk [vmem:[#allocation3 + $0x90] sm:$0xff] %vm967, %v5530
      %5572 = vst.msk [vmem:[#allocation3 + $0xa8] sm:$0xff] %vm967, %v5532
      %5573 = vst.msk [vmem:[#allocation3 + $0xc0] sm:$0xff] %vm967, %v5534
      %5574 = vst.msk [vmem:[#allocation3 + $0xd8] sm:$0xff] %vm967, %v5536
      %5575 = vst.msk [vmem:[#allocation3 + $0xf0] sm:$0xff] %vm967, %v5538
      %5576 = vst.msk [vmem:[#allocation3 + $0x108] sm:$0xff] %vm967, %v5540
      %5577 = vst.msk [vmem:[#allocation3 + $0x120] sm:$0xff] %vm967, %v5542
      %5578 = vst.msk [vmem:[#allocation3 + $0x138] sm:$0xff] %vm967, %v5544
      %5579 = vst.msk [vmem:[#allocation3 + $0x150] sm:$0xff] %vm967, %v5546
      %5580 = vst.msk [vmem:[#allocation3 + $0x168] sm:$0xff] %vm967, %v5548
      %v5584 = vrot.slane %v4998, 1
      %v5585 = vrot.slane %v4999, 1
      %v5586 = vsel %vm482, %v5584, %v5585
      %v5587 = vrot.slane %v5000, 1
      %v5588 = vsel %vm482, %v5585, %v5587
      %v5591 = vpack.c.bf16 %v5588, %v5586
      %5592 = vst.msk [vmem:[#allocation3 + $0x8] sm:$0xff] %vm226, %v5197
      %5593 = vst.msk [vmem:[#allocation3 + $0x20] sm:$0xff] %vm226, %v5198
      %5594 = vst.msk [vmem:[#allocation3 + $0x38] sm:$0xff] %vm226, %v5199
      %5595 = vst.msk [vmem:[#allocation3 + $0x50] sm:$0xff] %vm226, %v5200
      %5596 = vst.msk [vmem:[#allocation3 + $0x68] sm:$0xff] %vm226, %v5201
      %5597 = vst.msk [vmem:[#allocation3 + $0x80] sm:$0xff] %vm226, %v5202
      %5598 = vst.msk [vmem:[#allocation3 + $0x98] sm:$0xff] %vm226, %v5203
      %5599 = vst.msk [vmem:[#allocation3 + $0xb0] sm:$0xff] %vm226, %v5204
      %5600 = vst.msk [vmem:[#allocation3 + $0xc8] sm:$0xff] %vm226, %v5205
      %5601 = vst.msk [vmem:[#allocation3 + $0xe0] sm:$0xff] %vm226, %v5206
      %5602 = vst.msk [vmem:[#allocation3 + $0xf8] sm:$0xff] %vm226, %v5207
      %5603 = vst.msk [vmem:[#allocation3 + $0x110] sm:$0xff] %vm226, %v5208
      %5604 = vst.msk [vmem:[#allocation3 + $0x128] sm:$0xff] %vm226, %v5209
      %5605 = vst.msk [vmem:[#allocation3 + $0x140] sm:$0xff] %vm226, %v5210
      %5606 = vst.msk [vmem:[#allocation3 + $0x158] sm:$0xff] %vm226, %v5211
      %5607 = vst.msk [vmem:[#allocation3 + $0x170] sm:$0xff] %vm226, %v5591
      %v5608 = vrot.slane %v4998, 2
      %v5609 = vrot.slane %v4999, 2
      %v5610 = vsel %vm692, %v5608, %v5609
      %v5611 = vrot.slane %v5000, 2
      %v5612 = vsel %vm692, %v5609, %v5611
      %v5615 = vpack.c.bf16 %v5612, %v5610
      %5617 = vrot.lane.b32.xlu0 %v5405, 32
      %v5618 = vpop.permute.xlu0 %5617
      %5619 = vrot.lane.b32.xlu0 %v5406, 32
      %v5620 = vpop.permute.xlu0 %5619
      %5621 = vrot.lane.b32.xlu0 %v5407, 32
      %v5622 = vpop.permute.xlu0 %5621
      %5623 = vrot.lane.b32.xlu0 %v5408, 32
      %v5624 = vpop.permute.xlu0 %5623
      %5625 = vrot.lane.b32.xlu0 %v5409, 32
      %v5626 = vpop.permute.xlu0 %5625
      %5627 = vrot.lane.b32.xlu0 %v5410, 32
      %v5628 = vpop.permute.xlu0 %5627
      %5629 = vrot.lane.b32.xlu0 %v5411, 32
      %v5630 = vpop.permute.xlu0 %5629
      %5631 = vrot.lane.b32.xlu0 %v5412, 32
      %v5632 = vpop.permute.xlu0 %5631
      %5633 = vrot.lane.b32.xlu0 %v5413, 32
      %v5634 = vpop.permute.xlu0 %5633
      %5635 = vrot.lane.b32.xlu0 %v5414, 32
      %v5636 = vpop.permute.xlu0 %5635
      %5637 = vrot.lane.b32.xlu0 %v5415, 32
      %v5638 = vpop.permute.xlu0 %5637
      %5639 = vrot.lane.b32.xlu0 %v5416, 32
      %v5640 = vpop.permute.xlu0 %5639
      %5641 = vrot.lane.b32.xlu0 %v5417, 32
      %v5642 = vpop.permute.xlu0 %5641
      %5643 = vrot.lane.b32.xlu0 %v5418, 32
      %v5644 = vpop.permute.xlu0 %5643
      %5645 = vrot.lane.b32.xlu0 %v5419, 32
      %v5646 = vpop.permute.xlu0 %5645
      %5647 = vrot.lane.b32.xlu0 %v5615, 32
      %v5648 = vpop.permute.xlu0 %5647
      %5665 = vst.msk [vmem:[#allocation3 + $0x8] sm:$0xff] %vm675, %v5618
      %5666 = vst.msk [vmem:[#allocation3 + $0x20] sm:$0xff] %vm675, %v5620
      %5667 = vst.msk [vmem:[#allocation3 + $0x38] sm:$0xff] %vm675, %v5622
      %5668 = vst.msk [vmem:[#allocation3 + $0x50] sm:$0xff] %vm675, %v5624
      %5669 = vst.msk [vmem:[#allocation3 + $0x68] sm:$0xff] %vm675, %v5626
      %5670 = vst.msk [vmem:[#allocation3 + $0x80] sm:$0xff] %vm675, %v5628
      %5671 = vst.msk [vmem:[#allocation3 + $0x98] sm:$0xff] %vm675, %v5630
      %5672 = vst.msk [vmem:[#allocation3 + $0xb0] sm:$0xff] %vm675, %v5632
      %5673 = vst.msk [vmem:[#allocation3 + $0xc8] sm:$0xff] %vm675, %v5634
      %5674 = vst.msk [vmem:[#allocation3 + $0xe0] sm:$0xff] %vm675, %v5636
      %5675 = vst.msk [vmem:[#allocation3 + $0xf8] sm:$0xff] %vm675, %v5638
      %5676 = vst.msk [vmem:[#allocation3 + $0x110] sm:$0xff] %vm675, %v5640
      %5677 = vst.msk [vmem:[#allocation3 + $0x128] sm:$0xff] %vm675, %v5642
      %5678 = vst.msk [vmem:[#allocation3 + $0x140] sm:$0xff] %vm675, %v5644
      %5679 = vst.msk [vmem:[#allocation3 + $0x158] sm:$0xff] %vm675, %v5646
      %5680 = vst.msk [vmem:[#allocation3 + $0x170] sm:$0xff] %vm675, %v5648
      %v5681 = vpack.c.bf16 %v5002, %v5001
      %5683 = vrot.lane.b32.xlu0 %v5006, 64
      %v5684 = vpop.permute.xlu0 %5683
      %5685 = vrot.lane.b32.xlu0 %v5007, 64
      %v5686 = vpop.permute.xlu0 %5685
      %5687 = vrot.lane.b32.xlu0 %v5008, 64
      %v5688 = vpop.permute.xlu0 %5687
      %5689 = vrot.lane.b32.xlu0 %v5009, 64
      %v5690 = vpop.permute.xlu0 %5689
      %5691 = vrot.lane.b32.xlu0 %v5010, 64
      %v5692 = vpop.permute.xlu0 %5691
      %5693 = vrot.lane.b32.xlu0 %v5011, 64
      %v5694 = vpop.permute.xlu0 %5693
      %5695 = vrot.lane.b32.xlu0 %v5012, 64
      %v5696 = vpop.permute.xlu0 %5695
      %5697 = vrot.lane.b32.xlu0 %v5013, 64
      %v5698 = vpop.permute.xlu0 %5697
      %5699 = vrot.lane.b32.xlu0 %v5014, 64
      %v5700 = vpop.permute.xlu0 %5699
      %5701 = vrot.lane.b32.xlu0 %v5015, 64
      %v5702 = vpop.permute.xlu0 %5701
      %5703 = vrot.lane.b32.xlu0 %v5016, 64
      %v5704 = vpop.permute.xlu0 %5703
      %5705 = vrot.lane.b32.xlu0 %v5017, 64
      %v5706 = vpop.permute.xlu0 %5705
      %5707 = vrot.lane.b32.xlu0 %v5018, 64
      %v5708 = vpop.permute.xlu0 %5707
      %5709 = vrot.lane.b32.xlu0 %v5019, 64
      %v5710 = vpop.permute.xlu0 %5709
      %5711 = vrot.lane.b32.xlu0 %v5500, 64
      %v5712 = vpop.permute.xlu0 %5711
      %5713 = vrot.lane.b32.xlu0 %v5681, 64
      %v5714 = vpop.permute.xlu0 %5713
      %5731 = vst.msk [vmem:[#allocation3 + $0x8] sm:$0xff] %vm885, %v5684
      %5732 = vst.msk [vmem:[#allocation3 + $0x20] sm:$0xff] %vm885, %v5686
      %5733 = vst.msk [vmem:[#allocation3 + $0x38] sm:$0xff] %vm885, %v5688
      %5734 = vst.msk [vmem:[#allocation3 + $0x50] sm:$0xff] %vm885, %v5690
      %5735 = vst.msk [vmem:[#allocation3 + $0x68] sm:$0xff] %vm885, %v5692
      %5736 = vst.msk [vmem:[#allocation3 + $0x80] sm:$0xff] %vm885, %v5694
      %5737 = vst.msk [vmem:[#allocation3 + $0x98] sm:$0xff] %vm885, %v5696
      %5738 = vst.msk [vmem:[#allocation3 + $0xb0] sm:$0xff] %vm885, %v5698
      %5739 = vst.msk [vmem:[#allocation3 + $0xc8] sm:$0xff] %vm885, %v5700
      %5740 = vst.msk [vmem:[#allocation3 + $0xe0] sm:$0xff] %vm885, %v5702
      %5741 = vst.msk [vmem:[#allocation3 + $0xf8] sm:$0xff] %vm885, %v5704
      %5742 = vst.msk [vmem:[#allocation3 + $0x110] sm:$0xff] %vm885, %v5706
      %5743 = vst.msk [vmem:[#allocation3 + $0x128] sm:$0xff] %vm885, %v5708
      %5744 = vst.msk [vmem:[#allocation3 + $0x140] sm:$0xff] %vm885, %v5710
      %5745 = vst.msk [vmem:[#allocation3 + $0x158] sm:$0xff] %vm885, %v5712
      %5746 = vst.msk [vmem:[#allocation3 + $0x170] sm:$0xff] %vm885, %v5714
      %v5750 = vrot.slane %v5001, 1
      %v5751 = vrot.slane %v5002, 1
      %v5752 = vsel %vm482, %v5750, %v5751
      %v5753 = vrot.slane %v5003, 1
      %v5754 = vsel %vm482, %v5751, %v5753
      %v5757 = vpack.c.bf16 %v5754, %v5752
      %5760 = vrot.lane.b32.xlu0 %v5198, 96
      %v5761 = vpop.permute.xlu0 %5760
      %5762 = vrot.lane.b32.xlu0 %v5199, 96
      %v5763 = vpop.permute.xlu0 %5762
      %5764 = vrot.lane.b32.xlu0 %v5200, 96
      %v5765 = vpop.permute.xlu0 %5764
      %5766 = vrot.lane.b32.xlu0 %v5201, 96
      %v5767 = vpop.permute.xlu0 %5766
      %5768 = vrot.lane.b32.xlu0 %v5202, 96
      %v5769 = vpop.permute.xlu0 %5768
      %5770 = vrot.lane.b32.xlu0 %v5203, 96
      %v5771 = vpop.permute.xlu0 %5770
      %5772 = vrot.lane.b32.xlu0 %v5204, 96
      %v5773 = vpop.permute.xlu0 %5772
      %5774 = vrot.lane.b32.xlu0 %v5205, 96
      %v5775 = vpop.permute.xlu0 %5774
      %5776 = vrot.lane.b32.xlu0 %v5206, 96
      %v5777 = vpop.permute.xlu0 %5776
      %5778 = vrot.lane.b32.xlu0 %v5207, 96
      %v5779 = vpop.permute.xlu0 %5778
      %5780 = vrot.lane.b32.xlu0 %v5208, 96
      %v5781 = vpop.permute.xlu0 %5780
      %5782 = vrot.lane.b32.xlu0 %v5209, 96
      %v5783 = vpop.permute.xlu0 %5782
      %5784 = vrot.lane.b32.xlu0 %v5210, 96
      %v5785 = vpop.permute.xlu0 %5784
      %5786 = vrot.lane.b32.xlu0 %v5211, 96
      %v5787 = vpop.permute.xlu0 %5786
      %5788 = vrot.lane.b32.xlu0 %v5591, 96
      %v5789 = vpop.permute.xlu0 %5788
      %5790 = vrot.lane.b32.xlu0 %v5757, 96
      %v5791 = vpop.permute.xlu0 %5790
      %5808 = vst.msk [vmem:[#allocation3 + $0x8] sm:$0xff] %vm967, %v5761
      %5809 = vst.msk [vmem:[#allocation3 + $0x20] sm:$0xff] %vm967, %v5763
      %5810 = vst.msk [vmem:[#allocation3 + $0x38] sm:$0xff] %vm967, %v5765
      %5811 = vst.msk [vmem:[#allocation3 + $0x50] sm:$0xff] %vm967, %v5767
      %5812 = vst.msk [vmem:[#allocation3 + $0x68] sm:$0xff] %vm967, %v5769
      %5813 = vst.msk [vmem:[#allocation3 + $0x80] sm:$0xff] %vm967, %v5771
      %5814 = vst.msk [vmem:[#allocation3 + $0x98] sm:$0xff] %vm967, %v5773
      %5815 = vst.msk [vmem:[#allocation3 + $0xb0] sm:$0xff] %vm967, %v5775
      %5816 = vst.msk [vmem:[#allocation3 + $0xc8] sm:$0xff] %vm967, %v5777
      %5817 = vst.msk [vmem:[#allocation3 + $0xe0] sm:$0xff] %vm967, %v5779
      %5818 = vst.msk [vmem:[#allocation3 + $0xf8] sm:$0xff] %vm967, %v5781
      %5819 = vst.msk [vmem:[#allocation3 + $0x110] sm:$0xff] %vm967, %v5783
      %5820 = vst.msk [vmem:[#allocation3 + $0x128] sm:$0xff] %vm967, %v5785
      %5821 = vst.msk [vmem:[#allocation3 + $0x140] sm:$0xff] %vm967, %v5787
      %5822 = vst.msk [vmem:[#allocation3 + $0x158] sm:$0xff] %vm967, %v5789
      %5823 = vst.msk [vmem:[#allocation3 + $0x170] sm:$0xff] %vm967, %v5791
      %v5824 = vrot.slane %v5001, 2
      %v5825 = vrot.slane %v5002, 2
      %v5826 = vsel %vm692, %v5824, %v5825
      %v5827 = vrot.slane %v5003, 2
      %v5828 = vsel %vm692, %v5825, %v5827
      %v5831 = vpack.c.bf16 %v5828, %v5826
      %5832 = vst.msk [vmem:[#allocation3 + $0x10] sm:$0xff] %vm226, %v5406
      %5833 = vst.msk [vmem:[#allocation3 + $0x28] sm:$0xff] %vm226, %v5407
      %5834 = vst.msk [vmem:[#allocation3 + $0x40] sm:$0xff] %vm226, %v5408
      %5835 = vst.msk [vmem:[#allocation3 + $0x58] sm:$0xff] %vm226, %v5409
      %5836 = vst.msk [vmem:[#allocation3 + $0x70] sm:$0xff] %vm226, %v5410
      %5837 = vst.msk [vmem:[#allocation3 + $0x88] sm:$0xff] %vm226, %v5411
      %5838 = vst.msk [vmem:[#allocation3 + $0xa0] sm:$0xff] %vm226, %v5412
      %5839 = vst.msk [vmem:[#allocation3 + $0xb8] sm:$0xff] %vm226, %v5413
      %5840 = vst.msk [vmem:[#allocation3 + $0xd0] sm:$0xff] %vm226, %v5414
      %5841 = vst.msk [vmem:[#allocation3 + $0xe8] sm:$0xff] %vm226, %v5415
      %5842 = vst.msk [vmem:[#allocation3 + $0x100] sm:$0xff] %vm226, %v5416
      %5843 = vst.msk [vmem:[#allocation3 + $0x118] sm:$0xff] %vm226, %v5417
      %5844 = vst.msk [vmem:[#allocation3 + $0x130] sm:$0xff] %vm226, %v5418
      %5845 = vst.msk [vmem:[#allocation3 + $0x148] sm:$0xff] %vm226, %v5419
      %5846 = vst.msk [vmem:[#allocation3 + $0x160] sm:$0xff] %vm226, %v5615
      %5847 = vst.msk [vmem:[#allocation3 + $0x178] sm:$0xff] %vm226, %v5831
      %v5848 = vld [vmem:[#allocation3] sm:$0xff]
      %v5849 = vld [vmem:[#allocation3 + $0x8] sm:$0xff]
      %v5850 = vld [vmem:[#allocation3 + $0x10] sm:$0xff]
      %v5851 = vld [vmem:[#allocation3 + $0x18] sm:$0xff]
      %v5852 = vld [vmem:[#allocation3 + $0x20] sm:$0xff]
      %v5853 = vld [vmem:[#allocation3 + $0x28] sm:$0xff]
      %v5854 = vld [vmem:[#allocation3 + $0x30] sm:$0xff]
      %v5855 = vld [vmem:[#allocation3 + $0x38] sm:$0xff]
      %v5856 = vld [vmem:[#allocation3 + $0x40] sm:$0xff]
      %v5857 = vld [vmem:[#allocation3 + $0x48] sm:$0xff]
      %v5858 = vld [vmem:[#allocation3 + $0x50] sm:$0xff]
      %v5859 = vld [vmem:[#allocation3 + $0x58] sm:$0xff]
      %v5860 = vld [vmem:[#allocation3 + $0x60] sm:$0xff]
      %v5861 = vld [vmem:[#allocation3 + $0x68] sm:$0xff]
      %v5862 = vld [vmem:[#allocation3 + $0x70] sm:$0xff]
      %v5863 = vld [vmem:[#allocation3 + $0x78] sm:$0xff]
      %v5864 = vld [vmem:[#allocation3 + $0x80] sm:$0xff]
      %v5865 = vld [vmem:[#allocation3 + $0x88] sm:$0xff]
      %v5866 = vld [vmem:[#allocation3 + $0x90] sm:$0xff]
      %v5867 = vld [vmem:[#allocation3 + $0x98] sm:$0xff]
      %v5868 = vld [vmem:[#allocation3 + $0xa0] sm:$0xff]
      %v5869 = vld [vmem:[#allocation3 + $0xa8] sm:$0xff]
      %v5870 = vld [vmem:[#allocation3 + $0xb0] sm:$0xff]
      %v5871 = vld [vmem:[#allocation3 + $0xb8] sm:$0xff]
      %v5872 = vld [vmem:[#allocation3 + $0xc0] sm:$0xff]
      %v5873 = vld [vmem:[#allocation3 + $0xc8] sm:$0xff]
      %v5874 = vld [vmem:[#allocation3 + $0xd0] sm:$0xff]
      %v5875 = vld [vmem:[#allocation3 + $0xd8] sm:$0xff]
      %v5876 = vld [vmem:[#allocation3 + $0xe0] sm:$0xff]
      %v5877 = vld [vmem:[#allocation3 + $0xe8] sm:$0xff]
      %v5878 = vld [vmem:[#allocation3 + $0xf0] sm:$0xff]
      %v5879 = vld [vmem:[#allocation3 + $0xf8] sm:$0xff]
      %v5880 = vld [vmem:[#allocation3 + $0x100] sm:$0xff]
      %v5881 = vld [vmem:[#allocation3 + $0x108] sm:$0xff]
      %v5882 = vld [vmem:[#allocation3 + $0x110] sm:$0xff]
      %v5883 = vld [vmem:[#allocation3 + $0x118] sm:$0xff]
      %v5884 = vld [vmem:[#allocation3 + $0x120] sm:$0xff]
      %v5885 = vld [vmem:[#allocation3 + $0x128] sm:$0xff]
      %v5886 = vld [vmem:[#allocation3 + $0x130] sm:$0xff]
      %v5887 = vld [vmem:[#allocation3 + $0x138] sm:$0xff]
      %v5888 = vld [vmem:[#allocation3 + $0x140] sm:$0xff]
      %v5889 = vld [vmem:[#allocation3 + $0x148] sm:$0xff]
      %v5890 = vld [vmem:[#allocation3 + $0x150] sm:$0xff]
      %v5891 = vld [vmem:[#allocation3 + $0x158] sm:$0xff]
      %v5892 = vld [vmem:[#allocation3 + $0x160] sm:$0xff]
      %v5893 = vld [vmem:[#allocation3 + $0x168] sm:$0xff]
      %v5894 = vld [vmem:[#allocation3 + $0x170] sm:$0xff]
      %v5895 = vld [vmem:[#allocation3 + $0x178] sm:$0xff]
      %s5896 = scalar_lea.vmem %s1, 432
      %v5897 = vld [vmem:[%s5896] sm:$0xf]
      %v5898 = vld [vmem:[%s5896 + $0x4] sm:$0xf]
      %v5899 = vld [vmem:[%s5896 + $0x8] sm:$0xf]
      %v5900 = vld [vmem:[%s5896 + $0xc] sm:$0xf]
      %v5901 = vld [vmem:[%s5896 + $0x10] sm:$0xf]
      %v5902 = vld [vmem:[%s5896 + $0x14] sm:$0xf]
      %v5903 = vld [vmem:[%s5896 + $0x18] sm:$0xf]
      %v5904 = vld [vmem:[%s5896 + $0x1c] sm:$0xf]
      %v5905 = vld [vmem:[%s5896 + $0x20] sm:$0xf]
      %v5906 = vld [vmem:[%s5896 + $0x24] sm:$0xf]
      %v5907 = vld [vmem:[%s5896 + $0x28] sm:$0xf]
      %v5908 = vld [vmem:[%s5896 + $0x2c] sm:$0xf]
      %v5909 = vld [vmem:[%s5896 + $0x30] sm:$0xf]
      %v5910 = vld [vmem:[%s5896 + $0x34] sm:$0xf]
      %v5911 = vld [vmem:[%s5896 + $0x38] sm:$0xf]
      %v5912 = vld [vmem:[%s5896 + $0x3c] sm:$0xf]
      %v5913 = vld [vmem:[%s5896 + $0x40] sm:$0xf]
      %v5914 = vld [vmem:[%s5896 + $0x44] sm:$0xf]
      %v5915 = vld [vmem:[%s5896 + $0x48] sm:$0xf]
      %v5916 = vld [vmem:[%s5896 + $0x4c] sm:$0xf]
      %v5917 = vld [vmem:[%s5896 + $0x50] sm:$0xf]
      %v5918 = vld [vmem:[%s5896 + $0x54] sm:$0xf]
      %v5919 = vld [vmem:[%s5896 + $0x58] sm:$0xf]
      %v5920 = vld [vmem:[%s5896 + $0x5c] sm:$0xf]
      %v5921 = vld [vmem:[%s5896 + $0x60] sm:$0xf]
      %v5922 = vld [vmem:[%s5896 + $0x64] sm:$0xf]
      %v5923 = vld [vmem:[%s5896 + $0x68] sm:$0xf]
      %v5924 = vld [vmem:[%s5896 + $0x6c] sm:$0xf]
      %v5925 = vld [vmem:[%s5896 + $0x70] sm:$0xf]
      %v5926 = vld [vmem:[%s5896 + $0x74] sm:$0xf]
      %v5927 = vld [vmem:[%s5896 + $0x78] sm:$0xf]
      %v5928 = vld [vmem:[%s5896 + $0x7c] sm:$0xf]
      %v5929 = vld [vmem:[%s5896 + $0x80] sm:$0xf]
      %v5930 = vld [vmem:[%s5896 + $0x84] sm:$0xf]
      %v5931 = vld [vmem:[%s5896 + $0x88] sm:$0xf]
      %v5932 = vld [vmem:[%s5896 + $0x8c] sm:$0xf]
      %s5933 = scalar_lea.vmem %s2, 3
      %v5934 = vld [vmem:[%s5933] sm:$0x1]
      %v5936 = vlaneseq
      %v5937 = vshrl.u32 %v5936, 7
      %v5938 = vsub.s32 0, %v5937
      %v5939 = vrot.slane %v5934, %v5938
      %v5977 = vunpack.c.l.b16 %v5897
      %v5978 = vunpack.c.l.b16 %v5898
      %v5979 = vunpack.c.l.b16 %v5899
      %v5980 = vunpack.c.l.b16 %v5900
      %v5981 = vunpack.c.l.b16 %v5901
      %v5982 = vunpack.c.l.b16 %v5902
      %v5983 = vunpack.c.l.b16 %v5903
      %v5984 = vunpack.c.l.b16 %v5904
      %v5985 = vunpack.c.l.b16 %v5905
      %v5986 = vunpack.c.l.b16 %v5906
      %v5987 = vunpack.c.l.b16 %v5907
      %v5988 = vunpack.c.l.b16 %v5908
      %v5989 = vunpack.c.l.b16 %v5909
      %v5990 = vunpack.c.l.b16 %v5910
      %v5991 = vunpack.c.l.b16 %v5911
      %v5992 = vunpack.c.l.b16 %v5912
      %v5993 = vunpack.c.l.b16 %v5913
      %v5994 = vunpack.c.l.b16 %v5914
      %v5995 = vunpack.c.l.b16 %v5915
      %v5996 = vunpack.c.l.b16 %v5916
      %v5997 = vunpack.c.l.b16 %v5917
      %v5998 = vunpack.c.l.b16 %v5918
      %v5999 = vunpack.c.l.b16 %v5919
      %v6000 = vunpack.c.l.b16 %v5920
      %v6001 = vunpack.c.l.b16 %v5921
      %v6002 = vunpack.c.l.b16 %v5922
      %v6003 = vunpack.c.l.b16 %v5923
      %v6004 = vunpack.c.l.b16 %v5924
      %v6005 = vunpack.c.l.b16 %v5925
      %v6006 = vunpack.c.l.b16 %v5926
      %v6007 = vunpack.c.l.b16 %v5927
      %v6008 = vunpack.c.l.b16 %v5928
      %v6009 = vunpack.c.l.b16 %v5929
      %v6010 = vunpack.c.l.b16 %v5930
      %v6011 = vunpack.c.l.b16 %v5931
      %v6012 = vunpack.c.l.b16 %v5932
      %v6013 = vpack.c.b16 %v5978, %v5977
      %v6014 = vpack.c.b16 %v5980, %v5979
      %v6015 = vpack.c.b16 %v5982, %v5981
      %v6016 = vpack.c.b16 %v5984, %v5983
      %v6017 = vpack.c.b16 %v5986, %v5985
      %v6018 = vpack.c.b16 %v5988, %v5987
      %v6019 = vpack.c.b16 %v5990, %v5989
      %v6020 = vpack.c.b16 %v5992, %v5991
      %v6021 = vpack.c.b16 %v5994, %v5993
      %v6022 = vpack.c.b16 %v5996, %v5995
      %v6023 = vpack.c.b16 %v5998, %v5997
      %v6024 = vpack.c.b16 %v6000, %v5999
      %v6025 = vpack.c.b16 %v6002, %v6001
      %v6026 = vpack.c.b16 %v6004, %v6003
      %v6027 = vpack.c.b16 %v6006, %v6005
      %v6028 = vpack.c.b16 %v6008, %v6007
      %v6029 = vpack.c.b16 %v6010, %v6009
      %v6030 = vpack.c.b16 %v6012, %v6011
      %v6050 = vsel %vm226, %v5850, 0
      %v6053 = vsel %vm226, %v5853, 0
      %v6056 = vsel %vm226, %v5856, 0
      %v6059 = vsel %vm226, %v5859, 0
      %v6062 = vsel %vm226, %v5862, 0
      %v6065 = vsel %vm226, %v5865, 0
      %v6068 = vsel %vm226, %v5868, 0
      %v6071 = vsel %vm226, %v5871, 0
      %v6074 = vsel %vm226, %v5874, 0
      %v6077 = vsel %vm226, %v5877, 0
      %v6080 = vsel %vm226, %v5880, 0
      %v6083 = vsel %vm226, %v5883, 0
      %v6086 = vsel %vm226, %v5886, 0
      %v6089 = vsel %vm226, %v5889, 0
      %v6092 = vsel %vm226, %v5892, 0
      %v6095 = vsel %vm226, %v5895, 0
      %6097 = vmatprep.subr.bf16.mxu0 0
      %6098 = vmatpush1.bf16.msra.mxu0 %v6013
      %6099 = vmatprep.subr.bf16.mxu0 0
      %6100 = vmatpush1.bf16.msra.mxu0 %v6014
      %6101 = vmatprep.subr.bf16.mxu0 0
      %6102 = vmatpush1.bf16.msra.mxu0 %v6015
      %6103 = vmatprep.subr.bf16.mxu0 0
      %6104 = vmatpush1.bf16.msra.mxu0 %v6016
      %6105 = vmatprep.subr.bf16.mxu0 0
      %6106 = vmatpush1.bf16.msra.mxu0 %v6017
      %6107 = vmatprep.subr.bf16.mxu0 0
      %6108 = vmatpush1.bf16.msra.mxu0 %v6018
      %6109 = vmatprep.subr.bf16.mxu0 0
      %6110 = vmatpush1.bf16.msra.mxu0 %v6019
      %6111 = vmatprep.subr.bf16.mxu0 0
      %6112 = vmatpush1.bf16.msra.mxu0 %v6020
      %6113 = vmatprep.subr.bf16.mxu0 0
      %6114 = vmatpush1.bf16.msra.mxu0 %v6021
      %6115 = vmatprep.subr.bf16.mxu0 0
      %6116 = vmatpush1.bf16.msra.mxu0 %v6022
      %6117 = vmatprep.subr.bf16.mxu0 0
      %6118 = vmatpush1.bf16.msra.mxu0 %v6023
      %6119 = vmatprep.subr.bf16.mxu0 0
      %6120 = vmatpush1.bf16.msra.mxu0 %v6024
      %6121 = vmatprep.subr.bf16.mxu0 0
      %6122 = vmatpush1.bf16.msra.mxu0 %v6025
      %6123 = vmatprep.subr.bf16.mxu0 0
      %6124 = vmatpush1.bf16.msra.mxu0 %v6026
      %6125 = vmatprep.subr.bf16.mxu0 0
      %6126 = vmatpush1.bf16.msra.mxu0 %v6027
      %6127 = vmatprep.subr.bf16.mxu0 0
      %6128 = vmatpush1.bf16.msra.mxu0 %v6028
      %6129 = vmatprep.mubr.bf16.mxu0 %v5849
      %6130 = vmatmul.mubr.bf16.gmra.mrb[0].mxu0 %v5848
      %v6131 = vpop.f32.mrb[0].mxu0
      %v6132 = vadd.f32 %v5939, %v6131
      %v6133 = vpop.f32.mrb[0].mxu0
      %v6134 = vpop.f32.mrb[0].mxu0
      %v6135 = vadd.f32 %v5939, %v6134
      %v6136 = vpop.f32.mrb[0].mxu0
      %6137 = vmatprep.mubr.bf16.mxu0 %v5852
      %6138 = vmatmul.mubr.bf16.gmra.mrb[0].mxu0 %v5851
      %v6139 = vpop.f32.mrb[0].mxu0
      %v6140 = vadd.f32 %v5939, %v6139
      %v6141 = vpop.f32.mrb[0].mxu0
      %v6142 = vpop.f32.mrb[0].mxu0
      %v6143 = vadd.f32 %v5939, %v6142
      %v6144 = vpop.f32.mrb[0].mxu0
      %6145 = vmatprep.mubr.bf16.mxu0 %v5855
      %6146 = vmatmul.mubr.bf16.gmra.mrb[0].mxu0 %v5854
      %v6147 = vpop.f32.mrb[0].mxu0
      %v6148 = vadd.f32 %v5939, %v6147
      %v6149 = vpop.f32.mrb[0].mxu0
      %v6150 = vpop.f32.mrb[0].mxu0
      %v6151 = vadd.f32 %v5939, %v6150
      %v6152 = vpop.f32.mrb[0].mxu0
      %6153 = vmatprep.mubr.bf16.mxu0 %v5858
      %6154 = vmatmul.mubr.bf16.gmra.mrb[0].mxu0 %v5857
      %v6155 = vpop.f32.mrb[0].mxu0
      %v6156 = vadd.f32 %v5939, %v6155
      %v6157 = vpop.f32.mrb[0].mxu0
      %v6158 = vpop.f32.mrb[0].mxu0
      %v6159 = vadd.f32 %v5939, %v6158
      %v6160 = vpop.f32.mrb[0].mxu0
      %6161 = vmatprep.mubr.bf16.mxu0 %v5861
      %6162 = vmatmul.mubr.bf16.gmra.mrb[0].mxu0 %v5860
      %v6163 = vpop.f32.mrb[0].mxu0
      %v6164 = vadd.f32 %v5939, %v6163
      %v6165 = vpop.f32.mrb[0].mxu0
      %v6166 = vpop.f32.mrb[0].mxu0
      %v6167 = vadd.f32 %v5939, %v6166
      %v6168 = vpop.f32.mrb[0].mxu0
      %6169 = vmatprep.mubr.bf16.mxu0 %v5864
      %6170 = vmatmul.mubr.bf16.gmra.mrb[0].mxu0 %v5863
      %v6171 = vpop.f32.mrb[0].mxu0
      %v6172 = vadd.f32 %v5939, %v6171
      %v6173 = vpop.f32.mrb[0].mxu0
      %v6174 = vpop.f32.mrb[0].mxu0
      %v6175 = vadd.f32 %v5939, %v6174
      %v6176 = vpop.f32.mrb[0].mxu0
      %6177 = vmatprep.mubr.bf16.mxu0 %v5867
      %6178 = vmatmul.mubr.bf16.gmra.mrb[0].mxu0 %v5866
      %v6179 = vpop.f32.mrb[0].mxu0
      %v6180 = vadd.f32 %v5939, %v6179
      %v6181 = vpop.f32.mrb[0].mxu0
      %v6182 = vpop.f32.mrb[0].mxu0
      %v6183 = vadd.f32 %v5939, %v6182
      %v6184 = vpop.f32.mrb[0].mxu0
      %6185 = vmatprep.mubr.bf16.mxu0 %v5870
      %6186 = vmatmul.mubr.bf16.gmra.mrb[0].mxu0 %v5869
      %v6187 = vpop.f32.mrb[0].mxu0
      %v6188 = vadd.f32 %v5939, %v6187
      %v6189 = vpop.f32.mrb[0].mxu0
      %v6190 = vpop.f32.mrb[0].mxu0
      %v6191 = vadd.f32 %v5939, %v6190
      %v6192 = vpop.f32.mrb[0].mxu0
      %6193 = vmatprep.mubr.bf16.mxu0 %v5873
      %6194 = vmatmul.mubr.bf16.gmra.mrb[0].mxu0 %v5872
      %v6195 = vpop.f32.mrb[0].mxu0
      %v6196 = vadd.f32 %v5939, %v6195
      %v6197 = vpop.f32.mrb[0].mxu0
      %v6198 = vpop.f32.mrb[0].mxu0
      %v6199 = vadd.f32 %v5939, %v6198
      %v6200 = vpop.f32.mrb[0].mxu0
      %6201 = vmatprep.mubr.bf16.mxu0 %v5876
      %6202 = vmatmul.mubr.bf16.gmra.mrb[0].mxu0 %v5875
      %v6203 = vpop.f32.mrb[0].mxu0
      %v6204 = vadd.f32 %v5939, %v6203
      %v6205 = vpop.f32.mrb[0].mxu0
      %v6206 = vpop.f32.mrb[0].mxu0
      %v6207 = vadd.f32 %v5939, %v6206
      %v6208 = vpop.f32.mrb[0].mxu0
      %6209 = vmatprep.mubr.bf16.mxu0 %v5879
      %6210 = vmatmul.mubr.bf16.gmra.mrb[0].mxu0 %v5878
      %v6211 = vpop.f32.mrb[0].mxu0
      %v6212 = vadd.f32 %v5939, %v6211
      %v6213 = vpop.f32.mrb[0].mxu0
      %v6214 = vpop.f32.mrb[0].mxu0
      %v6215 = vadd.f32 %v5939, %v6214
      %v6216 = vpop.f32.mrb[0].mxu0
      %6217 = vmatprep.mubr.bf16.mxu0 %v5882
      %6218 = vmatmul.mubr.bf16.gmra.mrb[0].mxu0 %v5881
      %v6219 = vpop.f32.mrb[0].mxu0
      %v6220 = vadd.f32 %v5939, %v6219
      %v6221 = vpop.f32.mrb[0].mxu0
      %v6222 = vpop.f32.mrb[0].mxu0
      %v6223 = vadd.f32 %v5939, %v6222
      %v6224 = vpop.f32.mrb[0].mxu0
      %6225 = vmatprep.mubr.bf16.mxu0 %v5885
      %6226 = vmatmul.mubr.bf16.gmra.mrb[0].mxu0 %v5884
      %v6227 = vpop.f32.mrb[0].mxu0
      %v6228 = vadd.f32 %v5939, %v6227
      %v6229 = vpop.f32.mrb[0].mxu0
      %v6230 = vpop.f32.mrb[0].mxu0
      %v6231 = vadd.f32 %v5939, %v6230
      %v6232 = vpop.f32.mrb[0].mxu0
      %6233 = vmatprep.mubr.bf16.mxu0 %v5888
      %6234 = vmatmul.mubr.bf16.gmra.mrb[0].mxu0 %v5887
      %v6235 = vpop.f32.mrb[0].mxu0
      %v6236 = vadd.f32 %v5939, %v6235
      %v6237 = vpop.f32.mrb[0].mxu0
      %v6238 = vpop.f32.mrb[0].mxu0
      %v6239 = vadd.f32 %v5939, %v6238
      %v6240 = vpop.f32.mrb[0].mxu0
      %6241 = vmatprep.mubr.bf16.mxu0 %v5891
      %6242 = vmatmul.mubr.bf16.gmra.mrb[0].mxu0 %v5890
      %v6243 = vpop.f32.mrb[0].mxu0
      %v6244 = vadd.f32 %v5939, %v6243
      %v6245 = vpop.f32.mrb[0].mxu0
      %v6246 = vpop.f32.mrb[0].mxu0
      %v6247 = vadd.f32 %v5939, %v6246
      %v6248 = vpop.f32.mrb[0].mxu0
      %6249 = vmatprep.mubr.bf16.mxu0 %v5894
      %6250 = vmatmul.mubr.bf16.gmra.mrb[0].mxu0 %v5893
      %v6251 = vpop.f32.mrb[0].mxu0
      %v6252 = vadd.f32 %v5939, %v6251
      %v6253 = vpop.f32.mrb[0].mxu0
      %v6254 = vpop.f32.mrb[0].mxu0
      %v6255 = vadd.f32 %v5939, %v6254
      %v6256 = vpop.f32.mrb[0].mxu0
      %6257 = vdwg.mxu0
      %6258 = vmatprep.subr.bf16.mxu0 0
      %6259 = vmatpush1.bf16.msra.mxu0 %v6029
      %6260 = vmatprep.subr.bf16.mxu0 0
      %6261 = vmatpush1.bf16.msra.mxu0 %v6030
      %6262 = vmatprep.subr.bf16.mxu0 0
      %6263 = vmatpush1.bf16.msra.mxu0 0
      %6264 = vmatprep.subr.bf16.mxu0 0
      %6265 = vmatpush1.bf16.msra.mxu0 0
      %6266 = vmatprep.subr.bf16.mxu0 0
      %6267 = vmatpush1.bf16.msra.mxu0 0
      %6268 = vmatprep.subr.bf16.mxu0 0
      %6269 = vmatpush1.bf16.msra.mxu0 0
      %6270 = vmatprep.subr.bf16.mxu0 0
      %6271 = vmatpush1.bf16.msra.mxu0 0
      %6272 = vmatprep.subr.bf16.mxu0 0
      %6273 = vmatpush1.bf16.msra.mxu0 0
      %6274 = vmatprep.subr.bf16.mxu0 0
      %6275 = vmatpush1.bf16.msra.mxu0 0
      %6276 = vmatprep.subr.bf16.mxu0 0
      %6277 = vmatpush1.bf16.msra.mxu0 0
      %6278 = vmatprep.subr.bf16.mxu0 0
      %6279 = vmatpush1.bf16.msra.mxu0 0
      %6280 = vmatprep.subr.bf16.mxu0 0
      %6281 = vmatpush1.bf16.msra.mxu0 0
      %6282 = vmatprep.subr.bf16.mxu0 0
      %6283 = vmatpush1.bf16.msra.mxu0 0
      %6284 = vmatprep.subr.bf16.mxu0 0
      %6285 = vmatpush1.bf16.msra.mxu0 0
      %6286 = vmatprep.subr.bf16.mxu0 0
      %6287 = vmatpush1.bf16.msra.mxu0 0
      %6288 = vmatprep.subr.bf16.mxu0 0
      %6289 = vmatpush1.bf16.msra.mxu0 0
      %6290 = vmatprep.mubr.bf16.mxu0 0
      %6291 = vmatmul.mubr.bf16.gmra.mrb[0].mxu0 %v6050
      %v6292 = vpop.f32.mrb[0].mxu0
      %v6293 = vadd.f32 %v6132, %v6292
      %v6294 = vpop.f32.mrb[0].mxu0
      %v6295 = vpop.f32.mrb[0].mxu0
      %v6296 = vadd.f32 %v6135, %v6295
      %v6297 = vpop.f32.mrb[0].mxu0
      %6298 = vmatprep.mubr.bf16.mxu0 0
      %6299 = vmatmul.mubr.bf16.gmra.mrb[0].mxu0 %v6053
      %v6300 = vpop.f32.mrb[0].mxu0
      %v6301 = vadd.f32 %v6140, %v6300
      %v6302 = vpop.f32.mrb[0].mxu0
      %v6303 = vpop.f32.mrb[0].mxu0
      %v6304 = vadd.f32 %v6143, %v6303
      %v6305 = vpop.f32.mrb[0].mxu0
      %6306 = vmatprep.mubr.bf16.mxu0 0
      %6307 = vmatmul.mubr.bf16.gmra.mrb[0].mxu0 %v6056
      %v6308 = vpop.f32.mrb[0].mxu0
      %v6309 = vadd.f32 %v6148, %v6308
      %v6310 = vpop.f32.mrb[0].mxu0
      %v6311 = vpop.f32.mrb[0].mxu0
      %v6312 = vadd.f32 %v6151, %v6311
      %v6313 = vpop.f32.mrb[0].mxu0
      %6314 = vmatprep.mubr.bf16.mxu0 0
      %6315 = vmatmul.mubr.bf16.gmra.mrb[0].mxu0 %v6059
      %v6316 = vpop.f32.mrb[0].mxu0
      %v6317 = vadd.f32 %v6156, %v6316
      %v6318 = vpop.f32.mrb[0].mxu0
      %v6319 = vpop.f32.mrb[0].mxu0
      %v6320 = vadd.f32 %v6159, %v6319
      %v6321 = vpop.f32.mrb[0].mxu0
      %6322 = vmatprep.mubr.bf16.mxu0 0
      %6323 = vmatmul.mubr.bf16.gmra.mrb[0].mxu0 %v6062
      %v6324 = vpop.f32.mrb[0].mxu0
      %v6325 = vadd.f32 %v6164, %v6324
      %v6326 = vpop.f32.mrb[0].mxu0
      %v6327 = vpop.f32.mrb[0].mxu0
      %v6328 = vadd.f32 %v6167, %v6327
      %v6329 = vpop.f32.mrb[0].mxu0
      %6330 = vmatprep.mubr.bf16.mxu0 0
      %6331 = vmatmul.mubr.bf16.gmra.mrb[0].mxu0 %v6065
      %v6332 = vpop.f32.mrb[0].mxu0
      %v6333 = vadd.f32 %v6172, %v6332
      %v6334 = vpop.f32.mrb[0].mxu0
      %v6335 = vpop.f32.mrb[0].mxu0
      %v6336 = vadd.f32 %v6175, %v6335
      %v6337 = vpop.f32.mrb[0].mxu0
      %6338 = vmatprep.mubr.bf16.mxu0 0
      %6339 = vmatmul.mubr.bf16.gmra.mrb[0].mxu0 %v6068
      %v6340 = vpop.f32.mrb[0].mxu0
      %v6341 = vadd.f32 %v6180, %v6340
      %v6342 = vpop.f32.mrb[0].mxu0
      %v6343 = vpop.f32.mrb[0].mxu0
      %v6344 = vadd.f32 %v6183, %v6343
      %v6345 = vpop.f32.mrb[0].mxu0
      %6346 = vmatprep.mubr.bf16.mxu0 0
      %6347 = vmatmul.mubr.bf16.gmra.mrb[0].mxu0 %v6071
      %v6348 = vpop.f32.mrb[0].mxu0
      %v6349 = vadd.f32 %v6188, %v6348
      %v6350 = vpop.f32.mrb[0].mxu0
      %v6351 = vpop.f32.mrb[0].mxu0
      %v6352 = vadd.f32 %v6191, %v6351
      %v6353 = vpop.f32.mrb[0].mxu0
      %6354 = vmatprep.mubr.bf16.mxu0 0
      %6355 = vmatmul.mubr.bf16.gmra.mrb[0].mxu0 %v6074
      %v6356 = vpop.f32.mrb[0].mxu0
      %v6357 = vadd.f32 %v6196, %v6356
      %v6358 = vpop.f32.mrb[0].mxu0
      %v6359 = vpop.f32.mrb[0].mxu0
      %v6360 = vadd.f32 %v6199, %v6359
      %v6361 = vpop.f32.mrb[0].mxu0
      %6362 = vmatprep.mubr.bf16.mxu0 0
      %6363 = vmatmul.mubr.bf16.gmra.mrb[0].mxu0 %v6077
      %v6364 = vpop.f32.mrb[0].mxu0
      %v6365 = vadd.f32 %v6204, %v6364
      %v6366 = vpop.f32.mrb[0].mxu0
      %v6367 = vpop.f32.mrb[0].mxu0
      %v6368 = vadd.f32 %v6207, %v6367
      %v6369 = vpop.f32.mrb[0].mxu0
      %6370 = vmatprep.mubr.bf16.mxu0 0
      %6371 = vmatmul.mubr.bf16.gmra.mrb[0].mxu0 %v6080
      %v6372 = vpop.f32.mrb[0].mxu0
      %v6373 = vadd.f32 %v6212, %v6372
      %v6374 = vpop.f32.mrb[0].mxu0
      %v6375 = vpop.f32.mrb[0].mxu0
      %v6376 = vadd.f32 %v6215, %v6375
      %v6377 = vpop.f32.mrb[0].mxu0
      %6378 = vmatprep.mubr.bf16.mxu0 0
      %6379 = vmatmul.mubr.bf16.gmra.mrb[0].mxu0 %v6083
      %v6380 = vpop.f32.mrb[0].mxu0
      %v6381 = vadd.f32 %v6220, %v6380
      %v6382 = vpop.f32.mrb[0].mxu0
      %v6383 = vpop.f32.mrb[0].mxu0
      %v6384 = vadd.f32 %v6223, %v6383
      %v6385 = vpop.f32.mrb[0].mxu0
      %6386 = vmatprep.mubr.bf16.mxu0 0
      %6387 = vmatmul.mubr.bf16.gmra.mrb[0].mxu0 %v6086
      %v6388 = vpop.f32.mrb[0].mxu0
      %v6389 = vadd.f32 %v6228, %v6388
      %v6390 = vpop.f32.mrb[0].mxu0
      %v6391 = vpop.f32.mrb[0].mxu0
      %v6392 = vadd.f32 %v6231, %v6391
      %v6393 = vpop.f32.mrb[0].mxu0
      %6394 = vmatprep.mubr.bf16.mxu0 0
      %6395 = vmatmul.mubr.bf16.gmra.mrb[0].mxu0 %v6089
      %v6396 = vpop.f32.mrb[0].mxu0
      %v6397 = vadd.f32 %v6236, %v6396
      %v6398 = vpop.f32.mrb[0].mxu0
      %v6399 = vpop.f32.mrb[0].mxu0
      %v6400 = vadd.f32 %v6239, %v6399
      %v6401 = vpop.f32.mrb[0].mxu0
      %6402 = vmatprep.mubr.bf16.mxu0 0
      %6403 = vmatmul.mubr.bf16.gmra.mrb[0].mxu0 %v6092
      %v6404 = vpop.f32.mrb[0].mxu0
      %v6405 = vadd.f32 %v6244, %v6404
      %v6406 = vpop.f32.mrb[0].mxu0
      %v6407 = vpop.f32.mrb[0].mxu0
      %v6408 = vadd.f32 %v6247, %v6407
      %v6409 = vpop.f32.mrb[0].mxu0
      %6410 = vmatprep.mubr.bf16.mxu0 0
      %6411 = vmatmul.mubr.bf16.gmra.mrb[0].mxu0 %v6095
      %v6412 = vpop.f32.mrb[0].mxu0
      %v6413 = vadd.f32 %v6252, %v6412
      %v6414 = vpop.f32.mrb[0].mxu0
      %v6415 = vpop.f32.mrb[0].mxu0
      %v6416 = vadd.f32 %v6255, %v6415
      %v6417 = vpop.f32.mrb[0].mxu0
      %6418 = vdwg.mxu0
      %v6419 = vmax.f32 %v6293, 0.0
      %v6420 = vmax.f32 %v6296, 0.0
      %v6421 = vmax.f32 %v6301, 0.0
      %v6422 = vmax.f32 %v6304, 0.0
      %v6423 = vmax.f32 %v6309, 0.0
      %v6424 = vmax.f32 %v6312, 0.0
      %v6425 = vmax.f32 %v6317, 0.0
      %v6426 = vmax.f32 %v6320, 0.0
      %v6427 = vmax.f32 %v6325, 0.0
      %v6428 = vmax.f32 %v6328, 0.0
      %v6429 = vmax.f32 %v6333, 0.0
      %v6430 = vmax.f32 %v6336, 0.0
      %v6431 = vmax.f32 %v6341, 0.0
      %v6432 = vmax.f32 %v6344, 0.0
      %v6433 = vmax.f32 %v6349, 0.0
      %v6434 = vmax.f32 %v6352, 0.0
      %v6435 = vmax.f32 %v6357, 0.0
      %v6436 = vmax.f32 %v6360, 0.0
      %v6437 = vmax.f32 %v6365, 0.0
      %v6438 = vmax.f32 %v6368, 0.0
      %v6439 = vmax.f32 %v6373, 0.0
      %v6440 = vmax.f32 %v6376, 0.0
      %v6441 = vmax.f32 %v6381, 0.0
      %v6442 = vmax.f32 %v6384, 0.0
      %v6443 = vmax.f32 %v6389, 0.0
      %v6444 = vmax.f32 %v6392, 0.0
      %v6445 = vmax.f32 %v6397, 0.0
      %v6446 = vmax.f32 %v6400, 0.0
      %v6447 = vmax.f32 %v6405, 0.0
      %v6448 = vmax.f32 %v6408, 0.0
      %v6449 = vmax.f32 %v6413, 0.0
      %v6450 = vmax.f32 %v6416, 0.0
      %6451 = vst.msk [vmem:[%s314 + $0x1] sm:$0xff] %vm226, %v6419
      %6452 = vst.msk [vmem:[%s314 + $0x9] sm:$0xff] %vm226, %v6420
      %6453 = vst.msk [vmem:[%s314 + $0x19] sm:$0xff] %vm226, %v6421
      %6454 = vst.msk [vmem:[%s314 + $0x21] sm:$0xff] %vm226, %v6422
      %6455 = vst.msk [vmem:[%s314 + $0x31] sm:$0xff] %vm226, %v6423
      %6456 = vst.msk [vmem:[%s314 + $0x39] sm:$0xff] %vm226, %v6424
      %6457 = vst.msk [vmem:[%s314 + $0x49] sm:$0xff] %vm226, %v6425
      %6458 = vst.msk [vmem:[%s314 + $0x51] sm:$0xff] %vm226, %v6426
      %6459 = vst.msk [vmem:[%s314 + $0x61] sm:$0xff] %vm226, %v6427
      %6460 = vst.msk [vmem:[%s314 + $0x69] sm:$0xff] %vm226, %v6428
      %6461 = vst.msk [vmem:[%s314 + $0x79] sm:$0xff] %vm226, %v6429
      %6462 = vst.msk [vmem:[%s314 + $0x81] sm:$0xff] %vm226, %v6430
      %6463 = vst.msk [vmem:[%s314 + $0x91] sm:$0xff] %vm226, %v6431
      %6464 = vst.msk [vmem:[%s314 + $0x99] sm:$0xff] %vm226, %v6432
      %6465 = vst.msk [vmem:[%s314 + $0xa9] sm:$0xff] %vm226, %v6433
      %6466 = vst.msk [vmem:[%s314 + $0xb1] sm:$0xff] %vm226, %v6434
      %6467 = vst.msk [vmem:[%s314 + $0xc1] sm:$0xff] %vm226, %v6435
      %6468 = vst.msk [vmem:[%s314 + $0xc9] sm:$0xff] %vm226, %v6436
      %6469 = vst.msk [vmem:[%s314 + $0xd9] sm:$0xff] %vm226, %v6437
      %6470 = vst.msk [vmem:[%s314 + $0xe1] sm:$0xff] %vm226, %v6438
      %6471 = vst.msk [vmem:[%s314 + $0xf1] sm:$0xff] %vm226, %v6439
      %6472 = vst.msk [vmem:[%s314 + $0xf9] sm:$0xff] %vm226, %v6440
      %6473 = vst.msk [vmem:[%s314 + $0x109] sm:$0xff] %vm226, %v6441
      %6474 = vst.msk [vmem:[%s314 + $0x111] sm:$0xff] %vm226, %v6442
      %6475 = vst.msk [vmem:[%s314 + $0x121] sm:$0xff] %vm226, %v6443
      %6476 = vst.msk [vmem:[%s314 + $0x129] sm:$0xff] %vm226, %v6444
      %6477 = vst.msk [vmem:[%s314 + $0x139] sm:$0xff] %vm226, %v6445
      %6478 = vst.msk [vmem:[%s314 + $0x141] sm:$0xff] %vm226, %v6446
      %6479 = vst.msk [vmem:[%s314 + $0x151] sm:$0xff] %vm226, %v6447
      %6480 = vst.msk [vmem:[%s314 + $0x159] sm:$0xff] %vm226, %v6448
      %6481 = vst.msk [vmem:[%s314 + $0x169] sm:$0xff] %vm226, %v6449
      %6482 = vst.msk [vmem:[%s314 + $0x171] sm:$0xff] %vm226, %v6450
      %v6483 = vld [vmem:[#allocation2] sm:$0xff]
      %v6484 = vld [vmem:[#allocation2 + $0x8] sm:$0xff]
      %v6485 = vld [vmem:[#allocation2 + $0x10] sm:$0x3]
      %v6486 = vld [vmem:[#allocation2 + $0x18] sm:$0xff]
      %v6487 = vld [vmem:[#allocation2 + $0x20] sm:$0xff]
      %v6488 = vld [vmem:[#allocation2 + $0x28] sm:$0x3]
      %v6489 = vld [vmem:[#allocation2 + $0x30] sm:$0xff]
      %v6490 = vld [vmem:[#allocation2 + $0x38] sm:$0xff]
      %v6491 = vld [vmem:[#allocation2 + $0x40] sm:$0x3]
      %v6492 = vld [vmem:[#allocation2 + $0x48] sm:$0xff]
      %v6493 = vld [vmem:[#allocation2 + $0x50] sm:$0xff]
      %v6494 = vld [vmem:[#allocation2 + $0x58] sm:$0x3]
      %v6495 = vld [vmem:[#allocation2 + $0x60] sm:$0xff]
      %v6496 = vld [vmem:[#allocation2 + $0x68] sm:$0xff]
      %v6497 = vld [vmem:[#allocation2 + $0x70] sm:$0x3]
      %v6498 = vld [vmem:[#allocation2 + $0x78] sm:$0xff]
      %v6499 = vld [vmem:[#allocation2 + $0x80] sm:$0xff]
      %v6500 = vld [vmem:[#allocation2 + $0x88] sm:$0x3]
      %v6501 = vld [vmem:[#allocation2 + $0x90] sm:$0xff]
      %v6502 = vld [vmem:[#allocation2 + $0x98] sm:$0xff]
      %v6503 = vld [vmem:[#allocation2 + $0xa0] sm:$0x3]
      %v6504 = vld [vmem:[#allocation2 + $0xa8] sm:$0xff]
      %v6505 = vld [vmem:[#allocation2 + $0xb0] sm:$0xff]
      %v6506 = vld [vmem:[#allocation2 + $0xb8] sm:$0x3]
      %v6507 = vld [vmem:[#allocation2 + $0xc0] sm:$0xff]
      %v6508 = vld [vmem:[#allocation2 + $0xc8] sm:$0xff]
      %v6509 = vld [vmem:[#allocation2 + $0xd0] sm:$0x3]
      %v6510 = vld [vmem:[#allocation2 + $0xd8] sm:$0xff]
      %v6511 = vld [vmem:[#allocation2 + $0xe0] sm:$0xff]
      %v6512 = vld [vmem:[#allocation2 + $0xe8] sm:$0x3]
      %v6513 = vld [vmem:[#allocation2 + $0xf0] sm:$0xff]
      %v6514 = vld [vmem:[#allocation2 + $0xf8] sm:$0xff]
      %v6515 = vld [vmem:[#allocation2 + $0x100] sm:$0x3]
      %v6516 = vld [vmem:[#allocation2 + $0x108] sm:$0xff]
      %v6517 = vld [vmem:[#allocation2 + $0x110] sm:$0xff]
      %v6518 = vld [vmem:[#allocation2 + $0x118] sm:$0x3]
      %v6519 = vld [vmem:[#allocation2 + $0x120] sm:$0xff]
      %v6520 = vld [vmem:[#allocation2 + $0x128] sm:$0xff]
      %v6521 = vld [vmem:[#allocation2 + $0x130] sm:$0x3]
      %v6522 = vld [vmem:[#allocation2 + $0x138] sm:$0xff]
      %v6523 = vld [vmem:[#allocation2 + $0x140] sm:$0xff]
      %v6524 = vld [vmem:[#allocation2 + $0x148] sm:$0x3]
      %v6525 = vld [vmem:[#allocation2 + $0x150] sm:$0xff]
      %v6526 = vld [vmem:[#allocation2 + $0x158] sm:$0xff]
      %v6527 = vld [vmem:[#allocation2 + $0x160] sm:$0x3]
      %v6528 = vld [vmem:[#allocation2 + $0x168] sm:$0xff]
      %v6529 = vld [vmem:[#allocation2 + $0x170] sm:$0xff]
      %v6530 = vld [vmem:[#allocation2 + $0x178] sm:$0x3]
      %v6531 = vld [vmem:[#allocation2 + $0x180] sm:$0xff]
      %v6532 = vld [vmem:[#allocation2 + $0x188] sm:$0xff]
      %v6533 = vld [vmem:[#allocation2 + $0x190] sm:$0x3]
      %v6534 = vld [vmem:[#allocation2 + $0x198] sm:$0xff]
      %v6535 = vld [vmem:[#allocation2 + $0x1a0] sm:$0xff]
      %v6536 = vld [vmem:[#allocation2 + $0x1a8] sm:$0x3]
      %v6537 = vpack.c.bf16 %v6484, %v6483
      %v6538 = vpack.c.bf16 %v6487, %v6486
      %v6539 = vpack.c.bf16 %v6490, %v6489
      %v6540 = vpack.c.bf16 %v6493, %v6492
      %v6541 = vpack.c.bf16 %v6496, %v6495
      %v6542 = vpack.c.bf16 %v6499, %v6498
      %v6543 = vpack.c.bf16 %v6502, %v6501
      %v6544 = vpack.c.bf16 %v6505, %v6504
      %v6545 = vpack.c.bf16 %v6508, %v6507
      %v6546 = vpack.c.bf16 %v6511, %v6510
      %v6547 = vpack.c.bf16 %v6514, %v6513
      %v6548 = vpack.c.bf16 %v6517, %v6516
      %v6549 = vpack.c.bf16 %v6520, %v6519
      %v6550 = vpack.c.bf16 %v6523, %v6522
      %v6551 = vpack.c.bf16 %v6526, %v6525
      %v6552 = vpack.c.bf16 %v6529, %v6528
      %6553 = vst.msk [vmem:[#allocation3] sm:$0xff] %vm226, %v6537
      %6554 = vst.msk [vmem:[#allocation3 + $0x18] sm:$0xff] %vm226, %v6538
      %6555 = vst.msk [vmem:[#allocation3 + $0x30] sm:$0xff] %vm226, %v6539
      %6556 = vst.msk [vmem:[#allocation3 + $0x48] sm:$0xff] %vm226, %v6540
      %6557 = vst.msk [vmem:[#allocation3 + $0x60] sm:$0xff] %vm226, %v6541
      %6558 = vst.msk [vmem:[#allocation3 + $0x78] sm:$0xff] %vm226, %v6542
      %6559 = vst.msk [vmem:[#allocation3 + $0x90] sm:$0xff] %vm226, %v6543
      %6560 = vst.msk [vmem:[#allocation3 + $0xa8] sm:$0xff] %vm226, %v6544
      %6561 = vst.msk [vmem:[#allocation3 + $0xc0] sm:$0xff] %vm226, %v6545
      %6562 = vst.msk [vmem:[#allocation3 + $0xd8] sm:$0xff] %vm226, %v6546
      %6563 = vst.msk [vmem:[#allocation3 + $0xf0] sm:$0xff] %vm226, %v6547
      %6564 = vst.msk [vmem:[#allocation3 + $0x108] sm:$0xff] %vm226, %v6548
      %6565 = vst.msk [vmem:[#allocation3 + $0x120] sm:$0xff] %vm226, %v6549
      %6566 = vst.msk [vmem:[#allocation3 + $0x138] sm:$0xff] %vm226, %v6550
      %6567 = vst.msk [vmem:[#allocation3 + $0x150] sm:$0xff] %vm226, %v6551
      %6568 = vst.msk [vmem:[#allocation3 + $0x168] sm:$0xff] %vm226, %v6552
      %v6617 = vrot.slane %v6483, 1
      %v6618 = vrot.slane %v6484, 1
      %v6619 = vsel %vm482, %v6617, %v6618
      %v6620 = vrot.slane %v6485, 1
      %v6621 = vsel %vm482, %v6618, %v6620
      %v6622 = vrot.slane %v6486, 1
      %v6623 = vrot.slane %v6487, 1
      %v6624 = vsel %vm482, %v6622, %v6623
      %v6625 = vrot.slane %v6488, 1
      %v6626 = vsel %vm482, %v6623, %v6625
      %v6627 = vrot.slane %v6489, 1
      %v6628 = vrot.slane %v6490, 1
      %v6629 = vsel %vm482, %v6627, %v6628
      %v6630 = vrot.slane %v6491, 1
      %v6631 = vsel %vm482, %v6628, %v6630
      %v6632 = vrot.slane %v6492, 1
      %v6633 = vrot.slane %v6493, 1
      %v6634 = vsel %vm482, %v6632, %v6633
      %v6635 = vrot.slane %v6494, 1
      %v6636 = vsel %vm482, %v6633, %v6635
      %v6637 = vrot.slane %v6495, 1
      %v6638 = vrot.slane %v6496, 1
      %v6639 = vsel %vm482, %v6637, %v6638
      %v6640 = vrot.slane %v6497, 1
      %v6641 = vsel %vm482, %v6638, %v6640
      %v6642 = vrot.slane %v6498, 1
      %v6643 = vrot.slane %v6499, 1
      %v6644 = vsel %vm482, %v6642, %v6643
      %v6645 = vrot.slane %v6500, 1
      %v6646 = vsel %vm482, %v6643, %v6645
      %v6647 = vrot.slane %v6501, 1
      %v6648 = vrot.slane %v6502, 1
      %v6649 = vsel %vm482, %v6647, %v6648
      %v6650 = vrot.slane %v6503, 1
      %v6651 = vsel %vm482, %v6648, %v6650
      %v6652 = vrot.slane %v6504, 1
      %v6653 = vrot.slane %v6505, 1
      %v6654 = vsel %vm482, %v6652, %v6653
      %v6655 = vrot.slane %v6506, 1
      %v6656 = vsel %vm482, %v6653, %v6655
      %v6657 = vrot.slane %v6507, 1
      %v6658 = vrot.slane %v6508, 1
      %v6659 = vsel %vm482, %v6657, %v6658
      %v6660 = vrot.slane %v6509, 1
      %v6661 = vsel %vm482, %v6658, %v6660
      %v6662 = vrot.slane %v6510, 1
      %v6663 = vrot.slane %v6511, 1
      %v6664 = vsel %vm482, %v6662, %v6663
      %v6665 = vrot.slane %v6512, 1
      %v6666 = vsel %vm482, %v6663, %v6665
      %v6667 = vrot.slane %v6513, 1
      %v6668 = vrot.slane %v6514, 1
      %v6669 = vsel %vm482, %v6667, %v6668
      %v6670 = vrot.slane %v6515, 1
      %v6671 = vsel %vm482, %v6668, %v6670
      %v6672 = vrot.slane %v6516, 1
      %v6673 = vrot.slane %v6517, 1
      %v6674 = vsel %vm482, %v6672, %v6673
      %v6675 = vrot.slane %v6518, 1
      %v6676 = vsel %vm482, %v6673, %v6675
      %v6677 = vrot.slane %v6519, 1
      %v6678 = vrot.slane %v6520, 1
      %v6679 = vsel %vm482, %v6677, %v6678
      %v6680 = vrot.slane %v6521, 1
      %v6681 = vsel %vm482, %v6678, %v6680
      %v6682 = vrot.slane %v6522, 1
      %v6683 = vrot.slane %v6523, 1
      %v6684 = vsel %vm482, %v6682, %v6683
      %v6685 = vrot.slane %v6524, 1
      %v6686 = vsel %vm482, %v6683, %v6685
      %v6687 = vrot.slane %v6525, 1
      %v6688 = vrot.slane %v6526, 1
      %v6689 = vsel %vm482, %v6687, %v6688
      %v6690 = vrot.slane %v6527, 1
      %v6691 = vsel %vm482, %v6688, %v6690
      %v6692 = vrot.slane %v6528, 1
      %v6693 = vrot.slane %v6529, 1
      %v6694 = vsel %vm482, %v6692, %v6693
      %v6695 = vrot.slane %v6530, 1
      %v6696 = vsel %vm482, %v6693, %v6695
      %v6729 = vpack.c.bf16 %v6621, %v6619
      %v6730 = vpack.c.bf16 %v6626, %v6624
      %v6731 = vpack.c.bf16 %v6631, %v6629
      %v6732 = vpack.c.bf16 %v6636, %v6634
      %v6733 = vpack.c.bf16 %v6641, %v6639
      %v6734 = vpack.c.bf16 %v6646, %v6644
      %v6735 = vpack.c.bf16 %v6651, %v6649
      %v6736 = vpack.c.bf16 %v6656, %v6654
      %v6737 = vpack.c.bf16 %v6661, %v6659
      %v6738 = vpack.c.bf16 %v6666, %v6664
      %v6739 = vpack.c.bf16 %v6671, %v6669
      %v6740 = vpack.c.bf16 %v6676, %v6674
      %v6741 = vpack.c.bf16 %v6681, %v6679
      %v6742 = vpack.c.bf16 %v6686, %v6684
      %v6743 = vpack.c.bf16 %v6691, %v6689
      %v6744 = vpack.c.bf16 %v6696, %v6694
      %6761 = vrot.lane.b32.xlu0 %v6729, 32
      %v6762 = vpop.permute.xlu0 %6761
      %6763 = vrot.lane.b32.xlu0 %v6730, 32
      %v6764 = vpop.permute.xlu0 %6763
      %6765 = vrot.lane.b32.xlu0 %v6731, 32
      %v6766 = vpop.permute.xlu0 %6765
      %6767 = vrot.lane.b32.xlu0 %v6732, 32
      %v6768 = vpop.permute.xlu0 %6767
      %6769 = vrot.lane.b32.xlu0 %v6733, 32
      %v6770 = vpop.permute.xlu0 %6769
      %6771 = vrot.lane.b32.xlu0 %v6734, 32
      %v6772 = vpop.permute.xlu0 %6771
      %6773 = vrot.lane.b32.xlu0 %v6735, 32
      %v6774 = vpop.permute.xlu0 %6773
      %6775 = vrot.lane.b32.xlu0 %v6736, 32
      %v6776 = vpop.permute.xlu0 %6775
      %6777 = vrot.lane.b32.xlu0 %v6737, 32
      %v6778 = vpop.permute.xlu0 %6777
      %6779 = vrot.lane.b32.xlu0 %v6738, 32
      %v6780 = vpop.permute.xlu0 %6779
      %6781 = vrot.lane.b32.xlu0 %v6739, 32
      %v6782 = vpop.permute.xlu0 %6781
      %6783 = vrot.lane.b32.xlu0 %v6740, 32
      %v6784 = vpop.permute.xlu0 %6783
      %6785 = vrot.lane.b32.xlu0 %v6741, 32
      %v6786 = vpop.permute.xlu0 %6785
      %6787 = vrot.lane.b32.xlu0 %v6742, 32
      %v6788 = vpop.permute.xlu0 %6787
      %6789 = vrot.lane.b32.xlu0 %v6743, 32
      %v6790 = vpop.permute.xlu0 %6789
      %6791 = vrot.lane.b32.xlu0 %v6744, 32
      %v6792 = vpop.permute.xlu0 %6791
      %6809 = vst.msk [vmem:[#allocation3] sm:$0xff] %vm675, %v6762
      %6810 = vst.msk [vmem:[#allocation3 + $0x18] sm:$0xff] %vm675, %v6764
      %6811 = vst.msk [vmem:[#allocation3 + $0x30] sm:$0xff] %vm675, %v6766
      %6812 = vst.msk [vmem:[#allocation3 + $0x48] sm:$0xff] %vm675, %v6768
      %6813 = vst.msk [vmem:[#allocation3 + $0x60] sm:$0xff] %vm675, %v6770
      %6814 = vst.msk [vmem:[#allocation3 + $0x78] sm:$0xff] %vm675, %v6772
      %6815 = vst.msk [vmem:[#allocation3 + $0x90] sm:$0xff] %vm675, %v6774
      %6816 = vst.msk [vmem:[#allocation3 + $0xa8] sm:$0xff] %vm675, %v6776
      %6817 = vst.msk [vmem:[#allocation3 + $0xc0] sm:$0xff] %vm675, %v6778
      %6818 = vst.msk [vmem:[#allocation3 + $0xd8] sm:$0xff] %vm675, %v6780
      %6819 = vst.msk [vmem:[#allocation3 + $0xf0] sm:$0xff] %vm675, %v6782
      %6820 = vst.msk [vmem:[#allocation3 + $0x108] sm:$0xff] %vm675, %v6784
      %6821 = vst.msk [vmem:[#allocation3 + $0x120] sm:$0xff] %vm675, %v6786
      %6822 = vst.msk [vmem:[#allocation3 + $0x138] sm:$0xff] %vm675, %v6788
      %6823 = vst.msk [vmem:[#allocation3 + $0x150] sm:$0xff] %vm675, %v6790
      %6824 = vst.msk [vmem:[#allocation3 + $0x168] sm:$0xff] %vm675, %v6792
      %v6825 = vrot.slane %v6483, 2
      %v6826 = vrot.slane %v6484, 2
      %v6827 = vsel %vm692, %v6825, %v6826
      %v6828 = vrot.slane %v6485, 2
      %v6829 = vsel %vm692, %v6826, %v6828
      %v6830 = vrot.slane %v6486, 2
      %v6831 = vrot.slane %v6487, 2
      %v6832 = vsel %vm692, %v6830, %v6831
      %v6833 = vrot.slane %v6488, 2
      %v6834 = vsel %vm692, %v6831, %v6833
      %v6835 = vrot.slane %v6489, 2
      %v6836 = vrot.slane %v6490, 2
      %v6837 = vsel %vm692, %v6835, %v6836
      %v6838 = vrot.slane %v6491, 2
      %v6839 = vsel %vm692, %v6836, %v6838
      %v6840 = vrot.slane %v6492, 2
      %v6841 = vrot.slane %v6493, 2
      %v6842 = vsel %vm692, %v6840, %v6841
      %v6843 = vrot.slane %v6494, 2
      %v6844 = vsel %vm692, %v6841, %v6843
      %v6845 = vrot.slane %v6495, 2
      %v6846 = vrot.slane %v6496, 2
      %v6847 = vsel %vm692, %v6845, %v6846
      %v6848 = vrot.slane %v6497, 2
      %v6849 = vsel %vm692, %v6846, %v6848
      %v6850 = vrot.slane %v6498, 2
      %v6851 = vrot.slane %v6499, 2
      %v6852 = vsel %vm692, %v6850, %v6851
      %v6853 = vrot.slane %v6500, 2
      %v6854 = vsel %vm692, %v6851, %v6853
      %v6855 = vrot.slane %v6501, 2
      %v6856 = vrot.slane %v6502, 2
      %v6857 = vsel %vm692, %v6855, %v6856
      %v6858 = vrot.slane %v6503, 2
      %v6859 = vsel %vm692, %v6856, %v6858
      %v6860 = vrot.slane %v6504, 2
      %v6861 = vrot.slane %v6505, 2
      %v6862 = vsel %vm692, %v6860, %v6861
      %v6863 = vrot.slane %v6506, 2
      %v6864 = vsel %vm692, %v6861, %v6863
      %v6865 = vrot.slane %v6507, 2
      %v6866 = vrot.slane %v6508, 2
      %v6867 = vsel %vm692, %v6865, %v6866
      %v6868 = vrot.slane %v6509, 2
      %v6869 = vsel %vm692, %v6866, %v6868
      %v6870 = vrot.slane %v6510, 2
      %v6871 = vrot.slane %v6511, 2
      %v6872 = vsel %vm692, %v6870, %v6871
      %v6873 = vrot.slane %v6512, 2
      %v6874 = vsel %vm692, %v6871, %v6873
      %v6875 = vrot.slane %v6513, 2
      %v6876 = vrot.slane %v6514, 2
      %v6877 = vsel %vm692, %v6875, %v6876
      %v6878 = vrot.slane %v6515, 2
      %v6879 = vsel %vm692, %v6876, %v6878
      %v6880 = vrot.slane %v6516, 2
      %v6881 = vrot.slane %v6517, 2
      %v6882 = vsel %vm692, %v6880, %v6881
      %v6883 = vrot.slane %v6518, 2
      %v6884 = vsel %vm692, %v6881, %v6883
      %v6885 = vrot.slane %v6519, 2
      %v6886 = vrot.slane %v6520, 2
      %v6887 = vsel %vm692, %v6885, %v6886
      %v6888 = vrot.slane %v6521, 2
      %v6889 = vsel %vm692, %v6886, %v6888
      %v6890 = vrot.slane %v6522, 2
      %v6891 = vrot.slane %v6523, 2
      %v6892 = vsel %vm692, %v6890, %v6891
      %v6893 = vrot.slane %v6524, 2
      %v6894 = vsel %vm692, %v6891, %v6893
      %v6895 = vrot.slane %v6525, 2
      %v6896 = vrot.slane %v6526, 2
      %v6897 = vsel %vm692, %v6895, %v6896
      %v6898 = vrot.slane %v6527, 2
      %v6899 = vsel %vm692, %v6896, %v6898
      %v6900 = vrot.slane %v6528, 2
      %v6901 = vrot.slane %v6529, 2
      %v6902 = vsel %vm692, %v6900, %v6901
      %v6903 = vrot.slane %v6530, 2
      %v6904 = vsel %vm692, %v6901, %v6903
      %v6937 = vpack.c.bf16 %v6829, %v6827
      %v6938 = vpack.c.bf16 %v6834, %v6832
      %v6939 = vpack.c.bf16 %v6839, %v6837
      %v6940 = vpack.c.bf16 %v6844, %v6842
      %v6941 = vpack.c.bf16 %v6849, %v6847
      %v6942 = vpack.c.bf16 %v6854, %v6852
      %v6943 = vpack.c.bf16 %v6859, %v6857
      %v6944 = vpack.c.bf16 %v6864, %v6862
      %v6945 = vpack.c.bf16 %v6869, %v6867
      %v6946 = vpack.c.bf16 %v6874, %v6872
      %v6947 = vpack.c.bf16 %v6879, %v6877
      %v6948 = vpack.c.bf16 %v6884, %v6882
      %v6949 = vpack.c.bf16 %v6889, %v6887
      %v6950 = vpack.c.bf16 %v6894, %v6892
      %v6951 = vpack.c.bf16 %v6899, %v6897
      %v6952 = vpack.c.bf16 %v6904, %v6902
      %6969 = vrot.lane.b32.xlu0 %v6937, 64
      %v6970 = vpop.permute.xlu0 %6969
      %6971 = vrot.lane.b32.xlu0 %v6938, 64
      %v6972 = vpop.permute.xlu0 %6971
      %6973 = vrot.lane.b32.xlu0 %v6939, 64
      %v6974 = vpop.permute.xlu0 %6973
      %6975 = vrot.lane.b32.xlu0 %v6940, 64
      %v6976 = vpop.permute.xlu0 %6975
      %6977 = vrot.lane.b32.xlu0 %v6941, 64
      %v6978 = vpop.permute.xlu0 %6977
      %6979 = vrot.lane.b32.xlu0 %v6942, 64
      %v6980 = vpop.permute.xlu0 %6979
      %6981 = vrot.lane.b32.xlu0 %v6943, 64
      %v6982 = vpop.permute.xlu0 %6981
      %6983 = vrot.lane.b32.xlu0 %v6944, 64
      %v6984 = vpop.permute.xlu0 %6983
      %6985 = vrot.lane.b32.xlu0 %v6945, 64
      %v6986 = vpop.permute.xlu0 %6985
      %6987 = vrot.lane.b32.xlu0 %v6946, 64
      %v6988 = vpop.permute.xlu0 %6987
      %6989 = vrot.lane.b32.xlu0 %v6947, 64
      %v6990 = vpop.permute.xlu0 %6989
      %6991 = vrot.lane.b32.xlu0 %v6948, 64
      %v6992 = vpop.permute.xlu0 %6991
      %6993 = vrot.lane.b32.xlu0 %v6949, 64
      %v6994 = vpop.permute.xlu0 %6993
      %6995 = vrot.lane.b32.xlu0 %v6950, 64
      %v6996 = vpop.permute.xlu0 %6995
      %6997 = vrot.lane.b32.xlu0 %v6951, 64
      %v6998 = vpop.permute.xlu0 %6997
      %6999 = vrot.lane.b32.xlu0 %v6952, 64
      %v7000 = vpop.permute.xlu0 %6999
      %7017 = vst.msk [vmem:[#allocation3] sm:$0xff] %vm885, %v6970
      %7018 = vst.msk [vmem:[#allocation3 + $0x18] sm:$0xff] %vm885, %v6972
      %7019 = vst.msk [vmem:[#allocation3 + $0x30] sm:$0xff] %vm885, %v6974
      %7020 = vst.msk [vmem:[#allocation3 + $0x48] sm:$0xff] %vm885, %v6976
      %7021 = vst.msk [vmem:[#allocation3 + $0x60] sm:$0xff] %vm885, %v6978
      %7022 = vst.msk [vmem:[#allocation3 + $0x78] sm:$0xff] %vm885, %v6980
      %7023 = vst.msk [vmem:[#allocation3 + $0x90] sm:$0xff] %vm885, %v6982
      %7024 = vst.msk [vmem:[#allocation3 + $0xa8] sm:$0xff] %vm885, %v6984
      %7025 = vst.msk [vmem:[#allocation3 + $0xc0] sm:$0xff] %vm885, %v6986
      %7026 = vst.msk [vmem:[#allocation3 + $0xd8] sm:$0xff] %vm885, %v6988
      %7027 = vst.msk [vmem:[#allocation3 + $0xf0] sm:$0xff] %vm885, %v6990
      %7028 = vst.msk [vmem:[#allocation3 + $0x108] sm:$0xff] %vm885, %v6992
      %7029 = vst.msk [vmem:[#allocation3 + $0x120] sm:$0xff] %vm885, %v6994
      %7030 = vst.msk [vmem:[#allocation3 + $0x138] sm:$0xff] %vm885, %v6996
      %7031 = vst.msk [vmem:[#allocation3 + $0x150] sm:$0xff] %vm885, %v6998
      %7032 = vst.msk [vmem:[#allocation3 + $0x168] sm:$0xff] %vm885, %v7000
      %v7033 = vpack.c.bf16 %v6532, %v6531
      %7050 = vrot.lane.b32.xlu0 %v6538, 96
      %v7051 = vpop.permute.xlu0 %7050
      %7052 = vrot.lane.b32.xlu0 %v6539, 96
      %v7053 = vpop.permute.xlu0 %7052
      %7054 = vrot.lane.b32.xlu0 %v6540, 96
      %v7055 = vpop.permute.xlu0 %7054
      %7056 = vrot.lane.b32.xlu0 %v6541, 96
      %v7057 = vpop.permute.xlu0 %7056
      %7058 = vrot.lane.b32.xlu0 %v6542, 96
      %v7059 = vpop.permute.xlu0 %7058
      %7060 = vrot.lane.b32.xlu0 %v6543, 96
      %v7061 = vpop.permute.xlu0 %7060
      %7062 = vrot.lane.b32.xlu0 %v6544, 96
      %v7063 = vpop.permute.xlu0 %7062
      %7064 = vrot.lane.b32.xlu0 %v6545, 96
      %v7065 = vpop.permute.xlu0 %7064
      %7066 = vrot.lane.b32.xlu0 %v6546, 96
      %v7067 = vpop.permute.xlu0 %7066
      %7068 = vrot.lane.b32.xlu0 %v6547, 96
      %v7069 = vpop.permute.xlu0 %7068
      %7070 = vrot.lane.b32.xlu0 %v6548, 96
      %v7071 = vpop.permute.xlu0 %7070
      %7072 = vrot.lane.b32.xlu0 %v6549, 96
      %v7073 = vpop.permute.xlu0 %7072
      %7074 = vrot.lane.b32.xlu0 %v6550, 96
      %v7075 = vpop.permute.xlu0 %7074
      %7076 = vrot.lane.b32.xlu0 %v6551, 96
      %v7077 = vpop.permute.xlu0 %7076
      %7078 = vrot.lane.b32.xlu0 %v6552, 96
      %v7079 = vpop.permute.xlu0 %7078
      %7080 = vrot.lane.b32.xlu0 %v7033, 96
      %v7081 = vpop.permute.xlu0 %7080
      %7098 = vst.msk [vmem:[#allocation3] sm:$0xff] %vm967, %v7051
      %7099 = vst.msk [vmem:[#allocation3 + $0x18] sm:$0xff] %vm967, %v7053
      %7100 = vst.msk [vmem:[#allocation3 + $0x30] sm:$0xff] %vm967, %v7055
      %7101 = vst.msk [vmem:[#allocation3 + $0x48] sm:$0xff] %vm967, %v7057
      %7102 = vst.msk [vmem:[#allocation3 + $0x60] sm:$0xff] %vm967, %v7059
      %7103 = vst.msk [vmem:[#allocation3 + $0x78] sm:$0xff] %vm967, %v7061
      %7104 = vst.msk [vmem:[#allocation3 + $0x90] sm:$0xff] %vm967, %v7063
      %7105 = vst.msk [vmem:[#allocation3 + $0xa8] sm:$0xff] %vm967, %v7065
      %7106 = vst.msk [vmem:[#allocation3 + $0xc0] sm:$0xff] %vm967, %v7067
      %7107 = vst.msk [vmem:[#allocation3 + $0xd8] sm:$0xff] %vm967, %v7069
      %7108 = vst.msk [vmem:[#allocation3 + $0xf0] sm:$0xff] %vm967, %v7071
      %7109 = vst.msk [vmem:[#allocation3 + $0x108] sm:$0xff] %vm967, %v7073
      %7110 = vst.msk [vmem:[#allocation3 + $0x120] sm:$0xff] %vm967, %v7075
      %7111 = vst.msk [vmem:[#allocation3 + $0x138] sm:$0xff] %vm967, %v7077
      %7112 = vst.msk [vmem:[#allocation3 + $0x150] sm:$0xff] %vm967, %v7079
      %7113 = vst.msk [vmem:[#allocation3 + $0x168] sm:$0xff] %vm967, %v7081
      %v7117 = vrot.slane %v6531, 1
      %v7118 = vrot.slane %v6532, 1
      %v7119 = vsel %vm482, %v7117, %v7118
      %v7120 = vrot.slane %v6533, 1
      %v7121 = vsel %vm482, %v7118, %v7120
      %v7124 = vpack.c.bf16 %v7121, %v7119
      %7125 = vst.msk [vmem:[#allocation3 + $0x8] sm:$0xff] %vm226, %v6730
      %7126 = vst.msk [vmem:[#allocation3 + $0x20] sm:$0xff] %vm226, %v6731
      %7127 = vst.msk [vmem:[#allocation3 + $0x38] sm:$0xff] %vm226, %v6732
      %7128 = vst.msk [vmem:[#allocation3 + $0x50] sm:$0xff] %vm226, %v6733
      %7129 = vst.msk [vmem:[#allocation3 + $0x68] sm:$0xff] %vm226, %v6734
      %7130 = vst.msk [vmem:[#allocation3 + $0x80] sm:$0xff] %vm226, %v6735
      %7131 = vst.msk [vmem:[#allocation3 + $0x98] sm:$0xff] %vm226, %v6736
      %7132 = vst.msk [vmem:[#allocation3 + $0xb0] sm:$0xff] %vm226, %v6737
      %7133 = vst.msk [vmem:[#allocation3 + $0xc8] sm:$0xff] %vm226, %v6738
      %7134 = vst.msk [vmem:[#allocation3 + $0xe0] sm:$0xff] %vm226, %v6739
      %7135 = vst.msk [vmem:[#allocation3 + $0xf8] sm:$0xff] %vm226, %v6740
      %7136 = vst.msk [vmem:[#allocation3 + $0x110] sm:$0xff] %vm226, %v6741
      %7137 = vst.msk [vmem:[#allocation3 + $0x128] sm:$0xff] %vm226, %v6742
      %7138 = vst.msk [vmem:[#allocation3 + $0x140] sm:$0xff] %vm226, %v6743
      %7139 = vst.msk [vmem:[#allocation3 + $0x158] sm:$0xff] %vm226, %v6744
      %7140 = vst.msk [vmem:[#allocation3 + $0x170] sm:$0xff] %vm226, %v7124
      %v7141 = vrot.slane %v6531, 2
      %v7142 = vrot.slane %v6532, 2
      %v7143 = vsel %vm692, %v7141, %v7142
      %v7144 = vrot.slane %v6533, 2
      %v7145 = vsel %vm692, %v7142, %v7144
      %v7148 = vpack.c.bf16 %v7145, %v7143
      %7150 = vrot.lane.b32.xlu0 %v6938, 32
      %v7151 = vpop.permute.xlu0 %7150
      %7152 = vrot.lane.b32.xlu0 %v6939, 32
      %v7153 = vpop.permute.xlu0 %7152
      %7154 = vrot.lane.b32.xlu0 %v6940, 32
      %v7155 = vpop.permute.xlu0 %7154
      %7156 = vrot.lane.b32.xlu0 %v6941, 32
      %v7157 = vpop.permute.xlu0 %7156
      %7158 = vrot.lane.b32.xlu0 %v6942, 32
      %v7159 = vpop.permute.xlu0 %7158
      %7160 = vrot.lane.b32.xlu0 %v6943, 32
      %v7161 = vpop.permute.xlu0 %7160
      %7162 = vrot.lane.b32.xlu0 %v6944, 32
      %v7163 = vpop.permute.xlu0 %7162
      %7164 = vrot.lane.b32.xlu0 %v6945, 32
      %v7165 = vpop.permute.xlu0 %7164
      %7166 = vrot.lane.b32.xlu0 %v6946, 32
      %v7167 = vpop.permute.xlu0 %7166
      %7168 = vrot.lane.b32.xlu0 %v6947, 32
      %v7169 = vpop.permute.xlu0 %7168
      %7170 = vrot.lane.b32.xlu0 %v6948, 32
      %v7171 = vpop.permute.xlu0 %7170
      %7172 = vrot.lane.b32.xlu0 %v6949, 32
      %v7173 = vpop.permute.xlu0 %7172
      %7174 = vrot.lane.b32.xlu0 %v6950, 32
      %v7175 = vpop.permute.xlu0 %7174
      %7176 = vrot.lane.b32.xlu0 %v6951, 32
      %v7177 = vpop.permute.xlu0 %7176
      %7178 = vrot.lane.b32.xlu0 %v6952, 32
      %v7179 = vpop.permute.xlu0 %7178
      %7180 = vrot.lane.b32.xlu0 %v7148, 32
      %v7181 = vpop.permute.xlu0 %7180
      %7198 = vst.msk [vmem:[#allocation3 + $0x8] sm:$0xff] %vm675, %v7151
      %7199 = vst.msk [vmem:[#allocation3 + $0x20] sm:$0xff] %vm675, %v7153
      %7200 = vst.msk [vmem:[#allocation3 + $0x38] sm:$0xff] %vm675, %v7155
      %7201 = vst.msk [vmem:[#allocation3 + $0x50] sm:$0xff] %vm675, %v7157
      %7202 = vst.msk [vmem:[#allocation3 + $0x68] sm:$0xff] %vm675, %v7159
      %7203 = vst.msk [vmem:[#allocation3 + $0x80] sm:$0xff] %vm675, %v7161
      %7204 = vst.msk [vmem:[#allocation3 + $0x98] sm:$0xff] %vm675, %v7163
      %7205 = vst.msk [vmem:[#allocation3 + $0xb0] sm:$0xff] %vm675, %v7165
      %7206 = vst.msk [vmem:[#allocation3 + $0xc8] sm:$0xff] %vm675, %v7167
      %7207 = vst.msk [vmem:[#allocation3 + $0xe0] sm:$0xff] %vm675, %v7169
      %7208 = vst.msk [vmem:[#allocation3 + $0xf8] sm:$0xff] %vm675, %v7171
      %7209 = vst.msk [vmem:[#allocation3 + $0x110] sm:$0xff] %vm675, %v7173
      %7210 = vst.msk [vmem:[#allocation3 + $0x128] sm:$0xff] %vm675, %v7175
      %7211 = vst.msk [vmem:[#allocation3 + $0x140] sm:$0xff] %vm675, %v7177
      %7212 = vst.msk [vmem:[#allocation3 + $0x158] sm:$0xff] %vm675, %v7179
      %7213 = vst.msk [vmem:[#allocation3 + $0x170] sm:$0xff] %vm675, %v7181
      %v7214 = vpack.c.bf16 %v6535, %v6534
      %7216 = vrot.lane.b32.xlu0 %v6539, 64
      %v7217 = vpop.permute.xlu0 %7216
      %7218 = vrot.lane.b32.xlu0 %v6540, 64
      %v7219 = vpop.permute.xlu0 %7218
      %7220 = vrot.lane.b32.xlu0 %v6541, 64
      %v7221 = vpop.permute.xlu0 %7220
      %7222 = vrot.lane.b32.xlu0 %v6542, 64
      %v7223 = vpop.permute.xlu0 %7222
      %7224 = vrot.lane.b32.xlu0 %v6543, 64
      %v7225 = vpop.permute.xlu0 %7224
      %7226 = vrot.lane.b32.xlu0 %v6544, 64
      %v7227 = vpop.permute.xlu0 %7226
      %7228 = vrot.lane.b32.xlu0 %v6545, 64
      %v7229 = vpop.permute.xlu0 %7228
      %7230 = vrot.lane.b32.xlu0 %v6546, 64
      %v7231 = vpop.permute.xlu0 %7230
      %7232 = vrot.lane.b32.xlu0 %v6547, 64
      %v7233 = vpop.permute.xlu0 %7232
      %7234 = vrot.lane.b32.xlu0 %v6548, 64
      %v7235 = vpop.permute.xlu0 %7234
      %7236 = vrot.lane.b32.xlu0 %v6549, 64
      %v7237 = vpop.permute.xlu0 %7236
      %7238 = vrot.lane.b32.xlu0 %v6550, 64
      %v7239 = vpop.permute.xlu0 %7238
      %7240 = vrot.lane.b32.xlu0 %v6551, 64
      %v7241 = vpop.permute.xlu0 %7240
      %7242 = vrot.lane.b32.xlu0 %v6552, 64
      %v7243 = vpop.permute.xlu0 %7242
      %7244 = vrot.lane.b32.xlu0 %v7033, 64
      %v7245 = vpop.permute.xlu0 %7244
      %7246 = vrot.lane.b32.xlu0 %v7214, 64
      %v7247 = vpop.permute.xlu0 %7246
      %7264 = vst.msk [vmem:[#allocation3 + $0x8] sm:$0xff] %vm885, %v7217
      %7265 = vst.msk [vmem:[#allocation3 + $0x20] sm:$0xff] %vm885, %v7219
      %7266 = vst.msk [vmem:[#allocation3 + $0x38] sm:$0xff] %vm885, %v7221
      %7267 = vst.msk [vmem:[#allocation3 + $0x50] sm:$0xff] %vm885, %v7223
      %7268 = vst.msk [vmem:[#allocation3 + $0x68] sm:$0xff] %vm885, %v7225
      %7269 = vst.msk [vmem:[#allocation3 + $0x80] sm:$0xff] %vm885, %v7227
      %7270 = vst.msk [vmem:[#allocation3 + $0x98] sm:$0xff] %vm885, %v7229
      %7271 = vst.msk [vmem:[#allocation3 + $0xb0] sm:$0xff] %vm885, %v7231
      %7272 = vst.msk [vmem:[#allocation3 + $0xc8] sm:$0xff] %vm885, %v7233
      %7273 = vst.msk [vmem:[#allocation3 + $0xe0] sm:$0xff] %vm885, %v7235
      %7274 = vst.msk [vmem:[#allocation3 + $0xf8] sm:$0xff] %vm885, %v7237
      %7275 = vst.msk [vmem:[#allocation3 + $0x110] sm:$0xff] %vm885, %v7239
      %7276 = vst.msk [vmem:[#allocation3 + $0x128] sm:$0xff] %vm885, %v7241
      %7277 = vst.msk [vmem:[#allocation3 + $0x140] sm:$0xff] %vm885, %v7243
      %7278 = vst.msk [vmem:[#allocation3 + $0x158] sm:$0xff] %vm885, %v7245
      %7279 = vst.msk [vmem:[#allocation3 + $0x170] sm:$0xff] %vm885, %v7247
      %v7283 = vrot.slane %v6534, 1
      %v7284 = vrot.slane %v6535, 1
      %v7285 = vsel %vm482, %v7283, %v7284
      %v7286 = vrot.slane %v6536, 1
      %v7287 = vsel %vm482, %v7284, %v7286
      %v7290 = vpack.c.bf16 %v7287, %v7285
      %7293 = vrot.lane.b32.xlu0 %v6731, 96
      %v7294 = vpop.permute.xlu0 %7293
      %7295 = vrot.lane.b32.xlu0 %v6732, 96
      %v7296 = vpop.permute.xlu0 %7295
      %7297 = vrot.lane.b32.xlu0 %v6733, 96
      %v7298 = vpop.permute.xlu0 %7297
      %7299 = vrot.lane.b32.xlu0 %v6734, 96
      %v7300 = vpop.permute.xlu0 %7299
      %7301 = vrot.lane.b32.xlu0 %v6735, 96
      %v7302 = vpop.permute.xlu0 %7301
      %7303 = vrot.lane.b32.xlu0 %v6736, 96
      %v7304 = vpop.permute.xlu0 %7303
      %7305 = vrot.lane.b32.xlu0 %v6737, 96
      %v7306 = vpop.permute.xlu0 %7305
      %7307 = vrot.lane.b32.xlu0 %v6738, 96
      %v7308 = vpop.permute.xlu0 %7307
      %7309 = vrot.lane.b32.xlu0 %v6739, 96
      %v7310 = vpop.permute.xlu0 %7309
      %7311 = vrot.lane.b32.xlu0 %v6740, 96
      %v7312 = vpop.permute.xlu0 %7311
      %7313 = vrot.lane.b32.xlu0 %v6741, 96
      %v7314 = vpop.permute.xlu0 %7313
      %7315 = vrot.lane.b32.xlu0 %v6742, 96
      %v7316 = vpop.permute.xlu0 %7315
      %7317 = vrot.lane.b32.xlu0 %v6743, 96
      %v7318 = vpop.permute.xlu0 %7317
      %7319 = vrot.lane.b32.xlu0 %v6744, 96
      %v7320 = vpop.permute.xlu0 %7319
      %7321 = vrot.lane.b32.xlu0 %v7124, 96
      %v7322 = vpop.permute.xlu0 %7321
      %7323 = vrot.lane.b32.xlu0 %v7290, 96
      %v7324 = vpop.permute.xlu0 %7323
      %7341 = vst.msk [vmem:[#allocation3 + $0x8] sm:$0xff] %vm967, %v7294
      %7342 = vst.msk [vmem:[#allocation3 + $0x20] sm:$0xff] %vm967, %v7296
      %7343 = vst.msk [vmem:[#allocation3 + $0x38] sm:$0xff] %vm967, %v7298
      %7344 = vst.msk [vmem:[#allocation3 + $0x50] sm:$0xff] %vm967, %v7300
      %7345 = vst.msk [vmem:[#allocation3 + $0x68] sm:$0xff] %vm967, %v7302
      %7346 = vst.msk [vmem:[#allocation3 + $0x80] sm:$0xff] %vm967, %v7304
      %7347 = vst.msk [vmem:[#allocation3 + $0x98] sm:$0xff] %vm967, %v7306
      %7348 = vst.msk [vmem:[#allocation3 + $0xb0] sm:$0xff] %vm967, %v7308
      %7349 = vst.msk [vmem:[#allocation3 + $0xc8] sm:$0xff] %vm967, %v7310
      %7350 = vst.msk [vmem:[#allocation3 + $0xe0] sm:$0xff] %vm967, %v7312
      %7351 = vst.msk [vmem:[#allocation3 + $0xf8] sm:$0xff] %vm967, %v7314
      %7352 = vst.msk [vmem:[#allocation3 + $0x110] sm:$0xff] %vm967, %v7316
      %7353 = vst.msk [vmem:[#allocation3 + $0x128] sm:$0xff] %vm967, %v7318
      %7354 = vst.msk [vmem:[#allocation3 + $0x140] sm:$0xff] %vm967, %v7320
      %7355 = vst.msk [vmem:[#allocation3 + $0x158] sm:$0xff] %vm967, %v7322
      %7356 = vst.msk [vmem:[#allocation3 + $0x170] sm:$0xff] %vm967, %v7324
      %v7357 = vrot.slane %v6534, 2
      %v7358 = vrot.slane %v6535, 2
      %v7359 = vsel %vm692, %v7357, %v7358
      %v7360 = vrot.slane %v6536, 2
      %v7361 = vsel %vm692, %v7358, %v7360
      %v7364 = vpack.c.bf16 %v7361, %v7359
      %7365 = vst.msk [vmem:[#allocation3 + $0x10] sm:$0xff] %vm226, %v6939
      %7366 = vst.msk [vmem:[#allocation3 + $0x28] sm:$0xff] %vm226, %v6940
      %7367 = vst.msk [vmem:[#allocation3 + $0x40] sm:$0xff] %vm226, %v6941
      %7368 = vst.msk [vmem:[#allocation3 + $0x58] sm:$0xff] %vm226, %v6942
      %7369 = vst.msk [vmem:[#allocation3 + $0x70] sm:$0xff] %vm226, %v6943
      %7370 = vst.msk [vmem:[#allocation3 + $0x88] sm:$0xff] %vm226, %v6944
      %7371 = vst.msk [vmem:[#allocation3 + $0xa0] sm:$0xff] %vm226, %v6945
      %7372 = vst.msk [vmem:[#allocation3 + $0xb8] sm:$0xff] %vm226, %v6946
      %7373 = vst.msk [vmem:[#allocation3 + $0xd0] sm:$0xff] %vm226, %v6947
      %7374 = vst.msk [vmem:[#allocation3 + $0xe8] sm:$0xff] %vm226, %v6948
      %7375 = vst.msk [vmem:[#allocation3 + $0x100] sm:$0xff] %vm226, %v6949
      %7376 = vst.msk [vmem:[#allocation3 + $0x118] sm:$0xff] %vm226, %v6950
      %7377 = vst.msk [vmem:[#allocation3 + $0x130] sm:$0xff] %vm226, %v6951
      %7378 = vst.msk [vmem:[#allocation3 + $0x148] sm:$0xff] %vm226, %v6952
      %7379 = vst.msk [vmem:[#allocation3 + $0x160] sm:$0xff] %vm226, %v7148
      %7380 = vst.msk [vmem:[#allocation3 + $0x178] sm:$0xff] %vm226, %v7364
      %v7381 = vld [vmem:[#allocation3] sm:$0xff]
      %v7382 = vld [vmem:[#allocation3 + $0x8] sm:$0xff]
      %v7383 = vld [vmem:[#allocation3 + $0x10] sm:$0xff]
      %v7384 = vld [vmem:[#allocation3 + $0x18] sm:$0xff]
      %v7385 = vld [vmem:[#allocation3 + $0x20] sm:$0xff]
      %v7386 = vld [vmem:[#allocation3 + $0x28] sm:$0xff]
      %v7387 = vld [vmem:[#allocation3 + $0x30] sm:$0xff]
      %v7388 = vld [vmem:[#allocation3 + $0x38] sm:$0xff]
      %v7389 = vld [vmem:[#allocation3 + $0x40] sm:$0xff]
      %v7390 = vld [vmem:[#allocation3 + $0x48] sm:$0xff]
      %v7391 = vld [vmem:[#allocation3 + $0x50] sm:$0xff]
      %v7392 = vld [vmem:[#allocation3 + $0x58] sm:$0xff]
      %v7393 = vld [vmem:[#allocation3 + $0x60] sm:$0xff]
      %v7394 = vld [vmem:[#allocation3 + $0x68] sm:$0xff]
      %v7395 = vld [vmem:[#allocation3 + $0x70] sm:$0xff]
      %v7396 = vld [vmem:[#allocation3 + $0x78] sm:$0xff]
      %v7397 = vld [vmem:[#allocation3 + $0x80] sm:$0xff]
      %v7398 = vld [vmem:[#allocation3 + $0x88] sm:$0xff]
      %v7399 = vld [vmem:[#allocation3 + $0x90] sm:$0xff]
      %v7400 = vld [vmem:[#allocation3 + $0x98] sm:$0xff]
      %v7401 = vld [vmem:[#allocation3 + $0xa0] sm:$0xff]
      %v7402 = vld [vmem:[#allocation3 + $0xa8] sm:$0xff]
      %v7403 = vld [vmem:[#allocation3 + $0xb0] sm:$0xff]
      %v7404 = vld [vmem:[#allocation3 + $0xb8] sm:$0xff]
      %v7405 = vld [vmem:[#allocation3 + $0xc0] sm:$0xff]
      %v7406 = vld [vmem:[#allocation3 + $0xc8] sm:$0xff]
      %v7407 = vld [vmem:[#allocation3 + $0xd0] sm:$0xff]
      %v7408 = vld [vmem:[#allocation3 + $0xd8] sm:$0xff]
      %v7409 = vld [vmem:[#allocation3 + $0xe0] sm:$0xff]
      %v7410 = vld [vmem:[#allocation3 + $0xe8] sm:$0xff]
      %v7411 = vld [vmem:[#allocation3 + $0xf0] sm:$0xff]
      %v7412 = vld [vmem:[#allocation3 + $0xf8] sm:$0xff]
      %v7413 = vld [vmem:[#allocation3 + $0x100] sm:$0xff]
      %v7414 = vld [vmem:[#allocation3 + $0x108] sm:$0xff]
      %v7415 = vld [vmem:[#allocation3 + $0x110] sm:$0xff]
      %v7416 = vld [vmem:[#allocation3 + $0x118] sm:$0xff]
      %v7417 = vld [vmem:[#allocation3 + $0x120] sm:$0xff]
      %v7418 = vld [vmem:[#allocation3 + $0x128] sm:$0xff]
      %v7419 = vld [vmem:[#allocation3 + $0x130] sm:$0xff]
      %v7420 = vld [vmem:[#allocation3 + $0x138] sm:$0xff]
      %v7421 = vld [vmem:[#allocation3 + $0x140] sm:$0xff]
      %v7422 = vld [vmem:[#allocation3 + $0x148] sm:$0xff]
      %v7423 = vld [vmem:[#allocation3 + $0x150] sm:$0xff]
      %v7424 = vld [vmem:[#allocation3 + $0x158] sm:$0xff]
      %v7425 = vld [vmem:[#allocation3 + $0x160] sm:$0xff]
      %v7426 = vld [vmem:[#allocation3 + $0x168] sm:$0xff]
      %v7427 = vld [vmem:[#allocation3 + $0x170] sm:$0xff]
      %v7428 = vld [vmem:[#allocation3 + $0x178] sm:$0xff]
      %s7429 = scalar_lea.vmem %s1, 576
      %v7430 = vld [vmem:[%s7429] sm:$0xf]
      %v7431 = vld [vmem:[%s7429 + $0x4] sm:$0xf]
      %v7432 = vld [vmem:[%s7429 + $0x8] sm:$0xf]
      %v7433 = vld [vmem:[%s7429 + $0xc] sm:$0xf]
      %v7434 = vld [vmem:[%s7429 + $0x10] sm:$0xf]
      %v7435 = vld [vmem:[%s7429 + $0x14] sm:$0xf]
      %v7436 = vld [vmem:[%s7429 + $0x18] sm:$0xf]
      %v7437 = vld [vmem:[%s7429 + $0x1c] sm:$0xf]
      %v7438 = vld [vmem:[%s7429 + $0x20] sm:$0xf]
      %v7439 = vld [vmem:[%s7429 + $0x24] sm:$0xf]
      %v7440 = vld [vmem:[%s7429 + $0x28] sm:$0xf]
      %v7441 = vld [vmem:[%s7429 + $0x2c] sm:$0xf]
      %v7442 = vld [vmem:[%s7429 + $0x30] sm:$0xf]
      %v7443 = vld [vmem:[%s7429 + $0x34] sm:$0xf]
      %v7444 = vld [vmem:[%s7429 + $0x38] sm:$0xf]
      %v7445 = vld [vmem:[%s7429 + $0x3c] sm:$0xf]
      %v7446 = vld [vmem:[%s7429 + $0x40] sm:$0xf]
      %v7447 = vld [vmem:[%s7429 + $0x44] sm:$0xf]
      %v7448 = vld [vmem:[%s7429 + $0x48] sm:$0xf]
      %v7449 = vld [vmem:[%s7429 + $0x4c] sm:$0xf]
      %v7450 = vld [vmem:[%s7429 + $0x50] sm:$0xf]
      %v7451 = vld [vmem:[%s7429 + $0x54] sm:$0xf]
      %v7452 = vld [vmem:[%s7429 + $0x58] sm:$0xf]
      %v7453 = vld [vmem:[%s7429 + $0x5c] sm:$0xf]
      %v7454 = vld [vmem:[%s7429 + $0x60] sm:$0xf]
      %v7455 = vld [vmem:[%s7429 + $0x64] sm:$0xf]
      %v7456 = vld [vmem:[%s7429 + $0x68] sm:$0xf]
      %v7457 = vld [vmem:[%s7429 + $0x6c] sm:$0xf]
      %v7458 = vld [vmem:[%s7429 + $0x70] sm:$0xf]
      %v7459 = vld [vmem:[%s7429 + $0x74] sm:$0xf]
      %v7460 = vld [vmem:[%s7429 + $0x78] sm:$0xf]
      %v7461 = vld [vmem:[%s7429 + $0x7c] sm:$0xf]
      %v7462 = vld [vmem:[%s7429 + $0x80] sm:$0xf]
      %v7463 = vld [vmem:[%s7429 + $0x84] sm:$0xf]
      %v7464 = vld [vmem:[%s7429 + $0x88] sm:$0xf]
      %v7465 = vld [vmem:[%s7429 + $0x8c] sm:$0xf]
      %s7466 = scalar_lea.vmem %s2, 4
      %v7467 = vld [vmem:[%s7466] sm:$0x1]
      %v7469 = vlaneseq
      %v7470 = vshrl.u32 %v7469, 7
      %v7471 = vsub.s32 0, %v7470
      %v7472 = vrot.slane %v7467, %v7471
      %v7510 = vunpack.c.l.b16 %v7430
      %v7511 = vunpack.c.l.b16 %v7431
      %v7512 = vunpack.c.l.b16 %v7432
      %v7513 = vunpack.c.l.b16 %v7433
      %v7514 = vunpack.c.l.b16 %v7434
      %v7515 = vunpack.c.l.b16 %v7435
      %v7516 = vunpack.c.l.b16 %v7436
      %v7517 = vunpack.c.l.b16 %v7437
      %v7518 = vunpack.c.l.b16 %v7438
      %v7519 = vunpack.c.l.b16 %v7439
      %v7520 = vunpack.c.l.b16 %v7440
      %v7521 = vunpack.c.l.b16 %v7441
      %v7522 = vunpack.c.l.b16 %v7442
      %v7523 = vunpack.c.l.b16 %v7443
      %v7524 = vunpack.c.l.b16 %v7444
      %v7525 = vunpack.c.l.b16 %v7445
      %v7526 = vunpack.c.l.b16 %v7446
      %v7527 = vunpack.c.l.b16 %v7447
      %v7528 = vunpack.c.l.b16 %v7448
      %v7529 = vunpack.c.l.b16 %v7449
      %v7530 = vunpack.c.l.b16 %v7450
      %v7531 = vunpack.c.l.b16 %v7451
      %v7532 = vunpack.c.l.b16 %v7452
      %v7533 = vunpack.c.l.b16 %v7453
      %v7534 = vunpack.c.l.b16 %v7454
      %v7535 = vunpack.c.l.b16 %v7455
      %v7536 = vunpack.c.l.b16 %v7456
      %v7537 = vunpack.c.l.b16 %v7457
      %v7538 = vunpack.c.l.b16 %v7458
      %v7539 = vunpack.c.l.b16 %v7459
      %v7540 = vunpack.c.l.b16 %v7460
      %v7541 = vunpack.c.l.b16 %v7461
      %v7542 = vunpack.c.l.b16 %v7462
      %v7543 = vunpack.c.l.b16 %v7463
      %v7544 = vunpack.c.l.b16 %v7464
      %v7545 = vunpack.c.l.b16 %v7465
      %v7546 = vpack.c.b16 %v7511, %v7510
      %v7547 = vpack.c.b16 %v7513, %v7512
      %v7548 = vpack.c.b16 %v7515, %v7514
      %v7549 = vpack.c.b16 %v7517, %v7516
      %v7550 = vpack.c.b16 %v7519, %v7518
      %v7551 = vpack.c.b16 %v7521, %v7520
      %v7552 = vpack.c.b16 %v7523, %v7522
      %v7553 = vpack.c.b16 %v7525, %v7524
      %v7554 = vpack.c.b16 %v7527, %v7526
      %v7555 = vpack.c.b16 %v7529, %v7528
      %v7556 = vpack.c.b16 %v7531, %v7530
      %v7557 = vpack.c.b16 %v7533, %v7532
      %v7558 = vpack.c.b16 %v7535, %v7534
      %v7559 = vpack.c.b16 %v7537, %v7536
      %v7560 = vpack.c.b16 %v7539, %v7538
      %v7561 = vpack.c.b16 %v7541, %v7540
      %v7562 = vpack.c.b16 %v7543, %v7542
      %v7563 = vpack.c.b16 %v7545, %v7544
      %v7583 = vsel %vm226, %v7383, 0
      %v7586 = vsel %vm226, %v7386, 0
      %v7589 = vsel %vm226, %v7389, 0
      %v7592 = vsel %vm226, %v7392, 0
      %v7595 = vsel %vm226, %v7395, 0
      %v7598 = vsel %vm226, %v7398, 0
      %v7601 = vsel %vm226, %v7401, 0
      %v7604 = vsel %vm226, %v7404, 0
      %v7607 = vsel %vm226, %v7407, 0
      %v7610 = vsel %vm226, %v7410, 0
      %v7613 = vsel %vm226, %v7413, 0
      %v7616 = vsel %vm226, %v7416, 0
      %v7619 = vsel %vm226, %v7419, 0
      %v7622 = vsel %vm226, %v7422, 0
      %v7625 = vsel %vm226, %v7425, 0
      %v7628 = vsel %vm226, %v7428, 0
      %7630 = vmatprep.subr.bf16.mxu0 0
      %7631 = vmatpush1.bf16.msra.mxu0 %v7546
      %7632 = vmatprep.subr.bf16.mxu0 0
      %7633 = vmatpush1.bf16.msra.mxu0 %v7547
      %7634 = vmatprep.subr.bf16.mxu0 0
      %7635 = vmatpush1.bf16.msra.mxu0 %v7548
      %7636 = vmatprep.subr.bf16.mxu0 0
      %7637 = vmatpush1.bf16.msra.mxu0 %v7549
      %7638 = vmatprep.subr.bf16.mxu0 0
      %7639 = vmatpush1.bf16.msra.mxu0 %v7550
      %7640 = vmatprep.subr.bf16.mxu0 0
      %7641 = vmatpush1.bf16.msra.mxu0 %v7551
      %7642 = vmatprep.subr.bf16.mxu0 0
      %7643 = vmatpush1.bf16.msra.mxu0 %v7552
      %7644 = vmatprep.subr.bf16.mxu0 0
      %7645 = vmatpush1.bf16.msra.mxu0 %v7553
      %7646 = vmatprep.subr.bf16.mxu0 0
      %7647 = vmatpush1.bf16.msra.mxu0 %v7554
      %7648 = vmatprep.subr.bf16.mxu0 0
      %7649 = vmatpush1.bf16.msra.mxu0 %v7555
      %7650 = vmatprep.subr.bf16.mxu0 0
      %7651 = vmatpush1.bf16.msra.mxu0 %v7556
      %7652 = vmatprep.subr.bf16.mxu0 0
      %7653 = vmatpush1.bf16.msra.mxu0 %v7557
      %7654 = vmatprep.subr.bf16.mxu0 0
      %7655 = vmatpush1.bf16.msra.mxu0 %v7558
      %7656 = vmatprep.subr.bf16.mxu0 0
      %7657 = vmatpush1.bf16.msra.mxu0 %v7559
      %7658 = vmatprep.subr.bf16.mxu0 0
      %7659 = vmatpush1.bf16.msra.mxu0 %v7560
      %7660 = vmatprep.subr.bf16.mxu0 0
      %7661 = vmatpush1.bf16.msra.mxu0 %v7561
      %7662 = vmatprep.mubr.bf16.mxu0 %v7382
      %7663 = vmatmul.mubr.bf16.gmra.mrb[0].mxu0 %v7381
      %v7664 = vpop.f32.mrb[0].mxu0
      %v7665 = vadd.f32 %v7472, %v7664
      %v7666 = vpop.f32.mrb[0].mxu0
      %v7667 = vpop.f32.mrb[0].mxu0
      %v7668 = vadd.f32 %v7472, %v7667
      %v7669 = vpop.f32.mrb[0].mxu0
      %7670 = vmatprep.mubr.bf16.mxu0 %v7385
      %7671 = vmatmul.mubr.bf16.gmra.mrb[0].mxu0 %v7384
      %v7672 = vpop.f32.mrb[0].mxu0
      %v7673 = vadd.f32 %v7472, %v7672
      %v7674 = vpop.f32.mrb[0].mxu0
      %v7675 = vpop.f32.mrb[0].mxu0
      %v7676 = vadd.f32 %v7472, %v7675
      %v7677 = vpop.f32.mrb[0].mxu0
      %7678 = vmatprep.mubr.bf16.mxu0 %v7388
      %7679 = vmatmul.mubr.bf16.gmra.mrb[0].mxu0 %v7387
      %v7680 = vpop.f32.mrb[0].mxu0
      %v7681 = vadd.f32 %v7472, %v7680
      %v7682 = vpop.f32.mrb[0].mxu0
      %v7683 = vpop.f32.mrb[0].mxu0
      %v7684 = vadd.f32 %v7472, %v7683
      %v7685 = vpop.f32.mrb[0].mxu0
      %7686 = vmatprep.mubr.bf16.mxu0 %v7391
      %7687 = vmatmul.mubr.bf16.gmra.mrb[0].mxu0 %v7390
      %v7688 = vpop.f32.mrb[0].mxu0
      %v7689 = vadd.f32 %v7472, %v7688
      %v7690 = vpop.f32.mrb[0].mxu0
      %v7691 = vpop.f32.mrb[0].mxu0
      %v7692 = vadd.f32 %v7472, %v7691
      %v7693 = vpop.f32.mrb[0].mxu0
      %7694 = vmatprep.mubr.bf16.mxu0 %v7394
      %7695 = vmatmul.mubr.bf16.gmra.mrb[0].mxu0 %v7393
      %v7696 = vpop.f32.mrb[0].mxu0
      %v7697 = vadd.f32 %v7472, %v7696
      %v7698 = vpop.f32.mrb[0].mxu0
      %v7699 = vpop.f32.mrb[0].mxu0
      %v7700 = vadd.f32 %v7472, %v7699
      %v7701 = vpop.f32.mrb[0].mxu0
      %7702 = vmatprep.mubr.bf16.mxu0 %v7397
      %7703 = vmatmul.mubr.bf16.gmra.mrb[0].mxu0 %v7396
      %v7704 = vpop.f32.mrb[0].mxu0
      %v7705 = vadd.f32 %v7472, %v7704
      %v7706 = vpop.f32.mrb[0].mxu0
      %v7707 = vpop.f32.mrb[0].mxu0
      %v7708 = vadd.f32 %v7472, %v7707
      %v7709 = vpop.f32.mrb[0].mxu0
      %7710 = vmatprep.mubr.bf16.mxu0 %v7400
      %7711 = vmatmul.mubr.bf16.gmra.mrb[0].mxu0 %v7399
      %v7712 = vpop.f32.mrb[0].mxu0
      %v7713 = vadd.f32 %v7472, %v7712
      %v7714 = vpop.f32.mrb[0].mxu0
      %v7715 = vpop.f32.mrb[0].mxu0
      %v7716 = vadd.f32 %v7472, %v7715
      %v7717 = vpop.f32.mrb[0].mxu0
      %7718 = vmatprep.mubr.bf16.mxu0 %v7403
      %7719 = vmatmul.mubr.bf16.gmra.mrb[0].mxu0 %v7402
      %v7720 = vpop.f32.mrb[0].mxu0
      %v7721 = vadd.f32 %v7472, %v7720
      %v7722 = vpop.f32.mrb[0].mxu0
      %v7723 = vpop.f32.mrb[0].mxu0
      %v7724 = vadd.f32 %v7472, %v7723
      %v7725 = vpop.f32.mrb[0].mxu0
      %7726 = vmatprep.mubr.bf16.mxu0 %v7406
      %7727 = vmatmul.mubr.bf16.gmra.mrb[0].mxu0 %v7405
      %v7728 = vpop.f32.mrb[0].mxu0
      %v7729 = vadd.f32 %v7472, %v7728
      %v7730 = vpop.f32.mrb[0].mxu0
      %v7731 = vpop.f32.mrb[0].mxu0
      %v7732 = vadd.f32 %v7472, %v7731
      %v7733 = vpop.f32.mrb[0].mxu0
      %7734 = vmatprep.mubr.bf16.mxu0 %v7409
      %7735 = vmatmul.mubr.bf16.gmra.mrb[0].mxu0 %v7408
      %v7736 = vpop.f32.mrb[0].mxu0
      %v7737 = vadd.f32 %v7472, %v7736
      %v7738 = vpop.f32.mrb[0].mxu0
      %v7739 = vpop.f32.mrb[0].mxu0
      %v7740 = vadd.f32 %v7472, %v7739
      %v7741 = vpop.f32.mrb[0].mxu0
      %7742 = vmatprep.mubr.bf16.mxu0 %v7412
      %7743 = vmatmul.mubr.bf16.gmra.mrb[0].mxu0 %v7411
      %v7744 = vpop.f32.mrb[0].mxu0
      %v7745 = vadd.f32 %v7472, %v7744
      %v7746 = vpop.f32.mrb[0].mxu0
      %v7747 = vpop.f32.mrb[0].mxu0
      %v7748 = vadd.f32 %v7472, %v7747
      %v7749 = vpop.f32.mrb[0].mxu0
      %7750 = vmatprep.mubr.bf16.mxu0 %v7415
      %7751 = vmatmul.mubr.bf16.gmra.mrb[0].mxu0 %v7414
      %v7752 = vpop.f32.mrb[0].mxu0
      %v7753 = vadd.f32 %v7472, %v7752
      %v7754 = vpop.f32.mrb[0].mxu0
      %v7755 = vpop.f32.mrb[0].mxu0
      %v7756 = vadd.f32 %v7472, %v7755
      %v7757 = vpop.f32.mrb[0].mxu0
      %7758 = vmatprep.mubr.bf16.mxu0 %v7418
      %7759 = vmatmul.mubr.bf16.gmra.mrb[0].mxu0 %v7417
      %v7760 = vpop.f32.mrb[0].mxu0
      %v7761 = vadd.f32 %v7472, %v7760
      %v7762 = vpop.f32.mrb[0].mxu0
      %v7763 = vpop.f32.mrb[0].mxu0
      %v7764 = vadd.f32 %v7472, %v7763
      %v7765 = vpop.f32.mrb[0].mxu0
      %7766 = vmatprep.mubr.bf16.mxu0 %v7421
      %7767 = vmatmul.mubr.bf16.gmra.mrb[0].mxu0 %v7420
      %v7768 = vpop.f32.mrb[0].mxu0
      %v7769 = vadd.f32 %v7472, %v7768
      %v7770 = vpop.f32.mrb[0].mxu0
      %v7771 = vpop.f32.mrb[0].mxu0
      %v7772 = vadd.f32 %v7472, %v7771
      %v7773 = vpop.f32.mrb[0].mxu0
      %7774 = vmatprep.mubr.bf16.mxu0 %v7424
      %7775 = vmatmul.mubr.bf16.gmra.mrb[0].mxu0 %v7423
      %v7776 = vpop.f32.mrb[0].mxu0
      %v7777 = vadd.f32 %v7472, %v7776
      %v7778 = vpop.f32.mrb[0].mxu0
      %v7779 = vpop.f32.mrb[0].mxu0
      %v7780 = vadd.f32 %v7472, %v7779
      %v7781 = vpop.f32.mrb[0].mxu0
      %7782 = vmatprep.mubr.bf16.mxu0 %v7427
      %7783 = vmatmul.mubr.bf16.gmra.mrb[0].mxu0 %v7426
      %v7784 = vpop.f32.mrb[0].mxu0
      %v7785 = vadd.f32 %v7472, %v7784
      %v7786 = vpop.f32.mrb[0].mxu0
      %v7787 = vpop.f32.mrb[0].mxu0
      %v7788 = vadd.f32 %v7472, %v7787
      %v7789 = vpop.f32.mrb[0].mxu0
      %7790 = vdwg.mxu0
      %7791 = vmatprep.subr.bf16.mxu0 0
      %7792 = vmatpush1.bf16.msra.mxu0 %v7562
      %7793 = vmatprep.subr.bf16.mxu0 0
      %7794 = vmatpush1.bf16.msra.mxu0 %v7563
      %7795 = vmatprep.subr.bf16.mxu0 0
      %7796 = vmatpush1.bf16.msra.mxu0 0
      %7797 = vmatprep.subr.bf16.mxu0 0
      %7798 = vmatpush1.bf16.msra.mxu0 0
      %7799 = vmatprep.subr.bf16.mxu0 0
      %7800 = vmatpush1.bf16.msra.mxu0 0
      %7801 = vmatprep.subr.bf16.mxu0 0
      %7802 = vmatpush1.bf16.msra.mxu0 0
      %7803 = vmatprep.subr.bf16.mxu0 0
      %7804 = vmatpush1.bf16.msra.mxu0 0
      %7805 = vmatprep.subr.bf16.mxu0 0
      %7806 = vmatpush1.bf16.msra.mxu0 0
      %7807 = vmatprep.subr.bf16.mxu0 0
      %7808 = vmatpush1.bf16.msra.mxu0 0
      %7809 = vmatprep.subr.bf16.mxu0 0
      %7810 = vmatpush1.bf16.msra.mxu0 0
      %7811 = vmatprep.subr.bf16.mxu0 0
      %7812 = vmatpush1.bf16.msra.mxu0 0
      %7813 = vmatprep.subr.bf16.mxu0 0
      %7814 = vmatpush1.bf16.msra.mxu0 0
      %7815 = vmatprep.subr.bf16.mxu0 0
      %7816 = vmatpush1.bf16.msra.mxu0 0
      %7817 = vmatprep.subr.bf16.mxu0 0
      %7818 = vmatpush1.bf16.msra.mxu0 0
      %7819 = vmatprep.subr.bf16.mxu0 0
      %7820 = vmatpush1.bf16.msra.mxu0 0
      %7821 = vmatprep.subr.bf16.mxu0 0
      %7822 = vmatpush1.bf16.msra.mxu0 0
      %7823 = vmatprep.mubr.bf16.mxu0 0
      %7824 = vmatmul.mubr.bf16.gmra.mrb[0].mxu0 %v7583
      %v7825 = vpop.f32.mrb[0].mxu0
      %v7826 = vadd.f32 %v7665, %v7825
      %v7827 = vpop.f32.mrb[0].mxu0
      %v7828 = vpop.f32.mrb[0].mxu0
      %v7829 = vadd.f32 %v7668, %v7828
      %v7830 = vpop.f32.mrb[0].mxu0
      %7831 = vmatprep.mubr.bf16.mxu0 0
      %7832 = vmatmul.mubr.bf16.gmra.mrb[0].mxu0 %v7586
      %v7833 = vpop.f32.mrb[0].mxu0
      %v7834 = vadd.f32 %v7673, %v7833
      %v7835 = vpop.f32.mrb[0].mxu0
      %v7836 = vpop.f32.mrb[0].mxu0
      %v7837 = vadd.f32 %v7676, %v7836
      %v7838 = vpop.f32.mrb[0].mxu0
      %7839 = vmatprep.mubr.bf16.mxu0 0
      %7840 = vmatmul.mubr.bf16.gmra.mrb[0].mxu0 %v7589
      %v7841 = vpop.f32.mrb[0].mxu0
      %v7842 = vadd.f32 %v7681, %v7841
      %v7843 = vpop.f32.mrb[0].mxu0
      %v7844 = vpop.f32.mrb[0].mxu0
      %v7845 = vadd.f32 %v7684, %v7844
      %v7846 = vpop.f32.mrb[0].mxu0
      %7847 = vmatprep.mubr.bf16.mxu0 0
      %7848 = vmatmul.mubr.bf16.gmra.mrb[0].mxu0 %v7592
      %v7849 = vpop.f32.mrb[0].mxu0
      %v7850 = vadd.f32 %v7689, %v7849
      %v7851 = vpop.f32.mrb[0].mxu0
      %v7852 = vpop.f32.mrb[0].mxu0
      %v7853 = vadd.f32 %v7692, %v7852
      %v7854 = vpop.f32.mrb[0].mxu0
      %7855 = vmatprep.mubr.bf16.mxu0 0
      %7856 = vmatmul.mubr.bf16.gmra.mrb[0].mxu0 %v7595
      %v7857 = vpop.f32.mrb[0].mxu0
      %v7858 = vadd.f32 %v7697, %v7857
      %v7859 = vpop.f32.mrb[0].mxu0
      %v7860 = vpop.f32.mrb[0].mxu0
      %v7861 = vadd.f32 %v7700, %v7860
      %v7862 = vpop.f32.mrb[0].mxu0
      %7863 = vmatprep.mubr.bf16.mxu0 0
      %7864 = vmatmul.mubr.bf16.gmra.mrb[0].mxu0 %v7598
      %v7865 = vpop.f32.mrb[0].mxu0
      %v7866 = vadd.f32 %v7705, %v7865
      %v7867 = vpop.f32.mrb[0].mxu0
      %v7868 = vpop.f32.mrb[0].mxu0
      %v7869 = vadd.f32 %v7708, %v7868
      %v7870 = vpop.f32.mrb[0].mxu0
      %7871 = vmatprep.mubr.bf16.mxu0 0
      %7872 = vmatmul.mubr.bf16.gmra.mrb[0].mxu0 %v7601
      %v7873 = vpop.f32.mrb[0].mxu0
      %v7874 = vadd.f32 %v7713, %v7873
      %v7875 = vpop.f32.mrb[0].mxu0
      %v7876 = vpop.f32.mrb[0].mxu0
      %v7877 = vadd.f32 %v7716, %v7876
      %v7878 = vpop.f32.mrb[0].mxu0
      %7879 = vmatprep.mubr.bf16.mxu0 0
      %7880 = vmatmul.mubr.bf16.gmra.mrb[0].mxu0 %v7604
      %v7881 = vpop.f32.mrb[0].mxu0
      %v7882 = vadd.f32 %v7721, %v7881
      %v7883 = vpop.f32.mrb[0].mxu0
      %v7884 = vpop.f32.mrb[0].mxu0
      %v7885 = vadd.f32 %v7724, %v7884
      %v7886 = vpop.f32.mrb[0].mxu0
      %7887 = vmatprep.mubr.bf16.mxu0 0
      %7888 = vmatmul.mubr.bf16.gmra.mrb[0].mxu0 %v7607
      %v7889 = vpop.f32.mrb[0].mxu0
      %v7890 = vadd.f32 %v7729, %v7889
      %v7891 = vpop.f32.mrb[0].mxu0
      %v7892 = vpop.f32.mrb[0].mxu0
      %v7893 = vadd.f32 %v7732, %v7892
      %v7894 = vpop.f32.mrb[0].mxu0
      %7895 = vmatprep.mubr.bf16.mxu0 0
      %7896 = vmatmul.mubr.bf16.gmra.mrb[0].mxu0 %v7610
      %v7897 = vpop.f32.mrb[0].mxu0
      %v7898 = vadd.f32 %v7737, %v7897
      %v7899 = vpop.f32.mrb[0].mxu0
      %v7900 = vpop.f32.mrb[0].mxu0
      %v7901 = vadd.f32 %v7740, %v7900
      %v7902 = vpop.f32.mrb[0].mxu0
      %7903 = vmatprep.mubr.bf16.mxu0 0
      %7904 = vmatmul.mubr.bf16.gmra.mrb[0].mxu0 %v7613
      %v7905 = vpop.f32.mrb[0].mxu0
      %v7906 = vadd.f32 %v7745, %v7905
      %v7907 = vpop.f32.mrb[0].mxu0
      %v7908 = vpop.f32.mrb[0].mxu0
      %v7909 = vadd.f32 %v7748, %v7908
      %v7910 = vpop.f32.mrb[0].mxu0
      %7911 = vmatprep.mubr.bf16.mxu0 0
      %7912 = vmatmul.mubr.bf16.gmra.mrb[0].mxu0 %v7616
      %v7913 = vpop.f32.mrb[0].mxu0
      %v7914 = vadd.f32 %v7753, %v7913
      %v7915 = vpop.f32.mrb[0].mxu0
      %v7916 = vpop.f32.mrb[0].mxu0
      %v7917 = vadd.f32 %v7756, %v7916
      %v7918 = vpop.f32.mrb[0].mxu0
      %7919 = vmatprep.mubr.bf16.mxu0 0
      %7920 = vmatmul.mubr.bf16.gmra.mrb[0].mxu0 %v7619
      %v7921 = vpop.f32.mrb[0].mxu0
      %v7922 = vadd.f32 %v7761, %v7921
      %v7923 = vpop.f32.mrb[0].mxu0
      %v7924 = vpop.f32.mrb[0].mxu0
      %v7925 = vadd.f32 %v7764, %v7924
      %v7926 = vpop.f32.mrb[0].mxu0
      %7927 = vmatprep.mubr.bf16.mxu0 0
      %7928 = vmatmul.mubr.bf16.gmra.mrb[0].mxu0 %v7622
      %v7929 = vpop.f32.mrb[0].mxu0
      %v7930 = vadd.f32 %v7769, %v7929
      %v7931 = vpop.f32.mrb[0].mxu0
      %v7932 = vpop.f32.mrb[0].mxu0
      %v7933 = vadd.f32 %v7772, %v7932
      %v7934 = vpop.f32.mrb[0].mxu0
      %7935 = vmatprep.mubr.bf16.mxu0 0
      %7936 = vmatmul.mubr.bf16.gmra.mrb[0].mxu0 %v7625
      %v7937 = vpop.f32.mrb[0].mxu0
      %v7938 = vadd.f32 %v7777, %v7937
      %v7939 = vpop.f32.mrb[0].mxu0
      %v7940 = vpop.f32.mrb[0].mxu0
      %v7941 = vadd.f32 %v7780, %v7940
      %v7942 = vpop.f32.mrb[0].mxu0
      %7943 = vmatprep.mubr.bf16.mxu0 0
      %7944 = vmatmul.mubr.bf16.gmra.mrb[0].mxu0 %v7628
      %v7945 = vpop.f32.mrb[0].mxu0
      %v7946 = vadd.f32 %v7785, %v7945
      %v7947 = vpop.f32.mrb[0].mxu0
      %v7948 = vpop.f32.mrb[0].mxu0
      %v7949 = vadd.f32 %v7788, %v7948
      %v7950 = vpop.f32.mrb[0].mxu0
      %7951 = vdwg.mxu0
      %v7952 = vmax.f32 %v7826, 0.0
      %v7953 = vmax.f32 %v7829, 0.0
      %v7954 = vmax.f32 %v7834, 0.0
      %v7955 = vmax.f32 %v7837, 0.0
      %v7956 = vmax.f32 %v7842, 0.0
      %v7957 = vmax.f32 %v7845, 0.0
      %v7958 = vmax.f32 %v7850, 0.0
      %v7959 = vmax.f32 %v7853, 0.0
      %v7960 = vmax.f32 %v7858, 0.0
      %v7961 = vmax.f32 %v7861, 0.0
      %v7962 = vmax.f32 %v7866, 0.0
      %v7963 = vmax.f32 %v7869, 0.0
      %v7964 = vmax.f32 %v7874, 0.0
      %v7965 = vmax.f32 %v7877, 0.0
      %v7966 = vmax.f32 %v7882, 0.0
      %v7967 = vmax.f32 %v7885, 0.0
      %v7968 = vmax.f32 %v7890, 0.0
      %v7969 = vmax.f32 %v7893, 0.0
      %v7970 = vmax.f32 %v7898, 0.0
      %v7971 = vmax.f32 %v7901, 0.0
      %v7972 = vmax.f32 %v7906, 0.0
      %v7973 = vmax.f32 %v7909, 0.0
      %v7974 = vmax.f32 %v7914, 0.0
      %v7975 = vmax.f32 %v7917, 0.0
      %v7976 = vmax.f32 %v7922, 0.0
      %v7977 = vmax.f32 %v7925, 0.0
      %v7978 = vmax.f32 %v7930, 0.0
      %v7979 = vmax.f32 %v7933, 0.0
      %v7980 = vmax.f32 %v7938, 0.0
      %v7981 = vmax.f32 %v7941, 0.0
      %v7982 = vmax.f32 %v7946, 0.0
      %v7983 = vmax.f32 %v7949, 0.0
      %v7984 = vpack.c.bf16 %v7953, %v7952
      %v7985 = vpack.c.bf16 %v7955, %v7954
      %v7986 = vpack.c.bf16 %v7957, %v7956
      %v7987 = vpack.c.bf16 %v7959, %v7958
      %v7988 = vpack.c.bf16 %v7961, %v7960
      %v7989 = vpack.c.bf16 %v7963, %v7962
      %v7990 = vpack.c.bf16 %v7965, %v7964
      %v7991 = vpack.c.bf16 %v7967, %v7966
      %v7992 = vpack.c.bf16 %v7969, %v7968
      %v7993 = vpack.c.bf16 %v7971, %v7970
      %v7994 = vpack.c.bf16 %v7973, %v7972
      %v7995 = vpack.c.bf16 %v7975, %v7974
      %v7996 = vpack.c.bf16 %v7977, %v7976
      %v7997 = vpack.c.bf16 %v7979, %v7978
      %v7998 = vpack.c.bf16 %v7981, %v7980
      %v7999 = vpack.c.bf16 %v7983, %v7982
      %v8000 = vld [vmem:[%s3] sm:$0xf]
      %v8001 = vld [vmem:[%s3 + $0x4] sm:$0x1]
      %v8002 = vld [vmem:[%s4] sm:$0xff]
      %v8003 = vld [vmem:[%s4 + $0x8] sm:$0x3]
      %8005 = vset.pattern.permute.xlu0 0
      %8006 = vperm.xlu0 %8005, %v8002
      %v8007 = vpop.permute.xlu0 %8006
      %8010 = vset.pattern.permute.xlu0 0
      %8011 = vperm.xlu0 %8010, %v8003
      %v8012 = vpop.permute.xlu0 %8011
      %v8016 = vunpack.c.l.b16 %v8000
      %v8017 = vunpack.c.l.b16 %v8001
      %v8018 = vpack.c.b16 %v8017, %v8016
      %v8020 = vsel %vm226, %v8018, 0
      %v8023 = vsel %vm226, %v7984, 0
      %v8026 = vsel %vm226, %v7985, 0
      %v8029 = vsel %vm226, %v7986, 0
      %v8032 = vsel %vm226, %v7987, 0
      %v8035 = vsel %vm226, %v7988, 0
      %v8038 = vsel %vm226, %v7989, 0
      %v8041 = vsel %vm226, %v7990, 0
      %v8044 = vsel %vm226, %v7991, 0
      %v8047 = vsel %vm226, %v7992, 0
      %v8050 = vsel %vm226, %v7993, 0
      %v8053 = vsel %vm226, %v7994, 0
      %v8056 = vsel %vm226, %v7995, 0
      %v8059 = vsel %vm226, %v7996, 0
      %v8062 = vsel %vm226, %v7997, 0
      %v8065 = vsel %vm226, %v7998, 0
      %v8068 = vsel %vm226, %v7999, 0
      %8070 = vmatprep.subr.bf16.mxu0 0
      %8071 = vmatpush1.bf16.xpose.msra.mxu0 %v8023
      %8072 = vmatprep.subr.bf16.mxu0 0
      %8073 = vmatpush1.bf16.xpose.msra.mxu0 %v8026
      %8074 = vmatprep.subr.bf16.mxu0 0
      %8075 = vmatpush1.bf16.xpose.msra.mxu0 %v8029
      %8076 = vmatprep.subr.bf16.mxu0 0
      %8077 = vmatpush1.bf16.xpose.msra.mxu0 %v8032
      %8078 = vmatprep.subr.bf16.mxu0 0
      %8079 = vmatpush1.bf16.xpose.msra.mxu0 %v8035
      %8080 = vmatprep.subr.bf16.mxu0 0
      %8081 = vmatpush1.bf16.xpose.msra.mxu0 %v8038
      %8082 = vmatprep.subr.bf16.mxu0 0
      %8083 = vmatpush1.bf16.xpose.msra.mxu0 %v8041
      %8084 = vmatprep.subr.bf16.mxu0 0
      %8085 = vmatpush1.bf16.xpose.msra.mxu0 %v8044
      %8086 = vmatprep.subr.bf16.mxu0 0
      %8087 = vmatpush1.bf16.xpose.msra.mxu0 %v8047
      %8088 = vmatprep.subr.bf16.mxu0 0
      %8089 = vmatpush1.bf16.xpose.msra.mxu0 %v8050
      %8090 = vmatprep.subr.bf16.mxu0 0
      %8091 = vmatpush1.bf16.xpose.msra.mxu0 %v8053
      %8092 = vmatprep.subr.bf16.mxu0 0
      %8093 = vmatpush1.bf16.xpose.msra.mxu0 %v8056
      %8094 = vmatprep.subr.bf16.mxu0 0
      %8095 = vmatpush1.bf16.xpose.msra.mxu0 %v8059
      %8096 = vmatprep.subr.bf16.mxu0 0
      %8097 = vmatpush1.bf16.xpose.msra.mxu0 %v8062
      %8098 = vmatprep.subr.bf16.mxu0 0
      %8099 = vmatpush1.bf16.xpose.msra.mxu0 %v8065
      %8100 = vmatprep.subr.bf16.mxu0 0
      %8101 = vmatpush1.bf16.xpose.msra.mxu0 %v8068
      %8102 = vmatprep.mubr.bf16.mxu0 0
      %8103 = vmatmul.mubr.bf16.gmra.mrb[0].mxu0 %v8020
      %v8104 = vpop.f32.mrb[0].mxu0
      %v8105 = vadd.f32 %v8007, %v8104
      %v8106 = vpop.f32.mrb[0].mxu0
      %v8107 = vadd.f32 %v8007, %v8106
      %v8108 = vpop.f32.mrb[0].mxu0
      %v8109 = vadd.f32 %v8012, %v8108
      %v8110 = vpop.f32.mrb[0].mxu0
      %v8111 = vadd.f32 %v8012, %v8110
      %8112 = vdwg.mxu0
      %8113 = vst [vmem:[%s224] sm:$0xff] %v8105
      %8114 = vst [vmem:[%s224 + $0x8] sm:$0xff] %v8107
      %8115 = vst [vmem:[%s224 + $0x10] sm:$0x3] %v8109
      %8116 = vst [vmem:[%s224 + $0x18] sm:$0x3] %v8111
      %p8117 = scmp.lt.s32.totalorder %s16, 1
      %s8118 = scalar_select %p8117, %s16, 1
      %s8119 = smul.addr %s8118, 4
      %s8120 = smul.addr %s8119, 8
      %s8121 = scalar_lea.vmem %s5, %s8120
      // Predicated region
      $region41: #{fcn_forward.1} parent=39 // pred_check
        %p8122 = pneg %p144
      $region42: #{fcn_forward.1} parent=39 // pred_check_branch
        %8124 = sbr.rel (%p8122) target = $region44
      $region43: #{fcn_forward.1} parent=39 // pred_region
        _
      $region44: #{fcn_forward.1} parent=39 // pred_fallthru
        _
    $region40: #{fcn_forward.1} parent=5 // pred_fallthru
      _
    %p8125 = scmp.le.s32.totalorder 2, %s11
    // Predicated region
    $region45: #{fcn_forward.1} parent=5 // pred_check
      %p8126 = pneg %p8125
    $region46: #{fcn_forward.1} parent=5 // pred_check_branch
      %8128 = sbr.rel (%p8126) target = $region48
    $region47: #{fcn_forward.1} parent=5 // pred_region
      %s8129 = ssub.s32 %s11, 2
      // Predicated region
      $region49: #{fcn_forward.1} parent=47 // pred_check
        %p8130 = pneg %p150
      $region50: #{fcn_forward.1} parent=47 // pred_check_branch
        %8132 = sbr.rel (%p8130) target = $region52
      $region51: #{fcn_forward.1} parent=47 // pred_region
        %p8133 = scmp.lt.s32.totalorder %s17, 1
        %s8134 = scalar_select %p8133, %s17, 1
        %s8135 = smul.addr %s8134, 4
        %s8136 = smul.addr %s8135, 8
        %s8137 = scalar_lea.vmem %s5, %s8136
      $region52: #{fcn_forward.1} parent=47 // pred_fallthru
        _
    $region48: #{fcn_forward.1} parent=5 // pred_fallthru
      _
  $region6: #{fcn_forward.1} parent=0 // loop_footer
    %s15 = sadd.s32 1, %s11
  $region7: #{fcn_forward.1} parent=0 // loop_footer_branch
    %10 = sbr.rel target = $region3
  $region8: #{fcn_forward.1} parent=0 // loop_exit
    _

</llo_original>
